<compile_context>
chip_gen: v7x
topology: tpu7x:2x2x1
jax: 0.10.0
libtpu: 0.0.40
codegen_flags: <defaults>
</compile_context>

<pallas_src>
import functools

import jax
import jax.numpy as jnp
from jax.experimental import pallas as pl
from jax.experimental.pallas import tpu as pltpu

N_EMBD = 384
HIDDEN = 4 * N_EMBD          # 1536
DROPOUT_P = 0.2
DROP_THRESHOLD = int(DROPOUT_P * (1 << 32))   # drop iff bits < threshold
KEEP_SCALE = 1.0 / (1.0 - DROPOUT_P)


def _round_up(x, m):
    return ((x + m - 1) // m) * m


def _ffn_kernel(x_ref, *rest, training):
    if training:
        rbits_ref, w1_ref, b1_ref, w2_ref, b2_ref, o_ref = rest
    else:
        w1_ref, b1_ref, w2_ref, b2_ref, o_ref = rest

    # Linear 1: bf16 MXU operands, f32 accumulate; bias + ReLU in f32.
    x = x_ref[...].astype(jnp.bfloat16)
    h = jnp.dot(x, w1_ref[...], preferred_element_type=jnp.float32) + b1_ref[...]
    h = jnp.maximum(h, 0.0)

    # Linear 2.
    y = jnp.dot(h.astype(jnp.bfloat16), w2_ref[...],
                preferred_element_type=jnp.float32) + b2_ref[...]

    if training:
        # Inverted dropout directly on the uint32 random bits.
        keep = rbits_ref[...] >= jnp.uint32(DROP_THRESHOLD)
        y = jnp.where(keep, y * KEEP_SCALE, 0.0)

    o_ref[...] = y.astype(o_ref.dtype)


def _const_spec(shape):
    """BlockSpec for a grid-invariant operand; single-buffered when supported."""
    index_map = lambda i: (0,) * len(shape)
    if hasattr(pl, "Buffered"):
        return pl.BlockSpec(shape, index_map, pipeline_mode=pl.Buffered(1))
    return pl.BlockSpec(shape, index_map)


def feed_forward(x, w1, b1, w2, b2, *, dropout_key=None, training=True,
                 block_m=512):
    """x: (B, T, C).  w1: (C, H), b1: (H,), w2: (H, C), b2: (C,)."""
    B, T, C = x.shape
    H = w1.shape[1]
    assert w1.shape == (C, H) and w2.shape == (H, C)
    assert block_m % 256 == 0, "block_m should be a multiple of 256 (v6e/v7x MXU)"

    M = B * T
    bm = min(block_m, _round_up(M, 256))        # don't over-pad tiny inputs
    M_pad = pl.cdiv(M, bm) * bm
    grid = (M_pad // bm,)

    xf = x.reshape(M, C)
    if M_pad != M:
        xf = jnp.pad(xf, ((0, M_pad - M), (0, 0)))

    # bf16 weights: native MXU path, half the weight VMEM / DMA bytes.
    w1_b = w1.astype(jnp.bfloat16)
    w2_b = w2.astype(jnp.bfloat16)
    b1_2 = b1.reshape(1, H).astype(jnp.float32)
    b2_2 = b2.reshape(1, C).astype(jnp.float32)

    in_specs = [pl.BlockSpec((bm, C), lambda i: (i, 0))]          # x tile
    inputs = [xf]
    if training:
        if dropout_key is None:
            dropout_key = jax.random.PRNGKey(0)
        rbits = jax.random.bits(dropout_key, (M_pad, C), dtype=jnp.uint32)
        in_specs.append(pl.BlockSpec((bm, C), lambda i: (i, 0)))  # dropout bits
        inputs.append(rbits)
    in_specs += [
        _const_spec((C, H)),   # W1
        _const_spec((1, H)),   # b1
        _const_spec((H, C)),   # W2
        _const_spec((1, C)),   # b2
    ]
    inputs += [w1_b, b1_2, w2_b, b2_2]

    flops = 2 * M_pad * C * H * 2                          # two matmuls
    bytes_accessed = (2 * M_pad * C * 4                    # x in + y out (f32)
                      + 2 * C * H * 2                      # bf16 weights
                      + (H + C) * 4)                       # biases
    if training:
        bytes_accessed += M_pad * C * 4                    # dropout bits

    out = pl.pallas_call(
        functools.partial(_ffn_kernel, training=training),
        out_shape=jax.ShapeDtypeStruct((M_pad, C), x.dtype),
        grid=grid,
        in_specs=in_specs,
        out_specs=pl.BlockSpec((bm, C), lambda i: (i, 0)),
        compiler_params=pltpu.CompilerParams(
            dimension_semantics=("parallel",),
            vmem_limit_bytes=64 * 1024 * 1024,
        ),
        cost_estimate=pl.CostEstimate(
            flops=flops, transcendentals=0, bytes_accessed=bytes_accessed),
    )(*inputs)

    return out[:M].reshape(B, T, C)


def _ref_eval_bf16(x2d, w1, b1, w2, b2):
    # Pure-JAX reference matching the kernel's bf16-operand / f32-accumulate path.
    h = jnp.dot(x2d.astype(jnp.bfloat16), w1.astype(jnp.bfloat16),
                preferred_element_type=jnp.float32) + b1
    h = jnp.maximum(h, 0.0)
    return jnp.dot(h.astype(jnp.bfloat16), w2.astype(jnp.bfloat16),
                   preferred_element_type=jnp.float32) + b2


if __name__ == "__main__":
    key = jax.random.PRNGKey(0)
    k_x, k_w1, k_b1, k_w2, k_b2, k_drop = jax.random.split(key, 6)

    B, T = 2, 8
    x = jax.random.normal(k_x, (B, T, N_EMBD), dtype=jnp.float32)

    # PyTorch-style Linear init: U(-1/sqrt(fan_in), 1/sqrt(fan_in))
    lim1 = 1.0 / (N_EMBD ** 0.5)
    lim2 = 1.0 / (HIDDEN ** 0.5)
    w1 = jax.random.uniform(k_w1, (N_EMBD, HIDDEN), jnp.float32, -lim1, lim1)
    b1 = jax.random.uniform(k_b1, (HIDDEN,), jnp.float32, -lim1, lim1)
    w2 = jax.random.uniform(k_w2, (HIDDEN, N_EMBD), jnp.float32, -lim2, lim2)
    b2 = jax.random.uniform(k_b2, (N_EMBD,), jnp.float32, -lim2, lim2)

    # Eval path (dropout off): check against the matching pure-JAX reference.
    y_eval = jax.block_until_ready(feed_forward(x, w1, b1, w2, b2, training=False))
    y_ref = _ref_eval_bf16(x.reshape(-1, N_EMBD), w1, b1, w2, b2).reshape(B, T, N_EMBD)
    assert y_eval.shape == (B, T, N_EMBD)
    assert jnp.allclose(y_eval, y_ref, atol=2e-2, rtol=2e-2), (
        float(jnp.max(jnp.abs(y_eval - y_ref))))

    # Training path (inverted dropout, host-generated mask bits).
    y_train = jax.block_until_ready(
        feed_forward(x, w1, b1, w2, b2, dropout_key=k_drop, training=True))
    assert y_train.shape == (B, T, N_EMBD)
    drop_frac = float(jnp.mean(y_train == 0.0))
    assert 0.1 < drop_frac < 0.3, drop_frac
    # Kept elements equal the eval output scaled by 1/(1-p).
    kept = y_train != 0.0
    assert jnp.allclose(jnp.where(kept, y_train, 0.0),
                        jnp.where(kept, y_eval * KEEP_SCALE, 0.0),
                        atol=1e-4, rtol=1e-4)

    print("KERNEL_OK")
</pallas_src>

<mosaic_0001>
module attributes {stable_mosaic.version = 11 : i64} {
  func.func @_ffn_kernel(%arg0: i32, %arg1: memref<256x384xf32, #tpu.memory_space<vmem>>, %arg2: memref<384x1536xbf16, #tpu.memory_space<vmem>>, %arg3: memref<1x1536xf32, #tpu.memory_space<vmem>>, %arg4: memref<1536x384xbf16, #tpu.memory_space<vmem>>, %arg5: memref<1x384xf32, #tpu.memory_space<vmem>>, %arg6: memref<256x384xf32, #tpu.memory_space<vmem>>) attributes {dimension_semantics = [#tpu.dimension_semantics<parallel>], iteration_bounds = array<i64: 1>, scalar_prefetch = 0 : i64, scratch_operands = 0 : i64, tpu.core_type = #tpu.core_type<tc>, window_params = [{transform_indices = @transform_0, window_bounds = array<i64: 256, 384>}, {pipeline_mode = #tpu.pipeline_mode<synchronous>, transform_indices = @transform_1, window_bounds = array<i64: 384, 1536>}, {pipeline_mode = #tpu.pipeline_mode<synchronous>, transform_indices = @transform_2, window_bounds = array<i64: 1, 1536>}, {pipeline_mode = #tpu.pipeline_mode<synchronous>, transform_indices = @transform_3, window_bounds = array<i64: 1536, 384>}, {pipeline_mode = #tpu.pipeline_mode<synchronous>, transform_indices = @transform_4, window_bounds = array<i64: 1, 384>}, {transform_indices = @transform_5, window_bounds = array<i64: 256, 384>}]} {
    %c0 = arith.constant 0 : index
    %c0_0 = arith.constant 0 : index
    %0 = vector.load %arg1[%c0, %c0_0] : memref<256x384xf32, #tpu.memory_space<vmem>>, vector<256x384xf32>
    %1 = arith.truncf %0 : vector<256x384xf32> to vector<256x384xbf16>
    %c0_1 = arith.constant 0 : index
    %c0_2 = arith.constant 0 : index
    %2 = vector.load %arg2[%c0_1, %c0_2] : memref<384x1536xbf16, #tpu.memory_space<vmem>>, vector<384x1536xbf16>
    %cst = arith.constant dense<0.000000e+00> : vector<256x1536xf32>
    %3 = tpu.matmul %1, %2, %cst {dimension_numbers = #tpu.dot_dimension_numbers<[1], [0], [0], [1], [0, 0, 1, 1], [], []>} : vector<256x384xbf16>, vector<384x1536xbf16>, vector<256x1536xf32> -> vector<256x1536xf32>
    %c0_3 = arith.constant 0 : index
    %c0_4 = arith.constant 0 : index
    %4 = vector.load %arg3[%c0_3, %c0_4] : memref<1x1536xf32, #tpu.memory_space<vmem>>, vector<1x1536xf32>
    %5 = vector.broadcast %4 : vector<1x1536xf32> to vector<256x1536xf32>
    %6 = arith.addf %3, %5 : vector<256x1536xf32>
    %cst_5 = arith.constant 0.000000e+00 : f32
    %7 = vector.broadcast %cst_5 : f32 to vector<256x1536xf32>
    %8 = arith.maximumf %6, %7 : vector<256x1536xf32>
    %9 = arith.truncf %8 : vector<256x1536xf32> to vector<256x1536xbf16>
    %c0_6 = arith.constant 0 : index
    %c0_7 = arith.constant 0 : index
    %10 = vector.load %arg4[%c0_6, %c0_7] : memref<1536x384xbf16, #tpu.memory_space<vmem>>, vector<1536x384xbf16>
    %cst_8 = arith.constant dense<0.000000e+00> : vector<256x384xf32>
    %11 = tpu.matmul %9, %10, %cst_8 {dimension_numbers = #tpu.dot_dimension_numbers<[1], [0], [0], [1], [0, 0, 1, 1], [], []>} : vector<256x1536xbf16>, vector<1536x384xbf16>, vector<256x384xf32> -> vector<256x384xf32>
    %c0_9 = arith.constant 0 : index
    %c0_10 = arith.constant 0 : index
    %12 = vector.load %arg5[%c0_9, %c0_10] : memref<1x384xf32, #tpu.memory_space<vmem>>, vector<1x384xf32>
    %13 = vector.broadcast %12 : vector<1x384xf32> to vector<256x384xf32>
    %14 = arith.addf %11, %13 : vector<256x384xf32>
    %c0_11 = arith.constant 0 : index
    %c0_12 = arith.constant 0 : index
    %15 = vector.load %arg6[%c0_11, %c0_12] : memref<256x384xf32, #tpu.memory_space<vmem>>, vector<256x384xf32>
    tpu.vector_store %arg6[%c0_11, %c0_12], %14 {strides = array<i32>} : memref<256x384xf32, #tpu.memory_space<vmem>>, vector<256x384xf32>,
    return
  }
  func.func @transform_0(%arg0: i32) -> (i32, i32) {
    %c0_i32 = arith.constant 0 : i32
    %c0_i32_0 = arith.constant 0 : i32
    return %arg0, %c0_i32 : i32, i32
  }
  func.func @transform_1(%arg0: i32) -> (i32, i32) {
    %c0_i32 = arith.constant 0 : i32
    %c0_i32_0 = arith.constant 0 : i32
    %c0_i32_1 = arith.constant 0 : i32
    return %c0_i32, %c0_i32_0 : i32, i32
  }
  func.func @transform_2(%arg0: i32) -> (i32, i32) {
    %c0_i32 = arith.constant 0 : i32
    %c0_i32_0 = arith.constant 0 : i32
    %c0_i32_1 = arith.constant 0 : i32
    return %c0_i32, %c0_i32_0 : i32, i32
  }
  func.func @transform_3(%arg0: i32) -> (i32, i32) {
    %c0_i32 = arith.constant 0 : i32
    %c0_i32_0 = arith.constant 0 : i32
    %c0_i32_1 = arith.constant 0 : i32
    return %c0_i32, %c0_i32_0 : i32, i32
  }
  func.func @transform_4(%arg0: i32) -> (i32, i32) {
    %c0_i32 = arith.constant 0 : i32
    %c0_i32_0 = arith.constant 0 : i32
    %c0_i32_1 = arith.constant 0 : i32
    return %c0_i32, %c0_i32_0 : i32, i32
  }
  func.func @transform_5(%arg0: i32) -> (i32, i32) {
    %c0_i32 = arith.constant 0 : i32
    %c0_i32_0 = arith.constant 0 : i32
    return %arg0, %c0_i32 : i32, i32
  }
}

</mosaic_0001>

<llo_original>
// kernel: tpu_custom_call.1
$region0: #{tpu_custom_call.1}
  #allocation0 [shape = 'u32[]', space=smem, size = 0x4, offset = 0x4, fixed_abs, tag = 'smem constant byte address 0x4 - core index']
  #allocation1 [shape = 'u32[144,128]{1,0:T(1,128)}', space=vmem, size = 0x12000, scoped, tag = 'internal scratch']
  %s0 = inlined_call_operand.hbm [shape: f32[256,384], index: 0, kind: input, shape index: {}]
  %s1 = inlined_call_operand.hbm [shape: bf16[384,1536], index: 1, kind: input, shape index: {}]
  %s2 = inlined_call_operand.hbm [shape: f32[1,1536], index: 2, kind: input, shape index: {}]
  %s3 = inlined_call_operand.hbm [shape: bf16[1536,384], index: 3, kind: input, shape index: {}]
  %s4 = inlined_call_operand.hbm [shape: f32[1,384], index: 4, kind: input, shape index: {}]
  %s5 = inlined_call_operand.hbm [shape: f32[256,384], index: 5, kind: output, shape index: {}]
  %s6 = sld [smem:[#allocation0]]
  $region50: #{tpu_custom_call.1} parent=0
    _
  %s8 = ssub.s32 1, %s6
  %s9 = scalar_select 0, %s8, %s6
  $region1: #{tpu_custom_call.1} parent=0
    #allocation2 [shape = 'u8[393216]{0}', space=vmem, size = 0x60000, scoped, tag = 'input window, operand 0, single buffered']
    #allocation3 [shape = 's32[1]{0}', space=sflag, size = 0x4, scoped, tag = 'scoped memory for tpu_custom_call.1']
    #allocation4 [shape = 's32[1]{0}', space=sflag, size = 0x4, scoped, tag = 'scoped memory for tpu_custom_call.1']
    #allocation5 [shape = 'u8[1179648]{0}', space=vmem, size = 0x120000, scoped, tag = 'input window, operand 1, single buffered']
    #allocation6 [shape = 's32[1]{0}', space=sflag, size = 0x4, scoped, tag = 'scoped memory for tpu_custom_call.1']
    #allocation7 [shape = 'u8[6144]{0}', space=vmem, size = 0x1800, scoped, tag = 'input window, operand 2, single buffered']
    #allocation8 [shape = 'u8[1179648]{0}', space=vmem, size = 0x120000, scoped, tag = 'input window, operand 3, single buffered']
    #allocation9 [shape = 's32[1]{0}', space=sflag, size = 0x4, scoped, tag = 'scoped memory for tpu_custom_call.1']
    #allocation10 [shape = 'u8[1536]{0}', space=vmem, size = 0x800, scoped, tag = 'input window, operand 4, single buffered']
    #allocation11 [shape = 'u8[393216]{0}', space=vmem, size = 0x60000, scoped, tag = 'output window, operand 0, single buffered']
    %10 = vsyncpa [#allocation3], 0
    %11 = vsyncpa [#allocation6], 0
    %12 = vsyncpa [#allocation9], 0
    %13 = vsyncpa [#allocation4], 0
    // Predicated region
    $region2: #{tpu_custom_call.1} parent=1 // pred_check
      _
    $region3: #{tpu_custom_call.1} parent=1 // pred_check_branch
      %15 = sbr.rel (0) target = $region5
    $region4: #{tpu_custom_call.1} parent=1 // pred_region
      %s17 = ssub.s32 12288, 12288
      %18 = vsyncadd [#allocation3], %s17
      %s19 = sshll.u32 [#allocation2], 4
      %s20 = int_to_ptr.vmem [resolvable:$true] %s19
      %25 = dma.hbm_to_vmem [thread:$0]  %s0, 12288, %s20, [#allocation3], 384, 384, 24
    $region5: #{tpu_custom_call.1} parent=1 // pred_fallthru
      _
    // Predicated region
    $region6: #{tpu_custom_call.1} parent=1 // pred_check
      _
    $region7: #{tpu_custom_call.1} parent=1 // pred_check_branch
      %27 = sbr.rel (0) target = $region9
    $region8: #{tpu_custom_call.1} parent=1 // pred_region
      %s29 = ssub.s32 36864, 36864
      %30 = vsyncadd [#allocation6], %s29
      %s31 = sshll.u32 [#allocation5], 4
      %s32 = int_to_ptr.vmem [resolvable:$true] %s31
      %37 = dma.hbm_to_vmem [thread:$0]  %s1, 36864, %s32, [#allocation6], 768, 768, 48
    $region9: #{tpu_custom_call.1} parent=1 // pred_fallthru
      _
    // Predicated region
    $region10: #{tpu_custom_call.1} parent=1 // pred_check
      _
    $region11: #{tpu_custom_call.1} parent=1 // pred_check_branch
      %39 = sbr.rel (0) target = $region13
    $region12: #{tpu_custom_call.1} parent=1 // pred_region
      %s41 = ssub.s32 192, 192
      %42 = vsyncadd [#allocation6], %s41
      %s44 = sshll.u32 [#allocation7], 4
      %s45 = int_to_ptr.vmem [resolvable:$true] %s44
      %47 = dma.hbm_to_vmem [thread:$0]  %s2, 192, %s45, [#allocation6]
    $region13: #{tpu_custom_call.1} parent=1 // pred_fallthru
      _
    // Predicated region
    $region14: #{tpu_custom_call.1} parent=1 // pred_check
      _
    $region15: #{tpu_custom_call.1} parent=1 // pred_check_branch
      %49 = sbr.rel (0) target = $region17
    $region16: #{tpu_custom_call.1} parent=1 // pred_region
      %s51 = ssub.s32 36864, 36864
      %52 = vsyncadd [#allocation9], %s51
      %s53 = sshll.u32 [#allocation8], 4
      %s54 = int_to_ptr.vmem [resolvable:$true] %s53
      %59 = dma.hbm_to_vmem [thread:$0]  %s3, 36864, %s54, [#allocation9], 192, 192, 12
    $region17: #{tpu_custom_call.1} parent=1 // pred_fallthru
      _
    // Predicated region
    $region18: #{tpu_custom_call.1} parent=1 // pred_check
      _
    $region19: #{tpu_custom_call.1} parent=1 // pred_check_branch
      %61 = sbr.rel (0) target = $region21
    $region20: #{tpu_custom_call.1} parent=1 // pred_region
      %s63 = ssub.s32 48, 48
      %64 = vsyncadd [#allocation9], %s63
      %s66 = sshll.u32 [#allocation10], 4
      %s67 = int_to_ptr.vmem [resolvable:$true] %s66
      %69 = dma.hbm_to_vmem [thread:$0]  %s4, 48, %s67, [#allocation9]
    $region21: #{tpu_custom_call.1} parent=1 // pred_fallthru
      _
    // Predicated region
    $region22: #{tpu_custom_call.1} parent=1 // pred_check
      _
    $region23: #{tpu_custom_call.1} parent=1 // pred_check_branch
      %71 = sbr.rel (0) target = $region25
    $region24: #{tpu_custom_call.1} parent=1 // pred_region
      %72 = dma.done [#allocation3], 12288
    $region25: #{tpu_custom_call.1} parent=1 // pred_fallthru
      _
    // Predicated region
    $region26: #{tpu_custom_call.1} parent=1 // pred_check
      _
    $region27: #{tpu_custom_call.1} parent=1 // pred_check_branch
      %74 = sbr.rel (0) target = $region29
    $region28: #{tpu_custom_call.1} parent=1 // pred_region
      %75 = dma.done [#allocation6], 36864
    $region29: #{tpu_custom_call.1} parent=1 // pred_fallthru
      _
    // Predicated region
    $region30: #{tpu_custom_call.1} parent=1 // pred_check
      _
    $region31: #{tpu_custom_call.1} parent=1 // pred_check_branch
      %77 = sbr.rel (0) target = $region33
    $region32: #{tpu_custom_call.1} parent=1 // pred_region
      %78 = dma.done [#allocation6], 192
    $region33: #{tpu_custom_call.1} parent=1 // pred_fallthru
      _
    // Predicated region
    $region34: #{tpu_custom_call.1} parent=1 // pred_check
      _
    $region35: #{tpu_custom_call.1} parent=1 // pred_check_branch
      %80 = sbr.rel (0) target = $region37
    $region36: #{tpu_custom_call.1} parent=1 // pred_region
      %81 = dma.done [#allocation9], 36864
    $region37: #{tpu_custom_call.1} parent=1 // pred_fallthru
      _
    // Predicated region
    $region38: #{tpu_custom_call.1} parent=1 // pred_check
      _
    $region39: #{tpu_custom_call.1} parent=1 // pred_check_branch
      %83 = sbr.rel (0) target = $region41
    $region40: #{tpu_custom_call.1} parent=1 // pred_region
      %84 = dma.done [#allocation9], 48
    $region41: #{tpu_custom_call.1} parent=1 // pred_fallthru
      _
    %v86 = vld [vmem:[#allocation2] sm:$0xff]
    %v87 = vld [vmem:[#allocation2 + $0x8] sm:$0xff]
    %v88 = vld [vmem:[#allocation2 + $0x10] sm:$0xff]
    %v89 = vld [vmem:[#allocation2 + $0x18] sm:$0xff]
    %v90 = vld [vmem:[#allocation2 + $0x20] sm:$0xff]
    %v91 = vld [vmem:[#allocation2 + $0x28] sm:$0xff]
    %v92 = vld [vmem:[#allocation2 + $0x30] sm:$0xff]
    %v93 = vld [vmem:[#allocation2 + $0x38] sm:$0xff]
    %v94 = vld [vmem:[#allocation2 + $0x40] sm:$0xff]
    %v95 = vld [vmem:[#allocation2 + $0x48] sm:$0xff]
    %v96 = vld [vmem:[#allocation2 + $0x50] sm:$0xff]
    %v97 = vld [vmem:[#allocation2 + $0x58] sm:$0xff]
    %v98 = vld [vmem:[#allocation2 + $0x60] sm:$0xff]
    %v99 = vld [vmem:[#allocation2 + $0x68] sm:$0xff]
    %v100 = vld [vmem:[#allocation2 + $0x70] sm:$0xff]
    %v101 = vld [vmem:[#allocation2 + $0x78] sm:$0xff]
    %v102 = vld [vmem:[#allocation2 + $0x80] sm:$0xff]
    %v103 = vld [vmem:[#allocation2 + $0x88] sm:$0xff]
    %v104 = vld [vmem:[#allocation2 + $0x90] sm:$0xff]
    %v105 = vld [vmem:[#allocation2 + $0x98] sm:$0xff]
    %v106 = vld [vmem:[#allocation2 + $0xa0] sm:$0xff]
    %v107 = vld [vmem:[#allocation2 + $0xa8] sm:$0xff]
    %v108 = vld [vmem:[#allocation2 + $0xb0] sm:$0xff]
    %v109 = vld [vmem:[#allocation2 + $0xb8] sm:$0xff]
    %v110 = vld [vmem:[#allocation2 + $0xc0] sm:$0xff]
    %v111 = vld [vmem:[#allocation2 + $0xc8] sm:$0xff]
    %v112 = vld [vmem:[#allocation2 + $0xd0] sm:$0xff]
    %v113 = vld [vmem:[#allocation2 + $0xd8] sm:$0xff]
    %v114 = vld [vmem:[#allocation2 + $0xe0] sm:$0xff]
    %v115 = vld [vmem:[#allocation2 + $0xe8] sm:$0xff]
    %v116 = vld [vmem:[#allocation2 + $0xf0] sm:$0xff]
    %v117 = vld [vmem:[#allocation2 + $0xf8] sm:$0xff]
    %v118 = vld [vmem:[#allocation2 + $0x100] sm:$0xff]
    %v119 = vld [vmem:[#allocation2 + $0x108] sm:$0xff]
    %v120 = vld [vmem:[#allocation2 + $0x110] sm:$0xff]
    %v121 = vld [vmem:[#allocation2 + $0x118] sm:$0xff]
    %v122 = vld [vmem:[#allocation2 + $0x120] sm:$0xff]
    %v123 = vld [vmem:[#allocation2 + $0x128] sm:$0xff]
    %v124 = vld [vmem:[#allocation2 + $0x130] sm:$0xff]
    %v125 = vld [vmem:[#allocation2 + $0x138] sm:$0xff]
    %v126 = vld [vmem:[#allocation2 + $0x140] sm:$0xff]
    %v127 = vld [vmem:[#allocation2 + $0x148] sm:$0xff]
    %v128 = vld [vmem:[#allocation2 + $0x150] sm:$0xff]
    %v129 = vld [vmem:[#allocation2 + $0x158] sm:$0xff]
    %v130 = vld [vmem:[#allocation2 + $0x160] sm:$0xff]
    %v131 = vld [vmem:[#allocation2 + $0x168] sm:$0xff]
    %v132 = vld [vmem:[#allocation2 + $0x170] sm:$0xff]
    %v133 = vld [vmem:[#allocation2 + $0x178] sm:$0xff]
    %v134 = vld [vmem:[#allocation2 + $0x180] sm:$0xff]
    %v135 = vld [vmem:[#allocation2 + $0x188] sm:$0xff]
    %v136 = vld [vmem:[#allocation2 + $0x190] sm:$0xff]
    %v137 = vld [vmem:[#allocation2 + $0x198] sm:$0xff]
    %v138 = vld [vmem:[#allocation2 + $0x1a0] sm:$0xff]
    %v139 = vld [vmem:[#allocation2 + $0x1a8] sm:$0xff]
    %v140 = vld [vmem:[#allocation2 + $0x1b0] sm:$0xff]
    %v141 = vld [vmem:[#allocation2 + $0x1b8] sm:$0xff]
    %v142 = vld [vmem:[#allocation2 + $0x1c0] sm:$0xff]
    %v143 = vld [vmem:[#allocation2 + $0x1c8] sm:$0xff]
    %v144 = vld [vmem:[#allocation2 + $0x1d0] sm:$0xff]
    %v145 = vld [vmem:[#allocation2 + $0x1d8] sm:$0xff]
    %v146 = vld [vmem:[#allocation2 + $0x1e0] sm:$0xff]
    %v147 = vld [vmem:[#allocation2 + $0x1e8] sm:$0xff]
    %v148 = vld [vmem:[#allocation2 + $0x1f0] sm:$0xff]
    %v149 = vld [vmem:[#allocation2 + $0x1f8] sm:$0xff]
    %v150 = vld [vmem:[#allocation2 + $0x200] sm:$0xff]
    %v151 = vld [vmem:[#allocation2 + $0x208] sm:$0xff]
    %v152 = vld [vmem:[#allocation2 + $0x210] sm:$0xff]
    %v153 = vld [vmem:[#allocation2 + $0x218] sm:$0xff]
    %v154 = vld [vmem:[#allocation2 + $0x220] sm:$0xff]
    %v155 = vld [vmem:[#allocation2 + $0x228] sm:$0xff]
    %v156 = vld [vmem:[#allocation2 + $0x230] sm:$0xff]
    %v157 = vld [vmem:[#allocation2 + $0x238] sm:$0xff]
    %v158 = vld [vmem:[#allocation2 + $0x240] sm:$0xff]
    %v159 = vld [vmem:[#allocation2 + $0x248] sm:$0xff]
    %v160 = vld [vmem:[#allocation2 + $0x250] sm:$0xff]
    %v161 = vld [vmem:[#allocation2 + $0x258] sm:$0xff]
    %v162 = vld [vmem:[#allocation2 + $0x260] sm:$0xff]
    %v163 = vld [vmem:[#allocation2 + $0x268] sm:$0xff]
    %v164 = vld [vmem:[#allocation2 + $0x270] sm:$0xff]
    %v165 = vld [vmem:[#allocation2 + $0x278] sm:$0xff]
    %v166 = vld [vmem:[#allocation2 + $0x280] sm:$0xff]
    %v167 = vld [vmem:[#allocation2 + $0x288] sm:$0xff]
    %v168 = vld [vmem:[#allocation2 + $0x290] sm:$0xff]
    %v169 = vld [vmem:[#allocation2 + $0x298] sm:$0xff]
    %v170 = vld [vmem:[#allocation2 + $0x2a0] sm:$0xff]
    %v171 = vld [vmem:[#allocation2 + $0x2a8] sm:$0xff]
    %v172 = vld [vmem:[#allocation2 + $0x2b0] sm:$0xff]
    %v173 = vld [vmem:[#allocation2 + $0x2b8] sm:$0xff]
    %v174 = vld [vmem:[#allocation2 + $0x2c0] sm:$0xff]
    %v175 = vld [vmem:[#allocation2 + $0x2c8] sm:$0xff]
    %v176 = vld [vmem:[#allocation2 + $0x2d0] sm:$0xff]
    %v177 = vld [vmem:[#allocation2 + $0x2d8] sm:$0xff]
    %v178 = vld [vmem:[#allocation2 + $0x2e0] sm:$0xff]
    %v179 = vld [vmem:[#allocation2 + $0x2e8] sm:$0xff]
    %v180 = vld [vmem:[#allocation2 + $0x2f0] sm:$0xff]
    %v181 = vld [vmem:[#allocation2 + $0x2f8] sm:$0xff]
    %v182 = vpack.c.bf16 %v89, %v86
    %v183 = vpack.c.bf16 %v90, %v87
    %v184 = vpack.c.bf16 %v91, %v88
    %v185 = vpack.c.bf16 %v95, %v92
    %v186 = vpack.c.bf16 %v96, %v93
    %v187 = vpack.c.bf16 %v97, %v94
    %v188 = vpack.c.bf16 %v101, %v98
    %v189 = vpack.c.bf16 %v102, %v99
    %v190 = vpack.c.bf16 %v103, %v100
    %v191 = vpack.c.bf16 %v107, %v104
    %v192 = vpack.c.bf16 %v108, %v105
    %v193 = vpack.c.bf16 %v109, %v106
    %v194 = vpack.c.bf16 %v113, %v110
    %v195 = vpack.c.bf16 %v114, %v111
    %v196 = vpack.c.bf16 %v115, %v112
    %v197 = vpack.c.bf16 %v119, %v116
    %v198 = vpack.c.bf16 %v120, %v117
    %v199 = vpack.c.bf16 %v121, %v118
    %v200 = vpack.c.bf16 %v125, %v122
    %v201 = vpack.c.bf16 %v126, %v123
    %v202 = vpack.c.bf16 %v127, %v124
    %v203 = vpack.c.bf16 %v131, %v128
    %v204 = vpack.c.bf16 %v132, %v129
    %v205 = vpack.c.bf16 %v133, %v130
    %v206 = vpack.c.bf16 %v137, %v134
    %v207 = vpack.c.bf16 %v138, %v135
    %v208 = vpack.c.bf16 %v139, %v136
    %v209 = vpack.c.bf16 %v143, %v140
    %v210 = vpack.c.bf16 %v144, %v141
    %v211 = vpack.c.bf16 %v145, %v142
    %v212 = vpack.c.bf16 %v149, %v146
    %v213 = vpack.c.bf16 %v150, %v147
    %v214 = vpack.c.bf16 %v151, %v148
    %v215 = vpack.c.bf16 %v155, %v152
    %v216 = vpack.c.bf16 %v156, %v153
    %v217 = vpack.c.bf16 %v157, %v154
    %v218 = vpack.c.bf16 %v161, %v158
    %v219 = vpack.c.bf16 %v162, %v159
    %v220 = vpack.c.bf16 %v163, %v160
    %v221 = vpack.c.bf16 %v167, %v164
    %v222 = vpack.c.bf16 %v168, %v165
    %v223 = vpack.c.bf16 %v169, %v166
    %v224 = vpack.c.bf16 %v173, %v170
    %v225 = vpack.c.bf16 %v174, %v171
    %v226 = vpack.c.bf16 %v175, %v172
    %v227 = vpack.c.bf16 %v179, %v176
    %v228 = vpack.c.bf16 %v180, %v177
    %v229 = vpack.c.bf16 %v181, %v178
    %v230 = vld [vmem:[#allocation5] sm:$0xff]
    %v231 = vld [vmem:[#allocation5 + $0x8] sm:$0xff]
    %v232 = vld [vmem:[#allocation5 + $0x10] sm:$0xff]
    %v233 = vld [vmem:[#allocation5 + $0x18] sm:$0xff]
    %v234 = vld [vmem:[#allocation5 + $0x20] sm:$0xff]
    %v235 = vld [vmem:[#allocation5 + $0x28] sm:$0xff]
    %v236 = vld [vmem:[#allocation5 + $0x30] sm:$0xff]
    %v237 = vld [vmem:[#allocation5 + $0x38] sm:$0xff]
    %v238 = vld [vmem:[#allocation5 + $0x40] sm:$0xff]
    %v239 = vld [vmem:[#allocation5 + $0x48] sm:$0xff]
    %v240 = vld [vmem:[#allocation5 + $0x50] sm:$0xff]
    %v241 = vld [vmem:[#allocation5 + $0x58] sm:$0xff]
    %v242 = vld [vmem:[#allocation5 + $0x60] sm:$0xff]
    %v243 = vld [vmem:[#allocation5 + $0x68] sm:$0xff]
    %v244 = vld [vmem:[#allocation5 + $0x70] sm:$0xff]
    %v245 = vld [vmem:[#allocation5 + $0x78] sm:$0xff]
    %v246 = vld [vmem:[#allocation5 + $0x80] sm:$0xff]
    %v247 = vld [vmem:[#allocation5 + $0x88] sm:$0xff]
    %v248 = vld [vmem:[#allocation5 + $0x90] sm:$0xff]
    %v249 = vld [vmem:[#allocation5 + $0x98] sm:$0xff]
    %v250 = vld [vmem:[#allocation5 + $0xa0] sm:$0xff]
    %v251 = vld [vmem:[#allocation5 + $0xa8] sm:$0xff]
    %v252 = vld [vmem:[#allocation5 + $0xb0] sm:$0xff]
    %v253 = vld [vmem:[#allocation5 + $0xb8] sm:$0xff]
    %v254 = vld [vmem:[#allocation5 + $0xc0] sm:$0xff]
    %v255 = vld [vmem:[#allocation5 + $0xc8] sm:$0xff]
    %v256 = vld [vmem:[#allocation5 + $0xd0] sm:$0xff]
    %v257 = vld [vmem:[#allocation5 + $0xd8] sm:$0xff]
    %v258 = vld [vmem:[#allocation5 + $0xe0] sm:$0xff]
    %v259 = vld [vmem:[#allocation5 + $0xe8] sm:$0xff]
    %v260 = vld [vmem:[#allocation5 + $0xf0] sm:$0xff]
    %v261 = vld [vmem:[#allocation5 + $0xf8] sm:$0xff]
    %v262 = vld [vmem:[#allocation5 + $0x100] sm:$0xff]
    %v263 = vld [vmem:[#allocation5 + $0x108] sm:$0xff]
    %v264 = vld [vmem:[#allocation5 + $0x110] sm:$0xff]
    %v265 = vld [vmem:[#allocation5 + $0x118] sm:$0xff]
    %v266 = vld [vmem:[#allocation5 + $0x120] sm:$0xff]
    %v267 = vld [vmem:[#allocation5 + $0x128] sm:$0xff]
    %v268 = vld [vmem:[#allocation5 + $0x130] sm:$0xff]
    %v269 = vld [vmem:[#allocation5 + $0x138] sm:$0xff]
    %v270 = vld [vmem:[#allocation5 + $0x140] sm:$0xff]
    %v271 = vld [vmem:[#allocation5 + $0x148] sm:$0xff]
    %v272 = vld [vmem:[#allocation5 + $0x150] sm:$0xff]
    %v273 = vld [vmem:[#allocation5 + $0x158] sm:$0xff]
    %v274 = vld [vmem:[#allocation5 + $0x160] sm:$0xff]
    %v275 = vld [vmem:[#allocation5 + $0x168] sm:$0xff]
    %v276 = vld [vmem:[#allocation5 + $0x170] sm:$0xff]
    %v277 = vld [vmem:[#allocation5 + $0x178] sm:$0xff]
    %v278 = vld [vmem:[#allocation5 + $0x180] sm:$0xff]
    %v279 = vld [vmem:[#allocation5 + $0x188] sm:$0xff]
    %v280 = vld [vmem:[#allocation5 + $0x190] sm:$0xff]
    %v281 = vld [vmem:[#allocation5 + $0x198] sm:$0xff]
    %v282 = vld [vmem:[#allocation5 + $0x1a0] sm:$0xff]
    %v283 = vld [vmem:[#allocation5 + $0x1a8] sm:$0xff]
    %v284 = vld [vmem:[#allocation5 + $0x1b0] sm:$0xff]
    %v285 = vld [vmem:[#allocation5 + $0x1b8] sm:$0xff]
    %v286 = vld [vmem:[#allocation5 + $0x1c0] sm:$0xff]
    %v287 = vld [vmem:[#allocation5 + $0x1c8] sm:$0xff]
    %v288 = vld [vmem:[#allocation5 + $0x1d0] sm:$0xff]
    %v289 = vld [vmem:[#allocation5 + $0x1d8] sm:$0xff]
    %v290 = vld [vmem:[#allocation5 + $0x1e0] sm:$0xff]
    %v291 = vld [vmem:[#allocation5 + $0x1e8] sm:$0xff]
    %v292 = vld [vmem:[#allocation5 + $0x1f0] sm:$0xff]
    %v293 = vld [vmem:[#allocation5 + $0x1f8] sm:$0xff]
    %v294 = vld [vmem:[#allocation5 + $0x200] sm:$0xff]
    %v295 = vld [vmem:[#allocation5 + $0x208] sm:$0xff]
    %v296 = vld [vmem:[#allocation5 + $0x210] sm:$0xff]
    %v297 = vld [vmem:[#allocation5 + $0x218] sm:$0xff]
    %v298 = vld [vmem:[#allocation5 + $0x220] sm:$0xff]
    %v299 = vld [vmem:[#allocation5 + $0x228] sm:$0xff]
    %v300 = vld [vmem:[#allocation5 + $0x230] sm:$0xff]
    %v301 = vld [vmem:[#allocation5 + $0x238] sm:$0xff]
    %v302 = vld [vmem:[#allocation5 + $0x240] sm:$0xff]
    %v303 = vld [vmem:[#allocation5 + $0x248] sm:$0xff]
    %v304 = vld [vmem:[#allocation5 + $0x250] sm:$0xff]
    %v305 = vld [vmem:[#allocation5 + $0x258] sm:$0xff]
    %v306 = vld [vmem:[#allocation5 + $0x260] sm:$0xff]
    %v307 = vld [vmem:[#allocation5 + $0x268] sm:$0xff]
    %v308 = vld [vmem:[#allocation5 + $0x270] sm:$0xff]
    %v309 = vld [vmem:[#allocation5 + $0x278] sm:$0xff]
    %v310 = vld [vmem:[#allocation5 + $0x280] sm:$0xff]
    %v311 = vld [vmem:[#allocation5 + $0x288] sm:$0xff]
    %v312 = vld [vmem:[#allocation5 + $0x290] sm:$0xff]
    %v313 = vld [vmem:[#allocation5 + $0x298] sm:$0xff]
    %v314 = vld [vmem:[#allocation5 + $0x2a0] sm:$0xff]
    %v315 = vld [vmem:[#allocation5 + $0x2a8] sm:$0xff]
    %v316 = vld [vmem:[#allocation5 + $0x2b0] sm:$0xff]
    %v317 = vld [vmem:[#allocation5 + $0x2b8] sm:$0xff]
    %v318 = vld [vmem:[#allocation5 + $0x2c0] sm:$0xff]
    %v319 = vld [vmem:[#allocation5 + $0x2c8] sm:$0xff]
    %v320 = vld [vmem:[#allocation5 + $0x2d0] sm:$0xff]
    %v321 = vld [vmem:[#allocation5 + $0x2d8] sm:$0xff]
    %v322 = vld [vmem:[#allocation5 + $0x2e0] sm:$0xff]
    %v323 = vld [vmem:[#allocation5 + $0x2e8] sm:$0xff]
    %v324 = vld [vmem:[#allocation5 + $0x2f0] sm:$0xff]
    %v325 = vld [vmem:[#allocation5 + $0x2f8] sm:$0xff]
    %v326 = vld [vmem:[#allocation5 + $0x300] sm:$0xff]
    %v327 = vld [vmem:[#allocation5 + $0x308] sm:$0xff]
    %v328 = vld [vmem:[#allocation5 + $0x310] sm:$0xff]
    %v329 = vld [vmem:[#allocation5 + $0x318] sm:$0xff]
    %v330 = vld [vmem:[#allocation5 + $0x320] sm:$0xff]
    %v331 = vld [vmem:[#allocation5 + $0x328] sm:$0xff]
    %v332 = vld [vmem:[#allocation5 + $0x330] sm:$0xff]
    %v333 = vld [vmem:[#allocation5 + $0x338] sm:$0xff]
    %v334 = vld [vmem:[#allocation5 + $0x340] sm:$0xff]
    %v335 = vld [vmem:[#allocation5 + $0x348] sm:$0xff]
    %v336 = vld [vmem:[#allocation5 + $0x350] sm:$0xff]
    %v337 = vld [vmem:[#allocation5 + $0x358] sm:$0xff]
    %v338 = vld [vmem:[#allocation5 + $0x360] sm:$0xff]
    %v339 = vld [vmem:[#allocation5 + $0x368] sm:$0xff]
    %v340 = vld [vmem:[#allocation5 + $0x370] sm:$0xff]
    %v341 = vld [vmem:[#allocation5 + $0x378] sm:$0xff]
    %v342 = vld [vmem:[#allocation5 + $0x380] sm:$0xff]
    %v343 = vld [vmem:[#allocation5 + $0x388] sm:$0xff]
    %v344 = vld [vmem:[#allocation5 + $0x390] sm:$0xff]
    %v345 = vld [vmem:[#allocation5 + $0x398] sm:$0xff]
    %v346 = vld [vmem:[#allocation5 + $0x3a0] sm:$0xff]
    %v347 = vld [vmem:[#allocation5 + $0x3a8] sm:$0xff]
    %v348 = vld [vmem:[#allocation5 + $0x3b0] sm:$0xff]
    %v349 = vld [vmem:[#allocation5 + $0x3b8] sm:$0xff]
    %v350 = vld [vmem:[#allocation5 + $0x3c0] sm:$0xff]
    %v351 = vld [vmem:[#allocation5 + $0x3c8] sm:$0xff]
    %v352 = vld [vmem:[#allocation5 + $0x3d0] sm:$0xff]
    %v353 = vld [vmem:[#allocation5 + $0x3d8] sm:$0xff]
    %v354 = vld [vmem:[#allocation5 + $0x3e0] sm:$0xff]
    %v355 = vld [vmem:[#allocation5 + $0x3e8] sm:$0xff]
    %v356 = vld [vmem:[#allocation5 + $0x3f0] sm:$0xff]
    %v357 = vld [vmem:[#allocation5 + $0x3f8] sm:$0xff]
    %v358 = vld [vmem:[#allocation5 + $0x400] sm:$0xff]
    %v359 = vld [vmem:[#allocation5 + $0x408] sm:$0xff]
    %v360 = vld [vmem:[#allocation5 + $0x410] sm:$0xff]
    %v361 = vld [vmem:[#allocation5 + $0x418] sm:$0xff]
    %v362 = vld [vmem:[#allocation5 + $0x420] sm:$0xff]
    %v363 = vld [vmem:[#allocation5 + $0x428] sm:$0xff]
    %v364 = vld [vmem:[#allocation5 + $0x430] sm:$0xff]
    %v365 = vld [vmem:[#allocation5 + $0x438] sm:$0xff]
    %v366 = vld [vmem:[#allocation5 + $0x440] sm:$0xff]
    %v367 = vld [vmem:[#allocation5 + $0x448] sm:$0xff]
    %v368 = vld [vmem:[#allocation5 + $0x450] sm:$0xff]
    %v369 = vld [vmem:[#allocation5 + $0x458] sm:$0xff]
    %v370 = vld [vmem:[#allocation5 + $0x460] sm:$0xff]
    %v371 = vld [vmem:[#allocation5 + $0x468] sm:$0xff]
    %v372 = vld [vmem:[#allocation5 + $0x470] sm:$0xff]
    %v373 = vld [vmem:[#allocation5 + $0x478] sm:$0xff]
    %v374 = vld [vmem:[#allocation5 + $0x480] sm:$0xff]
    %v375 = vld [vmem:[#allocation5 + $0x488] sm:$0xff]
    %v376 = vld [vmem:[#allocation5 + $0x490] sm:$0xff]
    %v377 = vld [vmem:[#allocation5 + $0x498] sm:$0xff]
    %v378 = vld [vmem:[#allocation5 + $0x4a0] sm:$0xff]
    %v379 = vld [vmem:[#allocation5 + $0x4a8] sm:$0xff]
    %v380 = vld [vmem:[#allocation5 + $0x4b0] sm:$0xff]
    %v381 = vld [vmem:[#allocation5 + $0x4b8] sm:$0xff]
    %v382 = vld [vmem:[#allocation5 + $0x4c0] sm:$0xff]
    %v383 = vld [vmem:[#allocation5 + $0x4c8] sm:$0xff]
    %v384 = vld [vmem:[#allocation5 + $0x4d0] sm:$0xff]
    %v385 = vld [vmem:[#allocation5 + $0x4d8] sm:$0xff]
    %v386 = vld [vmem:[#allocation5 + $0x4e0] sm:$0xff]
    %v387 = vld [vmem:[#allocation5 + $0x4e8] sm:$0xff]
    %v388 = vld [vmem:[#allocation5 + $0x4f0] sm:$0xff]
    %v389 = vld [vmem:[#allocation5 + $0x4f8] sm:$0xff]
    %v390 = vld [vmem:[#allocation5 + $0x500] sm:$0xff]
    %v391 = vld [vmem:[#allocation5 + $0x508] sm:$0xff]
    %v392 = vld [vmem:[#allocation5 + $0x510] sm:$0xff]
    %v393 = vld [vmem:[#allocation5 + $0x518] sm:$0xff]
    %v394 = vld [vmem:[#allocation5 + $0x520] sm:$0xff]
    %v395 = vld [vmem:[#allocation5 + $0x528] sm:$0xff]
    %v396 = vld [vmem:[#allocation5 + $0x530] sm:$0xff]
    %v397 = vld [vmem:[#allocation5 + $0x538] sm:$0xff]
    %v398 = vld [vmem:[#allocation5 + $0x540] sm:$0xff]
    %v399 = vld [vmem:[#allocation5 + $0x548] sm:$0xff]
    %v400 = vld [vmem:[#allocation5 + $0x550] sm:$0xff]
    %v401 = vld [vmem:[#allocation5 + $0x558] sm:$0xff]
    %v402 = vld [vmem:[#allocation5 + $0x560] sm:$0xff]
    %v403 = vld [vmem:[#allocation5 + $0x568] sm:$0xff]
    %v404 = vld [vmem:[#allocation5 + $0x570] sm:$0xff]
    %v405 = vld [vmem:[#allocation5 + $0x578] sm:$0xff]
    %v406 = vld [vmem:[#allocation5 + $0x580] sm:$0xff]
    %v407 = vld [vmem:[#allocation5 + $0x588] sm:$0xff]
    %v408 = vld [vmem:[#allocation5 + $0x590] sm:$0xff]
    %v409 = vld [vmem:[#allocation5 + $0x598] sm:$0xff]
    %v410 = vld [vmem:[#allocation5 + $0x5a0] sm:$0xff]
    %v411 = vld [vmem:[#allocation5 + $0x5a8] sm:$0xff]
    %v412 = vld [vmem:[#allocation5 + $0x5b0] sm:$0xff]
    %v413 = vld [vmem:[#allocation5 + $0x5b8] sm:$0xff]
    %v414 = vld [vmem:[#allocation5 + $0x5c0] sm:$0xff]
    %v415 = vld [vmem:[#allocation5 + $0x5c8] sm:$0xff]
    %v416 = vld [vmem:[#allocation5 + $0x5d0] sm:$0xff]
    %v417 = vld [vmem:[#allocation5 + $0x5d8] sm:$0xff]
    %v418 = vld [vmem:[#allocation5 + $0x5e0] sm:$0xff]
    %v419 = vld [vmem:[#allocation5 + $0x5e8] sm:$0xff]
    %v420 = vld [vmem:[#allocation5 + $0x5f0] sm:$0xff]
    %v421 = vld [vmem:[#allocation5 + $0x5f8] sm:$0xff]
    %v422 = vld [vmem:[#allocation5 + $0x600] sm:$0xff]
    %v423 = vld [vmem:[#allocation5 + $0x608] sm:$0xff]
    %v424 = vld [vmem:[#allocation5 + $0x610] sm:$0xff]
    %v425 = vld [vmem:[#allocation5 + $0x618] sm:$0xff]
    %v426 = vld [vmem:[#allocation5 + $0x620] sm:$0xff]
    %v427 = vld [vmem:[#allocation5 + $0x628] sm:$0xff]
    %v428 = vld [vmem:[#allocation5 + $0x630] sm:$0xff]
    %v429 = vld [vmem:[#allocation5 + $0x638] sm:$0xff]
    %v430 = vld [vmem:[#allocation5 + $0x640] sm:$0xff]
    %v431 = vld [vmem:[#allocation5 + $0x648] sm:$0xff]
    %v432 = vld [vmem:[#allocation5 + $0x650] sm:$0xff]
    %v433 = vld [vmem:[#allocation5 + $0x658] sm:$0xff]
    %v434 = vld [vmem:[#allocation5 + $0x660] sm:$0xff]
    %v435 = vld [vmem:[#allocation5 + $0x668] sm:$0xff]
    %v436 = vld [vmem:[#allocation5 + $0x670] sm:$0xff]
    %v437 = vld [vmem:[#allocation5 + $0x678] sm:$0xff]
    %v438 = vld [vmem:[#allocation5 + $0x680] sm:$0xff]
    %v439 = vld [vmem:[#allocation5 + $0x688] sm:$0xff]
    %v440 = vld [vmem:[#allocation5 + $0x690] sm:$0xff]
    %v441 = vld [vmem:[#allocation5 + $0x698] sm:$0xff]
    %v442 = vld [vmem:[#allocation5 + $0x6a0] sm:$0xff]
    %v443 = vld [vmem:[#allocation5 + $0x6a8] sm:$0xff]
    %v444 = vld [vmem:[#allocation5 + $0x6b0] sm:$0xff]
    %v445 = vld [vmem:[#allocation5 + $0x6b8] sm:$0xff]
    %v446 = vld [vmem:[#allocation5 + $0x6c0] sm:$0xff]
    %v447 = vld [vmem:[#allocation5 + $0x6c8] sm:$0xff]
    %v448 = vld [vmem:[#allocation5 + $0x6d0] sm:$0xff]
    %v449 = vld [vmem:[#allocation5 + $0x6d8] sm:$0xff]
    %v450 = vld [vmem:[#allocation5 + $0x6e0] sm:$0xff]
    %v451 = vld [vmem:[#allocation5 + $0x6e8] sm:$0xff]
    %v452 = vld [vmem:[#allocation5 + $0x6f0] sm:$0xff]
    %v453 = vld [vmem:[#allocation5 + $0x6f8] sm:$0xff]
    %v454 = vld [vmem:[#allocation5 + $0x700] sm:$0xff]
    %v455 = vld [vmem:[#allocation5 + $0x708] sm:$0xff]
    %v456 = vld [vmem:[#allocation5 + $0x710] sm:$0xff]
    %v457 = vld [vmem:[#allocation5 + $0x718] sm:$0xff]
    %v458 = vld [vmem:[#allocation5 + $0x720] sm:$0xff]
    %v459 = vld [vmem:[#allocation5 + $0x728] sm:$0xff]
    %v460 = vld [vmem:[#allocation5 + $0x730] sm:$0xff]
    %v461 = vld [vmem:[#allocation5 + $0x738] sm:$0xff]
    %v462 = vld [vmem:[#allocation5 + $0x740] sm:$0xff]
    %v463 = vld [vmem:[#allocation5 + $0x748] sm:$0xff]
    %v464 = vld [vmem:[#allocation5 + $0x750] sm:$0xff]
    %v465 = vld [vmem:[#allocation5 + $0x758] sm:$0xff]
    %v466 = vld [vmem:[#allocation5 + $0x760] sm:$0xff]
    %v467 = vld [vmem:[#allocation5 + $0x768] sm:$0xff]
    %v468 = vld [vmem:[#allocation5 + $0x770] sm:$0xff]
    %v469 = vld [vmem:[#allocation5 + $0x778] sm:$0xff]
    %v470 = vld [vmem:[#allocation5 + $0x780] sm:$0xff]
    %v471 = vld [vmem:[#allocation5 + $0x788] sm:$0xff]
    %v472 = vld [vmem:[#allocation5 + $0x790] sm:$0xff]
    %v473 = vld [vmem:[#allocation5 + $0x798] sm:$0xff]
    %v474 = vld [vmem:[#allocation5 + $0x7a0] sm:$0xff]
    %v475 = vld [vmem:[#allocation5 + $0x7a8] sm:$0xff]
    %v476 = vld [vmem:[#allocation5 + $0x7b0] sm:$0xff]
    %v477 = vld [vmem:[#allocation5 + $0x7b8] sm:$0xff]
    %v478 = vld [vmem:[#allocation5 + $0x7c0] sm:$0xff]
    %v479 = vld [vmem:[#allocation5 + $0x7c8] sm:$0xff]
    %v480 = vld [vmem:[#allocation5 + $0x7d0] sm:$0xff]
    %v481 = vld [vmem:[#allocation5 + $0x7d8] sm:$0xff]
    %v482 = vld [vmem:[#allocation5 + $0x7e0] sm:$0xff]
    %v483 = vld [vmem:[#allocation5 + $0x7e8] sm:$0xff]
    %v484 = vld [vmem:[#allocation5 + $0x7f0] sm:$0xff]
    %v485 = vld [vmem:[#allocation5 + $0x7f8] sm:$0xff]
    %v486 = vld [vmem:[#allocation5 + $0x800] sm:$0xff]
    %v487 = vld [vmem:[#allocation5 + $0x808] sm:$0xff]
    %v488 = vld [vmem:[#allocation5 + $0x810] sm:$0xff]
    %v489 = vld [vmem:[#allocation5 + $0x818] sm:$0xff]
    %v490 = vld [vmem:[#allocation5 + $0x820] sm:$0xff]
    %v491 = vld [vmem:[#allocation5 + $0x828] sm:$0xff]
    %v492 = vld [vmem:[#allocation5 + $0x830] sm:$0xff]
    %v493 = vld [vmem:[#allocation5 + $0x838] sm:$0xff]
    %v494 = vld [vmem:[#allocation5 + $0x840] sm:$0xff]
    %v495 = vld [vmem:[#allocation5 + $0x848] sm:$0xff]
    %v496 = vld [vmem:[#allocation5 + $0x850] sm:$0xff]
    %v497 = vld [vmem:[#allocation5 + $0x858] sm:$0xff]
    %v498 = vld [vmem:[#allocation5 + $0x860] sm:$0xff]
    %v499 = vld [vmem:[#allocation5 + $0x868] sm:$0xff]
    %v500 = vld [vmem:[#allocation5 + $0x870] sm:$0xff]
    %v501 = vld [vmem:[#allocation5 + $0x878] sm:$0xff]
    %v502 = vld [vmem:[#allocation5 + $0x880] sm:$0xff]
    %v503 = vld [vmem:[#allocation5 + $0x888] sm:$0xff]
    %v504 = vld [vmem:[#allocation5 + $0x890] sm:$0xff]
    %v505 = vld [vmem:[#allocation5 + $0x898] sm:$0xff]
    %v506 = vld [vmem:[#allocation5 + $0x8a0] sm:$0xff]
    %v507 = vld [vmem:[#allocation5 + $0x8a8] sm:$0xff]
    %v508 = vld [vmem:[#allocation5 + $0x8b0] sm:$0xff]
    %v509 = vld [vmem:[#allocation5 + $0x8b8] sm:$0xff]
    %v510 = vld [vmem:[#allocation5 + $0x8c0] sm:$0xff]
    %v511 = vld [vmem:[#allocation5 + $0x8c8] sm:$0xff]
    %v512 = vld [vmem:[#allocation5 + $0x8d0] sm:$0xff]
    %v513 = vld [vmem:[#allocation5 + $0x8d8] sm:$0xff]
    %v514 = vld [vmem:[#allocation5 + $0x8e0] sm:$0xff]
    %v515 = vld [vmem:[#allocation5 + $0x8e8] sm:$0xff]
    %v516 = vld [vmem:[#allocation5 + $0x8f0] sm:$0xff]
    %v517 = vld [vmem:[#allocation5 + $0x8f8] sm:$0xff]
    %v518 = vld [vmem:[#allocation7] sm:$0xff]
    %v519 = vld [vmem:[#allocation7 + $0x8] sm:$0xf]
    %v522 = vlaneseq
    %v523 = vshrl.u32 %v522, 7
    %v524 = vsub.s32 0, %v523
    %v525 = vrot.slane %v518, %v524
    %v526 = vlaneseq
    %v527 = vshrl.u32 %v526, 7
    %v528 = vsub.s32 1, %v527
    %v529 = vrot.slane %v518, %v528
    %v530 = vlaneseq
    %v531 = vshrl.u32 %v530, 7
    %v532 = vsub.s32 2, %v531
    %v533 = vrot.slane %v518, %v532
    %v534 = vlaneseq
    %v535 = vshrl.u32 %v534, 7
    %v536 = vsub.s32 3, %v535
    %v537 = vrot.slane %v518, %v536
    %v538 = vlaneseq
    %v539 = vshrl.u32 %v538, 7
    %v540 = vsub.s32 4, %v539
    %v541 = vrot.slane %v518, %v540
    %v542 = vlaneseq
    %v543 = vshrl.u32 %v542, 7
    %v544 = vsub.s32 5, %v543
    %v545 = vrot.slane %v518, %v544
    %v546 = vlaneseq
    %v547 = vshrl.u32 %v546, 7
    %v548 = vsub.s32 6, %v547
    %v549 = vrot.slane %v518, %v548
    %v550 = vlaneseq
    %v551 = vshrl.u32 %v550, 7
    %v552 = vsub.s32 7, %v551
    %v553 = vrot.slane %v518, %v552
    %v554 = vlaneseq
    %v555 = vshrl.u32 %v554, 7
    %v556 = vsub.s32 0, %v555
    %v557 = vrot.slane %v519, %v556
    %v558 = vlaneseq
    %v559 = vshrl.u32 %v558, 7
    %v560 = vsub.s32 1, %v559
    %v561 = vrot.slane %v519, %v560
    %v562 = vlaneseq
    %v563 = vshrl.u32 %v562, 7
    %v564 = vsub.s32 2, %v563
    %v565 = vrot.slane %v519, %v564
    %v566 = vlaneseq
    %v567 = vshrl.u32 %v566, 7
    %v568 = vsub.s32 3, %v567
    %v569 = vrot.slane %v519, %v568
    %v870 = vunpack.c.l.b16 %v230
    %v871 = vunpack.c.h.b16 %v230
    %v872 = vunpack.c.l.b16 %v231
    %v873 = vunpack.c.h.b16 %v231
    %v874 = vunpack.c.l.b16 %v232
    %v875 = vunpack.c.h.b16 %v232
    %v876 = vunpack.c.l.b16 %v233
    %v877 = vunpack.c.h.b16 %v233
    %v878 = vunpack.c.l.b16 %v234
    %v879 = vunpack.c.h.b16 %v234
    %v880 = vunpack.c.l.b16 %v235
    %v881 = vunpack.c.h.b16 %v235
    %v882 = vunpack.c.l.b16 %v236
    %v883 = vunpack.c.h.b16 %v236
    %v884 = vunpack.c.l.b16 %v237
    %v885 = vunpack.c.h.b16 %v237
    %v886 = vunpack.c.l.b16 %v238
    %v887 = vunpack.c.h.b16 %v238
    %v888 = vunpack.c.l.b16 %v239
    %v889 = vunpack.c.h.b16 %v239
    %v890 = vunpack.c.l.b16 %v240
    %v891 = vunpack.c.h.b16 %v240
    %v892 = vunpack.c.l.b16 %v241
    %v893 = vunpack.c.h.b16 %v241
    %v894 = vunpack.c.l.b16 %v242
    %v895 = vunpack.c.h.b16 %v242
    %v896 = vunpack.c.l.b16 %v243
    %v897 = vunpack.c.h.b16 %v243
    %v898 = vunpack.c.l.b16 %v244
    %v899 = vunpack.c.h.b16 %v244
    %v900 = vunpack.c.l.b16 %v245
    %v901 = vunpack.c.h.b16 %v245
    %v902 = vunpack.c.l.b16 %v246
    %v903 = vunpack.c.h.b16 %v246
    %v904 = vunpack.c.l.b16 %v247
    %v905 = vunpack.c.h.b16 %v247
    %v906 = vunpack.c.l.b16 %v248
    %v907 = vunpack.c.h.b16 %v248
    %v908 = vunpack.c.l.b16 %v249
    %v909 = vunpack.c.h.b16 %v249
    %v910 = vunpack.c.l.b16 %v250
    %v911 = vunpack.c.h.b16 %v250
    %v912 = vunpack.c.l.b16 %v251
    %v913 = vunpack.c.h.b16 %v251
    %v914 = vunpack.c.l.b16 %v252
    %v915 = vunpack.c.h.b16 %v252
    %v916 = vunpack.c.l.b16 %v253
    %v917 = vunpack.c.h.b16 %v253
    %v918 = vunpack.c.l.b16 %v254
    %v919 = vunpack.c.h.b16 %v254
    %v920 = vunpack.c.l.b16 %v255
    %v921 = vunpack.c.h.b16 %v255
    %v922 = vunpack.c.l.b16 %v256
    %v923 = vunpack.c.h.b16 %v256
    %v924 = vunpack.c.l.b16 %v257
    %v925 = vunpack.c.h.b16 %v257
    %v926 = vunpack.c.l.b16 %v258
    %v927 = vunpack.c.h.b16 %v258
    %v928 = vunpack.c.l.b16 %v259
    %v929 = vunpack.c.h.b16 %v259
    %v930 = vunpack.c.l.b16 %v260
    %v931 = vunpack.c.h.b16 %v260
    %v932 = vunpack.c.l.b16 %v261
    %v933 = vunpack.c.h.b16 %v261
    %v934 = vunpack.c.l.b16 %v262
    %v935 = vunpack.c.h.b16 %v262
    %v936 = vunpack.c.l.b16 %v263
    %v937 = vunpack.c.h.b16 %v263
    %v938 = vunpack.c.l.b16 %v264
    %v939 = vunpack.c.h.b16 %v264
    %v940 = vunpack.c.l.b16 %v265
    %v941 = vunpack.c.h.b16 %v265
    %v942 = vunpack.c.l.b16 %v266
    %v943 = vunpack.c.h.b16 %v266
    %v944 = vunpack.c.l.b16 %v267
    %v945 = vunpack.c.h.b16 %v267
    %v946 = vunpack.c.l.b16 %v268
    %v947 = vunpack.c.h.b16 %v268
    %v948 = vunpack.c.l.b16 %v269
    %v949 = vunpack.c.h.b16 %v269
    %v950 = vunpack.c.l.b16 %v270
    %v951 = vunpack.c.h.b16 %v270
    %v952 = vunpack.c.l.b16 %v271
    %v953 = vunpack.c.h.b16 %v271
    %v954 = vunpack.c.l.b16 %v272
    %v955 = vunpack.c.h.b16 %v272
    %v956 = vunpack.c.l.b16 %v273
    %v957 = vunpack.c.h.b16 %v273
    %v958 = vunpack.c.l.b16 %v274
    %v959 = vunpack.c.h.b16 %v274
    %v960 = vunpack.c.l.b16 %v275
    %v961 = vunpack.c.h.b16 %v275
    %v962 = vunpack.c.l.b16 %v276
    %v963 = vunpack.c.h.b16 %v276
    %v964 = vunpack.c.l.b16 %v277
    %v965 = vunpack.c.h.b16 %v277
    %v966 = vunpack.c.l.b16 %v278
    %v967 = vunpack.c.h.b16 %v278
    %v968 = vunpack.c.l.b16 %v279
    %v969 = vunpack.c.h.b16 %v279
    %v970 = vunpack.c.l.b16 %v280
    %v971 = vunpack.c.h.b16 %v280
    %v972 = vunpack.c.l.b16 %v281
    %v973 = vunpack.c.h.b16 %v281
    %v974 = vunpack.c.l.b16 %v282
    %v975 = vunpack.c.h.b16 %v282
    %v976 = vunpack.c.l.b16 %v283
    %v977 = vunpack.c.h.b16 %v283
    %v978 = vunpack.c.l.b16 %v284
    %v979 = vunpack.c.h.b16 %v284
    %v980 = vunpack.c.l.b16 %v285
    %v981 = vunpack.c.h.b16 %v285
    %v982 = vunpack.c.l.b16 %v286
    %v983 = vunpack.c.h.b16 %v286
    %v984 = vunpack.c.l.b16 %v287
    %v985 = vunpack.c.h.b16 %v287
    %v986 = vunpack.c.l.b16 %v288
    %v987 = vunpack.c.h.b16 %v288
    %v988 = vunpack.c.l.b16 %v289
    %v989 = vunpack.c.h.b16 %v289
    %v990 = vunpack.c.l.b16 %v290
    %v991 = vunpack.c.h.b16 %v290
    %v992 = vunpack.c.l.b16 %v291
    %v993 = vunpack.c.h.b16 %v291
    %v994 = vunpack.c.l.b16 %v292
    %v995 = vunpack.c.h.b16 %v292
    %v996 = vunpack.c.l.b16 %v293
    %v997 = vunpack.c.h.b16 %v293
    %v998 = vunpack.c.l.b16 %v294
    %v999 = vunpack.c.h.b16 %v294
    %v1000 = vunpack.c.l.b16 %v295
    %v1001 = vunpack.c.h.b16 %v295
    %v1002 = vunpack.c.l.b16 %v296
    %v1003 = vunpack.c.h.b16 %v296
    %v1004 = vunpack.c.l.b16 %v297
    %v1005 = vunpack.c.h.b16 %v297
    %v1006 = vunpack.c.l.b16 %v298
    %v1007 = vunpack.c.h.b16 %v298
    %v1008 = vunpack.c.l.b16 %v299
    %v1009 = vunpack.c.h.b16 %v299
    %v1010 = vunpack.c.l.b16 %v300
    %v1011 = vunpack.c.h.b16 %v300
    %v1012 = vunpack.c.l.b16 %v301
    %v1013 = vunpack.c.h.b16 %v301
    %v1014 = vunpack.c.l.b16 %v302
    %v1015 = vunpack.c.h.b16 %v302
    %v1016 = vunpack.c.l.b16 %v303
    %v1017 = vunpack.c.h.b16 %v303
    %v1018 = vunpack.c.l.b16 %v304
    %v1019 = vunpack.c.h.b16 %v304
    %v1020 = vunpack.c.l.b16 %v305
    %v1021 = vunpack.c.h.b16 %v305
    %v1022 = vunpack.c.l.b16 %v306
    %v1023 = vunpack.c.h.b16 %v306
    %v1024 = vunpack.c.l.b16 %v307
    %v1025 = vunpack.c.h.b16 %v307
    %v1026 = vunpack.c.l.b16 %v308
    %v1027 = vunpack.c.h.b16 %v308
    %v1028 = vunpack.c.l.b16 %v309
    %v1029 = vunpack.c.h.b16 %v309
    %v1030 = vunpack.c.l.b16 %v310
    %v1031 = vunpack.c.h.b16 %v310
    %v1032 = vunpack.c.l.b16 %v311
    %v1033 = vunpack.c.h.b16 %v311
    %v1034 = vunpack.c.l.b16 %v312
    %v1035 = vunpack.c.h.b16 %v312
    %v1036 = vunpack.c.l.b16 %v313
    %v1037 = vunpack.c.h.b16 %v313
    %v1038 = vunpack.c.l.b16 %v314
    %v1039 = vunpack.c.h.b16 %v314
    %v1040 = vunpack.c.l.b16 %v315
    %v1041 = vunpack.c.h.b16 %v315
    %v1042 = vunpack.c.l.b16 %v316
    %v1043 = vunpack.c.h.b16 %v316
    %v1044 = vunpack.c.l.b16 %v317
    %v1045 = vunpack.c.h.b16 %v317
    %v1046 = vunpack.c.l.b16 %v318
    %v1047 = vunpack.c.h.b16 %v318
    %v1048 = vunpack.c.l.b16 %v319
    %v1049 = vunpack.c.h.b16 %v319
    %v1050 = vunpack.c.l.b16 %v320
    %v1051 = vunpack.c.h.b16 %v320
    %v1052 = vunpack.c.l.b16 %v321
    %v1053 = vunpack.c.h.b16 %v321
    %v1054 = vunpack.c.l.b16 %v322
    %v1055 = vunpack.c.h.b16 %v322
    %v1056 = vunpack.c.l.b16 %v323
    %v1057 = vunpack.c.h.b16 %v323
    %v1058 = vunpack.c.l.b16 %v324
    %v1059 = vunpack.c.h.b16 %v324
    %v1060 = vunpack.c.l.b16 %v325
    %v1061 = vunpack.c.h.b16 %v325
    %v1062 = vunpack.c.l.b16 %v326
    %v1063 = vunpack.c.h.b16 %v326
    %v1064 = vunpack.c.l.b16 %v327
    %v1065 = vunpack.c.h.b16 %v327
    %v1066 = vunpack.c.l.b16 %v328
    %v1067 = vunpack.c.h.b16 %v328
    %v1068 = vunpack.c.l.b16 %v329
    %v1069 = vunpack.c.h.b16 %v329
    %v1070 = vunpack.c.l.b16 %v330
    %v1071 = vunpack.c.h.b16 %v330
    %v1072 = vunpack.c.l.b16 %v331
    %v1073 = vunpack.c.h.b16 %v331
    %v1074 = vunpack.c.l.b16 %v332
    %v1075 = vunpack.c.h.b16 %v332
    %v1076 = vunpack.c.l.b16 %v333
    %v1077 = vunpack.c.h.b16 %v333
    %v1078 = vunpack.c.l.b16 %v334
    %v1079 = vunpack.c.h.b16 %v334
    %v1080 = vunpack.c.l.b16 %v335
    %v1081 = vunpack.c.h.b16 %v335
    %v1082 = vunpack.c.l.b16 %v336
    %v1083 = vunpack.c.h.b16 %v336
    %v1084 = vunpack.c.l.b16 %v337
    %v1085 = vunpack.c.h.b16 %v337
    %v1086 = vunpack.c.l.b16 %v338
    %v1087 = vunpack.c.h.b16 %v338
    %v1088 = vunpack.c.l.b16 %v339
    %v1089 = vunpack.c.h.b16 %v339
    %v1090 = vunpack.c.l.b16 %v340
    %v1091 = vunpack.c.h.b16 %v340
    %v1092 = vunpack.c.l.b16 %v341
    %v1093 = vunpack.c.h.b16 %v341
    %v1094 = vunpack.c.l.b16 %v342
    %v1095 = vunpack.c.h.b16 %v342
    %v1096 = vunpack.c.l.b16 %v343
    %v1097 = vunpack.c.h.b16 %v343
    %v1098 = vunpack.c.l.b16 %v344
    %v1099 = vunpack.c.h.b16 %v344
    %v1100 = vunpack.c.l.b16 %v345
    %v1101 = vunpack.c.h.b16 %v345
    %v1102 = vunpack.c.l.b16 %v346
    %v1103 = vunpack.c.h.b16 %v346
    %v1104 = vunpack.c.l.b16 %v347
    %v1105 = vunpack.c.h.b16 %v347
    %v1106 = vunpack.c.l.b16 %v348
    %v1107 = vunpack.c.h.b16 %v348
    %v1108 = vunpack.c.l.b16 %v349
    %v1109 = vunpack.c.h.b16 %v349
    %v1110 = vunpack.c.l.b16 %v350
    %v1111 = vunpack.c.h.b16 %v350
    %v1112 = vunpack.c.l.b16 %v351
    %v1113 = vunpack.c.h.b16 %v351
    %v1114 = vunpack.c.l.b16 %v352
    %v1115 = vunpack.c.h.b16 %v352
    %v1116 = vunpack.c.l.b16 %v353
    %v1117 = vunpack.c.h.b16 %v353
    %v1118 = vunpack.c.l.b16 %v354
    %v1119 = vunpack.c.h.b16 %v354
    %v1120 = vunpack.c.l.b16 %v355
    %v1121 = vunpack.c.h.b16 %v355
    %v1122 = vunpack.c.l.b16 %v356
    %v1123 = vunpack.c.h.b16 %v356
    %v1124 = vunpack.c.l.b16 %v357
    %v1125 = vunpack.c.h.b16 %v357
    %v1126 = vunpack.c.l.b16 %v358
    %v1127 = vunpack.c.h.b16 %v358
    %v1128 = vunpack.c.l.b16 %v359
    %v1129 = vunpack.c.h.b16 %v359
    %v1130 = vunpack.c.l.b16 %v360
    %v1131 = vunpack.c.h.b16 %v360
    %v1132 = vunpack.c.l.b16 %v361
    %v1133 = vunpack.c.h.b16 %v361
    %v1134 = vunpack.c.l.b16 %v362
    %v1135 = vunpack.c.h.b16 %v362
    %v1136 = vunpack.c.l.b16 %v363
    %v1137 = vunpack.c.h.b16 %v363
    %v1138 = vunpack.c.l.b16 %v364
    %v1139 = vunpack.c.h.b16 %v364
    %v1140 = vunpack.c.l.b16 %v365
    %v1141 = vunpack.c.h.b16 %v365
    %v1142 = vunpack.c.l.b16 %v366
    %v1143 = vunpack.c.h.b16 %v366
    %v1144 = vunpack.c.l.b16 %v367
    %v1145 = vunpack.c.h.b16 %v367
    %v1146 = vunpack.c.l.b16 %v368
    %v1147 = vunpack.c.h.b16 %v368
    %v1148 = vunpack.c.l.b16 %v369
    %v1149 = vunpack.c.h.b16 %v369
    %v1150 = vunpack.c.l.b16 %v370
    %v1151 = vunpack.c.h.b16 %v370
    %v1152 = vunpack.c.l.b16 %v371
    %v1153 = vunpack.c.h.b16 %v371
    %v1154 = vunpack.c.l.b16 %v372
    %v1155 = vunpack.c.h.b16 %v372
    %v1156 = vunpack.c.l.b16 %v373
    %v1157 = vunpack.c.h.b16 %v373
    %v1158 = vunpack.c.l.b16 %v374
    %v1159 = vunpack.c.h.b16 %v374
    %v1160 = vunpack.c.l.b16 %v375
    %v1161 = vunpack.c.h.b16 %v375
    %v1162 = vunpack.c.l.b16 %v376
    %v1163 = vunpack.c.h.b16 %v376
    %v1164 = vunpack.c.l.b16 %v377
    %v1165 = vunpack.c.h.b16 %v377
    %v1166 = vunpack.c.l.b16 %v378
    %v1167 = vunpack.c.h.b16 %v378
    %v1168 = vunpack.c.l.b16 %v379
    %v1169 = vunpack.c.h.b16 %v379
    %v1170 = vunpack.c.l.b16 %v380
    %v1171 = vunpack.c.h.b16 %v380
    %v1172 = vunpack.c.l.b16 %v381
    %v1173 = vunpack.c.h.b16 %v381
    %v1174 = vunpack.c.l.b16 %v382
    %v1175 = vunpack.c.h.b16 %v382
    %v1176 = vunpack.c.l.b16 %v383
    %v1177 = vunpack.c.h.b16 %v383
    %v1178 = vunpack.c.l.b16 %v384
    %v1179 = vunpack.c.h.b16 %v384
    %v1180 = vunpack.c.l.b16 %v385
    %v1181 = vunpack.c.h.b16 %v385
    %v1182 = vunpack.c.l.b16 %v386
    %v1183 = vunpack.c.h.b16 %v386
    %v1184 = vunpack.c.l.b16 %v387
    %v1185 = vunpack.c.h.b16 %v387
    %v1186 = vunpack.c.l.b16 %v388
    %v1187 = vunpack.c.h.b16 %v388
    %v1188 = vunpack.c.l.b16 %v389
    %v1189 = vunpack.c.h.b16 %v389
    %v1190 = vunpack.c.l.b16 %v390
    %v1191 = vunpack.c.h.b16 %v390
    %v1192 = vunpack.c.l.b16 %v391
    %v1193 = vunpack.c.h.b16 %v391
    %v1194 = vunpack.c.l.b16 %v392
    %v1195 = vunpack.c.h.b16 %v392
    %v1196 = vunpack.c.l.b16 %v393
    %v1197 = vunpack.c.h.b16 %v393
    %v1198 = vunpack.c.l.b16 %v394
    %v1199 = vunpack.c.h.b16 %v394
    %v1200 = vunpack.c.l.b16 %v395
    %v1201 = vunpack.c.h.b16 %v395
    %v1202 = vunpack.c.l.b16 %v396
    %v1203 = vunpack.c.h.b16 %v396
    %v1204 = vunpack.c.l.b16 %v397
    %v1205 = vunpack.c.h.b16 %v397
    %v1206 = vunpack.c.l.b16 %v398
    %v1207 = vunpack.c.h.b16 %v398
    %v1208 = vunpack.c.l.b16 %v399
    %v1209 = vunpack.c.h.b16 %v399
    %v1210 = vunpack.c.l.b16 %v400
    %v1211 = vunpack.c.h.b16 %v400
    %v1212 = vunpack.c.l.b16 %v401
    %v1213 = vunpack.c.h.b16 %v401
    %v1214 = vunpack.c.l.b16 %v402
    %v1215 = vunpack.c.h.b16 %v402
    %v1216 = vunpack.c.l.b16 %v403
    %v1217 = vunpack.c.h.b16 %v403
    %v1218 = vunpack.c.l.b16 %v404
    %v1219 = vunpack.c.h.b16 %v404
    %v1220 = vunpack.c.l.b16 %v405
    %v1221 = vunpack.c.h.b16 %v405
    %v1222 = vunpack.c.l.b16 %v406
    %v1223 = vunpack.c.h.b16 %v406
    %v1224 = vunpack.c.l.b16 %v407
    %v1225 = vunpack.c.h.b16 %v407
    %v1226 = vunpack.c.l.b16 %v408
    %v1227 = vunpack.c.h.b16 %v408
    %v1228 = vunpack.c.l.b16 %v409
    %v1229 = vunpack.c.h.b16 %v409
    %v1230 = vunpack.c.l.b16 %v410
    %v1231 = vunpack.c.h.b16 %v410
    %v1232 = vunpack.c.l.b16 %v411
    %v1233 = vunpack.c.h.b16 %v411
    %v1234 = vunpack.c.l.b16 %v412
    %v1235 = vunpack.c.h.b16 %v412
    %v1236 = vunpack.c.l.b16 %v413
    %v1237 = vunpack.c.h.b16 %v413
    %v1238 = vunpack.c.l.b16 %v414
    %v1239 = vunpack.c.h.b16 %v414
    %v1240 = vunpack.c.l.b16 %v415
    %v1241 = vunpack.c.h.b16 %v415
    %v1242 = vunpack.c.l.b16 %v416
    %v1243 = vunpack.c.h.b16 %v416
    %v1244 = vunpack.c.l.b16 %v417
    %v1245 = vunpack.c.h.b16 %v417
    %v1246 = vunpack.c.l.b16 %v418
    %v1247 = vunpack.c.h.b16 %v418
    %v1248 = vunpack.c.l.b16 %v419
    %v1249 = vunpack.c.h.b16 %v419
    %v1250 = vunpack.c.l.b16 %v420
    %v1251 = vunpack.c.h.b16 %v420
    %v1252 = vunpack.c.l.b16 %v421
    %v1253 = vunpack.c.h.b16 %v421
    %v1254 = vunpack.c.l.b16 %v422
    %v1255 = vunpack.c.h.b16 %v422
    %v1256 = vunpack.c.l.b16 %v423
    %v1257 = vunpack.c.h.b16 %v423
    %v1258 = vunpack.c.l.b16 %v424
    %v1259 = vunpack.c.h.b16 %v424
    %v1260 = vunpack.c.l.b16 %v425
    %v1261 = vunpack.c.h.b16 %v425
    %v1262 = vunpack.c.l.b16 %v426
    %v1263 = vunpack.c.h.b16 %v426
    %v1264 = vunpack.c.l.b16 %v427
    %v1265 = vunpack.c.h.b16 %v427
    %v1266 = vunpack.c.l.b16 %v428
    %v1267 = vunpack.c.h.b16 %v428
    %v1268 = vunpack.c.l.b16 %v429
    %v1269 = vunpack.c.h.b16 %v429
    %v1270 = vunpack.c.l.b16 %v430
    %v1271 = vunpack.c.h.b16 %v430
    %v1272 = vunpack.c.l.b16 %v431
    %v1273 = vunpack.c.h.b16 %v431
    %v1274 = vunpack.c.l.b16 %v432
    %v1275 = vunpack.c.h.b16 %v432
    %v1276 = vunpack.c.l.b16 %v433
    %v1277 = vunpack.c.h.b16 %v433
    %v1278 = vunpack.c.l.b16 %v434
    %v1279 = vunpack.c.h.b16 %v434
    %v1280 = vunpack.c.l.b16 %v435
    %v1281 = vunpack.c.h.b16 %v435
    %v1282 = vunpack.c.l.b16 %v436
    %v1283 = vunpack.c.h.b16 %v436
    %v1284 = vunpack.c.l.b16 %v437
    %v1285 = vunpack.c.h.b16 %v437
    %v1286 = vunpack.c.l.b16 %v438
    %v1287 = vunpack.c.h.b16 %v438
    %v1288 = vunpack.c.l.b16 %v439
    %v1289 = vunpack.c.h.b16 %v439
    %v1290 = vunpack.c.l.b16 %v440
    %v1291 = vunpack.c.h.b16 %v440
    %v1292 = vunpack.c.l.b16 %v441
    %v1293 = vunpack.c.h.b16 %v441
    %v1294 = vunpack.c.l.b16 %v442
    %v1295 = vunpack.c.h.b16 %v442
    %v1296 = vunpack.c.l.b16 %v443
    %v1297 = vunpack.c.h.b16 %v443
    %v1298 = vunpack.c.l.b16 %v444
    %v1299 = vunpack.c.h.b16 %v444
    %v1300 = vunpack.c.l.b16 %v445
    %v1301 = vunpack.c.h.b16 %v445
    %v1302 = vunpack.c.l.b16 %v446
    %v1303 = vunpack.c.h.b16 %v446
    %v1304 = vunpack.c.l.b16 %v447
    %v1305 = vunpack.c.h.b16 %v447
    %v1306 = vunpack.c.l.b16 %v448
    %v1307 = vunpack.c.h.b16 %v448
    %v1308 = vunpack.c.l.b16 %v449
    %v1309 = vunpack.c.h.b16 %v449
    %v1310 = vunpack.c.l.b16 %v450
    %v1311 = vunpack.c.h.b16 %v450
    %v1312 = vunpack.c.l.b16 %v451
    %v1313 = vunpack.c.h.b16 %v451
    %v1314 = vunpack.c.l.b16 %v452
    %v1315 = vunpack.c.h.b16 %v452
    %v1316 = vunpack.c.l.b16 %v453
    %v1317 = vunpack.c.h.b16 %v453
    %v1318 = vunpack.c.l.b16 %v454
    %v1319 = vunpack.c.h.b16 %v454
    %v1320 = vunpack.c.l.b16 %v455
    %v1321 = vunpack.c.h.b16 %v455
    %v1322 = vunpack.c.l.b16 %v456
    %v1323 = vunpack.c.h.b16 %v456
    %v1324 = vunpack.c.l.b16 %v457
    %v1325 = vunpack.c.h.b16 %v457
    %v1326 = vunpack.c.l.b16 %v458
    %v1327 = vunpack.c.h.b16 %v458
    %v1328 = vunpack.c.l.b16 %v459
    %v1329 = vunpack.c.h.b16 %v459
    %v1330 = vunpack.c.l.b16 %v460
    %v1331 = vunpack.c.h.b16 %v460
    %v1332 = vunpack.c.l.b16 %v461
    %v1333 = vunpack.c.h.b16 %v461
    %v1334 = vunpack.c.l.b16 %v462
    %v1335 = vunpack.c.h.b16 %v462
    %v1336 = vunpack.c.l.b16 %v463
    %v1337 = vunpack.c.h.b16 %v463
    %v1338 = vunpack.c.l.b16 %v464
    %v1339 = vunpack.c.h.b16 %v464
    %v1340 = vunpack.c.l.b16 %v465
    %v1341 = vunpack.c.h.b16 %v465
    %v1342 = vunpack.c.l.b16 %v466
    %v1343 = vunpack.c.h.b16 %v466
    %v1344 = vunpack.c.l.b16 %v467
    %v1345 = vunpack.c.h.b16 %v467
    %v1346 = vunpack.c.l.b16 %v468
    %v1347 = vunpack.c.h.b16 %v468
    %v1348 = vunpack.c.l.b16 %v469
    %v1349 = vunpack.c.h.b16 %v469
    %v1350 = vunpack.c.l.b16 %v470
    %v1351 = vunpack.c.h.b16 %v470
    %v1352 = vunpack.c.l.b16 %v471
    %v1353 = vunpack.c.h.b16 %v471
    %v1354 = vunpack.c.l.b16 %v472
    %v1355 = vunpack.c.h.b16 %v472
    %v1356 = vunpack.c.l.b16 %v473
    %v1357 = vunpack.c.h.b16 %v473
    %v1358 = vunpack.c.l.b16 %v474
    %v1359 = vunpack.c.h.b16 %v474
    %v1360 = vunpack.c.l.b16 %v475
    %v1361 = vunpack.c.h.b16 %v475
    %v1362 = vunpack.c.l.b16 %v476
    %v1363 = vunpack.c.h.b16 %v476
    %v1364 = vunpack.c.l.b16 %v477
    %v1365 = vunpack.c.h.b16 %v477
    %v1366 = vunpack.c.l.b16 %v478
    %v1367 = vunpack.c.h.b16 %v478
    %v1368 = vunpack.c.l.b16 %v479
    %v1369 = vunpack.c.h.b16 %v479
    %v1370 = vunpack.c.l.b16 %v480
    %v1371 = vunpack.c.h.b16 %v480
    %v1372 = vunpack.c.l.b16 %v481
    %v1373 = vunpack.c.h.b16 %v481
    %v1374 = vunpack.c.l.b16 %v482
    %v1375 = vunpack.c.h.b16 %v482
    %v1376 = vunpack.c.l.b16 %v483
    %v1377 = vunpack.c.h.b16 %v483
    %v1378 = vunpack.c.l.b16 %v484
    %v1379 = vunpack.c.h.b16 %v484
    %v1380 = vunpack.c.l.b16 %v485
    %v1381 = vunpack.c.h.b16 %v485
    %v1382 = vunpack.c.l.b16 %v486
    %v1383 = vunpack.c.h.b16 %v486
    %v1384 = vunpack.c.l.b16 %v487
    %v1385 = vunpack.c.h.b16 %v487
    %v1386 = vunpack.c.l.b16 %v488
    %v1387 = vunpack.c.h.b16 %v488
    %v1388 = vunpack.c.l.b16 %v489
    %v1389 = vunpack.c.h.b16 %v489
    %v1390 = vunpack.c.l.b16 %v490
    %v1391 = vunpack.c.h.b16 %v490
    %v1392 = vunpack.c.l.b16 %v491
    %v1393 = vunpack.c.h.b16 %v491
    %v1394 = vunpack.c.l.b16 %v492
    %v1395 = vunpack.c.h.b16 %v492
    %v1396 = vunpack.c.l.b16 %v493
    %v1397 = vunpack.c.h.b16 %v493
    %v1398 = vunpack.c.l.b16 %v494
    %v1399 = vunpack.c.h.b16 %v494
    %v1400 = vunpack.c.l.b16 %v495
    %v1401 = vunpack.c.h.b16 %v495
    %v1402 = vunpack.c.l.b16 %v496
    %v1403 = vunpack.c.h.b16 %v496
    %v1404 = vunpack.c.l.b16 %v497
    %v1405 = vunpack.c.h.b16 %v497
    %v1406 = vunpack.c.l.b16 %v498
    %v1407 = vunpack.c.h.b16 %v498
    %v1408 = vunpack.c.l.b16 %v499
    %v1409 = vunpack.c.h.b16 %v499
    %v1410 = vunpack.c.l.b16 %v500
    %v1411 = vunpack.c.h.b16 %v500
    %v1412 = vunpack.c.l.b16 %v501
    %v1413 = vunpack.c.h.b16 %v501
    %v1414 = vunpack.c.l.b16 %v502
    %v1415 = vunpack.c.h.b16 %v502
    %v1416 = vunpack.c.l.b16 %v503
    %v1417 = vunpack.c.h.b16 %v503
    %v1418 = vunpack.c.l.b16 %v504
    %v1419 = vunpack.c.h.b16 %v504
    %v1420 = vunpack.c.l.b16 %v505
    %v1421 = vunpack.c.h.b16 %v505
    %v1422 = vunpack.c.l.b16 %v506
    %v1423 = vunpack.c.h.b16 %v506
    %v1424 = vunpack.c.l.b16 %v507
    %v1425 = vunpack.c.h.b16 %v507
    %v1426 = vunpack.c.l.b16 %v508
    %v1427 = vunpack.c.h.b16 %v508
    %v1428 = vunpack.c.l.b16 %v509
    %v1429 = vunpack.c.h.b16 %v509
    %v1430 = vunpack.c.l.b16 %v510
    %v1431 = vunpack.c.h.b16 %v510
    %v1432 = vunpack.c.l.b16 %v511
    %v1433 = vunpack.c.h.b16 %v511
    %v1434 = vunpack.c.l.b16 %v512
    %v1435 = vunpack.c.h.b16 %v512
    %v1436 = vunpack.c.l.b16 %v513
    %v1437 = vunpack.c.h.b16 %v513
    %v1438 = vunpack.c.l.b16 %v514
    %v1439 = vunpack.c.h.b16 %v514
    %v1440 = vunpack.c.l.b16 %v515
    %v1441 = vunpack.c.h.b16 %v515
    %v1442 = vunpack.c.l.b16 %v516
    %v1443 = vunpack.c.h.b16 %v516
    %v1444 = vunpack.c.l.b16 %v517
    %v1445 = vunpack.c.h.b16 %v517
    %v1446 = vpack.c.b16 %v882, %v870
    %v1447 = vpack.c.b16 %v883, %v871
    %v1448 = vpack.c.b16 %v884, %v872
    %v1449 = vpack.c.b16 %v885, %v873
    %v1450 = vpack.c.b16 %v886, %v874
    %v1451 = vpack.c.b16 %v887, %v875
    %v1452 = vpack.c.b16 %v888, %v876
    %v1453 = vpack.c.b16 %v889, %v877
    %v1454 = vpack.c.b16 %v890, %v878
    %v1455 = vpack.c.b16 %v891, %v879
    %v1456 = vpack.c.b16 %v892, %v880
    %v1457 = vpack.c.b16 %v893, %v881
    %v1458 = vpack.c.b16 %v906, %v894
    %v1459 = vpack.c.b16 %v907, %v895
    %v1460 = vpack.c.b16 %v908, %v896
    %v1461 = vpack.c.b16 %v909, %v897
    %v1462 = vpack.c.b16 %v910, %v898
    %v1463 = vpack.c.b16 %v911, %v899
    %v1464 = vpack.c.b16 %v912, %v900
    %v1465 = vpack.c.b16 %v913, %v901
    %v1466 = vpack.c.b16 %v914, %v902
    %v1467 = vpack.c.b16 %v915, %v903
    %v1468 = vpack.c.b16 %v916, %v904
    %v1469 = vpack.c.b16 %v917, %v905
    %v1470 = vpack.c.b16 %v930, %v918
    %v1471 = vpack.c.b16 %v931, %v919
    %v1472 = vpack.c.b16 %v932, %v920
    %v1473 = vpack.c.b16 %v933, %v921
    %v1474 = vpack.c.b16 %v934, %v922
    %v1475 = vpack.c.b16 %v935, %v923
    %v1476 = vpack.c.b16 %v936, %v924
    %v1477 = vpack.c.b16 %v937, %v925
    %v1478 = vpack.c.b16 %v938, %v926
    %v1479 = vpack.c.b16 %v939, %v927
    %v1480 = vpack.c.b16 %v940, %v928
    %v1481 = vpack.c.b16 %v941, %v929
    %v1482 = vpack.c.b16 %v954, %v942
    %v1483 = vpack.c.b16 %v955, %v943
    %v1484 = vpack.c.b16 %v956, %v944
    %v1485 = vpack.c.b16 %v957, %v945
    %v1486 = vpack.c.b16 %v958, %v946
    %v1487 = vpack.c.b16 %v959, %v947
    %v1488 = vpack.c.b16 %v960, %v948
    %v1489 = vpack.c.b16 %v961, %v949
    %v1490 = vpack.c.b16 %v962, %v950
    %v1491 = vpack.c.b16 %v963, %v951
    %v1492 = vpack.c.b16 %v964, %v952
    %v1493 = vpack.c.b16 %v965, %v953
    %v1494 = vpack.c.b16 %v978, %v966
    %v1495 = vpack.c.b16 %v979, %v967
    %v1496 = vpack.c.b16 %v980, %v968
    %v1497 = vpack.c.b16 %v981, %v969
    %v1498 = vpack.c.b16 %v982, %v970
    %v1499 = vpack.c.b16 %v983, %v971
    %v1500 = vpack.c.b16 %v984, %v972
    %v1501 = vpack.c.b16 %v985, %v973
    %v1502 = vpack.c.b16 %v986, %v974
    %v1503 = vpack.c.b16 %v987, %v975
    %v1504 = vpack.c.b16 %v988, %v976
    %v1505 = vpack.c.b16 %v989, %v977
    %v1506 = vpack.c.b16 %v1002, %v990
    %v1507 = vpack.c.b16 %v1003, %v991
    %v1508 = vpack.c.b16 %v1004, %v992
    %v1509 = vpack.c.b16 %v1005, %v993
    %v1510 = vpack.c.b16 %v1006, %v994
    %v1511 = vpack.c.b16 %v1007, %v995
    %v1512 = vpack.c.b16 %v1008, %v996
    %v1513 = vpack.c.b16 %v1009, %v997
    %v1514 = vpack.c.b16 %v1010, %v998
    %v1515 = vpack.c.b16 %v1011, %v999
    %v1516 = vpack.c.b16 %v1012, %v1000
    %v1517 = vpack.c.b16 %v1013, %v1001
    %v1518 = vpack.c.b16 %v1026, %v1014
    %v1519 = vpack.c.b16 %v1027, %v1015
    %v1520 = vpack.c.b16 %v1028, %v1016
    %v1521 = vpack.c.b16 %v1029, %v1017
    %v1522 = vpack.c.b16 %v1030, %v1018
    %v1523 = vpack.c.b16 %v1031, %v1019
    %v1524 = vpack.c.b16 %v1032, %v1020
    %v1525 = vpack.c.b16 %v1033, %v1021
    %v1526 = vpack.c.b16 %v1034, %v1022
    %v1527 = vpack.c.b16 %v1035, %v1023
    %v1528 = vpack.c.b16 %v1036, %v1024
    %v1529 = vpack.c.b16 %v1037, %v1025
    %v1530 = vpack.c.b16 %v1050, %v1038
    %v1531 = vpack.c.b16 %v1051, %v1039
    %v1532 = vpack.c.b16 %v1052, %v1040
    %v1533 = vpack.c.b16 %v1053, %v1041
    %v1534 = vpack.c.b16 %v1054, %v1042
    %v1535 = vpack.c.b16 %v1055, %v1043
    %v1536 = vpack.c.b16 %v1056, %v1044
    %v1537 = vpack.c.b16 %v1057, %v1045
    %v1538 = vpack.c.b16 %v1058, %v1046
    %v1539 = vpack.c.b16 %v1059, %v1047
    %v1540 = vpack.c.b16 %v1060, %v1048
    %v1541 = vpack.c.b16 %v1061, %v1049
    %v1542 = vpack.c.b16 %v1074, %v1062
    %v1543 = vpack.c.b16 %v1075, %v1063
    %v1544 = vpack.c.b16 %v1076, %v1064
    %v1545 = vpack.c.b16 %v1077, %v1065
    %v1546 = vpack.c.b16 %v1078, %v1066
    %v1547 = vpack.c.b16 %v1079, %v1067
    %v1548 = vpack.c.b16 %v1080, %v1068
    %v1549 = vpack.c.b16 %v1081, %v1069
    %v1550 = vpack.c.b16 %v1082, %v1070
    %v1551 = vpack.c.b16 %v1083, %v1071
    %v1552 = vpack.c.b16 %v1084, %v1072
    %v1553 = vpack.c.b16 %v1085, %v1073
    %v1554 = vpack.c.b16 %v1098, %v1086
    %v1555 = vpack.c.b16 %v1099, %v1087
    %v1556 = vpack.c.b16 %v1100, %v1088
    %v1557 = vpack.c.b16 %v1101, %v1089
    %v1558 = vpack.c.b16 %v1102, %v1090
    %v1559 = vpack.c.b16 %v1103, %v1091
    %v1560 = vpack.c.b16 %v1104, %v1092
    %v1561 = vpack.c.b16 %v1105, %v1093
    %v1562 = vpack.c.b16 %v1106, %v1094
    %v1563 = vpack.c.b16 %v1107, %v1095
    %v1564 = vpack.c.b16 %v1108, %v1096
    %v1565 = vpack.c.b16 %v1109, %v1097
    %v1566 = vpack.c.b16 %v1122, %v1110
    %v1567 = vpack.c.b16 %v1123, %v1111
    %v1568 = vpack.c.b16 %v1124, %v1112
    %v1569 = vpack.c.b16 %v1125, %v1113
    %v1570 = vpack.c.b16 %v1126, %v1114
    %v1571 = vpack.c.b16 %v1127, %v1115
    %v1572 = vpack.c.b16 %v1128, %v1116
    %v1573 = vpack.c.b16 %v1129, %v1117
    %v1574 = vpack.c.b16 %v1130, %v1118
    %v1575 = vpack.c.b16 %v1131, %v1119
    %v1576 = vpack.c.b16 %v1132, %v1120
    %v1577 = vpack.c.b16 %v1133, %v1121
    %v1578 = vpack.c.b16 %v1146, %v1134
    %v1579 = vpack.c.b16 %v1147, %v1135
    %v1580 = vpack.c.b16 %v1148, %v1136
    %v1581 = vpack.c.b16 %v1149, %v1137
    %v1582 = vpack.c.b16 %v1150, %v1138
    %v1583 = vpack.c.b16 %v1151, %v1139
    %v1584 = vpack.c.b16 %v1152, %v1140
    %v1585 = vpack.c.b16 %v1153, %v1141
    %v1586 = vpack.c.b16 %v1154, %v1142
    %v1587 = vpack.c.b16 %v1155, %v1143
    %v1588 = vpack.c.b16 %v1156, %v1144
    %v1589 = vpack.c.b16 %v1157, %v1145
    %v1590 = vpack.c.b16 %v1170, %v1158
    %v1591 = vpack.c.b16 %v1171, %v1159
    %v1592 = vpack.c.b16 %v1172, %v1160
    %v1593 = vpack.c.b16 %v1173, %v1161
    %v1594 = vpack.c.b16 %v1174, %v1162
    %v1595 = vpack.c.b16 %v1175, %v1163
    %v1596 = vpack.c.b16 %v1176, %v1164
    %v1597 = vpack.c.b16 %v1177, %v1165
    %v1598 = vpack.c.b16 %v1178, %v1166
    %v1599 = vpack.c.b16 %v1179, %v1167
    %v1600 = vpack.c.b16 %v1180, %v1168
    %v1601 = vpack.c.b16 %v1181, %v1169
    %v1602 = vpack.c.b16 %v1194, %v1182
    %v1603 = vpack.c.b16 %v1195, %v1183
    %v1604 = vpack.c.b16 %v1196, %v1184
    %v1605 = vpack.c.b16 %v1197, %v1185
    %v1606 = vpack.c.b16 %v1198, %v1186
    %v1607 = vpack.c.b16 %v1199, %v1187
    %v1608 = vpack.c.b16 %v1200, %v1188
    %v1609 = vpack.c.b16 %v1201, %v1189
    %v1610 = vpack.c.b16 %v1202, %v1190
    %v1611 = vpack.c.b16 %v1203, %v1191
    %v1612 = vpack.c.b16 %v1204, %v1192
    %v1613 = vpack.c.b16 %v1205, %v1193
    %v1614 = vpack.c.b16 %v1218, %v1206
    %v1615 = vpack.c.b16 %v1219, %v1207
    %v1616 = vpack.c.b16 %v1220, %v1208
    %v1617 = vpack.c.b16 %v1221, %v1209
    %v1618 = vpack.c.b16 %v1222, %v1210
    %v1619 = vpack.c.b16 %v1223, %v1211
    %v1620 = vpack.c.b16 %v1224, %v1212
    %v1621 = vpack.c.b16 %v1225, %v1213
    %v1622 = vpack.c.b16 %v1226, %v1214
    %v1623 = vpack.c.b16 %v1227, %v1215
    %v1624 = vpack.c.b16 %v1228, %v1216
    %v1625 = vpack.c.b16 %v1229, %v1217
    %v1626 = vpack.c.b16 %v1242, %v1230
    %v1627 = vpack.c.b16 %v1243, %v1231
    %v1628 = vpack.c.b16 %v1244, %v1232
    %v1629 = vpack.c.b16 %v1245, %v1233
    %v1630 = vpack.c.b16 %v1246, %v1234
    %v1631 = vpack.c.b16 %v1247, %v1235
    %v1632 = vpack.c.b16 %v1248, %v1236
    %v1633 = vpack.c.b16 %v1249, %v1237
    %v1634 = vpack.c.b16 %v1250, %v1238
    %v1635 = vpack.c.b16 %v1251, %v1239
    %v1636 = vpack.c.b16 %v1252, %v1240
    %v1637 = vpack.c.b16 %v1253, %v1241
    %v1638 = vpack.c.b16 %v1266, %v1254
    %v1639 = vpack.c.b16 %v1267, %v1255
    %v1640 = vpack.c.b16 %v1268, %v1256
    %v1641 = vpack.c.b16 %v1269, %v1257
    %v1642 = vpack.c.b16 %v1270, %v1258
    %v1643 = vpack.c.b16 %v1271, %v1259
    %v1644 = vpack.c.b16 %v1272, %v1260
    %v1645 = vpack.c.b16 %v1273, %v1261
    %v1646 = vpack.c.b16 %v1274, %v1262
    %v1647 = vpack.c.b16 %v1275, %v1263
    %v1648 = vpack.c.b16 %v1276, %v1264
    %v1649 = vpack.c.b16 %v1277, %v1265
    %v1650 = vpack.c.b16 %v1290, %v1278
    %v1651 = vpack.c.b16 %v1291, %v1279
    %v1652 = vpack.c.b16 %v1292, %v1280
    %v1653 = vpack.c.b16 %v1293, %v1281
    %v1654 = vpack.c.b16 %v1294, %v1282
    %v1655 = vpack.c.b16 %v1295, %v1283
    %v1656 = vpack.c.b16 %v1296, %v1284
    %v1657 = vpack.c.b16 %v1297, %v1285
    %v1658 = vpack.c.b16 %v1298, %v1286
    %v1659 = vpack.c.b16 %v1299, %v1287
    %v1660 = vpack.c.b16 %v1300, %v1288
    %v1661 = vpack.c.b16 %v1301, %v1289
    %v1662 = vpack.c.b16 %v1314, %v1302
    %v1663 = vpack.c.b16 %v1315, %v1303
    %v1664 = vpack.c.b16 %v1316, %v1304
    %v1665 = vpack.c.b16 %v1317, %v1305
    %v1666 = vpack.c.b16 %v1318, %v1306
    %v1667 = vpack.c.b16 %v1319, %v1307
    %v1668 = vpack.c.b16 %v1320, %v1308
    %v1669 = vpack.c.b16 %v1321, %v1309
    %v1670 = vpack.c.b16 %v1322, %v1310
    %v1671 = vpack.c.b16 %v1323, %v1311
    %v1672 = vpack.c.b16 %v1324, %v1312
    %v1673 = vpack.c.b16 %v1325, %v1313
    %v1674 = vpack.c.b16 %v1338, %v1326
    %v1675 = vpack.c.b16 %v1339, %v1327
    %v1676 = vpack.c.b16 %v1340, %v1328
    %v1677 = vpack.c.b16 %v1341, %v1329
    %v1678 = vpack.c.b16 %v1342, %v1330
    %v1679 = vpack.c.b16 %v1343, %v1331
    %v1680 = vpack.c.b16 %v1344, %v1332
    %v1681 = vpack.c.b16 %v1345, %v1333
    %v1682 = vpack.c.b16 %v1346, %v1334
    %v1683 = vpack.c.b16 %v1347, %v1335
    %v1684 = vpack.c.b16 %v1348, %v1336
    %v1685 = vpack.c.b16 %v1349, %v1337
    %v1686 = vpack.c.b16 %v1362, %v1350
    %v1687 = vpack.c.b16 %v1363, %v1351
    %v1688 = vpack.c.b16 %v1364, %v1352
    %v1689 = vpack.c.b16 %v1365, %v1353
    %v1690 = vpack.c.b16 %v1366, %v1354
    %v1691 = vpack.c.b16 %v1367, %v1355
    %v1692 = vpack.c.b16 %v1368, %v1356
    %v1693 = vpack.c.b16 %v1369, %v1357
    %v1694 = vpack.c.b16 %v1370, %v1358
    %v1695 = vpack.c.b16 %v1371, %v1359
    %v1696 = vpack.c.b16 %v1372, %v1360
    %v1697 = vpack.c.b16 %v1373, %v1361
    %v1698 = vpack.c.b16 %v1386, %v1374
    %v1699 = vpack.c.b16 %v1387, %v1375
    %v1700 = vpack.c.b16 %v1388, %v1376
    %v1701 = vpack.c.b16 %v1389, %v1377
    %v1702 = vpack.c.b16 %v1390, %v1378
    %v1703 = vpack.c.b16 %v1391, %v1379
    %v1704 = vpack.c.b16 %v1392, %v1380
    %v1705 = vpack.c.b16 %v1393, %v1381
    %v1706 = vpack.c.b16 %v1394, %v1382
    %v1707 = vpack.c.b16 %v1395, %v1383
    %v1708 = vpack.c.b16 %v1396, %v1384
    %v1709 = vpack.c.b16 %v1397, %v1385
    %v1710 = vpack.c.b16 %v1410, %v1398
    %v1711 = vpack.c.b16 %v1411, %v1399
    %v1712 = vpack.c.b16 %v1412, %v1400
    %v1713 = vpack.c.b16 %v1413, %v1401
    %v1714 = vpack.c.b16 %v1414, %v1402
    %v1715 = vpack.c.b16 %v1415, %v1403
    %v1716 = vpack.c.b16 %v1416, %v1404
    %v1717 = vpack.c.b16 %v1417, %v1405
    %v1718 = vpack.c.b16 %v1418, %v1406
    %v1719 = vpack.c.b16 %v1419, %v1407
    %v1720 = vpack.c.b16 %v1420, %v1408
    %v1721 = vpack.c.b16 %v1421, %v1409
    %v1722 = vpack.c.b16 %v1434, %v1422
    %v1723 = vpack.c.b16 %v1435, %v1423
    %v1724 = vpack.c.b16 %v1436, %v1424
    %v1725 = vpack.c.b16 %v1437, %v1425
    %v1726 = vpack.c.b16 %v1438, %v1426
    %v1727 = vpack.c.b16 %v1439, %v1427
    %v1728 = vpack.c.b16 %v1440, %v1428
    %v1729 = vpack.c.b16 %v1441, %v1429
    %v1730 = vpack.c.b16 %v1442, %v1430
    %v1731 = vpack.c.b16 %v1443, %v1431
    %v1732 = vpack.c.b16 %v1444, %v1432
    %v1733 = vpack.c.b16 %v1445, %v1433
    %2022 = vmatprep.subr.bf16.mxu0 %v1447
    %2023 = vmatpush1.bf16.msra.mxu0 %v1446
    %2024 = vmatprep.subr.bf16.mxu0 %v1459
    %2025 = vmatpush1.bf16.msra.mxu0 %v1458
    %2026 = vmatprep.subr.bf16.mxu0 %v1471
    %2027 = vmatpush1.bf16.msra.mxu0 %v1470
    %2028 = vmatprep.subr.bf16.mxu0 %v1483
    %2029 = vmatpush1.bf16.msra.mxu0 %v1482
    %2030 = vmatprep.subr.bf16.mxu0 %v1495
    %2031 = vmatpush1.bf16.msra.mxu0 %v1494
    %2032 = vmatprep.subr.bf16.mxu0 %v1507
    %2033 = vmatpush1.bf16.msra.mxu0 %v1506
    %2034 = vmatprep.subr.bf16.mxu0 %v1519
    %2035 = vmatpush1.bf16.msra.mxu0 %v1518
    %2036 = vmatprep.subr.bf16.mxu0 %v1531
    %2037 = vmatpush1.bf16.msra.mxu0 %v1530
    %2038 = vmatprep.subr.bf16.mxu0 %v1543
    %2039 = vmatpush1.bf16.msra.mxu0 %v1542
    %2040 = vmatprep.subr.bf16.mxu0 %v1555
    %2041 = vmatpush1.bf16.msra.mxu0 %v1554
    %2042 = vmatprep.subr.bf16.mxu0 %v1567
    %2043 = vmatpush1.bf16.msra.mxu0 %v1566
    %2044 = vmatprep.subr.bf16.mxu0 %v1579
    %2045 = vmatpush1.bf16.msra.mxu0 %v1578
    %2046 = vmatprep.subr.bf16.mxu0 %v1591
    %2047 = vmatpush1.bf16.msra.mxu0 %v1590
    %2048 = vmatprep.subr.bf16.mxu0 %v1603
    %2049 = vmatpush1.bf16.msra.mxu0 %v1602
    %2050 = vmatprep.subr.bf16.mxu0 %v1615
    %2051 = vmatpush1.bf16.msra.mxu0 %v1614
    %2052 = vmatprep.subr.bf16.mxu0 %v1627
    %2053 = vmatpush1.bf16.msra.mxu0 %v1626
    %2054 = vmatprep.mubr.bf16.mxu0 %v183
    %2055 = vmatmul.mubr.bf16.gmra.mrb[0].mxu0 %v182
    %v2056 = vpop.f32.mrb[0].mxu0
    %v2057 = vadd.f32 %v525, %v2056
    %v2058 = vpop.f32.mrb[0].mxu0
    %v2059 = vadd.f32 %v529, %v2058
    %v2060 = vpop.f32.mrb[0].mxu0
    %v2061 = vadd.f32 %v525, %v2060
    %v2062 = vpop.f32.mrb[0].mxu0
    %v2063 = vadd.f32 %v529, %v2062
    %2064 = vmatprep.mubr.bf16.mxu0 %v186
    %2065 = vmatmul.mubr.bf16.gmra.mrb[0].mxu0 %v185
    %v2066 = vpop.f32.mrb[0].mxu0
    %v2067 = vadd.f32 %v525, %v2066
    %v2068 = vpop.f32.mrb[0].mxu0
    %v2069 = vadd.f32 %v529, %v2068
    %v2070 = vpop.f32.mrb[0].mxu0
    %v2071 = vadd.f32 %v525, %v2070
    %v2072 = vpop.f32.mrb[0].mxu0
    %v2073 = vadd.f32 %v529, %v2072
    %2074 = vmatprep.mubr.bf16.mxu0 %v189
    %2075 = vmatmul.mubr.bf16.gmra.mrb[0].mxu0 %v188
    %v2076 = vpop.f32.mrb[0].mxu0
    %v2077 = vadd.f32 %v525, %v2076
    %v2078 = vpop.f32.mrb[0].mxu0
    %v2079 = vadd.f32 %v529, %v2078
    %v2080 = vpop.f32.mrb[0].mxu0
    %v2081 = vadd.f32 %v525, %v2080
    %v2082 = vpop.f32.mrb[0].mxu0
    %v2083 = vadd.f32 %v529, %v2082
    %2084 = vmatprep.mubr.bf16.mxu0 %v192
    %2085 = vmatmul.mubr.bf16.gmra.mrb[0].mxu0 %v191
    %v2086 = vpop.f32.mrb[0].mxu0
    %v2087 = vadd.f32 %v525, %v2086
    %v2088 = vpop.f32.mrb[0].mxu0
    %v2089 = vadd.f32 %v529, %v2088
    %v2090 = vpop.f32.mrb[0].mxu0
    %v2091 = vadd.f32 %v525, %v2090
    %v2092 = vpop.f32.mrb[0].mxu0
    %v2093 = vadd.f32 %v529, %v2092
    %2094 = vmatprep.mubr.bf16.mxu0 %v195
    %2095 = vmatmul.mubr.bf16.gmra.mrb[0].mxu0 %v194
    %v2096 = vpop.f32.mrb[0].mxu0
    %v2097 = vadd.f32 %v525, %v2096
    %v2098 = vpop.f32.mrb[0].mxu0
    %v2099 = vadd.f32 %v529, %v2098
    %v2100 = vpop.f32.mrb[0].mxu0
    %v2101 = vadd.f32 %v525, %v2100
    %v2102 = vpop.f32.mrb[0].mxu0
    %v2103 = vadd.f32 %v529, %v2102
    %2104 = vmatprep.mubr.bf16.mxu0 %v198
    %2105 = vmatmul.mubr.bf16.gmra.mrb[0].mxu0 %v197
    %v2106 = vpop.f32.mrb[0].mxu0
    %v2107 = vadd.f32 %v525, %v2106
    %v2108 = vpop.f32.mrb[0].mxu0
    %v2109 = vadd.f32 %v529, %v2108
    %v2110 = vpop.f32.mrb[0].mxu0
    %v2111 = vadd.f32 %v525, %v2110
    %v2112 = vpop.f32.mrb[0].mxu0
    %v2113 = vadd.f32 %v529, %v2112
    %2114 = vmatprep.mubr.bf16.mxu0 %v201
    %2115 = vmatmul.mubr.bf16.gmra.mrb[0].mxu0 %v200
    %v2116 = vpop.f32.mrb[0].mxu0
    %v2117 = vadd.f32 %v525, %v2116
    %v2118 = vpop.f32.mrb[0].mxu0
    %v2119 = vadd.f32 %v529, %v2118
    %v2120 = vpop.f32.mrb[0].mxu0
    %v2121 = vadd.f32 %v525, %v2120
    %v2122 = vpop.f32.mrb[0].mxu0
    %v2123 = vadd.f32 %v529, %v2122
    %2124 = vmatprep.mubr.bf16.mxu0 %v204
    %2125 = vmatmul.mubr.bf16.gmra.mrb[0].mxu0 %v203
    %v2126 = vpop.f32.mrb[0].mxu0
    %v2127 = vadd.f32 %v525, %v2126
    %v2128 = vpop.f32.mrb[0].mxu0
    %v2129 = vadd.f32 %v529, %v2128
    %v2130 = vpop.f32.mrb[0].mxu0
    %v2131 = vadd.f32 %v525, %v2130
    %v2132 = vpop.f32.mrb[0].mxu0
    %v2133 = vadd.f32 %v529, %v2132
    %2134 = vmatprep.mubr.bf16.mxu0 %v207
    %2135 = vmatmul.mubr.bf16.gmra.mrb[0].mxu0 %v206
    %v2136 = vpop.f32.mrb[0].mxu0
    %v2137 = vadd.f32 %v525, %v2136
    %v2138 = vpop.f32.mrb[0].mxu0
    %v2139 = vadd.f32 %v529, %v2138
    %v2140 = vpop.f32.mrb[0].mxu0
    %v2141 = vadd.f32 %v525, %v2140
    %v2142 = vpop.f32.mrb[0].mxu0
    %v2143 = vadd.f32 %v529, %v2142
    %2144 = vmatprep.mubr.bf16.mxu0 %v210
    %2145 = vmatmul.mubr.bf16.gmra.mrb[0].mxu0 %v209
    %v2146 = vpop.f32.mrb[0].mxu0
    %v2147 = vadd.f32 %v525, %v2146
    %v2148 = vpop.f32.mrb[0].mxu0
    %v2149 = vadd.f32 %v529, %v2148
    %v2150 = vpop.f32.mrb[0].mxu0
    %v2151 = vadd.f32 %v525, %v2150
    %v2152 = vpop.f32.mrb[0].mxu0
    %v2153 = vadd.f32 %v529, %v2152
    %2154 = vmatprep.mubr.bf16.mxu0 %v213
    %2155 = vmatmul.mubr.bf16.gmra.mrb[0].mxu0 %v212
    %v2156 = vpop.f32.mrb[0].mxu0
    %v2157 = vadd.f32 %v525, %v2156
    %v2158 = vpop.f32.mrb[0].mxu0
    %v2159 = vadd.f32 %v529, %v2158
    %v2160 = vpop.f32.mrb[0].mxu0
    %v2161 = vadd.f32 %v525, %v2160
    %v2162 = vpop.f32.mrb[0].mxu0
    %v2163 = vadd.f32 %v529, %v2162
    %2164 = vmatprep.mubr.bf16.mxu0 %v216
    %2165 = vmatmul.mubr.bf16.gmra.mrb[0].mxu0 %v215
    %v2166 = vpop.f32.mrb[0].mxu0
    %v2167 = vadd.f32 %v525, %v2166
    %v2168 = vpop.f32.mrb[0].mxu0
    %v2169 = vadd.f32 %v529, %v2168
    %v2170 = vpop.f32.mrb[0].mxu0
    %v2171 = vadd.f32 %v525, %v2170
    %v2172 = vpop.f32.mrb[0].mxu0
    %v2173 = vadd.f32 %v529, %v2172
    %2174 = vmatprep.mubr.bf16.mxu0 %v219
    %2175 = vmatmul.mubr.bf16.gmra.mrb[0].mxu0 %v218
    %v2176 = vpop.f32.mrb[0].mxu0
    %v2177 = vadd.f32 %v525, %v2176
    %v2178 = vpop.f32.mrb[0].mxu0
    %v2179 = vadd.f32 %v529, %v2178
    %v2180 = vpop.f32.mrb[0].mxu0
    %v2181 = vadd.f32 %v525, %v2180
    %v2182 = vpop.f32.mrb[0].mxu0
    %v2183 = vadd.f32 %v529, %v2182
    %2184 = vmatprep.mubr.bf16.mxu0 %v222
    %2185 = vmatmul.mubr.bf16.gmra.mrb[0].mxu0 %v221
    %v2186 = vpop.f32.mrb[0].mxu0
    %v2187 = vadd.f32 %v525, %v2186
    %v2188 = vpop.f32.mrb[0].mxu0
    %v2189 = vadd.f32 %v529, %v2188
    %v2190 = vpop.f32.mrb[0].mxu0
    %v2191 = vadd.f32 %v525, %v2190
    %v2192 = vpop.f32.mrb[0].mxu0
    %v2193 = vadd.f32 %v529, %v2192
    %2194 = vmatprep.mubr.bf16.mxu0 %v225
    %2195 = vmatmul.mubr.bf16.gmra.mrb[0].mxu0 %v224
    %v2196 = vpop.f32.mrb[0].mxu0
    %v2197 = vadd.f32 %v525, %v2196
    %v2198 = vpop.f32.mrb[0].mxu0
    %v2199 = vadd.f32 %v529, %v2198
    %v2200 = vpop.f32.mrb[0].mxu0
    %v2201 = vadd.f32 %v525, %v2200
    %v2202 = vpop.f32.mrb[0].mxu0
    %v2203 = vadd.f32 %v529, %v2202
    %2204 = vmatprep.mubr.bf16.mxu0 %v228
    %2205 = vmatmul.mubr.bf16.gmra.mrb[0].mxu0 %v227
    %v2206 = vpop.f32.mrb[0].mxu0
    %v2207 = vadd.f32 %v525, %v2206
    %v2208 = vpop.f32.mrb[0].mxu0
    %v2209 = vadd.f32 %v529, %v2208
    %v2210 = vpop.f32.mrb[0].mxu0
    %v2211 = vadd.f32 %v525, %v2210
    %v2212 = vpop.f32.mrb[0].mxu0
    %v2213 = vadd.f32 %v529, %v2212
    %2214 = vdwg.mxu0
    %2215 = vmatprep.subr.bf16.mxu0 %v1639
    %2216 = vmatpush1.bf16.msra.mxu0 %v1638
    %2217 = vmatprep.subr.bf16.mxu0 %v1651
    %2218 = vmatpush1.bf16.msra.mxu0 %v1650
    %2219 = vmatprep.subr.bf16.mxu0 %v1663
    %2220 = vmatpush1.bf16.msra.mxu0 %v1662
    %2221 = vmatprep.subr.bf16.mxu0 %v1675
    %2222 = vmatpush1.bf16.msra.mxu0 %v1674
    %2223 = vmatprep.subr.bf16.mxu0 %v1687
    %2224 = vmatpush1.bf16.msra.mxu0 %v1686
    %2225 = vmatprep.subr.bf16.mxu0 %v1699
    %2226 = vmatpush1.bf16.msra.mxu0 %v1698
    %2227 = vmatprep.subr.bf16.mxu0 %v1711
    %2228 = vmatpush1.bf16.msra.mxu0 %v1710
    %2229 = vmatprep.subr.bf16.mxu0 %v1723
    %2230 = vmatpush1.bf16.msra.mxu0 %v1722
    %2231 = vmatprep.subr.bf16.mxu0 0
    %2232 = vmatpush1.bf16.msra.mxu0 0
    %2233 = vmatprep.subr.bf16.mxu0 0
    %2234 = vmatpush1.bf16.msra.mxu0 0
    %2235 = vmatprep.subr.bf16.mxu0 0
    %2236 = vmatpush1.bf16.msra.mxu0 0
    %2237 = vmatprep.subr.bf16.mxu0 0
    %2238 = vmatpush1.bf16.msra.mxu0 0
    %2239 = vmatprep.subr.bf16.mxu0 0
    %2240 = vmatpush1.bf16.msra.mxu0 0
    %2241 = vmatprep.subr.bf16.mxu0 0
    %2242 = vmatpush1.bf16.msra.mxu0 0
    %2243 = vmatprep.subr.bf16.mxu0 0
    %2244 = vmatpush1.bf16.msra.mxu0 0
    %2245 = vmatprep.subr.bf16.mxu0 0
    %2246 = vmatpush1.bf16.msra.mxu0 0
    %2247 = vmatprep.mubr.bf16.mxu0 0
    %2248 = vmatmul.mubr.bf16.gmra.mrb[0].mxu0 %v184
    %v2249 = vpop.f32.mrb[0].mxu0
    %v2250 = vadd.f32 %v2057, %v2249
    %v2251 = vpop.f32.mrb[0].mxu0
    %v2252 = vadd.f32 %v2059, %v2251
    %v2253 = vpop.f32.mrb[0].mxu0
    %v2254 = vadd.f32 %v2061, %v2253
    %v2255 = vpop.f32.mrb[0].mxu0
    %v2256 = vadd.f32 %v2063, %v2255
    %2257 = vmatprep.mubr.bf16.mxu0 0
    %2258 = vmatmul.mubr.bf16.gmra.mrb[0].mxu0 %v187
    %v2259 = vpop.f32.mrb[0].mxu0
    %v2260 = vadd.f32 %v2067, %v2259
    %v2261 = vpop.f32.mrb[0].mxu0
    %v2262 = vadd.f32 %v2069, %v2261
    %v2263 = vpop.f32.mrb[0].mxu0
    %v2264 = vadd.f32 %v2071, %v2263
    %v2265 = vpop.f32.mrb[0].mxu0
    %v2266 = vadd.f32 %v2073, %v2265
    %2267 = vmatprep.mubr.bf16.mxu0 0
    %2268 = vmatmul.mubr.bf16.gmra.mrb[0].mxu0 %v190
    %v2269 = vpop.f32.mrb[0].mxu0
    %v2270 = vadd.f32 %v2077, %v2269
    %v2271 = vpop.f32.mrb[0].mxu0
    %v2272 = vadd.f32 %v2079, %v2271
    %v2273 = vpop.f32.mrb[0].mxu0
    %v2274 = vadd.f32 %v2081, %v2273
    %v2275 = vpop.f32.mrb[0].mxu0
    %v2276 = vadd.f32 %v2083, %v2275
    %2277 = vmatprep.mubr.bf16.mxu0 0
    %2278 = vmatmul.mubr.bf16.gmra.mrb[0].mxu0 %v193
    %v2279 = vpop.f32.mrb[0].mxu0
    %v2280 = vadd.f32 %v2087, %v2279
    %v2281 = vpop.f32.mrb[0].mxu0
    %v2282 = vadd.f32 %v2089, %v2281
    %v2283 = vpop.f32.mrb[0].mxu0
    %v2284 = vadd.f32 %v2091, %v2283
    %v2285 = vpop.f32.mrb[0].mxu0
    %v2286 = vadd.f32 %v2093, %v2285
    %2287 = vmatprep.mubr.bf16.mxu0 0
    %2288 = vmatmul.mubr.bf16.gmra.mrb[0].mxu0 %v196
    %v2289 = vpop.f32.mrb[0].mxu0
    %v2290 = vadd.f32 %v2097, %v2289
    %v2291 = vpop.f32.mrb[0].mxu0
    %v2292 = vadd.f32 %v2099, %v2291
    %v2293 = vpop.f32.mrb[0].mxu0
    %v2294 = vadd.f32 %v2101, %v2293
    %v2295 = vpop.f32.mrb[0].mxu0
    %v2296 = vadd.f32 %v2103, %v2295
    %2297 = vmatprep.mubr.bf16.mxu0 0
    %2298 = vmatmul.mubr.bf16.gmra.mrb[0].mxu0 %v199
    %v2299 = vpop.f32.mrb[0].mxu0
    %v2300 = vadd.f32 %v2107, %v2299
    %v2301 = vpop.f32.mrb[0].mxu0
    %v2302 = vadd.f32 %v2109, %v2301
    %v2303 = vpop.f32.mrb[0].mxu0
    %v2304 = vadd.f32 %v2111, %v2303
    %v2305 = vpop.f32.mrb[0].mxu0
    %v2306 = vadd.f32 %v2113, %v2305
    %2307 = vmatprep.mubr.bf16.mxu0 0
    %2308 = vmatmul.mubr.bf16.gmra.mrb[0].mxu0 %v202
    %v2309 = vpop.f32.mrb[0].mxu0
    %v2310 = vadd.f32 %v2117, %v2309
    %v2311 = vpop.f32.mrb[0].mxu0
    %v2312 = vadd.f32 %v2119, %v2311
    %v2313 = vpop.f32.mrb[0].mxu0
    %v2314 = vadd.f32 %v2121, %v2313
    %v2315 = vpop.f32.mrb[0].mxu0
    %v2316 = vadd.f32 %v2123, %v2315
    %2317 = vmatprep.mubr.bf16.mxu0 0
    %2318 = vmatmul.mubr.bf16.gmra.mrb[0].mxu0 %v205
    %v2319 = vpop.f32.mrb[0].mxu0
    %v2320 = vadd.f32 %v2127, %v2319
    %v2321 = vpop.f32.mrb[0].mxu0
    %v2322 = vadd.f32 %v2129, %v2321
    %v2323 = vpop.f32.mrb[0].mxu0
    %v2324 = vadd.f32 %v2131, %v2323
    %v2325 = vpop.f32.mrb[0].mxu0
    %v2326 = vadd.f32 %v2133, %v2325
    %2327 = vmatprep.mubr.bf16.mxu0 0
    %2328 = vmatmul.mubr.bf16.gmra.mrb[0].mxu0 %v208
    %v2329 = vpop.f32.mrb[0].mxu0
    %v2330 = vadd.f32 %v2137, %v2329
    %v2331 = vpop.f32.mrb[0].mxu0
    %v2332 = vadd.f32 %v2139, %v2331
    %v2333 = vpop.f32.mrb[0].mxu0
    %v2334 = vadd.f32 %v2141, %v2333
    %v2335 = vpop.f32.mrb[0].mxu0
    %v2336 = vadd.f32 %v2143, %v2335
    %2337 = vmatprep.mubr.bf16.mxu0 0
    %2338 = vmatmul.mubr.bf16.gmra.mrb[0].mxu0 %v211
    %v2339 = vpop.f32.mrb[0].mxu0
    %v2340 = vadd.f32 %v2147, %v2339
    %v2341 = vpop.f32.mrb[0].mxu0
    %v2342 = vadd.f32 %v2149, %v2341
    %v2343 = vpop.f32.mrb[0].mxu0
    %v2344 = vadd.f32 %v2151, %v2343
    %v2345 = vpop.f32.mrb[0].mxu0
    %v2346 = vadd.f32 %v2153, %v2345
    %2347 = vmatprep.mubr.bf16.mxu0 0
    %2348 = vmatmul.mubr.bf16.gmra.mrb[0].mxu0 %v214
    %v2349 = vpop.f32.mrb[0].mxu0
    %v2350 = vadd.f32 %v2157, %v2349
    %v2351 = vpop.f32.mrb[0].mxu0
    %v2352 = vadd.f32 %v2159, %v2351
    %v2353 = vpop.f32.mrb[0].mxu0
    %v2354 = vadd.f32 %v2161, %v2353
    %v2355 = vpop.f32.mrb[0].mxu0
    %v2356 = vadd.f32 %v2163, %v2355
    %2357 = vmatprep.mubr.bf16.mxu0 0
    %2358 = vmatmul.mubr.bf16.gmra.mrb[0].mxu0 %v217
    %v2359 = vpop.f32.mrb[0].mxu0
    %v2360 = vadd.f32 %v2167, %v2359
    %v2361 = vpop.f32.mrb[0].mxu0
    %v2362 = vadd.f32 %v2169, %v2361
    %v2363 = vpop.f32.mrb[0].mxu0
    %v2364 = vadd.f32 %v2171, %v2363
    %v2365 = vpop.f32.mrb[0].mxu0
    %v2366 = vadd.f32 %v2173, %v2365
    %2367 = vmatprep.mubr.bf16.mxu0 0
    %2368 = vmatmul.mubr.bf16.gmra.mrb[0].mxu0 %v220
    %v2369 = vpop.f32.mrb[0].mxu0
    %v2370 = vadd.f32 %v2177, %v2369
    %v2371 = vpop.f32.mrb[0].mxu0
    %v2372 = vadd.f32 %v2179, %v2371
    %v2373 = vpop.f32.mrb[0].mxu0
    %v2374 = vadd.f32 %v2181, %v2373
    %v2375 = vpop.f32.mrb[0].mxu0
    %v2376 = vadd.f32 %v2183, %v2375
    %2377 = vmatprep.mubr.bf16.mxu0 0
    %2378 = vmatmul.mubr.bf16.gmra.mrb[0].mxu0 %v223
    %v2379 = vpop.f32.mrb[0].mxu0
    %v2380 = vadd.f32 %v2187, %v2379
    %v2381 = vpop.f32.mrb[0].mxu0
    %v2382 = vadd.f32 %v2189, %v2381
    %v2383 = vpop.f32.mrb[0].mxu0
    %v2384 = vadd.f32 %v2191, %v2383
    %v2385 = vpop.f32.mrb[0].mxu0
    %v2386 = vadd.f32 %v2193, %v2385
    %2387 = vmatprep.mubr.bf16.mxu0 0
    %2388 = vmatmul.mubr.bf16.gmra.mrb[0].mxu0 %v226
    %v2389 = vpop.f32.mrb[0].mxu0
    %v2390 = vadd.f32 %v2197, %v2389
    %v2391 = vpop.f32.mrb[0].mxu0
    %v2392 = vadd.f32 %v2199, %v2391
    %v2393 = vpop.f32.mrb[0].mxu0
    %v2394 = vadd.f32 %v2201, %v2393
    %v2395 = vpop.f32.mrb[0].mxu0
    %v2396 = vadd.f32 %v2203, %v2395
    %2397 = vmatprep.mubr.bf16.mxu0 0
    %2398 = vmatmul.mubr.bf16.gmra.mrb[0].mxu0 %v229
    %v2399 = vpop.f32.mrb[0].mxu0
    %v2400 = vadd.f32 %v2207, %v2399
    %v2401 = vpop.f32.mrb[0].mxu0
    %v2402 = vadd.f32 %v2209, %v2401
    %v2403 = vpop.f32.mrb[0].mxu0
    %v2404 = vadd.f32 %v2211, %v2403
    %v2405 = vpop.f32.mrb[0].mxu0
    %v2406 = vadd.f32 %v2213, %v2405
    %2407 = vdwg.mxu0
    %2408 = vmatprep.subr.bf16.mxu0 %v1449
    %2409 = vmatpush1.bf16.msra.mxu0 %v1448
    %2410 = vmatprep.subr.bf16.mxu0 %v1461
    %2411 = vmatpush1.bf16.msra.mxu0 %v1460
    %2412 = vmatprep.subr.bf16.mxu0 %v1473
    %2413 = vmatpush1.bf16.msra.mxu0 %v1472
    %2414 = vmatprep.subr.bf16.mxu0 %v1485
    %2415 = vmatpush1.bf16.msra.mxu0 %v1484
    %2416 = vmatprep.subr.bf16.mxu0 %v1497
    %2417 = vmatpush1.bf16.msra.mxu0 %v1496
    %2418 = vmatprep.subr.bf16.mxu0 %v1509
    %2419 = vmatpush1.bf16.msra.mxu0 %v1508
    %2420 = vmatprep.subr.bf16.mxu0 %v1521
    %2421 = vmatpush1.bf16.msra.mxu0 %v1520
    %2422 = vmatprep.subr.bf16.mxu0 %v1533
    %2423 = vmatpush1.bf16.msra.mxu0 %v1532
    %2424 = vmatprep.subr.bf16.mxu0 %v1545
    %2425 = vmatpush1.bf16.msra.mxu0 %v1544
    %2426 = vmatprep.subr.bf16.mxu0 %v1557
    %2427 = vmatpush1.bf16.msra.mxu0 %v1556
    %2428 = vmatprep.subr.bf16.mxu0 %v1569
    %2429 = vmatpush1.bf16.msra.mxu0 %v1568
    %2430 = vmatprep.subr.bf16.mxu0 %v1581
    %2431 = vmatpush1.bf16.msra.mxu0 %v1580
    %2432 = vmatprep.subr.bf16.mxu0 %v1593
    %2433 = vmatpush1.bf16.msra.mxu0 %v1592
    %2434 = vmatprep.subr.bf16.mxu0 %v1605
    %2435 = vmatpush1.bf16.msra.mxu0 %v1604
    %2436 = vmatprep.subr.bf16.mxu0 %v1617
    %2437 = vmatpush1.bf16.msra.mxu0 %v1616
    %2438 = vmatprep.subr.bf16.mxu0 %v1629
    %2439 = vmatpush1.bf16.msra.mxu0 %v1628
    %2440 = vmatprep.mubr.bf16.mxu0 %v183
    %2441 = vmatmul.mubr.bf16.gmra.mrb[0].mxu0 %v182
    %v2442 = vpop.f32.mrb[0].mxu0
    %v2443 = vadd.f32 %v533, %v2442
    %v2444 = vpop.f32.mrb[0].mxu0
    %v2445 = vadd.f32 %v537, %v2444
    %v2446 = vpop.f32.mrb[0].mxu0
    %v2447 = vadd.f32 %v533, %v2446
    %v2448 = vpop.f32.mrb[0].mxu0
    %v2449 = vadd.f32 %v537, %v2448
    %2450 = vmatprep.mubr.bf16.mxu0 %v186
    %2451 = vmatmul.mubr.bf16.gmra.mrb[0].mxu0 %v185
    %v2452 = vpop.f32.mrb[0].mxu0
    %v2453 = vadd.f32 %v533, %v2452
    %v2454 = vpop.f32.mrb[0].mxu0
    %v2455 = vadd.f32 %v537, %v2454
    %v2456 = vpop.f32.mrb[0].mxu0
    %v2457 = vadd.f32 %v533, %v2456
    %v2458 = vpop.f32.mrb[0].mxu0
    %v2459 = vadd.f32 %v537, %v2458
    %2460 = vmatprep.mubr.bf16.mxu0 %v189
    %2461 = vmatmul.mubr.bf16.gmra.mrb[0].mxu0 %v188
    %v2462 = vpop.f32.mrb[0].mxu0
    %v2463 = vadd.f32 %v533, %v2462
    %v2464 = vpop.f32.mrb[0].mxu0
    %v2465 = vadd.f32 %v537, %v2464
    %v2466 = vpop.f32.mrb[0].mxu0
    %v2467 = vadd.f32 %v533, %v2466
    %v2468 = vpop.f32.mrb[0].mxu0
    %v2469 = vadd.f32 %v537, %v2468
    %2470 = vmatprep.mubr.bf16.mxu0 %v192
    %2471 = vmatmul.mubr.bf16.gmra.mrb[0].mxu0 %v191
    %v2472 = vpop.f32.mrb[0].mxu0
    %v2473 = vadd.f32 %v533, %v2472
    %v2474 = vpop.f32.mrb[0].mxu0
    %v2475 = vadd.f32 %v537, %v2474
    %v2476 = vpop.f32.mrb[0].mxu0
    %v2477 = vadd.f32 %v533, %v2476
    %v2478 = vpop.f32.mrb[0].mxu0
    %v2479 = vadd.f32 %v537, %v2478
    %2480 = vmatprep.mubr.bf16.mxu0 %v195
    %2481 = vmatmul.mubr.bf16.gmra.mrb[0].mxu0 %v194
    %v2482 = vpop.f32.mrb[0].mxu0
    %v2483 = vadd.f32 %v533, %v2482
    %v2484 = vpop.f32.mrb[0].mxu0
    %v2485 = vadd.f32 %v537, %v2484
    %v2486 = vpop.f32.mrb[0].mxu0
    %v2487 = vadd.f32 %v533, %v2486
    %v2488 = vpop.f32.mrb[0].mxu0
    %v2489 = vadd.f32 %v537, %v2488
    %2490 = vmatprep.mubr.bf16.mxu0 %v198
    %2491 = vmatmul.mubr.bf16.gmra.mrb[0].mxu0 %v197
    %v2492 = vpop.f32.mrb[0].mxu0
    %v2493 = vadd.f32 %v533, %v2492
    %v2494 = vpop.f32.mrb[0].mxu0
    %v2495 = vadd.f32 %v537, %v2494
    %v2496 = vpop.f32.mrb[0].mxu0
    %v2497 = vadd.f32 %v533, %v2496
    %v2498 = vpop.f32.mrb[0].mxu0
    %v2499 = vadd.f32 %v537, %v2498
    %2500 = vmatprep.mubr.bf16.mxu0 %v201
    %2501 = vmatmul.mubr.bf16.gmra.mrb[0].mxu0 %v200
    %v2502 = vpop.f32.mrb[0].mxu0
    %v2503 = vadd.f32 %v533, %v2502
    %v2504 = vpop.f32.mrb[0].mxu0
    %v2505 = vadd.f32 %v537, %v2504
    %v2506 = vpop.f32.mrb[0].mxu0
    %v2507 = vadd.f32 %v533, %v2506
    %v2508 = vpop.f32.mrb[0].mxu0
    %v2509 = vadd.f32 %v537, %v2508
    %2510 = vmatprep.mubr.bf16.mxu0 %v204
    %2511 = vmatmul.mubr.bf16.gmra.mrb[0].mxu0 %v203
    %v2512 = vpop.f32.mrb[0].mxu0
    %v2513 = vadd.f32 %v533, %v2512
    %v2514 = vpop.f32.mrb[0].mxu0
    %v2515 = vadd.f32 %v537, %v2514
    %v2516 = vpop.f32.mrb[0].mxu0
    %v2517 = vadd.f32 %v533, %v2516
    %v2518 = vpop.f32.mrb[0].mxu0
    %v2519 = vadd.f32 %v537, %v2518
    %2520 = vmatprep.mubr.bf16.mxu0 %v207
    %2521 = vmatmul.mubr.bf16.gmra.mrb[0].mxu0 %v206
    %v2522 = vpop.f32.mrb[0].mxu0
    %v2523 = vadd.f32 %v533, %v2522
    %v2524 = vpop.f32.mrb[0].mxu0
    %v2525 = vadd.f32 %v537, %v2524
    %v2526 = vpop.f32.mrb[0].mxu0
    %v2527 = vadd.f32 %v533, %v2526
    %v2528 = vpop.f32.mrb[0].mxu0
    %v2529 = vadd.f32 %v537, %v2528
    %2530 = vmatprep.mubr.bf16.mxu0 %v210
    %2531 = vmatmul.mubr.bf16.gmra.mrb[0].mxu0 %v209
    %v2532 = vpop.f32.mrb[0].mxu0
    %v2533 = vadd.f32 %v533, %v2532
    %v2534 = vpop.f32.mrb[0].mxu0
    %v2535 = vadd.f32 %v537, %v2534
    %v2536 = vpop.f32.mrb[0].mxu0
    %v2537 = vadd.f32 %v533, %v2536
    %v2538 = vpop.f32.mrb[0].mxu0
    %v2539 = vadd.f32 %v537, %v2538
    %2540 = vmatprep.mubr.bf16.mxu0 %v213
    %2541 = vmatmul.mubr.bf16.gmra.mrb[0].mxu0 %v212
    %v2542 = vpop.f32.mrb[0].mxu0
    %v2543 = vadd.f32 %v533, %v2542
    %v2544 = vpop.f32.mrb[0].mxu0
    %v2545 = vadd.f32 %v537, %v2544
    %v2546 = vpop.f32.mrb[0].mxu0
    %v2547 = vadd.f32 %v533, %v2546
    %v2548 = vpop.f32.mrb[0].mxu0
    %v2549 = vadd.f32 %v537, %v2548
    %2550 = vmatprep.mubr.bf16.mxu0 %v216
    %2551 = vmatmul.mubr.bf16.gmra.mrb[0].mxu0 %v215
    %v2552 = vpop.f32.mrb[0].mxu0
    %v2553 = vadd.f32 %v533, %v2552
    %v2554 = vpop.f32.mrb[0].mxu0
    %v2555 = vadd.f32 %v537, %v2554
    %v2556 = vpop.f32.mrb[0].mxu0
    %v2557 = vadd.f32 %v533, %v2556
    %v2558 = vpop.f32.mrb[0].mxu0
    %v2559 = vadd.f32 %v537, %v2558
    %2560 = vmatprep.mubr.bf16.mxu0 %v219
    %2561 = vmatmul.mubr.bf16.gmra.mrb[0].mxu0 %v218
    %v2562 = vpop.f32.mrb[0].mxu0
    %v2563 = vadd.f32 %v533, %v2562
    %v2564 = vpop.f32.mrb[0].mxu0
    %v2565 = vadd.f32 %v537, %v2564
    %v2566 = vpop.f32.mrb[0].mxu0
    %v2567 = vadd.f32 %v533, %v2566
    %v2568 = vpop.f32.mrb[0].mxu0
    %v2569 = vadd.f32 %v537, %v2568
    %2570 = vmatprep.mubr.bf16.mxu0 %v222
    %2571 = vmatmul.mubr.bf16.gmra.mrb[0].mxu0 %v221
    %v2572 = vpop.f32.mrb[0].mxu0
    %v2573 = vadd.f32 %v533, %v2572
    %v2574 = vpop.f32.mrb[0].mxu0
    %v2575 = vadd.f32 %v537, %v2574
    %v2576 = vpop.f32.mrb[0].mxu0
    %v2577 = vadd.f32 %v533, %v2576
    %v2578 = vpop.f32.mrb[0].mxu0
    %v2579 = vadd.f32 %v537, %v2578
    %2580 = vmatprep.mubr.bf16.mxu0 %v225
    %2581 = vmatmul.mubr.bf16.gmra.mrb[0].mxu0 %v224
    %v2582 = vpop.f32.mrb[0].mxu0
    %v2583 = vadd.f32 %v533, %v2582
    %v2584 = vpop.f32.mrb[0].mxu0
    %v2585 = vadd.f32 %v537, %v2584
    %v2586 = vpop.f32.mrb[0].mxu0
    %v2587 = vadd.f32 %v533, %v2586
    %v2588 = vpop.f32.mrb[0].mxu0
    %v2589 = vadd.f32 %v537, %v2588
    %2590 = vmatprep.mubr.bf16.mxu0 %v228
    %2591 = vmatmul.mubr.bf16.gmra.mrb[0].mxu0 %v227
    %v2592 = vpop.f32.mrb[0].mxu0
    %v2593 = vadd.f32 %v533, %v2592
    %v2594 = vpop.f32.mrb[0].mxu0
    %v2595 = vadd.f32 %v537, %v2594
    %v2596 = vpop.f32.mrb[0].mxu0
    %v2597 = vadd.f32 %v533, %v2596
    %v2598 = vpop.f32.mrb[0].mxu0
    %v2599 = vadd.f32 %v537, %v2598
    %2600 = vdwg.mxu0
    %2601 = vmatprep.subr.bf16.mxu0 %v1641
    %2602 = vmatpush1.bf16.msra.mxu0 %v1640
    %2603 = vmatprep.subr.bf16.mxu0 %v1653
    %2604 = vmatpush1.bf16.msra.mxu0 %v1652
    %2605 = vmatprep.subr.bf16.mxu0 %v1665
    %2606 = vmatpush1.bf16.msra.mxu0 %v1664
    %2607 = vmatprep.subr.bf16.mxu0 %v1677
    %2608 = vmatpush1.bf16.msra.mxu0 %v1676
    %2609 = vmatprep.subr.bf16.mxu0 %v1689
    %2610 = vmatpush1.bf16.msra.mxu0 %v1688
    %2611 = vmatprep.subr.bf16.mxu0 %v1701
    %2612 = vmatpush1.bf16.msra.mxu0 %v1700
    %2613 = vmatprep.subr.bf16.mxu0 %v1713
    %2614 = vmatpush1.bf16.msra.mxu0 %v1712
    %2615 = vmatprep.subr.bf16.mxu0 %v1725
    %2616 = vmatpush1.bf16.msra.mxu0 %v1724
    %2617 = vmatprep.subr.bf16.mxu0 0
    %2618 = vmatpush1.bf16.msra.mxu0 0
    %2619 = vmatprep.subr.bf16.mxu0 0
    %2620 = vmatpush1.bf16.msra.mxu0 0
    %2621 = vmatprep.subr.bf16.mxu0 0
    %2622 = vmatpush1.bf16.msra.mxu0 0
    %2623 = vmatprep.subr.bf16.mxu0 0
    %2624 = vmatpush1.bf16.msra.mxu0 0
    %2625 = vmatprep.subr.bf16.mxu0 0
    %2626 = vmatpush1.bf16.msra.mxu0 0
    %2627 = vmatprep.subr.bf16.mxu0 0
    %2628 = vmatpush1.bf16.msra.mxu0 0
    %2629 = vmatprep.subr.bf16.mxu0 0
    %2630 = vmatpush1.bf16.msra.mxu0 0
    %2631 = vmatprep.subr.bf16.mxu0 0
    %2632 = vmatpush1.bf16.msra.mxu0 0
    %2633 = vmatprep.mubr.bf16.mxu0 0
    %2634 = vmatmul.mubr.bf16.gmra.mrb[0].mxu0 %v184
    %v2635 = vpop.f32.mrb[0].mxu0
    %v2636 = vadd.f32 %v2443, %v2635
    %v2637 = vpop.f32.mrb[0].mxu0
    %v2638 = vadd.f32 %v2445, %v2637
    %v2639 = vpop.f32.mrb[0].mxu0
    %v2640 = vadd.f32 %v2447, %v2639
    %v2641 = vpop.f32.mrb[0].mxu0
    %v2642 = vadd.f32 %v2449, %v2641
    %2643 = vmatprep.mubr.bf16.mxu0 0
    %2644 = vmatmul.mubr.bf16.gmra.mrb[0].mxu0 %v187
    %v2645 = vpop.f32.mrb[0].mxu0
    %v2646 = vadd.f32 %v2453, %v2645
    %v2647 = vpop.f32.mrb[0].mxu0
    %v2648 = vadd.f32 %v2455, %v2647
    %v2649 = vpop.f32.mrb[0].mxu0
    %v2650 = vadd.f32 %v2457, %v2649
    %v2651 = vpop.f32.mrb[0].mxu0
    %v2652 = vadd.f32 %v2459, %v2651
    %2653 = vmatprep.mubr.bf16.mxu0 0
    %2654 = vmatmul.mubr.bf16.gmra.mrb[0].mxu0 %v190
    %v2655 = vpop.f32.mrb[0].mxu0
    %v2656 = vadd.f32 %v2463, %v2655
    %v2657 = vpop.f32.mrb[0].mxu0
    %v2658 = vadd.f32 %v2465, %v2657
    %v2659 = vpop.f32.mrb[0].mxu0
    %v2660 = vadd.f32 %v2467, %v2659
    %v2661 = vpop.f32.mrb[0].mxu0
    %v2662 = vadd.f32 %v2469, %v2661
    %2663 = vmatprep.mubr.bf16.mxu0 0
    %2664 = vmatmul.mubr.bf16.gmra.mrb[0].mxu0 %v193
    %v2665 = vpop.f32.mrb[0].mxu0
    %v2666 = vadd.f32 %v2473, %v2665
    %v2667 = vpop.f32.mrb[0].mxu0
    %v2668 = vadd.f32 %v2475, %v2667
    %v2669 = vpop.f32.mrb[0].mxu0
    %v2670 = vadd.f32 %v2477, %v2669
    %v2671 = vpop.f32.mrb[0].mxu0
    %v2672 = vadd.f32 %v2479, %v2671
    %2673 = vmatprep.mubr.bf16.mxu0 0
    %2674 = vmatmul.mubr.bf16.gmra.mrb[0].mxu0 %v196
    %v2675 = vpop.f32.mrb[0].mxu0
    %v2676 = vadd.f32 %v2483, %v2675
    %v2677 = vpop.f32.mrb[0].mxu0
    %v2678 = vadd.f32 %v2485, %v2677
    %v2679 = vpop.f32.mrb[0].mxu0
    %v2680 = vadd.f32 %v2487, %v2679
    %v2681 = vpop.f32.mrb[0].mxu0
    %v2682 = vadd.f32 %v2489, %v2681
    %2683 = vmatprep.mubr.bf16.mxu0 0
    %2684 = vmatmul.mubr.bf16.gmra.mrb[0].mxu0 %v199
    %v2685 = vpop.f32.mrb[0].mxu0
    %v2686 = vadd.f32 %v2493, %v2685
    %v2687 = vpop.f32.mrb[0].mxu0
    %v2688 = vadd.f32 %v2495, %v2687
    %v2689 = vpop.f32.mrb[0].mxu0
    %v2690 = vadd.f32 %v2497, %v2689
    %v2691 = vpop.f32.mrb[0].mxu0
    %v2692 = vadd.f32 %v2499, %v2691
    %2693 = vmatprep.mubr.bf16.mxu0 0
    %2694 = vmatmul.mubr.bf16.gmra.mrb[0].mxu0 %v202
    %v2695 = vpop.f32.mrb[0].mxu0
    %v2696 = vadd.f32 %v2503, %v2695
    %v2697 = vpop.f32.mrb[0].mxu0
    %v2698 = vadd.f32 %v2505, %v2697
    %v2699 = vpop.f32.mrb[0].mxu0
    %v2700 = vadd.f32 %v2507, %v2699
    %v2701 = vpop.f32.mrb[0].mxu0
    %v2702 = vadd.f32 %v2509, %v2701
    %2703 = vmatprep.mubr.bf16.mxu0 0
    %2704 = vmatmul.mubr.bf16.gmra.mrb[0].mxu0 %v205
    %v2705 = vpop.f32.mrb[0].mxu0
    %v2706 = vadd.f32 %v2513, %v2705
    %v2707 = vpop.f32.mrb[0].mxu0
    %v2708 = vadd.f32 %v2515, %v2707
    %v2709 = vpop.f32.mrb[0].mxu0
    %v2710 = vadd.f32 %v2517, %v2709
    %v2711 = vpop.f32.mrb[0].mxu0
    %v2712 = vadd.f32 %v2519, %v2711
    %2713 = vmatprep.mubr.bf16.mxu0 0
    %2714 = vmatmul.mubr.bf16.gmra.mrb[0].mxu0 %v208
    %v2715 = vpop.f32.mrb[0].mxu0
    %v2716 = vadd.f32 %v2523, %v2715
    %v2717 = vpop.f32.mrb[0].mxu0
    %v2718 = vadd.f32 %v2525, %v2717
    %v2719 = vpop.f32.mrb[0].mxu0
    %v2720 = vadd.f32 %v2527, %v2719
    %v2721 = vpop.f32.mrb[0].mxu0
    %v2722 = vadd.f32 %v2529, %v2721
    %2723 = vmatprep.mubr.bf16.mxu0 0
    %2724 = vmatmul.mubr.bf16.gmra.mrb[0].mxu0 %v211
    %v2725 = vpop.f32.mrb[0].mxu0
    %v2726 = vadd.f32 %v2533, %v2725
    %v2727 = vpop.f32.mrb[0].mxu0
    %v2728 = vadd.f32 %v2535, %v2727
    %v2729 = vpop.f32.mrb[0].mxu0
    %v2730 = vadd.f32 %v2537, %v2729
    %v2731 = vpop.f32.mrb[0].mxu0
    %v2732 = vadd.f32 %v2539, %v2731
    %2733 = vmatprep.mubr.bf16.mxu0 0
    %2734 = vmatmul.mubr.bf16.gmra.mrb[0].mxu0 %v214
    %v2735 = vpop.f32.mrb[0].mxu0
    %v2736 = vadd.f32 %v2543, %v2735
    %v2737 = vpop.f32.mrb[0].mxu0
    %v2738 = vadd.f32 %v2545, %v2737
    %v2739 = vpop.f32.mrb[0].mxu0
    %v2740 = vadd.f32 %v2547, %v2739
    %v2741 = vpop.f32.mrb[0].mxu0
    %v2742 = vadd.f32 %v2549, %v2741
    %2743 = vmatprep.mubr.bf16.mxu0 0
    %2744 = vmatmul.mubr.bf16.gmra.mrb[0].mxu0 %v217
    %v2745 = vpop.f32.mrb[0].mxu0
    %v2746 = vadd.f32 %v2553, %v2745
    %v2747 = vpop.f32.mrb[0].mxu0
    %v2748 = vadd.f32 %v2555, %v2747
    %v2749 = vpop.f32.mrb[0].mxu0
    %v2750 = vadd.f32 %v2557, %v2749
    %v2751 = vpop.f32.mrb[0].mxu0
    %v2752 = vadd.f32 %v2559, %v2751
    %2753 = vmatprep.mubr.bf16.mxu0 0
    %2754 = vmatmul.mubr.bf16.gmra.mrb[0].mxu0 %v220
    %v2755 = vpop.f32.mrb[0].mxu0
    %v2756 = vadd.f32 %v2563, %v2755
    %v2757 = vpop.f32.mrb[0].mxu0
    %v2758 = vadd.f32 %v2565, %v2757
    %v2759 = vpop.f32.mrb[0].mxu0
    %v2760 = vadd.f32 %v2567, %v2759
    %v2761 = vpop.f32.mrb[0].mxu0
    %v2762 = vadd.f32 %v2569, %v2761
    %2763 = vmatprep.mubr.bf16.mxu0 0
    %2764 = vmatmul.mubr.bf16.gmra.mrb[0].mxu0 %v223
    %v2765 = vpop.f32.mrb[0].mxu0
    %v2766 = vadd.f32 %v2573, %v2765
    %v2767 = vpop.f32.mrb[0].mxu0
    %v2768 = vadd.f32 %v2575, %v2767
    %v2769 = vpop.f32.mrb[0].mxu0
    %v2770 = vadd.f32 %v2577, %v2769
    %v2771 = vpop.f32.mrb[0].mxu0
    %v2772 = vadd.f32 %v2579, %v2771
    %2773 = vmatprep.mubr.bf16.mxu0 0
    %2774 = vmatmul.mubr.bf16.gmra.mrb[0].mxu0 %v226
    %v2775 = vpop.f32.mrb[0].mxu0
    %v2776 = vadd.f32 %v2583, %v2775
    %v2777 = vpop.f32.mrb[0].mxu0
    %v2778 = vadd.f32 %v2585, %v2777
    %v2779 = vpop.f32.mrb[0].mxu0
    %v2780 = vadd.f32 %v2587, %v2779
    %v2781 = vpop.f32.mrb[0].mxu0
    %v2782 = vadd.f32 %v2589, %v2781
    %2783 = vmatprep.mubr.bf16.mxu0 0
    %2784 = vmatmul.mubr.bf16.gmra.mrb[0].mxu0 %v229
    %v2785 = vpop.f32.mrb[0].mxu0
    %v2786 = vadd.f32 %v2593, %v2785
    %v2787 = vpop.f32.mrb[0].mxu0
    %v2788 = vadd.f32 %v2595, %v2787
    %v2789 = vpop.f32.mrb[0].mxu0
    %v2790 = vadd.f32 %v2597, %v2789
    %v2791 = vpop.f32.mrb[0].mxu0
    %v2792 = vadd.f32 %v2599, %v2791
    %2793 = vdwg.mxu0
    %2794 = vmatprep.subr.bf16.mxu0 %v1451
    %2795 = vmatpush1.bf16.msra.mxu0 %v1450
    %2796 = vmatprep.subr.bf16.mxu0 %v1463
    %2797 = vmatpush1.bf16.msra.mxu0 %v1462
    %2798 = vmatprep.subr.bf16.mxu0 %v1475
    %2799 = vmatpush1.bf16.msra.mxu0 %v1474
    %2800 = vmatprep.subr.bf16.mxu0 %v1487
    %2801 = vmatpush1.bf16.msra.mxu0 %v1486
    %2802 = vmatprep.subr.bf16.mxu0 %v1499
    %2803 = vmatpush1.bf16.msra.mxu0 %v1498
    %2804 = vmatprep.subr.bf16.mxu0 %v1511
    %2805 = vmatpush1.bf16.msra.mxu0 %v1510
    %2806 = vmatprep.subr.bf16.mxu0 %v1523
    %2807 = vmatpush1.bf16.msra.mxu0 %v1522
    %2808 = vmatprep.subr.bf16.mxu0 %v1535
    %2809 = vmatpush1.bf16.msra.mxu0 %v1534
    %2810 = vmatprep.subr.bf16.mxu0 %v1547
    %2811 = vmatpush1.bf16.msra.mxu0 %v1546
    %2812 = vmatprep.subr.bf16.mxu0 %v1559
    %2813 = vmatpush1.bf16.msra.mxu0 %v1558
    %2814 = vmatprep.subr.bf16.mxu0 %v1571
    %2815 = vmatpush1.bf16.msra.mxu0 %v1570
    %2816 = vmatprep.subr.bf16.mxu0 %v1583
    %2817 = vmatpush1.bf16.msra.mxu0 %v1582
    %2818 = vmatprep.subr.bf16.mxu0 %v1595
    %2819 = vmatpush1.bf16.msra.mxu0 %v1594
    %2820 = vmatprep.subr.bf16.mxu0 %v1607
    %2821 = vmatpush1.bf16.msra.mxu0 %v1606
    %2822 = vmatprep.subr.bf16.mxu0 %v1619
    %2823 = vmatpush1.bf16.msra.mxu0 %v1618
    %2824 = vmatprep.subr.bf16.mxu0 %v1631
    %2825 = vmatpush1.bf16.msra.mxu0 %v1630
    %2826 = vmatprep.mubr.bf16.mxu0 %v183
    %2827 = vmatmul.mubr.bf16.gmra.mrb[0].mxu0 %v182
    %v2828 = vpop.f32.mrb[0].mxu0
    %v2829 = vadd.f32 %v541, %v2828
    %v2830 = vpop.f32.mrb[0].mxu0
    %v2831 = vadd.f32 %v545, %v2830
    %v2832 = vpop.f32.mrb[0].mxu0
    %v2833 = vadd.f32 %v541, %v2832
    %v2834 = vpop.f32.mrb[0].mxu0
    %v2835 = vadd.f32 %v545, %v2834
    %2836 = vmatprep.mubr.bf16.mxu0 %v186
    %2837 = vmatmul.mubr.bf16.gmra.mrb[0].mxu0 %v185
    %v2838 = vpop.f32.mrb[0].mxu0
    %v2839 = vadd.f32 %v541, %v2838
    %v2840 = vpop.f32.mrb[0].mxu0
    %v2841 = vadd.f32 %v545, %v2840
    %v2842 = vpop.f32.mrb[0].mxu0
    %v2843 = vadd.f32 %v541, %v2842
    %v2844 = vpop.f32.mrb[0].mxu0
    %v2845 = vadd.f32 %v545, %v2844
    %2846 = vmatprep.mubr.bf16.mxu0 %v189
    %2847 = vmatmul.mubr.bf16.gmra.mrb[0].mxu0 %v188
    %v2848 = vpop.f32.mrb[0].mxu0
    %v2849 = vadd.f32 %v541, %v2848
    %v2850 = vpop.f32.mrb[0].mxu0
    %v2851 = vadd.f32 %v545, %v2850
    %v2852 = vpop.f32.mrb[0].mxu0
    %v2853 = vadd.f32 %v541, %v2852
    %v2854 = vpop.f32.mrb[0].mxu0
    %v2855 = vadd.f32 %v545, %v2854
    %2856 = vmatprep.mubr.bf16.mxu0 %v192
    %2857 = vmatmul.mubr.bf16.gmra.mrb[0].mxu0 %v191
    %v2858 = vpop.f32.mrb[0].mxu0
    %v2859 = vadd.f32 %v541, %v2858
    %v2860 = vpop.f32.mrb[0].mxu0
    %v2861 = vadd.f32 %v545, %v2860
    %v2862 = vpop.f32.mrb[0].mxu0
    %v2863 = vadd.f32 %v541, %v2862
    %v2864 = vpop.f32.mrb[0].mxu0
    %v2865 = vadd.f32 %v545, %v2864
    %2866 = vmatprep.mubr.bf16.mxu0 %v195
    %2867 = vmatmul.mubr.bf16.gmra.mrb[0].mxu0 %v194
    %v2868 = vpop.f32.mrb[0].mxu0
    %v2869 = vadd.f32 %v541, %v2868
    %v2870 = vpop.f32.mrb[0].mxu0
    %v2871 = vadd.f32 %v545, %v2870
    %v2872 = vpop.f32.mrb[0].mxu0
    %v2873 = vadd.f32 %v541, %v2872
    %v2874 = vpop.f32.mrb[0].mxu0
    %v2875 = vadd.f32 %v545, %v2874
    %2876 = vmatprep.mubr.bf16.mxu0 %v198
    %2877 = vmatmul.mubr.bf16.gmra.mrb[0].mxu0 %v197
    %v2878 = vpop.f32.mrb[0].mxu0
    %v2879 = vadd.f32 %v541, %v2878
    %v2880 = vpop.f32.mrb[0].mxu0
    %v2881 = vadd.f32 %v545, %v2880
    %v2882 = vpop.f32.mrb[0].mxu0
    %v2883 = vadd.f32 %v541, %v2882
    %v2884 = vpop.f32.mrb[0].mxu0
    %v2885 = vadd.f32 %v545, %v2884
    %2886 = vmatprep.mubr.bf16.mxu0 %v201
    %2887 = vmatmul.mubr.bf16.gmra.mrb[0].mxu0 %v200
    %v2888 = vpop.f32.mrb[0].mxu0
    %v2889 = vadd.f32 %v541, %v2888
    %v2890 = vpop.f32.mrb[0].mxu0
    %v2891 = vadd.f32 %v545, %v2890
    %v2892 = vpop.f32.mrb[0].mxu0
    %v2893 = vadd.f32 %v541, %v2892
    %v2894 = vpop.f32.mrb[0].mxu0
    %v2895 = vadd.f32 %v545, %v2894
    %2896 = vmatprep.mubr.bf16.mxu0 %v204
    %2897 = vmatmul.mubr.bf16.gmra.mrb[0].mxu0 %v203
    %v2898 = vpop.f32.mrb[0].mxu0
    %v2899 = vadd.f32 %v541, %v2898
    %v2900 = vpop.f32.mrb[0].mxu0
    %v2901 = vadd.f32 %v545, %v2900
    %v2902 = vpop.f32.mrb[0].mxu0
    %v2903 = vadd.f32 %v541, %v2902
    %v2904 = vpop.f32.mrb[0].mxu0
    %v2905 = vadd.f32 %v545, %v2904
    %2906 = vmatprep.mubr.bf16.mxu0 %v207
    %2907 = vmatmul.mubr.bf16.gmra.mrb[0].mxu0 %v206
    %v2908 = vpop.f32.mrb[0].mxu0
    %v2909 = vadd.f32 %v541, %v2908
    %v2910 = vpop.f32.mrb[0].mxu0
    %v2911 = vadd.f32 %v545, %v2910
    %v2912 = vpop.f32.mrb[0].mxu0
    %v2913 = vadd.f32 %v541, %v2912
    %v2914 = vpop.f32.mrb[0].mxu0
    %v2915 = vadd.f32 %v545, %v2914
    %2916 = vmatprep.mubr.bf16.mxu0 %v210
    %2917 = vmatmul.mubr.bf16.gmra.mrb[0].mxu0 %v209
    %v2918 = vpop.f32.mrb[0].mxu0
    %v2919 = vadd.f32 %v541, %v2918
    %v2920 = vpop.f32.mrb[0].mxu0
    %v2921 = vadd.f32 %v545, %v2920
    %v2922 = vpop.f32.mrb[0].mxu0
    %v2923 = vadd.f32 %v541, %v2922
    %v2924 = vpop.f32.mrb[0].mxu0
    %v2925 = vadd.f32 %v545, %v2924
    %2926 = vmatprep.mubr.bf16.mxu0 %v213
    %2927 = vmatmul.mubr.bf16.gmra.mrb[0].mxu0 %v212
    %v2928 = vpop.f32.mrb[0].mxu0
    %v2929 = vadd.f32 %v541, %v2928
    %v2930 = vpop.f32.mrb[0].mxu0
    %v2931 = vadd.f32 %v545, %v2930
    %v2932 = vpop.f32.mrb[0].mxu0
    %v2933 = vadd.f32 %v541, %v2932
    %v2934 = vpop.f32.mrb[0].mxu0
    %v2935 = vadd.f32 %v545, %v2934
    %2936 = vmatprep.mubr.bf16.mxu0 %v216
    %2937 = vmatmul.mubr.bf16.gmra.mrb[0].mxu0 %v215
    %v2938 = vpop.f32.mrb[0].mxu0
    %v2939 = vadd.f32 %v541, %v2938
    %v2940 = vpop.f32.mrb[0].mxu0
    %v2941 = vadd.f32 %v545, %v2940
    %v2942 = vpop.f32.mrb[0].mxu0
    %v2943 = vadd.f32 %v541, %v2942
    %v2944 = vpop.f32.mrb[0].mxu0
    %v2945 = vadd.f32 %v545, %v2944
    %2946 = vmatprep.mubr.bf16.mxu0 %v219
    %2947 = vmatmul.mubr.bf16.gmra.mrb[0].mxu0 %v218
    %v2948 = vpop.f32.mrb[0].mxu0
    %v2949 = vadd.f32 %v541, %v2948
    %v2950 = vpop.f32.mrb[0].mxu0
    %v2951 = vadd.f32 %v545, %v2950
    %v2952 = vpop.f32.mrb[0].mxu0
    %v2953 = vadd.f32 %v541, %v2952
    %v2954 = vpop.f32.mrb[0].mxu0
    %v2955 = vadd.f32 %v545, %v2954
    %2956 = vmatprep.mubr.bf16.mxu0 %v222
    %2957 = vmatmul.mubr.bf16.gmra.mrb[0].mxu0 %v221
    %v2958 = vpop.f32.mrb[0].mxu0
    %v2959 = vadd.f32 %v541, %v2958
    %v2960 = vpop.f32.mrb[0].mxu0
    %v2961 = vadd.f32 %v545, %v2960
    %v2962 = vpop.f32.mrb[0].mxu0
    %v2963 = vadd.f32 %v541, %v2962
    %v2964 = vpop.f32.mrb[0].mxu0
    %v2965 = vadd.f32 %v545, %v2964
    %2966 = vmatprep.mubr.bf16.mxu0 %v225
    %2967 = vmatmul.mubr.bf16.gmra.mrb[0].mxu0 %v224
    %v2968 = vpop.f32.mrb[0].mxu0
    %v2969 = vadd.f32 %v541, %v2968
    %v2970 = vpop.f32.mrb[0].mxu0
    %v2971 = vadd.f32 %v545, %v2970
    %v2972 = vpop.f32.mrb[0].mxu0
    %v2973 = vadd.f32 %v541, %v2972
    %v2974 = vpop.f32.mrb[0].mxu0
    %v2975 = vadd.f32 %v545, %v2974
    %2976 = vmatprep.mubr.bf16.mxu0 %v228
    %2977 = vmatmul.mubr.bf16.gmra.mrb[0].mxu0 %v227
    %v2978 = vpop.f32.mrb[0].mxu0
    %v2979 = vadd.f32 %v541, %v2978
    %v2980 = vpop.f32.mrb[0].mxu0
    %v2981 = vadd.f32 %v545, %v2980
    %v2982 = vpop.f32.mrb[0].mxu0
    %v2983 = vadd.f32 %v541, %v2982
    %v2984 = vpop.f32.mrb[0].mxu0
    %v2985 = vadd.f32 %v545, %v2984
    %2986 = vdwg.mxu0
    %2987 = vmatprep.subr.bf16.mxu0 %v1643
    %2988 = vmatpush1.bf16.msra.mxu0 %v1642
    %2989 = vmatprep.subr.bf16.mxu0 %v1655
    %2990 = vmatpush1.bf16.msra.mxu0 %v1654
    %2991 = vmatprep.subr.bf16.mxu0 %v1667
    %2992 = vmatpush1.bf16.msra.mxu0 %v1666
    %2993 = vmatprep.subr.bf16.mxu0 %v1679
    %2994 = vmatpush1.bf16.msra.mxu0 %v1678
    %2995 = vmatprep.subr.bf16.mxu0 %v1691
    %2996 = vmatpush1.bf16.msra.mxu0 %v1690
    %2997 = vmatprep.subr.bf16.mxu0 %v1703
    %2998 = vmatpush1.bf16.msra.mxu0 %v1702
    %2999 = vmatprep.subr.bf16.mxu0 %v1715
    %3000 = vmatpush1.bf16.msra.mxu0 %v1714
    %3001 = vmatprep.subr.bf16.mxu0 %v1727
    %3002 = vmatpush1.bf16.msra.mxu0 %v1726
    %3003 = vmatprep.subr.bf16.mxu0 0
    %3004 = vmatpush1.bf16.msra.mxu0 0
    %3005 = vmatprep.subr.bf16.mxu0 0
    %3006 = vmatpush1.bf16.msra.mxu0 0
    %3007 = vmatprep.subr.bf16.mxu0 0
    %3008 = vmatpush1.bf16.msra.mxu0 0
    %3009 = vmatprep.subr.bf16.mxu0 0
    %3010 = vmatpush1.bf16.msra.mxu0 0
    %3011 = vmatprep.subr.bf16.mxu0 0
    %3012 = vmatpush1.bf16.msra.mxu0 0
    %3013 = vmatprep.subr.bf16.mxu0 0
    %3014 = vmatpush1.bf16.msra.mxu0 0
    %3015 = vmatprep.subr.bf16.mxu0 0
    %3016 = vmatpush1.bf16.msra.mxu0 0
    %3017 = vmatprep.subr.bf16.mxu0 0
    %3018 = vmatpush1.bf16.msra.mxu0 0
    %3019 = vmatprep.mubr.bf16.mxu0 0
    %3020 = vmatmul.mubr.bf16.gmra.mrb[0].mxu0 %v184
    %v3021 = vpop.f32.mrb[0].mxu0
    %v3022 = vadd.f32 %v2829, %v3021
    %v3023 = vpop.f32.mrb[0].mxu0
    %v3024 = vadd.f32 %v2831, %v3023
    %v3025 = vpop.f32.mrb[0].mxu0
    %v3026 = vadd.f32 %v2833, %v3025
    %v3027 = vpop.f32.mrb[0].mxu0
    %v3028 = vadd.f32 %v2835, %v3027
    %3029 = vmatprep.mubr.bf16.mxu0 0
    %3030 = vmatmul.mubr.bf16.gmra.mrb[0].mxu0 %v187
    %v3031 = vpop.f32.mrb[0].mxu0
    %v3032 = vadd.f32 %v2839, %v3031
    %v3033 = vpop.f32.mrb[0].mxu0
    %v3034 = vadd.f32 %v2841, %v3033
    %v3035 = vpop.f32.mrb[0].mxu0
    %v3036 = vadd.f32 %v2843, %v3035
    %v3037 = vpop.f32.mrb[0].mxu0
    %v3038 = vadd.f32 %v2845, %v3037
    %3039 = vmatprep.mubr.bf16.mxu0 0
    %3040 = vmatmul.mubr.bf16.gmra.mrb[0].mxu0 %v190
    %v3041 = vpop.f32.mrb[0].mxu0
    %v3042 = vadd.f32 %v2849, %v3041
    %v3043 = vpop.f32.mrb[0].mxu0
    %v3044 = vadd.f32 %v2851, %v3043
    %v3045 = vpop.f32.mrb[0].mxu0
    %v3046 = vadd.f32 %v2853, %v3045
    %v3047 = vpop.f32.mrb[0].mxu0
    %v3048 = vadd.f32 %v2855, %v3047
    %3049 = vmatprep.mubr.bf16.mxu0 0
    %3050 = vmatmul.mubr.bf16.gmra.mrb[0].mxu0 %v193
    %v3051 = vpop.f32.mrb[0].mxu0
    %v3052 = vadd.f32 %v2859, %v3051
    %v3053 = vpop.f32.mrb[0].mxu0
    %v3054 = vadd.f32 %v2861, %v3053
    %v3055 = vpop.f32.mrb[0].mxu0
    %v3056 = vadd.f32 %v2863, %v3055
    %v3057 = vpop.f32.mrb[0].mxu0
    %v3058 = vadd.f32 %v2865, %v3057
    %3059 = vmatprep.mubr.bf16.mxu0 0
    %3060 = vmatmul.mubr.bf16.gmra.mrb[0].mxu0 %v196
    %v3061 = vpop.f32.mrb[0].mxu0
    %v3062 = vadd.f32 %v2869, %v3061
    %v3063 = vpop.f32.mrb[0].mxu0
    %v3064 = vadd.f32 %v2871, %v3063
    %v3065 = vpop.f32.mrb[0].mxu0
    %v3066 = vadd.f32 %v2873, %v3065
    %v3067 = vpop.f32.mrb[0].mxu0
    %v3068 = vadd.f32 %v2875, %v3067
    %3069 = vmatprep.mubr.bf16.mxu0 0
    %3070 = vmatmul.mubr.bf16.gmra.mrb[0].mxu0 %v199
    %v3071 = vpop.f32.mrb[0].mxu0
    %v3072 = vadd.f32 %v2879, %v3071
    %v3073 = vpop.f32.mrb[0].mxu0
    %v3074 = vadd.f32 %v2881, %v3073
    %v3075 = vpop.f32.mrb[0].mxu0
    %v3076 = vadd.f32 %v2883, %v3075
    %v3077 = vpop.f32.mrb[0].mxu0
    %v3078 = vadd.f32 %v2885, %v3077
    %3079 = vmatprep.mubr.bf16.mxu0 0
    %3080 = vmatmul.mubr.bf16.gmra.mrb[0].mxu0 %v202
    %v3081 = vpop.f32.mrb[0].mxu0
    %v3082 = vadd.f32 %v2889, %v3081
    %v3083 = vpop.f32.mrb[0].mxu0
    %v3084 = vadd.f32 %v2891, %v3083
    %v3085 = vpop.f32.mrb[0].mxu0
    %v3086 = vadd.f32 %v2893, %v3085
    %v3087 = vpop.f32.mrb[0].mxu0
    %v3088 = vadd.f32 %v2895, %v3087
    %3089 = vmatprep.mubr.bf16.mxu0 0
    %3090 = vmatmul.mubr.bf16.gmra.mrb[0].mxu0 %v205
    %v3091 = vpop.f32.mrb[0].mxu0
    %v3092 = vadd.f32 %v2899, %v3091
    %v3093 = vpop.f32.mrb[0].mxu0
    %v3094 = vadd.f32 %v2901, %v3093
    %v3095 = vpop.f32.mrb[0].mxu0
    %v3096 = vadd.f32 %v2903, %v3095
    %v3097 = vpop.f32.mrb[0].mxu0
    %v3098 = vadd.f32 %v2905, %v3097
    %3099 = vmatprep.mubr.bf16.mxu0 0
    %3100 = vmatmul.mubr.bf16.gmra.mrb[0].mxu0 %v208
    %v3101 = vpop.f32.mrb[0].mxu0
    %v3102 = vadd.f32 %v2909, %v3101
    %v3103 = vpop.f32.mrb[0].mxu0
    %v3104 = vadd.f32 %v2911, %v3103
    %v3105 = vpop.f32.mrb[0].mxu0
    %v3106 = vadd.f32 %v2913, %v3105
    %v3107 = vpop.f32.mrb[0].mxu0
    %v3108 = vadd.f32 %v2915, %v3107
    %3109 = vmatprep.mubr.bf16.mxu0 0
    %3110 = vmatmul.mubr.bf16.gmra.mrb[0].mxu0 %v211
    %v3111 = vpop.f32.mrb[0].mxu0
    %v3112 = vadd.f32 %v2919, %v3111
    %v3113 = vpop.f32.mrb[0].mxu0
    %v3114 = vadd.f32 %v2921, %v3113
    %v3115 = vpop.f32.mrb[0].mxu0
    %v3116 = vadd.f32 %v2923, %v3115
    %v3117 = vpop.f32.mrb[0].mxu0
    %v3118 = vadd.f32 %v2925, %v3117
    %3119 = vmatprep.mubr.bf16.mxu0 0
    %3120 = vmatmul.mubr.bf16.gmra.mrb[0].mxu0 %v214
    %v3121 = vpop.f32.mrb[0].mxu0
    %v3122 = vadd.f32 %v2929, %v3121
    %v3123 = vpop.f32.mrb[0].mxu0
    %v3124 = vadd.f32 %v2931, %v3123
    %v3125 = vpop.f32.mrb[0].mxu0
    %v3126 = vadd.f32 %v2933, %v3125
    %v3127 = vpop.f32.mrb[0].mxu0
    %v3128 = vadd.f32 %v2935, %v3127
    %3129 = vmatprep.mubr.bf16.mxu0 0
    %3130 = vmatmul.mubr.bf16.gmra.mrb[0].mxu0 %v217
    %v3131 = vpop.f32.mrb[0].mxu0
    %v3132 = vadd.f32 %v2939, %v3131
    %v3133 = vpop.f32.mrb[0].mxu0
    %v3134 = vadd.f32 %v2941, %v3133
    %v3135 = vpop.f32.mrb[0].mxu0
    %v3136 = vadd.f32 %v2943, %v3135
    %v3137 = vpop.f32.mrb[0].mxu0
    %v3138 = vadd.f32 %v2945, %v3137
    %3139 = vmatprep.mubr.bf16.mxu0 0
    %3140 = vmatmul.mubr.bf16.gmra.mrb[0].mxu0 %v220
    %v3141 = vpop.f32.mrb[0].mxu0
    %v3142 = vadd.f32 %v2949, %v3141
    %v3143 = vpop.f32.mrb[0].mxu0
    %v3144 = vadd.f32 %v2951, %v3143
    %v3145 = vpop.f32.mrb[0].mxu0
    %v3146 = vadd.f32 %v2953, %v3145
    %v3147 = vpop.f32.mrb[0].mxu0
    %v3148 = vadd.f32 %v2955, %v3147
    %3149 = vmatprep.mubr.bf16.mxu0 0
    %3150 = vmatmul.mubr.bf16.gmra.mrb[0].mxu0 %v223
    %v3151 = vpop.f32.mrb[0].mxu0
    %v3152 = vadd.f32 %v2959, %v3151
    %v3153 = vpop.f32.mrb[0].mxu0
    %v3154 = vadd.f32 %v2961, %v3153
    %v3155 = vpop.f32.mrb[0].mxu0
    %v3156 = vadd.f32 %v2963, %v3155
    %v3157 = vpop.f32.mrb[0].mxu0
    %v3158 = vadd.f32 %v2965, %v3157
    %3159 = vmatprep.mubr.bf16.mxu0 0
    %3160 = vmatmul.mubr.bf16.gmra.mrb[0].mxu0 %v226
    %v3161 = vpop.f32.mrb[0].mxu0
    %v3162 = vadd.f32 %v2969, %v3161
    %v3163 = vpop.f32.mrb[0].mxu0
    %v3164 = vadd.f32 %v2971, %v3163
    %v3165 = vpop.f32.mrb[0].mxu0
    %v3166 = vadd.f32 %v2973, %v3165
    %v3167 = vpop.f32.mrb[0].mxu0
    %v3168 = vadd.f32 %v2975, %v3167
    %3169 = vmatprep.mubr.bf16.mxu0 0
    %3170 = vmatmul.mubr.bf16.gmra.mrb[0].mxu0 %v229
    %v3171 = vpop.f32.mrb[0].mxu0
    %v3172 = vadd.f32 %v2979, %v3171
    %v3173 = vpop.f32.mrb[0].mxu0
    %v3174 = vadd.f32 %v2981, %v3173
    %v3175 = vpop.f32.mrb[0].mxu0
    %v3176 = vadd.f32 %v2983, %v3175
    %v3177 = vpop.f32.mrb[0].mxu0
    %v3178 = vadd.f32 %v2985, %v3177
    %3179 = vdwg.mxu0
    %3180 = vmatprep.subr.bf16.mxu0 %v1453
    %3181 = vmatpush1.bf16.msra.mxu0 %v1452
    %3182 = vmatprep.subr.bf16.mxu0 %v1465
    %3183 = vmatpush1.bf16.msra.mxu0 %v1464
    %3184 = vmatprep.subr.bf16.mxu0 %v1477
    %3185 = vmatpush1.bf16.msra.mxu0 %v1476
    %3186 = vmatprep.subr.bf16.mxu0 %v1489
    %3187 = vmatpush1.bf16.msra.mxu0 %v1488
    %3188 = vmatprep.subr.bf16.mxu0 %v1501
    %3189 = vmatpush1.bf16.msra.mxu0 %v1500
    %3190 = vmatprep.subr.bf16.mxu0 %v1513
    %3191 = vmatpush1.bf16.msra.mxu0 %v1512
    %3192 = vmatprep.subr.bf16.mxu0 %v1525
    %3193 = vmatpush1.bf16.msra.mxu0 %v1524
    %3194 = vmatprep.subr.bf16.mxu0 %v1537
    %3195 = vmatpush1.bf16.msra.mxu0 %v1536
    %3196 = vmatprep.subr.bf16.mxu0 %v1549
    %3197 = vmatpush1.bf16.msra.mxu0 %v1548
    %3198 = vmatprep.subr.bf16.mxu0 %v1561
    %3199 = vmatpush1.bf16.msra.mxu0 %v1560
    %3200 = vmatprep.subr.bf16.mxu0 %v1573
    %3201 = vmatpush1.bf16.msra.mxu0 %v1572
    %3202 = vmatprep.subr.bf16.mxu0 %v1585
    %3203 = vmatpush1.bf16.msra.mxu0 %v1584
    %3204 = vmatprep.subr.bf16.mxu0 %v1597
    %3205 = vmatpush1.bf16.msra.mxu0 %v1596
    %3206 = vmatprep.subr.bf16.mxu0 %v1609
    %3207 = vmatpush1.bf16.msra.mxu0 %v1608
    %3208 = vmatprep.subr.bf16.mxu0 %v1621
    %3209 = vmatpush1.bf16.msra.mxu0 %v1620
    %3210 = vmatprep.subr.bf16.mxu0 %v1633
    %3211 = vmatpush1.bf16.msra.mxu0 %v1632
    %3212 = vmatprep.mubr.bf16.mxu0 %v183
    %3213 = vmatmul.mubr.bf16.gmra.mrb[0].mxu0 %v182
    %v3214 = vpop.f32.mrb[0].mxu0
    %v3215 = vadd.f32 %v549, %v3214
    %v3216 = vpop.f32.mrb[0].mxu0
    %v3217 = vadd.f32 %v553, %v3216
    %v3218 = vpop.f32.mrb[0].mxu0
    %v3219 = vadd.f32 %v549, %v3218
    %v3220 = vpop.f32.mrb[0].mxu0
    %v3221 = vadd.f32 %v553, %v3220
    %3222 = vmatprep.mubr.bf16.mxu0 %v186
    %3223 = vmatmul.mubr.bf16.gmra.mrb[0].mxu0 %v185
    %v3224 = vpop.f32.mrb[0].mxu0
    %v3225 = vadd.f32 %v549, %v3224
    %v3226 = vpop.f32.mrb[0].mxu0
    %v3227 = vadd.f32 %v553, %v3226
    %v3228 = vpop.f32.mrb[0].mxu0
    %v3229 = vadd.f32 %v549, %v3228
    %v3230 = vpop.f32.mrb[0].mxu0
    %v3231 = vadd.f32 %v553, %v3230
    %3232 = vmatprep.mubr.bf16.mxu0 %v189
    %3233 = vmatmul.mubr.bf16.gmra.mrb[0].mxu0 %v188
    %v3234 = vpop.f32.mrb[0].mxu0
    %v3235 = vadd.f32 %v549, %v3234
    %v3236 = vpop.f32.mrb[0].mxu0
    %v3237 = vadd.f32 %v553, %v3236
    %v3238 = vpop.f32.mrb[0].mxu0
    %v3239 = vadd.f32 %v549, %v3238
    %v3240 = vpop.f32.mrb[0].mxu0
    %v3241 = vadd.f32 %v553, %v3240
    %3242 = vmatprep.mubr.bf16.mxu0 %v192
    %3243 = vmatmul.mubr.bf16.gmra.mrb[0].mxu0 %v191
    %v3244 = vpop.f32.mrb[0].mxu0
    %v3245 = vadd.f32 %v549, %v3244
    %v3246 = vpop.f32.mrb[0].mxu0
    %v3247 = vadd.f32 %v553, %v3246
    %v3248 = vpop.f32.mrb[0].mxu0
    %v3249 = vadd.f32 %v549, %v3248
    %v3250 = vpop.f32.mrb[0].mxu0
    %v3251 = vadd.f32 %v553, %v3250
    %3252 = vmatprep.mubr.bf16.mxu0 %v195
    %3253 = vmatmul.mubr.bf16.gmra.mrb[0].mxu0 %v194
    %v3254 = vpop.f32.mrb[0].mxu0
    %v3255 = vadd.f32 %v549, %v3254
    %v3256 = vpop.f32.mrb[0].mxu0
    %v3257 = vadd.f32 %v553, %v3256
    %v3258 = vpop.f32.mrb[0].mxu0
    %v3259 = vadd.f32 %v549, %v3258
    %v3260 = vpop.f32.mrb[0].mxu0
    %v3261 = vadd.f32 %v553, %v3260
    %3262 = vmatprep.mubr.bf16.mxu0 %v198
    %3263 = vmatmul.mubr.bf16.gmra.mrb[0].mxu0 %v197
    %v3264 = vpop.f32.mrb[0].mxu0
    %v3265 = vadd.f32 %v549, %v3264
    %v3266 = vpop.f32.mrb[0].mxu0
    %v3267 = vadd.f32 %v553, %v3266
    %v3268 = vpop.f32.mrb[0].mxu0
    %v3269 = vadd.f32 %v549, %v3268
    %v3270 = vpop.f32.mrb[0].mxu0
    %v3271 = vadd.f32 %v553, %v3270
    %3272 = vmatprep.mubr.bf16.mxu0 %v201
    %3273 = vmatmul.mubr.bf16.gmra.mrb[0].mxu0 %v200
    %v3274 = vpop.f32.mrb[0].mxu0
    %v3275 = vadd.f32 %v549, %v3274
    %v3276 = vpop.f32.mrb[0].mxu0
    %v3277 = vadd.f32 %v553, %v3276
    %v3278 = vpop.f32.mrb[0].mxu0
    %v3279 = vadd.f32 %v549, %v3278
    %v3280 = vpop.f32.mrb[0].mxu0
    %v3281 = vadd.f32 %v553, %v3280
    %3282 = vmatprep.mubr.bf16.mxu0 %v204
    %3283 = vmatmul.mubr.bf16.gmra.mrb[0].mxu0 %v203
    %v3284 = vpop.f32.mrb[0].mxu0
    %v3285 = vadd.f32 %v549, %v3284
    %v3286 = vpop.f32.mrb[0].mxu0
    %v3287 = vadd.f32 %v553, %v3286
    %v3288 = vpop.f32.mrb[0].mxu0
    %v3289 = vadd.f32 %v549, %v3288
    %v3290 = vpop.f32.mrb[0].mxu0
    %v3291 = vadd.f32 %v553, %v3290
    %3292 = vmatprep.mubr.bf16.mxu0 %v207
    %3293 = vmatmul.mubr.bf16.gmra.mrb[0].mxu0 %v206
    %v3294 = vpop.f32.mrb[0].mxu0
    %v3295 = vadd.f32 %v549, %v3294
    %v3296 = vpop.f32.mrb[0].mxu0
    %v3297 = vadd.f32 %v553, %v3296
    %v3298 = vpop.f32.mrb[0].mxu0
    %v3299 = vadd.f32 %v549, %v3298
    %v3300 = vpop.f32.mrb[0].mxu0
    %v3301 = vadd.f32 %v553, %v3300
    %3302 = vmatprep.mubr.bf16.mxu0 %v210
    %3303 = vmatmul.mubr.bf16.gmra.mrb[0].mxu0 %v209
    %v3304 = vpop.f32.mrb[0].mxu0
    %v3305 = vadd.f32 %v549, %v3304
    %v3306 = vpop.f32.mrb[0].mxu0
    %v3307 = vadd.f32 %v553, %v3306
    %v3308 = vpop.f32.mrb[0].mxu0
    %v3309 = vadd.f32 %v549, %v3308
    %v3310 = vpop.f32.mrb[0].mxu0
    %v3311 = vadd.f32 %v553, %v3310
    %3312 = vmatprep.mubr.bf16.mxu0 %v213
    %3313 = vmatmul.mubr.bf16.gmra.mrb[0].mxu0 %v212
    %v3314 = vpop.f32.mrb[0].mxu0
    %v3315 = vadd.f32 %v549, %v3314
    %v3316 = vpop.f32.mrb[0].mxu0
    %v3317 = vadd.f32 %v553, %v3316
    %v3318 = vpop.f32.mrb[0].mxu0
    %v3319 = vadd.f32 %v549, %v3318
    %v3320 = vpop.f32.mrb[0].mxu0
    %v3321 = vadd.f32 %v553, %v3320
    %3322 = vmatprep.mubr.bf16.mxu0 %v216
    %3323 = vmatmul.mubr.bf16.gmra.mrb[0].mxu0 %v215
    %v3324 = vpop.f32.mrb[0].mxu0
    %v3325 = vadd.f32 %v549, %v3324
    %v3326 = vpop.f32.mrb[0].mxu0
    %v3327 = vadd.f32 %v553, %v3326
    %v3328 = vpop.f32.mrb[0].mxu0
    %v3329 = vadd.f32 %v549, %v3328
    %v3330 = vpop.f32.mrb[0].mxu0
    %v3331 = vadd.f32 %v553, %v3330
    %3332 = vmatprep.mubr.bf16.mxu0 %v219
    %3333 = vmatmul.mubr.bf16.gmra.mrb[0].mxu0 %v218
    %v3334 = vpop.f32.mrb[0].mxu0
    %v3335 = vadd.f32 %v549, %v3334
    %v3336 = vpop.f32.mrb[0].mxu0
    %v3337 = vadd.f32 %v553, %v3336
    %v3338 = vpop.f32.mrb[0].mxu0
    %v3339 = vadd.f32 %v549, %v3338
    %v3340 = vpop.f32.mrb[0].mxu0
    %v3341 = vadd.f32 %v553, %v3340
    %3342 = vmatprep.mubr.bf16.mxu0 %v222
    %3343 = vmatmul.mubr.bf16.gmra.mrb[0].mxu0 %v221
    %v3344 = vpop.f32.mrb[0].mxu0
    %v3345 = vadd.f32 %v549, %v3344
    %v3346 = vpop.f32.mrb[0].mxu0
    %v3347 = vadd.f32 %v553, %v3346
    %v3348 = vpop.f32.mrb[0].mxu0
    %v3349 = vadd.f32 %v549, %v3348
    %v3350 = vpop.f32.mrb[0].mxu0
    %v3351 = vadd.f32 %v553, %v3350
    %3352 = vmatprep.mubr.bf16.mxu0 %v225
    %3353 = vmatmul.mubr.bf16.gmra.mrb[0].mxu0 %v224
    %v3354 = vpop.f32.mrb[0].mxu0
    %v3355 = vadd.f32 %v549, %v3354
    %v3356 = vpop.f32.mrb[0].mxu0
    %v3357 = vadd.f32 %v553, %v3356
    %v3358 = vpop.f32.mrb[0].mxu0
    %v3359 = vadd.f32 %v549, %v3358
    %v3360 = vpop.f32.mrb[0].mxu0
    %v3361 = vadd.f32 %v553, %v3360
    %3362 = vmatprep.mubr.bf16.mxu0 %v228
    %3363 = vmatmul.mubr.bf16.gmra.mrb[0].mxu0 %v227
    %v3364 = vpop.f32.mrb[0].mxu0
    %v3365 = vadd.f32 %v549, %v3364
    %v3366 = vpop.f32.mrb[0].mxu0
    %v3367 = vadd.f32 %v553, %v3366
    %v3368 = vpop.f32.mrb[0].mxu0
    %v3369 = vadd.f32 %v549, %v3368
    %v3370 = vpop.f32.mrb[0].mxu0
    %v3371 = vadd.f32 %v553, %v3370
    %3372 = vdwg.mxu0
    %3373 = vmatprep.subr.bf16.mxu0 %v1645
    %3374 = vmatpush1.bf16.msra.mxu0 %v1644
    %3375 = vmatprep.subr.bf16.mxu0 %v1657
    %3376 = vmatpush1.bf16.msra.mxu0 %v1656
    %3377 = vmatprep.subr.bf16.mxu0 %v1669
    %3378 = vmatpush1.bf16.msra.mxu0 %v1668
    %3379 = vmatprep.subr.bf16.mxu0 %v1681
    %3380 = vmatpush1.bf16.msra.mxu0 %v1680
    %3381 = vmatprep.subr.bf16.mxu0 %v1693
    %3382 = vmatpush1.bf16.msra.mxu0 %v1692
    %3383 = vmatprep.subr.bf16.mxu0 %v1705
    %3384 = vmatpush1.bf16.msra.mxu0 %v1704
    %3385 = vmatprep.subr.bf16.mxu0 %v1717
    %3386 = vmatpush1.bf16.msra.mxu0 %v1716
    %3387 = vmatprep.subr.bf16.mxu0 %v1729
    %3388 = vmatpush1.bf16.msra.mxu0 %v1728
    %3389 = vmatprep.subr.bf16.mxu0 0
    %3390 = vmatpush1.bf16.msra.mxu0 0
    %3391 = vmatprep.subr.bf16.mxu0 0
    %3392 = vmatpush1.bf16.msra.mxu0 0
    %3393 = vmatprep.subr.bf16.mxu0 0
    %3394 = vmatpush1.bf16.msra.mxu0 0
    %3395 = vmatprep.subr.bf16.mxu0 0
    %3396 = vmatpush1.bf16.msra.mxu0 0
    %3397 = vmatprep.subr.bf16.mxu0 0
    %3398 = vmatpush1.bf16.msra.mxu0 0
    %3399 = vmatprep.subr.bf16.mxu0 0
    %3400 = vmatpush1.bf16.msra.mxu0 0
    %3401 = vmatprep.subr.bf16.mxu0 0
    %3402 = vmatpush1.bf16.msra.mxu0 0
    %3403 = vmatprep.subr.bf16.mxu0 0
    %3404 = vmatpush1.bf16.msra.mxu0 0
    %3405 = vmatprep.mubr.bf16.mxu0 0
    %3406 = vmatmul.mubr.bf16.gmra.mrb[0].mxu0 %v184
    %v3407 = vpop.f32.mrb[0].mxu0
    %v3408 = vadd.f32 %v3215, %v3407
    %v3409 = vpop.f32.mrb[0].mxu0
    %v3410 = vadd.f32 %v3217, %v3409
    %v3411 = vpop.f32.mrb[0].mxu0
    %v3412 = vadd.f32 %v3219, %v3411
    %v3413 = vpop.f32.mrb[0].mxu0
    %v3414 = vadd.f32 %v3221, %v3413
    %3415 = vmatprep.mubr.bf16.mxu0 0
    %3416 = vmatmul.mubr.bf16.gmra.mrb[0].mxu0 %v187
    %v3417 = vpop.f32.mrb[0].mxu0
    %v3418 = vadd.f32 %v3225, %v3417
    %v3419 = vpop.f32.mrb[0].mxu0
    %v3420 = vadd.f32 %v3227, %v3419
    %v3421 = vpop.f32.mrb[0].mxu0
    %v3422 = vadd.f32 %v3229, %v3421
    %v3423 = vpop.f32.mrb[0].mxu0
    %v3424 = vadd.f32 %v3231, %v3423
    %3425 = vmatprep.mubr.bf16.mxu0 0
    %3426 = vmatmul.mubr.bf16.gmra.mrb[0].mxu0 %v190
    %v3427 = vpop.f32.mrb[0].mxu0
    %v3428 = vadd.f32 %v3235, %v3427
    %v3429 = vpop.f32.mrb[0].mxu0
    %v3430 = vadd.f32 %v3237, %v3429
    %v3431 = vpop.f32.mrb[0].mxu0
    %v3432 = vadd.f32 %v3239, %v3431
    %v3433 = vpop.f32.mrb[0].mxu0
    %v3434 = vadd.f32 %v3241, %v3433
    %3435 = vmatprep.mubr.bf16.mxu0 0
    %3436 = vmatmul.mubr.bf16.gmra.mrb[0].mxu0 %v193
    %v3437 = vpop.f32.mrb[0].mxu0
    %v3438 = vadd.f32 %v3245, %v3437
    %v3439 = vpop.f32.mrb[0].mxu0
    %v3440 = vadd.f32 %v3247, %v3439
    %v3441 = vpop.f32.mrb[0].mxu0
    %v3442 = vadd.f32 %v3249, %v3441
    %v3443 = vpop.f32.mrb[0].mxu0
    %v3444 = vadd.f32 %v3251, %v3443
    %3445 = vmatprep.mubr.bf16.mxu0 0
    %3446 = vmatmul.mubr.bf16.gmra.mrb[0].mxu0 %v196
    %v3447 = vpop.f32.mrb[0].mxu0
    %v3448 = vadd.f32 %v3255, %v3447
    %v3449 = vpop.f32.mrb[0].mxu0
    %v3450 = vadd.f32 %v3257, %v3449
    %v3451 = vpop.f32.mrb[0].mxu0
    %v3452 = vadd.f32 %v3259, %v3451
    %v3453 = vpop.f32.mrb[0].mxu0
    %v3454 = vadd.f32 %v3261, %v3453
    %3455 = vmatprep.mubr.bf16.mxu0 0
    %3456 = vmatmul.mubr.bf16.gmra.mrb[0].mxu0 %v199
    %v3457 = vpop.f32.mrb[0].mxu0
    %v3458 = vadd.f32 %v3265, %v3457
    %v3459 = vpop.f32.mrb[0].mxu0
    %v3460 = vadd.f32 %v3267, %v3459
    %v3461 = vpop.f32.mrb[0].mxu0
    %v3462 = vadd.f32 %v3269, %v3461
    %v3463 = vpop.f32.mrb[0].mxu0
    %v3464 = vadd.f32 %v3271, %v3463
    %3465 = vmatprep.mubr.bf16.mxu0 0
    %3466 = vmatmul.mubr.bf16.gmra.mrb[0].mxu0 %v202
    %v3467 = vpop.f32.mrb[0].mxu0
    %v3468 = vadd.f32 %v3275, %v3467
    %v3469 = vpop.f32.mrb[0].mxu0
    %v3470 = vadd.f32 %v3277, %v3469
    %v3471 = vpop.f32.mrb[0].mxu0
    %v3472 = vadd.f32 %v3279, %v3471
    %v3473 = vpop.f32.mrb[0].mxu0
    %v3474 = vadd.f32 %v3281, %v3473
    %3475 = vmatprep.mubr.bf16.mxu0 0
    %3476 = vmatmul.mubr.bf16.gmra.mrb[0].mxu0 %v205
    %v3477 = vpop.f32.mrb[0].mxu0
    %v3478 = vadd.f32 %v3285, %v3477
    %v3479 = vpop.f32.mrb[0].mxu0
    %v3480 = vadd.f32 %v3287, %v3479
    %v3481 = vpop.f32.mrb[0].mxu0
    %v3482 = vadd.f32 %v3289, %v3481
    %v3483 = vpop.f32.mrb[0].mxu0
    %v3484 = vadd.f32 %v3291, %v3483
    %3485 = vmatprep.mubr.bf16.mxu0 0
    %3486 = vmatmul.mubr.bf16.gmra.mrb[0].mxu0 %v208
    %v3487 = vpop.f32.mrb[0].mxu0
    %v3488 = vadd.f32 %v3295, %v3487
    %v3489 = vpop.f32.mrb[0].mxu0
    %v3490 = vadd.f32 %v3297, %v3489
    %v3491 = vpop.f32.mrb[0].mxu0
    %v3492 = vadd.f32 %v3299, %v3491
    %v3493 = vpop.f32.mrb[0].mxu0
    %v3494 = vadd.f32 %v3301, %v3493
    %3495 = vmatprep.mubr.bf16.mxu0 0
    %3496 = vmatmul.mubr.bf16.gmra.mrb[0].mxu0 %v211
    %v3497 = vpop.f32.mrb[0].mxu0
    %v3498 = vadd.f32 %v3305, %v3497
    %v3499 = vpop.f32.mrb[0].mxu0
    %v3500 = vadd.f32 %v3307, %v3499
    %v3501 = vpop.f32.mrb[0].mxu0
    %v3502 = vadd.f32 %v3309, %v3501
    %v3503 = vpop.f32.mrb[0].mxu0
    %v3504 = vadd.f32 %v3311, %v3503
    %3505 = vmatprep.mubr.bf16.mxu0 0
    %3506 = vmatmul.mubr.bf16.gmra.mrb[0].mxu0 %v214
    %v3507 = vpop.f32.mrb[0].mxu0
    %v3508 = vadd.f32 %v3315, %v3507
    %v3509 = vpop.f32.mrb[0].mxu0
    %v3510 = vadd.f32 %v3317, %v3509
    %v3511 = vpop.f32.mrb[0].mxu0
    %v3512 = vadd.f32 %v3319, %v3511
    %v3513 = vpop.f32.mrb[0].mxu0
    %v3514 = vadd.f32 %v3321, %v3513
    %3515 = vmatprep.mubr.bf16.mxu0 0
    %3516 = vmatmul.mubr.bf16.gmra.mrb[0].mxu0 %v217
    %v3517 = vpop.f32.mrb[0].mxu0
    %v3518 = vadd.f32 %v3325, %v3517
    %v3519 = vpop.f32.mrb[0].mxu0
    %v3520 = vadd.f32 %v3327, %v3519
    %v3521 = vpop.f32.mrb[0].mxu0
    %v3522 = vadd.f32 %v3329, %v3521
    %v3523 = vpop.f32.mrb[0].mxu0
    %v3524 = vadd.f32 %v3331, %v3523
    %3525 = vmatprep.mubr.bf16.mxu0 0
    %3526 = vmatmul.mubr.bf16.gmra.mrb[0].mxu0 %v220
    %v3527 = vpop.f32.mrb[0].mxu0
    %v3528 = vadd.f32 %v3335, %v3527
    %v3529 = vpop.f32.mrb[0].mxu0
    %v3530 = vadd.f32 %v3337, %v3529
    %v3531 = vpop.f32.mrb[0].mxu0
    %v3532 = vadd.f32 %v3339, %v3531
    %v3533 = vpop.f32.mrb[0].mxu0
    %v3534 = vadd.f32 %v3341, %v3533
    %3535 = vmatprep.mubr.bf16.mxu0 0
    %3536 = vmatmul.mubr.bf16.gmra.mrb[0].mxu0 %v223
    %v3537 = vpop.f32.mrb[0].mxu0
    %v3538 = vadd.f32 %v3345, %v3537
    %v3539 = vpop.f32.mrb[0].mxu0
    %v3540 = vadd.f32 %v3347, %v3539
    %v3541 = vpop.f32.mrb[0].mxu0
    %v3542 = vadd.f32 %v3349, %v3541
    %v3543 = vpop.f32.mrb[0].mxu0
    %v3544 = vadd.f32 %v3351, %v3543
    %3545 = vmatprep.mubr.bf16.mxu0 0
    %3546 = vmatmul.mubr.bf16.gmra.mrb[0].mxu0 %v226
    %v3547 = vpop.f32.mrb[0].mxu0
    %v3548 = vadd.f32 %v3355, %v3547
    %v3549 = vpop.f32.mrb[0].mxu0
    %v3550 = vadd.f32 %v3357, %v3549
    %v3551 = vpop.f32.mrb[0].mxu0
    %v3552 = vadd.f32 %v3359, %v3551
    %v3553 = vpop.f32.mrb[0].mxu0
    %v3554 = vadd.f32 %v3361, %v3553
    %3555 = vmatprep.mubr.bf16.mxu0 0
    %3556 = vmatmul.mubr.bf16.gmra.mrb[0].mxu0 %v229
    %v3557 = vpop.f32.mrb[0].mxu0
    %v3558 = vadd.f32 %v3365, %v3557
    %v3559 = vpop.f32.mrb[0].mxu0
    %v3560 = vadd.f32 %v3367, %v3559
    %v3561 = vpop.f32.mrb[0].mxu0
    %v3562 = vadd.f32 %v3369, %v3561
    %v3563 = vpop.f32.mrb[0].mxu0
    %v3564 = vadd.f32 %v3371, %v3563
    %3565 = vdwg.mxu0
    %3566 = vmatprep.subr.bf16.mxu0 %v1455
    %3567 = vmatpush1.bf16.msra.mxu0 %v1454
    %3568 = vmatprep.subr.bf16.mxu0 %v1467
    %3569 = vmatpush1.bf16.msra.mxu0 %v1466
    %3570 = vmatprep.subr.bf16.mxu0 %v1479
    %3571 = vmatpush1.bf16.msra.mxu0 %v1478
    %3572 = vmatprep.subr.bf16.mxu0 %v1491
    %3573 = vmatpush1.bf16.msra.mxu0 %v1490
    %3574 = vmatprep.subr.bf16.mxu0 %v1503
    %3575 = vmatpush1.bf16.msra.mxu0 %v1502
    %3576 = vmatprep.subr.bf16.mxu0 %v1515
    %3577 = vmatpush1.bf16.msra.mxu0 %v1514
    %3578 = vmatprep.subr.bf16.mxu0 %v1527
    %3579 = vmatpush1.bf16.msra.mxu0 %v1526
    %3580 = vmatprep.subr.bf16.mxu0 %v1539
    %3581 = vmatpush1.bf16.msra.mxu0 %v1538
    %3582 = vmatprep.subr.bf16.mxu0 %v1551
    %3583 = vmatpush1.bf16.msra.mxu0 %v1550
    %3584 = vmatprep.subr.bf16.mxu0 %v1563
    %3585 = vmatpush1.bf16.msra.mxu0 %v1562
    %3586 = vmatprep.subr.bf16.mxu0 %v1575
    %3587 = vmatpush1.bf16.msra.mxu0 %v1574
    %3588 = vmatprep.subr.bf16.mxu0 %v1587
    %3589 = vmatpush1.bf16.msra.mxu0 %v1586
    %3590 = vmatprep.subr.bf16.mxu0 %v1599
    %3591 = vmatpush1.bf16.msra.mxu0 %v1598
    %3592 = vmatprep.subr.bf16.mxu0 %v1611
    %3593 = vmatpush1.bf16.msra.mxu0 %v1610
    %3594 = vmatprep.subr.bf16.mxu0 %v1623
    %3595 = vmatpush1.bf16.msra.mxu0 %v1622
    %3596 = vmatprep.subr.bf16.mxu0 %v1635
    %3597 = vmatpush1.bf16.msra.mxu0 %v1634
    %3598 = vmatprep.mubr.bf16.mxu0 %v183
    %3599 = vmatmul.mubr.bf16.gmra.mrb[0].mxu0 %v182
    %v3600 = vpop.f32.mrb[0].mxu0
    %v3601 = vadd.f32 %v557, %v3600
    %v3602 = vpop.f32.mrb[0].mxu0
    %v3603 = vadd.f32 %v561, %v3602
    %v3604 = vpop.f32.mrb[0].mxu0
    %v3605 = vadd.f32 %v557, %v3604
    %v3606 = vpop.f32.mrb[0].mxu0
    %v3607 = vadd.f32 %v561, %v3606
    %3608 = vmatprep.mubr.bf16.mxu0 %v186
    %3609 = vmatmul.mubr.bf16.gmra.mrb[0].mxu0 %v185
    %v3610 = vpop.f32.mrb[0].mxu0
    %v3611 = vadd.f32 %v557, %v3610
    %v3612 = vpop.f32.mrb[0].mxu0
    %v3613 = vadd.f32 %v561, %v3612
    %v3614 = vpop.f32.mrb[0].mxu0
    %v3615 = vadd.f32 %v557, %v3614
    %v3616 = vpop.f32.mrb[0].mxu0
    %v3617 = vadd.f32 %v561, %v3616
    %3618 = vmatprep.mubr.bf16.mxu0 %v189
    %3619 = vmatmul.mubr.bf16.gmra.mrb[0].mxu0 %v188
    %v3620 = vpop.f32.mrb[0].mxu0
    %v3621 = vadd.f32 %v557, %v3620
    %v3622 = vpop.f32.mrb[0].mxu0
    %v3623 = vadd.f32 %v561, %v3622
    %v3624 = vpop.f32.mrb[0].mxu0
    %v3625 = vadd.f32 %v557, %v3624
    %v3626 = vpop.f32.mrb[0].mxu0
    %v3627 = vadd.f32 %v561, %v3626
    %3628 = vmatprep.mubr.bf16.mxu0 %v192
    %3629 = vmatmul.mubr.bf16.gmra.mrb[0].mxu0 %v191
    %v3630 = vpop.f32.mrb[0].mxu0
    %v3631 = vadd.f32 %v557, %v3630
    %v3632 = vpop.f32.mrb[0].mxu0
    %v3633 = vadd.f32 %v561, %v3632
    %v3634 = vpop.f32.mrb[0].mxu0
    %v3635 = vadd.f32 %v557, %v3634
    %v3636 = vpop.f32.mrb[0].mxu0
    %v3637 = vadd.f32 %v561, %v3636
    %3638 = vmatprep.mubr.bf16.mxu0 %v195
    %3639 = vmatmul.mubr.bf16.gmra.mrb[0].mxu0 %v194
    %v3640 = vpop.f32.mrb[0].mxu0
    %v3641 = vadd.f32 %v557, %v3640
    %v3642 = vpop.f32.mrb[0].mxu0
    %v3643 = vadd.f32 %v561, %v3642
    %v3644 = vpop.f32.mrb[0].mxu0
    %v3645 = vadd.f32 %v557, %v3644
    %v3646 = vpop.f32.mrb[0].mxu0
    %v3647 = vadd.f32 %v561, %v3646
    %3648 = vmatprep.mubr.bf16.mxu0 %v198
    %3649 = vmatmul.mubr.bf16.gmra.mrb[0].mxu0 %v197
    %v3650 = vpop.f32.mrb[0].mxu0
    %v3651 = vadd.f32 %v557, %v3650
    %v3652 = vpop.f32.mrb[0].mxu0
    %v3653 = vadd.f32 %v561, %v3652
    %v3654 = vpop.f32.mrb[0].mxu0
    %v3655 = vadd.f32 %v557, %v3654
    %v3656 = vpop.f32.mrb[0].mxu0
    %v3657 = vadd.f32 %v561, %v3656
    %3658 = vmatprep.mubr.bf16.mxu0 %v201
    %3659 = vmatmul.mubr.bf16.gmra.mrb[0].mxu0 %v200
    %v3660 = vpop.f32.mrb[0].mxu0
    %v3661 = vadd.f32 %v557, %v3660
    %v3662 = vpop.f32.mrb[0].mxu0
    %v3663 = vadd.f32 %v561, %v3662
    %v3664 = vpop.f32.mrb[0].mxu0
    %v3665 = vadd.f32 %v557, %v3664
    %v3666 = vpop.f32.mrb[0].mxu0
    %v3667 = vadd.f32 %v561, %v3666
    %3668 = vmatprep.mubr.bf16.mxu0 %v204
    %3669 = vmatmul.mubr.bf16.gmra.mrb[0].mxu0 %v203
    %v3670 = vpop.f32.mrb[0].mxu0
    %v3671 = vadd.f32 %v557, %v3670
    %v3672 = vpop.f32.mrb[0].mxu0
    %v3673 = vadd.f32 %v561, %v3672
    %v3674 = vpop.f32.mrb[0].mxu0
    %v3675 = vadd.f32 %v557, %v3674
    %v3676 = vpop.f32.mrb[0].mxu0
    %v3677 = vadd.f32 %v561, %v3676
    %3678 = vmatprep.mubr.bf16.mxu0 %v207
    %3679 = vmatmul.mubr.bf16.gmra.mrb[0].mxu0 %v206
    %v3680 = vpop.f32.mrb[0].mxu0
    %v3681 = vadd.f32 %v557, %v3680
    %v3682 = vpop.f32.mrb[0].mxu0
    %v3683 = vadd.f32 %v561, %v3682
    %v3684 = vpop.f32.mrb[0].mxu0
    %v3685 = vadd.f32 %v557, %v3684
    %v3686 = vpop.f32.mrb[0].mxu0
    %v3687 = vadd.f32 %v561, %v3686
    %3688 = vmatprep.mubr.bf16.mxu0 %v210
    %3689 = vmatmul.mubr.bf16.gmra.mrb[0].mxu0 %v209
    %v3690 = vpop.f32.mrb[0].mxu0
    %v3691 = vadd.f32 %v557, %v3690
    %v3692 = vpop.f32.mrb[0].mxu0
    %v3693 = vadd.f32 %v561, %v3692
    %v3694 = vpop.f32.mrb[0].mxu0
    %v3695 = vadd.f32 %v557, %v3694
    %v3696 = vpop.f32.mrb[0].mxu0
    %v3697 = vadd.f32 %v561, %v3696
    %3698 = vmatprep.mubr.bf16.mxu0 %v213
    %3699 = vmatmul.mubr.bf16.gmra.mrb[0].mxu0 %v212
    %v3700 = vpop.f32.mrb[0].mxu0
    %v3701 = vadd.f32 %v557, %v3700
    %v3702 = vpop.f32.mrb[0].mxu0
    %v3703 = vadd.f32 %v561, %v3702
    %v3704 = vpop.f32.mrb[0].mxu0
    %v3705 = vadd.f32 %v557, %v3704
    %v3706 = vpop.f32.mrb[0].mxu0
    %v3707 = vadd.f32 %v561, %v3706
    %3708 = vmatprep.mubr.bf16.mxu0 %v216
    %3709 = vmatmul.mubr.bf16.gmra.mrb[0].mxu0 %v215
    %v3710 = vpop.f32.mrb[0].mxu0
    %v3711 = vadd.f32 %v557, %v3710
    %v3712 = vpop.f32.mrb[0].mxu0
    %v3713 = vadd.f32 %v561, %v3712
    %v3714 = vpop.f32.mrb[0].mxu0
    %v3715 = vadd.f32 %v557, %v3714
    %v3716 = vpop.f32.mrb[0].mxu0
    %v3717 = vadd.f32 %v561, %v3716
    %3718 = vmatprep.mubr.bf16.mxu0 %v219
    %3719 = vmatmul.mubr.bf16.gmra.mrb[0].mxu0 %v218
    %v3720 = vpop.f32.mrb[0].mxu0
    %v3721 = vadd.f32 %v557, %v3720
    %v3722 = vpop.f32.mrb[0].mxu0
    %v3723 = vadd.f32 %v561, %v3722
    %v3724 = vpop.f32.mrb[0].mxu0
    %v3725 = vadd.f32 %v557, %v3724
    %v3726 = vpop.f32.mrb[0].mxu0
    %v3727 = vadd.f32 %v561, %v3726
    %3728 = vmatprep.mubr.bf16.mxu0 %v222
    %3729 = vmatmul.mubr.bf16.gmra.mrb[0].mxu0 %v221
    %v3730 = vpop.f32.mrb[0].mxu0
    %v3731 = vadd.f32 %v557, %v3730
    %v3732 = vpop.f32.mrb[0].mxu0
    %v3733 = vadd.f32 %v561, %v3732
    %v3734 = vpop.f32.mrb[0].mxu0
    %v3735 = vadd.f32 %v557, %v3734
    %v3736 = vpop.f32.mrb[0].mxu0
    %v3737 = vadd.f32 %v561, %v3736
    %3738 = vmatprep.mubr.bf16.mxu0 %v225
    %3739 = vmatmul.mubr.bf16.gmra.mrb[0].mxu0 %v224
    %v3740 = vpop.f32.mrb[0].mxu0
    %v3741 = vadd.f32 %v557, %v3740
    %v3742 = vpop.f32.mrb[0].mxu0
    %v3743 = vadd.f32 %v561, %v3742
    %v3744 = vpop.f32.mrb[0].mxu0
    %v3745 = vadd.f32 %v557, %v3744
    %v3746 = vpop.f32.mrb[0].mxu0
    %v3747 = vadd.f32 %v561, %v3746
    %3748 = vmatprep.mubr.bf16.mxu0 %v228
    %3749 = vmatmul.mubr.bf16.gmra.mrb[0].mxu0 %v227
    %v3750 = vpop.f32.mrb[0].mxu0
    %v3751 = vadd.f32 %v557, %v3750
    %v3752 = vpop.f32.mrb[0].mxu0
    %v3753 = vadd.f32 %v561, %v3752
    %v3754 = vpop.f32.mrb[0].mxu0
    %v3755 = vadd.f32 %v557, %v3754
    %v3756 = vpop.f32.mrb[0].mxu0
    %v3757 = vadd.f32 %v561, %v3756
    %3758 = vdwg.mxu0
    %3759 = vmatprep.subr.bf16.mxu0 %v1647
    %3760 = vmatpush1.bf16.msra.mxu0 %v1646
    %3761 = vmatprep.subr.bf16.mxu0 %v1659
    %3762 = vmatpush1.bf16.msra.mxu0 %v1658
    %3763 = vmatprep.subr.bf16.mxu0 %v1671
    %3764 = vmatpush1.bf16.msra.mxu0 %v1670
    %3765 = vmatprep.subr.bf16.mxu0 %v1683
    %3766 = vmatpush1.bf16.msra.mxu0 %v1682
    %3767 = vmatprep.subr.bf16.mxu0 %v1695
    %3768 = vmatpush1.bf16.msra.mxu0 %v1694
    %3769 = vmatprep.subr.bf16.mxu0 %v1707
    %3770 = vmatpush1.bf16.msra.mxu0 %v1706
    %3771 = vmatprep.subr.bf16.mxu0 %v1719
    %3772 = vmatpush1.bf16.msra.mxu0 %v1718
    %3773 = vmatprep.subr.bf16.mxu0 %v1731
    %3774 = vmatpush1.bf16.msra.mxu0 %v1730
    %3775 = vmatprep.subr.bf16.mxu0 0
    %3776 = vmatpush1.bf16.msra.mxu0 0
    %3777 = vmatprep.subr.bf16.mxu0 0
    %3778 = vmatpush1.bf16.msra.mxu0 0
    %3779 = vmatprep.subr.bf16.mxu0 0
    %3780 = vmatpush1.bf16.msra.mxu0 0
    %3781 = vmatprep.subr.bf16.mxu0 0
    %3782 = vmatpush1.bf16.msra.mxu0 0
    %3783 = vmatprep.subr.bf16.mxu0 0
    %3784 = vmatpush1.bf16.msra.mxu0 0
    %3785 = vmatprep.subr.bf16.mxu0 0
    %3786 = vmatpush1.bf16.msra.mxu0 0
    %3787 = vmatprep.subr.bf16.mxu0 0
    %3788 = vmatpush1.bf16.msra.mxu0 0
    %3789 = vmatprep.subr.bf16.mxu0 0
    %3790 = vmatpush1.bf16.msra.mxu0 0
    %3791 = vmatprep.mubr.bf16.mxu0 0
    %3792 = vmatmul.mubr.bf16.gmra.mrb[0].mxu0 %v184
    %v3793 = vpop.f32.mrb[0].mxu0
    %v3794 = vadd.f32 %v3601, %v3793
    %v3795 = vpop.f32.mrb[0].mxu0
    %v3796 = vadd.f32 %v3603, %v3795
    %v3797 = vpop.f32.mrb[0].mxu0
    %v3798 = vadd.f32 %v3605, %v3797
    %v3799 = vpop.f32.mrb[0].mxu0
    %v3800 = vadd.f32 %v3607, %v3799
    %3801 = vmatprep.mubr.bf16.mxu0 0
    %3802 = vmatmul.mubr.bf16.gmra.mrb[0].mxu0 %v187
    %v3803 = vpop.f32.mrb[0].mxu0
    %v3804 = vadd.f32 %v3611, %v3803
    %v3805 = vpop.f32.mrb[0].mxu0
    %v3806 = vadd.f32 %v3613, %v3805
    %v3807 = vpop.f32.mrb[0].mxu0
    %v3808 = vadd.f32 %v3615, %v3807
    %v3809 = vpop.f32.mrb[0].mxu0
    %v3810 = vadd.f32 %v3617, %v3809
    %3811 = vmatprep.mubr.bf16.mxu0 0
    %3812 = vmatmul.mubr.bf16.gmra.mrb[0].mxu0 %v190
    %v3813 = vpop.f32.mrb[0].mxu0
    %v3814 = vadd.f32 %v3621, %v3813
    %v3815 = vpop.f32.mrb[0].mxu0
    %v3816 = vadd.f32 %v3623, %v3815
    %v3817 = vpop.f32.mrb[0].mxu0
    %v3818 = vadd.f32 %v3625, %v3817
    %v3819 = vpop.f32.mrb[0].mxu0
    %v3820 = vadd.f32 %v3627, %v3819
    %3821 = vmatprep.mubr.bf16.mxu0 0
    %3822 = vmatmul.mubr.bf16.gmra.mrb[0].mxu0 %v193
    %v3823 = vpop.f32.mrb[0].mxu0
    %v3824 = vadd.f32 %v3631, %v3823
    %v3825 = vpop.f32.mrb[0].mxu0
    %v3826 = vadd.f32 %v3633, %v3825
    %v3827 = vpop.f32.mrb[0].mxu0
    %v3828 = vadd.f32 %v3635, %v3827
    %v3829 = vpop.f32.mrb[0].mxu0
    %v3830 = vadd.f32 %v3637, %v3829
    %3831 = vmatprep.mubr.bf16.mxu0 0
    %3832 = vmatmul.mubr.bf16.gmra.mrb[0].mxu0 %v196
    %v3833 = vpop.f32.mrb[0].mxu0
    %v3834 = vadd.f32 %v3641, %v3833
    %v3835 = vpop.f32.mrb[0].mxu0
    %v3836 = vadd.f32 %v3643, %v3835
    %v3837 = vpop.f32.mrb[0].mxu0
    %v3838 = vadd.f32 %v3645, %v3837
    %v3839 = vpop.f32.mrb[0].mxu0
    %v3840 = vadd.f32 %v3647, %v3839
    %3841 = vmatprep.mubr.bf16.mxu0 0
    %3842 = vmatmul.mubr.bf16.gmra.mrb[0].mxu0 %v199
    %v3843 = vpop.f32.mrb[0].mxu0
    %v3844 = vadd.f32 %v3651, %v3843
    %v3845 = vpop.f32.mrb[0].mxu0
    %v3846 = vadd.f32 %v3653, %v3845
    %v3847 = vpop.f32.mrb[0].mxu0
    %v3848 = vadd.f32 %v3655, %v3847
    %v3849 = vpop.f32.mrb[0].mxu0
    %v3850 = vadd.f32 %v3657, %v3849
    %3851 = vmatprep.mubr.bf16.mxu0 0
    %3852 = vmatmul.mubr.bf16.gmra.mrb[0].mxu0 %v202
    %v3853 = vpop.f32.mrb[0].mxu0
    %v3854 = vadd.f32 %v3661, %v3853
    %v3855 = vpop.f32.mrb[0].mxu0
    %v3856 = vadd.f32 %v3663, %v3855
    %v3857 = vpop.f32.mrb[0].mxu0
    %v3858 = vadd.f32 %v3665, %v3857
    %v3859 = vpop.f32.mrb[0].mxu0
    %v3860 = vadd.f32 %v3667, %v3859
    %3861 = vmatprep.mubr.bf16.mxu0 0
    %3862 = vmatmul.mubr.bf16.gmra.mrb[0].mxu0 %v205
    %v3863 = vpop.f32.mrb[0].mxu0
    %v3864 = vadd.f32 %v3671, %v3863
    %v3865 = vpop.f32.mrb[0].mxu0
    %v3866 = vadd.f32 %v3673, %v3865
    %v3867 = vpop.f32.mrb[0].mxu0
    %v3868 = vadd.f32 %v3675, %v3867
    %v3869 = vpop.f32.mrb[0].mxu0
    %v3870 = vadd.f32 %v3677, %v3869
    %3871 = vmatprep.mubr.bf16.mxu0 0
    %3872 = vmatmul.mubr.bf16.gmra.mrb[0].mxu0 %v208
    %v3873 = vpop.f32.mrb[0].mxu0
    %v3874 = vadd.f32 %v3681, %v3873
    %v3875 = vpop.f32.mrb[0].mxu0
    %v3876 = vadd.f32 %v3683, %v3875
    %v3877 = vpop.f32.mrb[0].mxu0
    %v3878 = vadd.f32 %v3685, %v3877
    %v3879 = vpop.f32.mrb[0].mxu0
    %v3880 = vadd.f32 %v3687, %v3879
    %3881 = vmatprep.mubr.bf16.mxu0 0
    %3882 = vmatmul.mubr.bf16.gmra.mrb[0].mxu0 %v211
    %v3883 = vpop.f32.mrb[0].mxu0
    %v3884 = vadd.f32 %v3691, %v3883
    %v3885 = vpop.f32.mrb[0].mxu0
    %v3886 = vadd.f32 %v3693, %v3885
    %v3887 = vpop.f32.mrb[0].mxu0
    %v3888 = vadd.f32 %v3695, %v3887
    %v3889 = vpop.f32.mrb[0].mxu0
    %v3890 = vadd.f32 %v3697, %v3889
    %3891 = vmatprep.mubr.bf16.mxu0 0
    %3892 = vmatmul.mubr.bf16.gmra.mrb[0].mxu0 %v214
    %v3893 = vpop.f32.mrb[0].mxu0
    %v3894 = vadd.f32 %v3701, %v3893
    %v3895 = vpop.f32.mrb[0].mxu0
    %v3896 = vadd.f32 %v3703, %v3895
    %v3897 = vpop.f32.mrb[0].mxu0
    %v3898 = vadd.f32 %v3705, %v3897
    %v3899 = vpop.f32.mrb[0].mxu0
    %v3900 = vadd.f32 %v3707, %v3899
    %3901 = vmatprep.mubr.bf16.mxu0 0
    %3902 = vmatmul.mubr.bf16.gmra.mrb[0].mxu0 %v217
    %v3903 = vpop.f32.mrb[0].mxu0
    %v3904 = vadd.f32 %v3711, %v3903
    %v3905 = vpop.f32.mrb[0].mxu0
    %v3906 = vadd.f32 %v3713, %v3905
    %v3907 = vpop.f32.mrb[0].mxu0
    %v3908 = vadd.f32 %v3715, %v3907
    %v3909 = vpop.f32.mrb[0].mxu0
    %v3910 = vadd.f32 %v3717, %v3909
    %3911 = vmatprep.mubr.bf16.mxu0 0
    %3912 = vmatmul.mubr.bf16.gmra.mrb[0].mxu0 %v220
    %v3913 = vpop.f32.mrb[0].mxu0
    %v3914 = vadd.f32 %v3721, %v3913
    %v3915 = vpop.f32.mrb[0].mxu0
    %v3916 = vadd.f32 %v3723, %v3915
    %v3917 = vpop.f32.mrb[0].mxu0
    %v3918 = vadd.f32 %v3725, %v3917
    %v3919 = vpop.f32.mrb[0].mxu0
    %v3920 = vadd.f32 %v3727, %v3919
    %3921 = vmatprep.mubr.bf16.mxu0 0
    %3922 = vmatmul.mubr.bf16.gmra.mrb[0].mxu0 %v223
    %v3923 = vpop.f32.mrb[0].mxu0
    %v3924 = vadd.f32 %v3731, %v3923
    %v3925 = vpop.f32.mrb[0].mxu0
    %v3926 = vadd.f32 %v3733, %v3925
    %v3927 = vpop.f32.mrb[0].mxu0
    %v3928 = vadd.f32 %v3735, %v3927
    %v3929 = vpop.f32.mrb[0].mxu0
    %v3930 = vadd.f32 %v3737, %v3929
    %3931 = vmatprep.mubr.bf16.mxu0 0
    %3932 = vmatmul.mubr.bf16.gmra.mrb[0].mxu0 %v226
    %v3933 = vpop.f32.mrb[0].mxu0
    %v3934 = vadd.f32 %v3741, %v3933
    %v3935 = vpop.f32.mrb[0].mxu0
    %v3936 = vadd.f32 %v3743, %v3935
    %v3937 = vpop.f32.mrb[0].mxu0
    %v3938 = vadd.f32 %v3745, %v3937
    %v3939 = vpop.f32.mrb[0].mxu0
    %v3940 = vadd.f32 %v3747, %v3939
    %3941 = vmatprep.mubr.bf16.mxu0 0
    %3942 = vmatmul.mubr.bf16.gmra.mrb[0].mxu0 %v229
    %v3943 = vpop.f32.mrb[0].mxu0
    %v3944 = vadd.f32 %v3751, %v3943
    %v3945 = vpop.f32.mrb[0].mxu0
    %v3946 = vadd.f32 %v3753, %v3945
    %v3947 = vpop.f32.mrb[0].mxu0
    %v3948 = vadd.f32 %v3755, %v3947
    %v3949 = vpop.f32.mrb[0].mxu0
    %v3950 = vadd.f32 %v3757, %v3949
    %3951 = vdwg.mxu0
    %3952 = vmatprep.subr.bf16.mxu0 %v1457
    %3953 = vmatpush1.bf16.msra.mxu0 %v1456
    %3954 = vmatprep.subr.bf16.mxu0 %v1469
    %3955 = vmatpush1.bf16.msra.mxu0 %v1468
    %3956 = vmatprep.subr.bf16.mxu0 %v1481
    %3957 = vmatpush1.bf16.msra.mxu0 %v1480
    %3958 = vmatprep.subr.bf16.mxu0 %v1493
    %3959 = vmatpush1.bf16.msra.mxu0 %v1492
    %3960 = vmatprep.subr.bf16.mxu0 %v1505
    %3961 = vmatpush1.bf16.msra.mxu0 %v1504
    %3962 = vmatprep.subr.bf16.mxu0 %v1517
    %3963 = vmatpush1.bf16.msra.mxu0 %v1516
    %3964 = vmatprep.subr.bf16.mxu0 %v1529
    %3965 = vmatpush1.bf16.msra.mxu0 %v1528
    %3966 = vmatprep.subr.bf16.mxu0 %v1541
    %3967 = vmatpush1.bf16.msra.mxu0 %v1540
    %3968 = vmatprep.subr.bf16.mxu0 %v1553
    %3969 = vmatpush1.bf16.msra.mxu0 %v1552
    %3970 = vmatprep.subr.bf16.mxu0 %v1565
    %3971 = vmatpush1.bf16.msra.mxu0 %v1564
    %3972 = vmatprep.subr.bf16.mxu0 %v1577
    %3973 = vmatpush1.bf16.msra.mxu0 %v1576
    %3974 = vmatprep.subr.bf16.mxu0 %v1589
    %3975 = vmatpush1.bf16.msra.mxu0 %v1588
    %3976 = vmatprep.subr.bf16.mxu0 %v1601
    %3977 = vmatpush1.bf16.msra.mxu0 %v1600
    %3978 = vmatprep.subr.bf16.mxu0 %v1613
    %3979 = vmatpush1.bf16.msra.mxu0 %v1612
    %3980 = vmatprep.subr.bf16.mxu0 %v1625
    %3981 = vmatpush1.bf16.msra.mxu0 %v1624
    %3982 = vmatprep.subr.bf16.mxu0 %v1637
    %3983 = vmatpush1.bf16.msra.mxu0 %v1636
    %3984 = vmatprep.mubr.bf16.mxu0 %v183
    %3985 = vmatmul.mubr.bf16.gmra.mrb[0].mxu0 %v182
    %v3986 = vpop.f32.mrb[0].mxu0
    %v3987 = vadd.f32 %v565, %v3986
    %v3988 = vpop.f32.mrb[0].mxu0
    %v3989 = vadd.f32 %v569, %v3988
    %v3990 = vpop.f32.mrb[0].mxu0
    %v3991 = vadd.f32 %v565, %v3990
    %v3992 = vpop.f32.mrb[0].mxu0
    %v3993 = vadd.f32 %v569, %v3992
    %3994 = vmatprep.mubr.bf16.mxu0 %v186
    %3995 = vmatmul.mubr.bf16.gmra.mrb[0].mxu0 %v185
    %v3996 = vpop.f32.mrb[0].mxu0
    %v3997 = vadd.f32 %v565, %v3996
    %v3998 = vpop.f32.mrb[0].mxu0
    %v3999 = vadd.f32 %v569, %v3998
    %v4000 = vpop.f32.mrb[0].mxu0
    %v4001 = vadd.f32 %v565, %v4000
    %v4002 = vpop.f32.mrb[0].mxu0
    %v4003 = vadd.f32 %v569, %v4002
    %4004 = vmatprep.mubr.bf16.mxu0 %v189
    %4005 = vmatmul.mubr.bf16.gmra.mrb[0].mxu0 %v188
    %v4006 = vpop.f32.mrb[0].mxu0
    %v4007 = vadd.f32 %v565, %v4006
    %v4008 = vpop.f32.mrb[0].mxu0
    %v4009 = vadd.f32 %v569, %v4008
    %v4010 = vpop.f32.mrb[0].mxu0
    %v4011 = vadd.f32 %v565, %v4010
    %v4012 = vpop.f32.mrb[0].mxu0
    %v4013 = vadd.f32 %v569, %v4012
    %4014 = vmatprep.mubr.bf16.mxu0 %v192
    %4015 = vmatmul.mubr.bf16.gmra.mrb[0].mxu0 %v191
    %v4016 = vpop.f32.mrb[0].mxu0
    %v4017 = vadd.f32 %v565, %v4016
    %v4018 = vpop.f32.mrb[0].mxu0
    %v4019 = vadd.f32 %v569, %v4018
    %v4020 = vpop.f32.mrb[0].mxu0
    %v4021 = vadd.f32 %v565, %v4020
    %v4022 = vpop.f32.mrb[0].mxu0
    %v4023 = vadd.f32 %v569, %v4022
    %4024 = vmatprep.mubr.bf16.mxu0 %v195
    %4025 = vmatmul.mubr.bf16.gmra.mrb[0].mxu0 %v194
    %v4026 = vpop.f32.mrb[0].mxu0
    %v4027 = vadd.f32 %v565, %v4026
    %v4028 = vpop.f32.mrb[0].mxu0
    %v4029 = vadd.f32 %v569, %v4028
    %v4030 = vpop.f32.mrb[0].mxu0
    %v4031 = vadd.f32 %v565, %v4030
    %v4032 = vpop.f32.mrb[0].mxu0
    %v4033 = vadd.f32 %v569, %v4032
    %4034 = vmatprep.mubr.bf16.mxu0 %v198
    %4035 = vmatmul.mubr.bf16.gmra.mrb[0].mxu0 %v197
    %v4036 = vpop.f32.mrb[0].mxu0
    %v4037 = vadd.f32 %v565, %v4036
    %v4038 = vpop.f32.mrb[0].mxu0
    %v4039 = vadd.f32 %v569, %v4038
    %v4040 = vpop.f32.mrb[0].mxu0
    %v4041 = vadd.f32 %v565, %v4040
    %v4042 = vpop.f32.mrb[0].mxu0
    %v4043 = vadd.f32 %v569, %v4042
    %4044 = vmatprep.mubr.bf16.mxu0 %v201
    %4045 = vmatmul.mubr.bf16.gmra.mrb[0].mxu0 %v200
    %v4046 = vpop.f32.mrb[0].mxu0
    %v4047 = vadd.f32 %v565, %v4046
    %v4048 = vpop.f32.mrb[0].mxu0
    %v4049 = vadd.f32 %v569, %v4048
    %v4050 = vpop.f32.mrb[0].mxu0
    %v4051 = vadd.f32 %v565, %v4050
    %v4052 = vpop.f32.mrb[0].mxu0
    %v4053 = vadd.f32 %v569, %v4052
    %4054 = vmatprep.mubr.bf16.mxu0 %v204
    %4055 = vmatmul.mubr.bf16.gmra.mrb[0].mxu0 %v203
    %v4056 = vpop.f32.mrb[0].mxu0
    %v4057 = vadd.f32 %v565, %v4056
    %v4058 = vpop.f32.mrb[0].mxu0
    %v4059 = vadd.f32 %v569, %v4058
    %v4060 = vpop.f32.mrb[0].mxu0
    %v4061 = vadd.f32 %v565, %v4060
    %v4062 = vpop.f32.mrb[0].mxu0
    %v4063 = vadd.f32 %v569, %v4062
    %4064 = vmatprep.mubr.bf16.mxu0 %v207
    %4065 = vmatmul.mubr.bf16.gmra.mrb[0].mxu0 %v206
    %v4066 = vpop.f32.mrb[0].mxu0
    %v4067 = vadd.f32 %v565, %v4066
    %v4068 = vpop.f32.mrb[0].mxu0
    %v4069 = vadd.f32 %v569, %v4068
    %v4070 = vpop.f32.mrb[0].mxu0
    %v4071 = vadd.f32 %v565, %v4070
    %v4072 = vpop.f32.mrb[0].mxu0
    %v4073 = vadd.f32 %v569, %v4072
    %4074 = vmatprep.mubr.bf16.mxu0 %v210
    %4075 = vmatmul.mubr.bf16.gmra.mrb[0].mxu0 %v209
    %v4076 = vpop.f32.mrb[0].mxu0
    %v4077 = vadd.f32 %v565, %v4076
    %v4078 = vpop.f32.mrb[0].mxu0
    %v4079 = vadd.f32 %v569, %v4078
    %v4080 = vpop.f32.mrb[0].mxu0
    %v4081 = vadd.f32 %v565, %v4080
    %v4082 = vpop.f32.mrb[0].mxu0
    %v4083 = vadd.f32 %v569, %v4082
    %4084 = vmatprep.mubr.bf16.mxu0 %v213
    %4085 = vmatmul.mubr.bf16.gmra.mrb[0].mxu0 %v212
    %v4086 = vpop.f32.mrb[0].mxu0
    %v4087 = vadd.f32 %v565, %v4086
    %v4088 = vpop.f32.mrb[0].mxu0
    %v4089 = vadd.f32 %v569, %v4088
    %v4090 = vpop.f32.mrb[0].mxu0
    %v4091 = vadd.f32 %v565, %v4090
    %v4092 = vpop.f32.mrb[0].mxu0
    %v4093 = vadd.f32 %v569, %v4092
    %4094 = vmatprep.mubr.bf16.mxu0 %v216
    %4095 = vmatmul.mubr.bf16.gmra.mrb[0].mxu0 %v215
    %v4096 = vpop.f32.mrb[0].mxu0
    %v4097 = vadd.f32 %v565, %v4096
    %v4098 = vpop.f32.mrb[0].mxu0
    %v4099 = vadd.f32 %v569, %v4098
    %v4100 = vpop.f32.mrb[0].mxu0
    %v4101 = vadd.f32 %v565, %v4100
    %v4102 = vpop.f32.mrb[0].mxu0
    %v4103 = vadd.f32 %v569, %v4102
    %4104 = vmatprep.mubr.bf16.mxu0 %v219
    %4105 = vmatmul.mubr.bf16.gmra.mrb[0].mxu0 %v218
    %v4106 = vpop.f32.mrb[0].mxu0
    %v4107 = vadd.f32 %v565, %v4106
    %v4108 = vpop.f32.mrb[0].mxu0
    %v4109 = vadd.f32 %v569, %v4108
    %v4110 = vpop.f32.mrb[0].mxu0
    %v4111 = vadd.f32 %v565, %v4110
    %v4112 = vpop.f32.mrb[0].mxu0
    %v4113 = vadd.f32 %v569, %v4112
    %4114 = vmatprep.mubr.bf16.mxu0 %v222
    %4115 = vmatmul.mubr.bf16.gmra.mrb[0].mxu0 %v221
    %v4116 = vpop.f32.mrb[0].mxu0
    %v4117 = vadd.f32 %v565, %v4116
    %v4118 = vpop.f32.mrb[0].mxu0
    %v4119 = vadd.f32 %v569, %v4118
    %v4120 = vpop.f32.mrb[0].mxu0
    %v4121 = vadd.f32 %v565, %v4120
    %v4122 = vpop.f32.mrb[0].mxu0
    %v4123 = vadd.f32 %v569, %v4122
    %4124 = vmatprep.mubr.bf16.mxu0 %v225
    %4125 = vmatmul.mubr.bf16.gmra.mrb[0].mxu0 %v224
    %v4126 = vpop.f32.mrb[0].mxu0
    %v4127 = vadd.f32 %v565, %v4126
    %v4128 = vpop.f32.mrb[0].mxu0
    %v4129 = vadd.f32 %v569, %v4128
    %v4130 = vpop.f32.mrb[0].mxu0
    %v4131 = vadd.f32 %v565, %v4130
    %v4132 = vpop.f32.mrb[0].mxu0
    %v4133 = vadd.f32 %v569, %v4132
    %4134 = vmatprep.mubr.bf16.mxu0 %v228
    %4135 = vmatmul.mubr.bf16.gmra.mrb[0].mxu0 %v227
    %v4136 = vpop.f32.mrb[0].mxu0
    %v4137 = vadd.f32 %v565, %v4136
    %v4138 = vpop.f32.mrb[0].mxu0
    %v4139 = vadd.f32 %v569, %v4138
    %v4140 = vpop.f32.mrb[0].mxu0
    %v4141 = vadd.f32 %v565, %v4140
    %v4142 = vpop.f32.mrb[0].mxu0
    %v4143 = vadd.f32 %v569, %v4142
    %4144 = vdwg.mxu0
    %4145 = vmatprep.subr.bf16.mxu0 %v1649
    %4146 = vmatpush1.bf16.msra.mxu0 %v1648
    %4147 = vmatprep.subr.bf16.mxu0 %v1661
    %4148 = vmatpush1.bf16.msra.mxu0 %v1660
    %4149 = vmatprep.subr.bf16.mxu0 %v1673
    %4150 = vmatpush1.bf16.msra.mxu0 %v1672
    %4151 = vmatprep.subr.bf16.mxu0 %v1685
    %4152 = vmatpush1.bf16.msra.mxu0 %v1684
    %4153 = vmatprep.subr.bf16.mxu0 %v1697
    %4154 = vmatpush1.bf16.msra.mxu0 %v1696
    %4155 = vmatprep.subr.bf16.mxu0 %v1709
    %4156 = vmatpush1.bf16.msra.mxu0 %v1708
    %4157 = vmatprep.subr.bf16.mxu0 %v1721
    %4158 = vmatpush1.bf16.msra.mxu0 %v1720
    %4159 = vmatprep.subr.bf16.mxu0 %v1733
    %4160 = vmatpush1.bf16.msra.mxu0 %v1732
    %4161 = vmatprep.subr.bf16.mxu0 0
    %4162 = vmatpush1.bf16.msra.mxu0 0
    %4163 = vmatprep.subr.bf16.mxu0 0
    %4164 = vmatpush1.bf16.msra.mxu0 0
    %4165 = vmatprep.subr.bf16.mxu0 0
    %4166 = vmatpush1.bf16.msra.mxu0 0
    %4167 = vmatprep.subr.bf16.mxu0 0
    %4168 = vmatpush1.bf16.msra.mxu0 0
    %4169 = vmatprep.subr.bf16.mxu0 0
    %4170 = vmatpush1.bf16.msra.mxu0 0
    %4171 = vmatprep.subr.bf16.mxu0 0
    %4172 = vmatpush1.bf16.msra.mxu0 0
    %4173 = vmatprep.subr.bf16.mxu0 0
    %4174 = vmatpush1.bf16.msra.mxu0 0
    %4175 = vmatprep.subr.bf16.mxu0 0
    %4176 = vmatpush1.bf16.msra.mxu0 0
    %4177 = vmatprep.mubr.bf16.mxu0 0
    %4178 = vmatmul.mubr.bf16.gmra.mrb[0].mxu0 %v184
    %v4179 = vpop.f32.mrb[0].mxu0
    %v4180 = vadd.f32 %v3987, %v4179
    %v4181 = vpop.f32.mrb[0].mxu0
    %v4182 = vadd.f32 %v3989, %v4181
    %v4183 = vpop.f32.mrb[0].mxu0
    %v4184 = vadd.f32 %v3991, %v4183
    %v4185 = vpop.f32.mrb[0].mxu0
    %v4186 = vadd.f32 %v3993, %v4185
    %4187 = vmatprep.mubr.bf16.mxu0 0
    %4188 = vmatmul.mubr.bf16.gmra.mrb[0].mxu0 %v187
    %v4189 = vpop.f32.mrb[0].mxu0
    %v4190 = vadd.f32 %v3997, %v4189
    %v4191 = vpop.f32.mrb[0].mxu0
    %v4192 = vadd.f32 %v3999, %v4191
    %v4193 = vpop.f32.mrb[0].mxu0
    %v4194 = vadd.f32 %v4001, %v4193
    %v4195 = vpop.f32.mrb[0].mxu0
    %v4196 = vadd.f32 %v4003, %v4195
    %4197 = vmatprep.mubr.bf16.mxu0 0
    %4198 = vmatmul.mubr.bf16.gmra.mrb[0].mxu0 %v190
    %v4199 = vpop.f32.mrb[0].mxu0
    %v4200 = vadd.f32 %v4007, %v4199
    %v4201 = vpop.f32.mrb[0].mxu0
    %v4202 = vadd.f32 %v4009, %v4201
    %v4203 = vpop.f32.mrb[0].mxu0
    %v4204 = vadd.f32 %v4011, %v4203
    %v4205 = vpop.f32.mrb[0].mxu0
    %v4206 = vadd.f32 %v4013, %v4205
    %4207 = vmatprep.mubr.bf16.mxu0 0
    %4208 = vmatmul.mubr.bf16.gmra.mrb[0].mxu0 %v193
    %v4209 = vpop.f32.mrb[0].mxu0
    %v4210 = vadd.f32 %v4017, %v4209
    %v4211 = vpop.f32.mrb[0].mxu0
    %v4212 = vadd.f32 %v4019, %v4211
    %v4213 = vpop.f32.mrb[0].mxu0
    %v4214 = vadd.f32 %v4021, %v4213
    %v4215 = vpop.f32.mrb[0].mxu0
    %v4216 = vadd.f32 %v4023, %v4215
    %4217 = vmatprep.mubr.bf16.mxu0 0
    %4218 = vmatmul.mubr.bf16.gmra.mrb[0].mxu0 %v196
    %v4219 = vpop.f32.mrb[0].mxu0
    %v4220 = vadd.f32 %v4027, %v4219
    %v4221 = vpop.f32.mrb[0].mxu0
    %v4222 = vadd.f32 %v4029, %v4221
    %v4223 = vpop.f32.mrb[0].mxu0
    %v4224 = vadd.f32 %v4031, %v4223
    %v4225 = vpop.f32.mrb[0].mxu0
    %v4226 = vadd.f32 %v4033, %v4225
    %4227 = vmatprep.mubr.bf16.mxu0 0
    %4228 = vmatmul.mubr.bf16.gmra.mrb[0].mxu0 %v199
    %v4229 = vpop.f32.mrb[0].mxu0
    %v4230 = vadd.f32 %v4037, %v4229
    %v4231 = vpop.f32.mrb[0].mxu0
    %v4232 = vadd.f32 %v4039, %v4231
    %v4233 = vpop.f32.mrb[0].mxu0
    %v4234 = vadd.f32 %v4041, %v4233
    %v4235 = vpop.f32.mrb[0].mxu0
    %v4236 = vadd.f32 %v4043, %v4235
    %4237 = vmatprep.mubr.bf16.mxu0 0
    %4238 = vmatmul.mubr.bf16.gmra.mrb[0].mxu0 %v202
    %v4239 = vpop.f32.mrb[0].mxu0
    %v4240 = vadd.f32 %v4047, %v4239
    %v4241 = vpop.f32.mrb[0].mxu0
    %v4242 = vadd.f32 %v4049, %v4241
    %v4243 = vpop.f32.mrb[0].mxu0
    %v4244 = vadd.f32 %v4051, %v4243
    %v4245 = vpop.f32.mrb[0].mxu0
    %v4246 = vadd.f32 %v4053, %v4245
    %4247 = vmatprep.mubr.bf16.mxu0 0
    %4248 = vmatmul.mubr.bf16.gmra.mrb[0].mxu0 %v205
    %v4249 = vpop.f32.mrb[0].mxu0
    %v4250 = vadd.f32 %v4057, %v4249
    %v4251 = vpop.f32.mrb[0].mxu0
    %v4252 = vadd.f32 %v4059, %v4251
    %v4253 = vpop.f32.mrb[0].mxu0
    %v4254 = vadd.f32 %v4061, %v4253
    %v4255 = vpop.f32.mrb[0].mxu0
    %v4256 = vadd.f32 %v4063, %v4255
    %4257 = vmatprep.mubr.bf16.mxu0 0
    %4258 = vmatmul.mubr.bf16.gmra.mrb[0].mxu0 %v208
    %v4259 = vpop.f32.mrb[0].mxu0
    %v4260 = vadd.f32 %v4067, %v4259
    %v4261 = vpop.f32.mrb[0].mxu0
    %v4262 = vadd.f32 %v4069, %v4261
    %v4263 = vpop.f32.mrb[0].mxu0
    %v4264 = vadd.f32 %v4071, %v4263
    %v4265 = vpop.f32.mrb[0].mxu0
    %v4266 = vadd.f32 %v4073, %v4265
    %4267 = vmatprep.mubr.bf16.mxu0 0
    %4268 = vmatmul.mubr.bf16.gmra.mrb[0].mxu0 %v211
    %v4269 = vpop.f32.mrb[0].mxu0
    %v4270 = vadd.f32 %v4077, %v4269
    %v4271 = vpop.f32.mrb[0].mxu0
    %v4272 = vadd.f32 %v4079, %v4271
    %v4273 = vpop.f32.mrb[0].mxu0
    %v4274 = vadd.f32 %v4081, %v4273
    %v4275 = vpop.f32.mrb[0].mxu0
    %v4276 = vadd.f32 %v4083, %v4275
    %4277 = vmatprep.mubr.bf16.mxu0 0
    %4278 = vmatmul.mubr.bf16.gmra.mrb[0].mxu0 %v214
    %v4279 = vpop.f32.mrb[0].mxu0
    %v4280 = vadd.f32 %v4087, %v4279
    %v4281 = vpop.f32.mrb[0].mxu0
    %v4282 = vadd.f32 %v4089, %v4281
    %v4283 = vpop.f32.mrb[0].mxu0
    %v4284 = vadd.f32 %v4091, %v4283
    %v4285 = vpop.f32.mrb[0].mxu0
    %v4286 = vadd.f32 %v4093, %v4285
    %4287 = vmatprep.mubr.bf16.mxu0 0
    %4288 = vmatmul.mubr.bf16.gmra.mrb[0].mxu0 %v217
    %v4289 = vpop.f32.mrb[0].mxu0
    %v4290 = vadd.f32 %v4097, %v4289
    %v4291 = vpop.f32.mrb[0].mxu0
    %v4292 = vadd.f32 %v4099, %v4291
    %v4293 = vpop.f32.mrb[0].mxu0
    %v4294 = vadd.f32 %v4101, %v4293
    %v4295 = vpop.f32.mrb[0].mxu0
    %v4296 = vadd.f32 %v4103, %v4295
    %4297 = vmatprep.mubr.bf16.mxu0 0
    %4298 = vmatmul.mubr.bf16.gmra.mrb[0].mxu0 %v220
    %v4299 = vpop.f32.mrb[0].mxu0
    %v4300 = vadd.f32 %v4107, %v4299
    %v4301 = vpop.f32.mrb[0].mxu0
    %v4302 = vadd.f32 %v4109, %v4301
    %v4303 = vpop.f32.mrb[0].mxu0
    %v4304 = vadd.f32 %v4111, %v4303
    %v4305 = vpop.f32.mrb[0].mxu0
    %v4306 = vadd.f32 %v4113, %v4305
    %4307 = vmatprep.mubr.bf16.mxu0 0
    %4308 = vmatmul.mubr.bf16.gmra.mrb[0].mxu0 %v223
    %v4309 = vpop.f32.mrb[0].mxu0
    %v4310 = vadd.f32 %v4117, %v4309
    %v4311 = vpop.f32.mrb[0].mxu0
    %v4312 = vadd.f32 %v4119, %v4311
    %v4313 = vpop.f32.mrb[0].mxu0
    %v4314 = vadd.f32 %v4121, %v4313
    %v4315 = vpop.f32.mrb[0].mxu0
    %v4316 = vadd.f32 %v4123, %v4315
    %4317 = vmatprep.mubr.bf16.mxu0 0
    %4318 = vmatmul.mubr.bf16.gmra.mrb[0].mxu0 %v226
    %v4319 = vpop.f32.mrb[0].mxu0
    %v4320 = vadd.f32 %v4127, %v4319
    %v4321 = vpop.f32.mrb[0].mxu0
    %v4322 = vadd.f32 %v4129, %v4321
    %v4323 = vpop.f32.mrb[0].mxu0
    %v4324 = vadd.f32 %v4131, %v4323
    %v4325 = vpop.f32.mrb[0].mxu0
    %v4326 = vadd.f32 %v4133, %v4325
    %4327 = vmatprep.mubr.bf16.mxu0 0
    %4328 = vmatmul.mubr.bf16.gmra.mrb[0].mxu0 %v229
    %v4329 = vpop.f32.mrb[0].mxu0
    %v4330 = vadd.f32 %v4137, %v4329
    %v4331 = vpop.f32.mrb[0].mxu0
    %v4332 = vadd.f32 %v4139, %v4331
    %v4333 = vpop.f32.mrb[0].mxu0
    %v4334 = vadd.f32 %v4141, %v4333
    %v4335 = vpop.f32.mrb[0].mxu0
    %v4336 = vadd.f32 %v4143, %v4335
    %4337 = vdwg.mxu0
    %v4338 = vmax.f32 %v2250, 0.0
    %v4339 = vmax.f32 %v2252, 0.0
    %v4340 = vmax.f32 %v2636, 0.0
    %v4341 = vmax.f32 %v2638, 0.0
    %v4342 = vmax.f32 %v3022, 0.0
    %v4343 = vmax.f32 %v3024, 0.0
    %v4344 = vmax.f32 %v3408, 0.0
    %v4345 = vmax.f32 %v3410, 0.0
    %v4346 = vmax.f32 %v3794, 0.0
    %v4347 = vmax.f32 %v3796, 0.0
    %v4348 = vmax.f32 %v4180, 0.0
    %v4349 = vmax.f32 %v4182, 0.0
    %v4350 = vmax.f32 %v2254, 0.0
    %v4351 = vmax.f32 %v2256, 0.0
    %v4352 = vmax.f32 %v2640, 0.0
    %v4353 = vmax.f32 %v2642, 0.0
    %v4354 = vmax.f32 %v3026, 0.0
    %v4355 = vmax.f32 %v3028, 0.0
    %v4356 = vmax.f32 %v3412, 0.0
    %v4357 = vmax.f32 %v3414, 0.0
    %v4358 = vmax.f32 %v3798, 0.0
    %v4359 = vmax.f32 %v3800, 0.0
    %v4360 = vmax.f32 %v4184, 0.0
    %v4361 = vmax.f32 %v4186, 0.0
    %v4362 = vmax.f32 %v2260, 0.0
    %v4363 = vmax.f32 %v2262, 0.0
    %v4364 = vmax.f32 %v2646, 0.0
    %v4365 = vmax.f32 %v2648, 0.0
    %v4366 = vmax.f32 %v3032, 0.0
    %v4367 = vmax.f32 %v3034, 0.0
    %v4368 = vmax.f32 %v3418, 0.0
    %v4369 = vmax.f32 %v3420, 0.0
    %v4370 = vmax.f32 %v3804, 0.0
    %v4371 = vmax.f32 %v3806, 0.0
    %v4372 = vmax.f32 %v4190, 0.0
    %v4373 = vmax.f32 %v4192, 0.0
    %v4374 = vmax.f32 %v2264, 0.0
    %v4375 = vmax.f32 %v2266, 0.0
    %v4376 = vmax.f32 %v2650, 0.0
    %v4377 = vmax.f32 %v2652, 0.0
    %v4378 = vmax.f32 %v3036, 0.0
    %v4379 = vmax.f32 %v3038, 0.0
    %v4380 = vmax.f32 %v3422, 0.0
    %v4381 = vmax.f32 %v3424, 0.0
    %v4382 = vmax.f32 %v3808, 0.0
    %v4383 = vmax.f32 %v3810, 0.0
    %v4384 = vmax.f32 %v4194, 0.0
    %v4385 = vmax.f32 %v4196, 0.0
    %v4386 = vmax.f32 %v2270, 0.0
    %v4387 = vmax.f32 %v2272, 0.0
    %v4388 = vmax.f32 %v2656, 0.0
    %v4389 = vmax.f32 %v2658, 0.0
    %v4390 = vmax.f32 %v3042, 0.0
    %v4391 = vmax.f32 %v3044, 0.0
    %v4392 = vmax.f32 %v3428, 0.0
    %v4393 = vmax.f32 %v3430, 0.0
    %v4394 = vmax.f32 %v3814, 0.0
    %v4395 = vmax.f32 %v3816, 0.0
    %v4396 = vmax.f32 %v4200, 0.0
    %v4397 = vmax.f32 %v4202, 0.0
    %v4398 = vmax.f32 %v2274, 0.0
    %v4399 = vmax.f32 %v2276, 0.0
    %v4400 = vmax.f32 %v2660, 0.0
    %v4401 = vmax.f32 %v2662, 0.0
    %v4402 = vmax.f32 %v3046, 0.0
    %v4403 = vmax.f32 %v3048, 0.0
    %v4404 = vmax.f32 %v3432, 0.0
    %v4405 = vmax.f32 %v3434, 0.0
    %v4406 = vmax.f32 %v3818, 0.0
    %v4407 = vmax.f32 %v3820, 0.0
    %v4408 = vmax.f32 %v4204, 0.0
    %v4409 = vmax.f32 %v4206, 0.0
    %v4410 = vmax.f32 %v2280, 0.0
    %v4411 = vmax.f32 %v2282, 0.0
    %v4412 = vmax.f32 %v2666, 0.0
    %v4413 = vmax.f32 %v2668, 0.0
    %v4414 = vmax.f32 %v3052, 0.0
    %v4415 = vmax.f32 %v3054, 0.0
    %v4416 = vmax.f32 %v3438, 0.0
    %v4417 = vmax.f32 %v3440, 0.0
    %v4418 = vmax.f32 %v3824, 0.0
    %v4419 = vmax.f32 %v3826, 0.0
    %v4420 = vmax.f32 %v4210, 0.0
    %v4421 = vmax.f32 %v4212, 0.0
    %v4422 = vmax.f32 %v2284, 0.0
    %v4423 = vmax.f32 %v2286, 0.0
    %v4424 = vmax.f32 %v2670, 0.0
    %v4425 = vmax.f32 %v2672, 0.0
    %v4426 = vmax.f32 %v3056, 0.0
    %v4427 = vmax.f32 %v3058, 0.0
    %v4428 = vmax.f32 %v3442, 0.0
    %v4429 = vmax.f32 %v3444, 0.0
    %v4430 = vmax.f32 %v3828, 0.0
    %v4431 = vmax.f32 %v3830, 0.0
    %v4432 = vmax.f32 %v4214, 0.0
    %v4433 = vmax.f32 %v4216, 0.0
    %v4434 = vmax.f32 %v2290, 0.0
    %v4435 = vmax.f32 %v2292, 0.0
    %v4436 = vmax.f32 %v2676, 0.0
    %v4437 = vmax.f32 %v2678, 0.0
    %v4438 = vmax.f32 %v3062, 0.0
    %v4439 = vmax.f32 %v3064, 0.0
    %v4440 = vmax.f32 %v3448, 0.0
    %v4441 = vmax.f32 %v3450, 0.0
    %v4442 = vmax.f32 %v3834, 0.0
    %v4443 = vmax.f32 %v3836, 0.0
    %v4444 = vmax.f32 %v4220, 0.0
    %v4445 = vmax.f32 %v4222, 0.0
    %v4446 = vmax.f32 %v2294, 0.0
    %v4447 = vmax.f32 %v2296, 0.0
    %v4448 = vmax.f32 %v2680, 0.0
    %v4449 = vmax.f32 %v2682, 0.0
    %v4450 = vmax.f32 %v3066, 0.0
    %v4451 = vmax.f32 %v3068, 0.0
    %v4452 = vmax.f32 %v3452, 0.0
    %v4453 = vmax.f32 %v3454, 0.0
    %v4454 = vmax.f32 %v3838, 0.0
    %v4455 = vmax.f32 %v3840, 0.0
    %v4456 = vmax.f32 %v4224, 0.0
    %v4457 = vmax.f32 %v4226, 0.0
    %v4458 = vmax.f32 %v2300, 0.0
    %v4459 = vmax.f32 %v2302, 0.0
    %v4460 = vmax.f32 %v2686, 0.0
    %v4461 = vmax.f32 %v2688, 0.0
    %v4462 = vmax.f32 %v3072, 0.0
    %v4463 = vmax.f32 %v3074, 0.0
    %v4464 = vmax.f32 %v3458, 0.0
    %v4465 = vmax.f32 %v3460, 0.0
    %v4466 = vmax.f32 %v3844, 0.0
    %v4467 = vmax.f32 %v3846, 0.0
    %v4468 = vmax.f32 %v4230, 0.0
    %v4469 = vmax.f32 %v4232, 0.0
    %v4470 = vmax.f32 %v2304, 0.0
    %v4471 = vmax.f32 %v2306, 0.0
    %v4472 = vmax.f32 %v2690, 0.0
    %v4473 = vmax.f32 %v2692, 0.0
    %v4474 = vmax.f32 %v3076, 0.0
    %v4475 = vmax.f32 %v3078, 0.0
    %v4476 = vmax.f32 %v3462, 0.0
    %v4477 = vmax.f32 %v3464, 0.0
    %v4478 = vmax.f32 %v3848, 0.0
    %v4479 = vmax.f32 %v3850, 0.0
    %v4480 = vmax.f32 %v4234, 0.0
    %v4481 = vmax.f32 %v4236, 0.0
    %v4482 = vmax.f32 %v2310, 0.0
    %v4483 = vmax.f32 %v2312, 0.0
    %v4484 = vmax.f32 %v2696, 0.0
    %v4485 = vmax.f32 %v2698, 0.0
    %v4486 = vmax.f32 %v3082, 0.0
    %v4487 = vmax.f32 %v3084, 0.0
    %v4488 = vmax.f32 %v3468, 0.0
    %v4489 = vmax.f32 %v3470, 0.0
    %v4490 = vmax.f32 %v3854, 0.0
    %v4491 = vmax.f32 %v3856, 0.0
    %v4492 = vmax.f32 %v4240, 0.0
    %v4493 = vmax.f32 %v4242, 0.0
    %v4494 = vmax.f32 %v2314, 0.0
    %v4495 = vmax.f32 %v2316, 0.0
    %v4496 = vmax.f32 %v2700, 0.0
    %v4497 = vmax.f32 %v2702, 0.0
    %v4498 = vmax.f32 %v3086, 0.0
    %v4499 = vmax.f32 %v3088, 0.0
    %v4500 = vmax.f32 %v3472, 0.0
    %v4501 = vmax.f32 %v3474, 0.0
    %v4502 = vmax.f32 %v3858, 0.0
    %v4503 = vmax.f32 %v3860, 0.0
    %v4504 = vmax.f32 %v4244, 0.0
    %v4505 = vmax.f32 %v4246, 0.0
    %v4506 = vmax.f32 %v2320, 0.0
    %v4507 = vmax.f32 %v2322, 0.0
    %v4508 = vmax.f32 %v2706, 0.0
    %v4509 = vmax.f32 %v2708, 0.0
    %v4510 = vmax.f32 %v3092, 0.0
    %v4511 = vmax.f32 %v3094, 0.0
    %v4512 = vmax.f32 %v3478, 0.0
    %v4513 = vmax.f32 %v3480, 0.0
    %v4514 = vmax.f32 %v3864, 0.0
    %v4515 = vmax.f32 %v3866, 0.0
    %v4516 = vmax.f32 %v4250, 0.0
    %v4517 = vmax.f32 %v4252, 0.0
    %v4518 = vmax.f32 %v2324, 0.0
    %v4519 = vmax.f32 %v2326, 0.0
    %v4520 = vmax.f32 %v2710, 0.0
    %v4521 = vmax.f32 %v2712, 0.0
    %v4522 = vmax.f32 %v3096, 0.0
    %v4523 = vmax.f32 %v3098, 0.0
    %v4524 = vmax.f32 %v3482, 0.0
    %v4525 = vmax.f32 %v3484, 0.0
    %v4526 = vmax.f32 %v3868, 0.0
    %v4527 = vmax.f32 %v3870, 0.0
    %v4528 = vmax.f32 %v4254, 0.0
    %v4529 = vmax.f32 %v4256, 0.0
    %v4530 = vmax.f32 %v2330, 0.0
    %v4531 = vmax.f32 %v2332, 0.0
    %v4532 = vmax.f32 %v2716, 0.0
    %v4533 = vmax.f32 %v2718, 0.0
    %v4534 = vmax.f32 %v3102, 0.0
    %v4535 = vmax.f32 %v3104, 0.0
    %v4536 = vmax.f32 %v3488, 0.0
    %v4537 = vmax.f32 %v3490, 0.0
    %v4538 = vmax.f32 %v3874, 0.0
    %v4539 = vmax.f32 %v3876, 0.0
    %v4540 = vmax.f32 %v4260, 0.0
    %v4541 = vmax.f32 %v4262, 0.0
    %v4542 = vmax.f32 %v2334, 0.0
    %v4543 = vmax.f32 %v2336, 0.0
    %v4544 = vmax.f32 %v2720, 0.0
    %v4545 = vmax.f32 %v2722, 0.0
    %v4546 = vmax.f32 %v3106, 0.0
    %v4547 = vmax.f32 %v3108, 0.0
    %v4548 = vmax.f32 %v3492, 0.0
    %v4549 = vmax.f32 %v3494, 0.0
    %v4550 = vmax.f32 %v3878, 0.0
    %v4551 = vmax.f32 %v3880, 0.0
    %v4552 = vmax.f32 %v4264, 0.0
    %v4553 = vmax.f32 %v4266, 0.0
    %v4554 = vmax.f32 %v2340, 0.0
    %v4555 = vmax.f32 %v2342, 0.0
    %v4556 = vmax.f32 %v2726, 0.0
    %v4557 = vmax.f32 %v2728, 0.0
    %v4558 = vmax.f32 %v3112, 0.0
    %v4559 = vmax.f32 %v3114, 0.0
    %v4560 = vmax.f32 %v3498, 0.0
    %v4561 = vmax.f32 %v3500, 0.0
    %v4562 = vmax.f32 %v3884, 0.0
    %v4563 = vmax.f32 %v3886, 0.0
    %v4564 = vmax.f32 %v4270, 0.0
    %v4565 = vmax.f32 %v4272, 0.0
    %v4566 = vmax.f32 %v2344, 0.0
    %v4567 = vmax.f32 %v2346, 0.0
    %v4568 = vmax.f32 %v2730, 0.0
    %v4569 = vmax.f32 %v2732, 0.0
    %v4570 = vmax.f32 %v3116, 0.0
    %v4571 = vmax.f32 %v3118, 0.0
    %v4572 = vmax.f32 %v3502, 0.0
    %v4573 = vmax.f32 %v3504, 0.0
    %v4574 = vmax.f32 %v3888, 0.0
    %v4575 = vmax.f32 %v3890, 0.0
    %v4576 = vmax.f32 %v4274, 0.0
    %v4577 = vmax.f32 %v4276, 0.0
    %v4578 = vmax.f32 %v2350, 0.0
    %v4579 = vmax.f32 %v2352, 0.0
    %v4580 = vmax.f32 %v2736, 0.0
    %v4581 = vmax.f32 %v2738, 0.0
    %v4582 = vmax.f32 %v3122, 0.0
    %v4583 = vmax.f32 %v3124, 0.0
    %v4584 = vmax.f32 %v3508, 0.0
    %v4585 = vmax.f32 %v3510, 0.0
    %v4586 = vmax.f32 %v3894, 0.0
    %v4587 = vmax.f32 %v3896, 0.0
    %v4588 = vmax.f32 %v4280, 0.0
    %v4589 = vmax.f32 %v4282, 0.0
    %v4590 = vmax.f32 %v2354, 0.0
    %v4591 = vmax.f32 %v2356, 0.0
    %v4592 = vmax.f32 %v2740, 0.0
    %v4593 = vmax.f32 %v2742, 0.0
    %v4594 = vmax.f32 %v3126, 0.0
    %v4595 = vmax.f32 %v3128, 0.0
    %v4596 = vmax.f32 %v3512, 0.0
    %v4597 = vmax.f32 %v3514, 0.0
    %v4598 = vmax.f32 %v3898, 0.0
    %v4599 = vmax.f32 %v3900, 0.0
    %v4600 = vmax.f32 %v4284, 0.0
    %v4601 = vmax.f32 %v4286, 0.0
    %v4602 = vmax.f32 %v2360, 0.0
    %v4603 = vmax.f32 %v2362, 0.0
    %v4604 = vmax.f32 %v2746, 0.0
    %v4605 = vmax.f32 %v2748, 0.0
    %v4606 = vmax.f32 %v3132, 0.0
    %v4607 = vmax.f32 %v3134, 0.0
    %v4608 = vmax.f32 %v3518, 0.0
    %v4609 = vmax.f32 %v3520, 0.0
    %v4610 = vmax.f32 %v3904, 0.0
    %v4611 = vmax.f32 %v3906, 0.0
    %v4612 = vmax.f32 %v4290, 0.0
    %v4613 = vmax.f32 %v4292, 0.0
    %v4614 = vmax.f32 %v2364, 0.0
    %v4615 = vmax.f32 %v2366, 0.0
    %v4616 = vmax.f32 %v2750, 0.0
    %v4617 = vmax.f32 %v2752, 0.0
    %v4618 = vmax.f32 %v3136, 0.0
    %v4619 = vmax.f32 %v3138, 0.0
    %v4620 = vmax.f32 %v3522, 0.0
    %v4621 = vmax.f32 %v3524, 0.0
    %v4622 = vmax.f32 %v3908, 0.0
    %v4623 = vmax.f32 %v3910, 0.0
    %v4624 = vmax.f32 %v4294, 0.0
    %v4625 = vmax.f32 %v4296, 0.0
    %v4626 = vmax.f32 %v2370, 0.0
    %v4627 = vmax.f32 %v2372, 0.0
    %v4628 = vmax.f32 %v2756, 0.0
    %v4629 = vmax.f32 %v2758, 0.0
    %v4630 = vmax.f32 %v3142, 0.0
    %v4631 = vmax.f32 %v3144, 0.0
    %v4632 = vmax.f32 %v3528, 0.0
    %v4633 = vmax.f32 %v3530, 0.0
    %v4634 = vmax.f32 %v3914, 0.0
    %v4635 = vmax.f32 %v3916, 0.0
    %v4636 = vmax.f32 %v4300, 0.0
    %v4637 = vmax.f32 %v4302, 0.0
    %v4638 = vmax.f32 %v2374, 0.0
    %v4639 = vmax.f32 %v2376, 0.0
    %v4640 = vmax.f32 %v2760, 0.0
    %v4641 = vmax.f32 %v2762, 0.0
    %v4642 = vmax.f32 %v3146, 0.0
    %v4643 = vmax.f32 %v3148, 0.0
    %v4644 = vmax.f32 %v3532, 0.0
    %v4645 = vmax.f32 %v3534, 0.0
    %v4646 = vmax.f32 %v3918, 0.0
    %v4647 = vmax.f32 %v3920, 0.0
    %v4648 = vmax.f32 %v4304, 0.0
    %v4649 = vmax.f32 %v4306, 0.0
    %v4650 = vmax.f32 %v2380, 0.0
    %v4651 = vmax.f32 %v2382, 0.0
    %v4652 = vmax.f32 %v2766, 0.0
    %v4653 = vmax.f32 %v2768, 0.0
    %v4654 = vmax.f32 %v3152, 0.0
    %v4655 = vmax.f32 %v3154, 0.0
    %v4656 = vmax.f32 %v3538, 0.0
    %v4657 = vmax.f32 %v3540, 0.0
    %v4658 = vmax.f32 %v3924, 0.0
    %v4659 = vmax.f32 %v3926, 0.0
    %v4660 = vmax.f32 %v4310, 0.0
    %v4661 = vmax.f32 %v4312, 0.0
    %v4662 = vmax.f32 %v2384, 0.0
    %v4663 = vmax.f32 %v2386, 0.0
    %v4664 = vmax.f32 %v2770, 0.0
    %v4665 = vmax.f32 %v2772, 0.0
    %v4666 = vmax.f32 %v3156, 0.0
    %v4667 = vmax.f32 %v3158, 0.0
    %v4668 = vmax.f32 %v3542, 0.0
    %v4669 = vmax.f32 %v3544, 0.0
    %v4670 = vmax.f32 %v3928, 0.0
    %v4671 = vmax.f32 %v3930, 0.0
    %v4672 = vmax.f32 %v4314, 0.0
    %v4673 = vmax.f32 %v4316, 0.0
    %v4674 = vmax.f32 %v2390, 0.0
    %v4675 = vmax.f32 %v2392, 0.0
    %v4676 = vmax.f32 %v2776, 0.0
    %v4677 = vmax.f32 %v2778, 0.0
    %v4678 = vmax.f32 %v3162, 0.0
    %v4679 = vmax.f32 %v3164, 0.0
    %v4680 = vmax.f32 %v3548, 0.0
    %v4681 = vmax.f32 %v3550, 0.0
    %v4682 = vmax.f32 %v3934, 0.0
    %v4683 = vmax.f32 %v3936, 0.0
    %v4684 = vmax.f32 %v4320, 0.0
    %v4685 = vmax.f32 %v4322, 0.0
    %v4686 = vmax.f32 %v2394, 0.0
    %v4687 = vmax.f32 %v2396, 0.0
    %v4688 = vmax.f32 %v2780, 0.0
    %v4689 = vmax.f32 %v2782, 0.0
    %v4690 = vmax.f32 %v3166, 0.0
    %v4691 = vmax.f32 %v3168, 0.0
    %v4692 = vmax.f32 %v3552, 0.0
    %v4693 = vmax.f32 %v3554, 0.0
    %v4694 = vmax.f32 %v3938, 0.0
    %v4695 = vmax.f32 %v3940, 0.0
    %v4696 = vmax.f32 %v4324, 0.0
    %v4697 = vmax.f32 %v4326, 0.0
    %v4698 = vmax.f32 %v2400, 0.0
    %v4699 = vmax.f32 %v2402, 0.0
    %v4700 = vmax.f32 %v2786, 0.0
    %v4701 = vmax.f32 %v2788, 0.0
    %v4702 = vmax.f32 %v3172, 0.0
    %v4703 = vmax.f32 %v3174, 0.0
    %v4704 = vmax.f32 %v3558, 0.0
    %v4705 = vmax.f32 %v3560, 0.0
    %v4706 = vmax.f32 %v3944, 0.0
    %v4707 = vmax.f32 %v3946, 0.0
    %v4708 = vmax.f32 %v4330, 0.0
    %v4709 = vmax.f32 %v4332, 0.0
    %v4710 = vmax.f32 %v2404, 0.0
    %v4711 = vmax.f32 %v2406, 0.0
    %v4712 = vmax.f32 %v2790, 0.0
    %v4713 = vmax.f32 %v2792, 0.0
    %v4714 = vmax.f32 %v3176, 0.0
    %v4715 = vmax.f32 %v3178, 0.0
    %v4716 = vmax.f32 %v3562, 0.0
    %v4717 = vmax.f32 %v3564, 0.0
    %v4718 = vmax.f32 %v3948, 0.0
    %v4719 = vmax.f32 %v3950, 0.0
    %v4720 = vmax.f32 %v4334, 0.0
    %v4721 = vmax.f32 %v4336, 0.0
    %v4722 = vpack.c.bf16 %v4350, %v4338
    %v4723 = vpack.c.bf16 %v4351, %v4339
    %v4724 = vpack.c.bf16 %v4352, %v4340
    %v4725 = vpack.c.bf16 %v4353, %v4341
    %v4726 = vpack.c.bf16 %v4354, %v4342
    %v4727 = vpack.c.bf16 %v4355, %v4343
    %v4728 = vpack.c.bf16 %v4356, %v4344
    %v4729 = vpack.c.bf16 %v4357, %v4345
    %v4730 = vpack.c.bf16 %v4358, %v4346
    %v4731 = vpack.c.bf16 %v4359, %v4347
    %v4732 = vpack.c.bf16 %v4360, %v4348
    %v4733 = vpack.c.bf16 %v4361, %v4349
    %v4734 = vpack.c.bf16 %v4374, %v4362
    %v4735 = vpack.c.bf16 %v4375, %v4363
    %v4736 = vpack.c.bf16 %v4376, %v4364
    %v4737 = vpack.c.bf16 %v4377, %v4365
    %v4738 = vpack.c.bf16 %v4378, %v4366
    %v4739 = vpack.c.bf16 %v4379, %v4367
    %v4740 = vpack.c.bf16 %v4380, %v4368
    %v4741 = vpack.c.bf16 %v4381, %v4369
    %v4742 = vpack.c.bf16 %v4382, %v4370
    %v4743 = vpack.c.bf16 %v4383, %v4371
    %v4744 = vpack.c.bf16 %v4384, %v4372
    %v4745 = vpack.c.bf16 %v4385, %v4373
    %v4746 = vpack.c.bf16 %v4398, %v4386
    %v4747 = vpack.c.bf16 %v4399, %v4387
    %v4748 = vpack.c.bf16 %v4400, %v4388
    %v4749 = vpack.c.bf16 %v4401, %v4389
    %v4750 = vpack.c.bf16 %v4402, %v4390
    %v4751 = vpack.c.bf16 %v4403, %v4391
    %v4752 = vpack.c.bf16 %v4404, %v4392
    %v4753 = vpack.c.bf16 %v4405, %v4393
    %v4754 = vpack.c.bf16 %v4406, %v4394
    %v4755 = vpack.c.bf16 %v4407, %v4395
    %v4756 = vpack.c.bf16 %v4408, %v4396
    %v4757 = vpack.c.bf16 %v4409, %v4397
    %v4758 = vpack.c.bf16 %v4422, %v4410
    %v4759 = vpack.c.bf16 %v4423, %v4411
    %v4760 = vpack.c.bf16 %v4424, %v4412
    %v4761 = vpack.c.bf16 %v4425, %v4413
    %v4762 = vpack.c.bf16 %v4426, %v4414
    %v4763 = vpack.c.bf16 %v4427, %v4415
    %v4764 = vpack.c.bf16 %v4428, %v4416
    %v4765 = vpack.c.bf16 %v4429, %v4417
    %v4766 = vpack.c.bf16 %v4430, %v4418
    %v4767 = vpack.c.bf16 %v4431, %v4419
    %v4768 = vpack.c.bf16 %v4432, %v4420
    %v4769 = vpack.c.bf16 %v4433, %v4421
    %v4770 = vpack.c.bf16 %v4446, %v4434
    %v4771 = vpack.c.bf16 %v4447, %v4435
    %v4772 = vpack.c.bf16 %v4448, %v4436
    %v4773 = vpack.c.bf16 %v4449, %v4437
    %v4774 = vpack.c.bf16 %v4450, %v4438
    %v4775 = vpack.c.bf16 %v4451, %v4439
    %v4776 = vpack.c.bf16 %v4452, %v4440
    %v4777 = vpack.c.bf16 %v4453, %v4441
    %v4778 = vpack.c.bf16 %v4454, %v4442
    %v4779 = vpack.c.bf16 %v4455, %v4443
    %v4780 = vpack.c.bf16 %v4456, %v4444
    %v4781 = vpack.c.bf16 %v4457, %v4445
    %v4782 = vpack.c.bf16 %v4470, %v4458
    %v4783 = vpack.c.bf16 %v4471, %v4459
    %v4784 = vpack.c.bf16 %v4472, %v4460
    %v4785 = vpack.c.bf16 %v4473, %v4461
    %v4786 = vpack.c.bf16 %v4474, %v4462
    %v4787 = vpack.c.bf16 %v4475, %v4463
    %v4788 = vpack.c.bf16 %v4476, %v4464
    %v4789 = vpack.c.bf16 %v4477, %v4465
    %v4790 = vpack.c.bf16 %v4478, %v4466
    %v4791 = vpack.c.bf16 %v4479, %v4467
    %v4792 = vpack.c.bf16 %v4480, %v4468
    %v4793 = vpack.c.bf16 %v4481, %v4469
    %v4794 = vpack.c.bf16 %v4494, %v4482
    %v4795 = vpack.c.bf16 %v4495, %v4483
    %v4796 = vpack.c.bf16 %v4496, %v4484
    %v4797 = vpack.c.bf16 %v4497, %v4485
    %v4798 = vpack.c.bf16 %v4498, %v4486
    %v4799 = vpack.c.bf16 %v4499, %v4487
    %v4800 = vpack.c.bf16 %v4500, %v4488
    %v4801 = vpack.c.bf16 %v4501, %v4489
    %v4802 = vpack.c.bf16 %v4502, %v4490
    %v4803 = vpack.c.bf16 %v4503, %v4491
    %v4804 = vpack.c.bf16 %v4504, %v4492
    %v4805 = vpack.c.bf16 %v4505, %v4493
    %v4806 = vpack.c.bf16 %v4518, %v4506
    %v4807 = vpack.c.bf16 %v4519, %v4507
    %v4808 = vpack.c.bf16 %v4520, %v4508
    %v4809 = vpack.c.bf16 %v4521, %v4509
    %v4810 = vpack.c.bf16 %v4522, %v4510
    %v4811 = vpack.c.bf16 %v4523, %v4511
    %v4812 = vpack.c.bf16 %v4524, %v4512
    %v4813 = vpack.c.bf16 %v4525, %v4513
    %v4814 = vpack.c.bf16 %v4526, %v4514
    %v4815 = vpack.c.bf16 %v4527, %v4515
    %v4816 = vpack.c.bf16 %v4528, %v4516
    %v4817 = vpack.c.bf16 %v4529, %v4517
    %v4818 = vpack.c.bf16 %v4542, %v4530
    %v4819 = vpack.c.bf16 %v4543, %v4531
    %v4820 = vpack.c.bf16 %v4544, %v4532
    %v4821 = vpack.c.bf16 %v4545, %v4533
    %v4822 = vpack.c.bf16 %v4546, %v4534
    %v4823 = vpack.c.bf16 %v4547, %v4535
    %v4824 = vpack.c.bf16 %v4548, %v4536
    %v4825 = vpack.c.bf16 %v4549, %v4537
    %v4826 = vpack.c.bf16 %v4550, %v4538
    %v4827 = vpack.c.bf16 %v4551, %v4539
    %v4828 = vpack.c.bf16 %v4552, %v4540
    %v4829 = vpack.c.bf16 %v4553, %v4541
    %v4830 = vpack.c.bf16 %v4566, %v4554
    %v4831 = vpack.c.bf16 %v4567, %v4555
    %v4832 = vpack.c.bf16 %v4568, %v4556
    %v4833 = vpack.c.bf16 %v4569, %v4557
    %v4834 = vpack.c.bf16 %v4570, %v4558
    %v4835 = vpack.c.bf16 %v4571, %v4559
    %v4836 = vpack.c.bf16 %v4572, %v4560
    %v4837 = vpack.c.bf16 %v4573, %v4561
    %v4838 = vpack.c.bf16 %v4574, %v4562
    %v4839 = vpack.c.bf16 %v4575, %v4563
    %v4840 = vpack.c.bf16 %v4576, %v4564
    %v4841 = vpack.c.bf16 %v4577, %v4565
    %v4842 = vpack.c.bf16 %v4590, %v4578
    %v4843 = vpack.c.bf16 %v4591, %v4579
    %v4844 = vpack.c.bf16 %v4592, %v4580
    %v4845 = vpack.c.bf16 %v4593, %v4581
    %v4846 = vpack.c.bf16 %v4594, %v4582
    %v4847 = vpack.c.bf16 %v4595, %v4583
    %v4848 = vpack.c.bf16 %v4596, %v4584
    %v4849 = vpack.c.bf16 %v4597, %v4585
    %v4850 = vpack.c.bf16 %v4598, %v4586
    %v4851 = vpack.c.bf16 %v4599, %v4587
    %v4852 = vpack.c.bf16 %v4600, %v4588
    %v4853 = vpack.c.bf16 %v4601, %v4589
    %v4854 = vpack.c.bf16 %v4614, %v4602
    %v4855 = vpack.c.bf16 %v4615, %v4603
    %v4856 = vpack.c.bf16 %v4616, %v4604
    %v4857 = vpack.c.bf16 %v4617, %v4605
    %v4858 = vpack.c.bf16 %v4618, %v4606
    %v4859 = vpack.c.bf16 %v4619, %v4607
    %v4860 = vpack.c.bf16 %v4620, %v4608
    %v4861 = vpack.c.bf16 %v4621, %v4609
    %v4862 = vpack.c.bf16 %v4622, %v4610
    %v4863 = vpack.c.bf16 %v4623, %v4611
    %v4864 = vpack.c.bf16 %v4624, %v4612
    %v4865 = vpack.c.bf16 %v4625, %v4613
    %v4866 = vpack.c.bf16 %v4638, %v4626
    %v4867 = vpack.c.bf16 %v4639, %v4627
    %v4868 = vpack.c.bf16 %v4640, %v4628
    %v4869 = vpack.c.bf16 %v4641, %v4629
    %v4870 = vpack.c.bf16 %v4642, %v4630
    %v4871 = vpack.c.bf16 %v4643, %v4631
    %v4872 = vpack.c.bf16 %v4644, %v4632
    %v4873 = vpack.c.bf16 %v4645, %v4633
    %v4874 = vpack.c.bf16 %v4646, %v4634
    %v4875 = vpack.c.bf16 %v4647, %v4635
    %v4876 = vpack.c.bf16 %v4648, %v4636
    %v4877 = vpack.c.bf16 %v4649, %v4637
    %v4878 = vpack.c.bf16 %v4662, %v4650
    %v4879 = vpack.c.bf16 %v4663, %v4651
    %v4880 = vpack.c.bf16 %v4664, %v4652
    %v4881 = vpack.c.bf16 %v4665, %v4653
    %v4882 = vpack.c.bf16 %v4666, %v4654
    %v4883 = vpack.c.bf16 %v4667, %v4655
    %v4884 = vpack.c.bf16 %v4668, %v4656
    %v4885 = vpack.c.bf16 %v4669, %v4657
    %v4886 = vpack.c.bf16 %v4670, %v4658
    %v4887 = vpack.c.bf16 %v4671, %v4659
    %v4888 = vpack.c.bf16 %v4672, %v4660
    %v4889 = vpack.c.bf16 %v4673, %v4661
    %v4890 = vpack.c.bf16 %v4686, %v4674
    %v4891 = vpack.c.bf16 %v4687, %v4675
    %v4892 = vpack.c.bf16 %v4688, %v4676
    %v4893 = vpack.c.bf16 %v4689, %v4677
    %v4894 = vpack.c.bf16 %v4690, %v4678
    %v4895 = vpack.c.bf16 %v4691, %v4679
    %v4896 = vpack.c.bf16 %v4692, %v4680
    %v4897 = vpack.c.bf16 %v4693, %v4681
    %v4898 = vpack.c.bf16 %v4694, %v4682
    %v4899 = vpack.c.bf16 %v4695, %v4683
    %v4900 = vpack.c.bf16 %v4696, %v4684
    %v4901 = vpack.c.bf16 %v4697, %v4685
    %v4902 = vpack.c.bf16 %v4710, %v4698
    %v4903 = vpack.c.bf16 %v4711, %v4699
    %v4904 = vpack.c.bf16 %v4712, %v4700
    %v4905 = vpack.c.bf16 %v4713, %v4701
    %v4906 = vpack.c.bf16 %v4714, %v4702
    %v4907 = vpack.c.bf16 %v4715, %v4703
    %v4908 = vpack.c.bf16 %v4716, %v4704
    %v4909 = vpack.c.bf16 %v4717, %v4705
    %v4910 = vpack.c.bf16 %v4718, %v4706
    %v4911 = vpack.c.bf16 %v4719, %v4707
    %v4912 = vpack.c.bf16 %v4720, %v4708
    %v4913 = vpack.c.bf16 %v4721, %v4709
    %v4914 = vld [vmem:[#allocation8] sm:$0xff]
    %v4915 = vld [vmem:[#allocation8 + $0x8] sm:$0xf]
    %v4916 = vld [vmem:[#allocation8 + $0xc] sm:$0xff]
    %v4917 = vld [vmem:[#allocation8 + $0x14] sm:$0xf]
    %v4918 = vld [vmem:[#allocation8 + $0x18] sm:$0xff]
    %v4919 = vld [vmem:[#allocation8 + $0x20] sm:$0xf]
    %v4920 = vld [vmem:[#allocation8 + $0x24] sm:$0xff]
    %v4921 = vld [vmem:[#allocation8 + $0x2c] sm:$0xf]
    %v4922 = vld [vmem:[#allocation8 + $0x30] sm:$0xff]
    %v4923 = vld [vmem:[#allocation8 + $0x38] sm:$0xf]
    %v4924 = vld [vmem:[#allocation8 + $0x3c] sm:$0xff]
    %v4925 = vld [vmem:[#allocation8 + $0x44] sm:$0xf]
    %v4926 = vld [vmem:[#allocation8 + $0x48] sm:$0xff]
    %v4927 = vld [vmem:[#allocation8 + $0x50] sm:$0xf]
    %v4928 = vld [vmem:[#allocation8 + $0x54] sm:$0xff]
    %v4929 = vld [vmem:[#allocation8 + $0x5c] sm:$0xf]
    %v4930 = vld [vmem:[#allocation8 + $0x60] sm:$0xff]
    %v4931 = vld [vmem:[#allocation8 + $0x68] sm:$0xf]
    %v4932 = vld [vmem:[#allocation8 + $0x6c] sm:$0xff]
    %v4933 = vld [vmem:[#allocation8 + $0x74] sm:$0xf]
    %v4934 = vld [vmem:[#allocation8 + $0x78] sm:$0xff]
    %v4935 = vld [vmem:[#allocation8 + $0x80] sm:$0xf]
    %v4936 = vld [vmem:[#allocation8 + $0x84] sm:$0xff]
    %v4937 = vld [vmem:[#allocation8 + $0x8c] sm:$0xf]
    %v4938 = vld [vmem:[#allocation8 + $0x90] sm:$0xff]
    %v4939 = vld [vmem:[#allocation8 + $0x98] sm:$0xf]
    %v4940 = vld [vmem:[#allocation8 + $0x9c] sm:$0xff]
    %v4941 = vld [vmem:[#allocation8 + $0xa4] sm:$0xf]
    %v4942 = vld [vmem:[#allocation8 + $0xa8] sm:$0xff]
    %v4943 = vld [vmem:[#allocation8 + $0xb0] sm:$0xf]
    %v4944 = vld [vmem:[#allocation8 + $0xb4] sm:$0xff]
    %v4945 = vld [vmem:[#allocation8 + $0xbc] sm:$0xf]
    %v4946 = vld [vmem:[#allocation8 + $0xc0] sm:$0xff]
    %v4947 = vld [vmem:[#allocation8 + $0xc8] sm:$0xf]
    %v4948 = vld [vmem:[#allocation8 + $0xcc] sm:$0xff]
    %v4949 = vld [vmem:[#allocation8 + $0xd4] sm:$0xf]
    %v4950 = vld [vmem:[#allocation8 + $0xd8] sm:$0xff]
    %v4951 = vld [vmem:[#allocation8 + $0xe0] sm:$0xf]
    %v4952 = vld [vmem:[#allocation8 + $0xe4] sm:$0xff]
    %v4953 = vld [vmem:[#allocation8 + $0xec] sm:$0xf]
    %v4954 = vld [vmem:[#allocation8 + $0xf0] sm:$0xff]
    %v4955 = vld [vmem:[#allocation8 + $0xf8] sm:$0xf]
    %v4956 = vld [vmem:[#allocation8 + $0xfc] sm:$0xff]
    %v4957 = vld [vmem:[#allocation8 + $0x104] sm:$0xf]
    %v4958 = vld [vmem:[#allocation8 + $0x108] sm:$0xff]
    %v4959 = vld [vmem:[#allocation8 + $0x110] sm:$0xf]
    %v4960 = vld [vmem:[#allocation8 + $0x114] sm:$0xff]
    %v4961 = vld [vmem:[#allocation8 + $0x11c] sm:$0xf]
    %v4962 = vld [vmem:[#allocation8 + $0x120] sm:$0xff]
    %v4963 = vld [vmem:[#allocation8 + $0x128] sm:$0xf]
    %v4964 = vld [vmem:[#allocation8 + $0x12c] sm:$0xff]
    %v4965 = vld [vmem:[#allocation8 + $0x134] sm:$0xf]
    %v4966 = vld [vmem:[#allocation8 + $0x138] sm:$0xff]
    %v4967 = vld [vmem:[#allocation8 + $0x140] sm:$0xf]
    %v4968 = vld [vmem:[#allocation8 + $0x144] sm:$0xff]
    %v4969 = vld [vmem:[#allocation8 + $0x14c] sm:$0xf]
    %v4970 = vld [vmem:[#allocation8 + $0x150] sm:$0xff]
    %v4971 = vld [vmem:[#allocation8 + $0x158] sm:$0xf]
    %v4972 = vld [vmem:[#allocation8 + $0x15c] sm:$0xff]
    %v4973 = vld [vmem:[#allocation8 + $0x164] sm:$0xf]
    %v4974 = vld [vmem:[#allocation8 + $0x168] sm:$0xff]
    %v4975 = vld [vmem:[#allocation8 + $0x170] sm:$0xf]
    %v4976 = vld [vmem:[#allocation8 + $0x174] sm:$0xff]
    %v4977 = vld [vmem:[#allocation8 + $0x17c] sm:$0xf]
    %v4978 = vld [vmem:[#allocation8 + $0x180] sm:$0xff]
    %v4979 = vld [vmem:[#allocation8 + $0x188] sm:$0xf]
    %v4980 = vld [vmem:[#allocation8 + $0x18c] sm:$0xff]
    %v4981 = vld [vmem:[#allocation8 + $0x194] sm:$0xf]
    %v4982 = vld [vmem:[#allocation8 + $0x198] sm:$0xff]
    %v4983 = vld [vmem:[#allocation8 + $0x1a0] sm:$0xf]
    %v4984 = vld [vmem:[#allocation8 + $0x1a4] sm:$0xff]
    %v4985 = vld [vmem:[#allocation8 + $0x1ac] sm:$0xf]
    %v4986 = vld [vmem:[#allocation8 + $0x1b0] sm:$0xff]
    %v4987 = vld [vmem:[#allocation8 + $0x1b8] sm:$0xf]
    %v4988 = vld [vmem:[#allocation8 + $0x1bc] sm:$0xff]
    %v4989 = vld [vmem:[#allocation8 + $0x1c4] sm:$0xf]
    %v4990 = vld [vmem:[#allocation8 + $0x1c8] sm:$0xff]
    %v4991 = vld [vmem:[#allocation8 + $0x1d0] sm:$0xf]
    %v4992 = vld [vmem:[#allocation8 + $0x1d4] sm:$0xff]
    %v4993 = vld [vmem:[#allocation8 + $0x1dc] sm:$0xf]
    %v4994 = vld [vmem:[#allocation8 + $0x1e0] sm:$0xff]
    %v4995 = vld [vmem:[#allocation8 + $0x1e8] sm:$0xf]
    %v4996 = vld [vmem:[#allocation8 + $0x1ec] sm:$0xff]
    %v4997 = vld [vmem:[#allocation8 + $0x1f4] sm:$0xf]
    %v4998 = vld [vmem:[#allocation8 + $0x1f8] sm:$0xff]
    %v4999 = vld [vmem:[#allocation8 + $0x200] sm:$0xf]
    %v5000 = vld [vmem:[#allocation8 + $0x204] sm:$0xff]
    %v5001 = vld [vmem:[#allocation8 + $0x20c] sm:$0xf]
    %v5002 = vld [vmem:[#allocation8 + $0x210] sm:$0xff]
    %v5003 = vld [vmem:[#allocation8 + $0x218] sm:$0xf]
    %v5004 = vld [vmem:[#allocation8 + $0x21c] sm:$0xff]
    %v5005 = vld [vmem:[#allocation8 + $0x224] sm:$0xf]
    %v5006 = vld [vmem:[#allocation8 + $0x228] sm:$0xff]
    %v5007 = vld [vmem:[#allocation8 + $0x230] sm:$0xf]
    %v5008 = vld [vmem:[#allocation8 + $0x234] sm:$0xff]
    %v5009 = vld [vmem:[#allocation8 + $0x23c] sm:$0xf]
    %v5010 = vld [vmem:[#allocation8 + $0x240] sm:$0xff]
    %v5011 = vld [vmem:[#allocation8 + $0x248] sm:$0xf]
    %v5012 = vld [vmem:[#allocation8 + $0x24c] sm:$0xff]
    %v5013 = vld [vmem:[#allocation8 + $0x254] sm:$0xf]
    %v5014 = vld [vmem:[#allocation8 + $0x258] sm:$0xff]
    %v5015 = vld [vmem:[#allocation8 + $0x260] sm:$0xf]
    %v5016 = vld [vmem:[#allocation8 + $0x264] sm:$0xff]
    %v5017 = vld [vmem:[#allocation8 + $0x26c] sm:$0xf]
    %v5018 = vld [vmem:[#allocation8 + $0x270] sm:$0xff]
    %v5019 = vld [vmem:[#allocation8 + $0x278] sm:$0xf]
    %v5020 = vld [vmem:[#allocation8 + $0x27c] sm:$0xff]
    %v5021 = vld [vmem:[#allocation8 + $0x284] sm:$0xf]
    %v5022 = vld [vmem:[#allocation8 + $0x288] sm:$0xff]
    %v5023 = vld [vmem:[#allocation8 + $0x290] sm:$0xf]
    %v5024 = vld [vmem:[#allocation8 + $0x294] sm:$0xff]
    %v5025 = vld [vmem:[#allocation8 + $0x29c] sm:$0xf]
    %v5026 = vld [vmem:[#allocation8 + $0x2a0] sm:$0xff]
    %v5027 = vld [vmem:[#allocation8 + $0x2a8] sm:$0xf]
    %v5028 = vld [vmem:[#allocation8 + $0x2ac] sm:$0xff]
    %v5029 = vld [vmem:[#allocation8 + $0x2b4] sm:$0xf]
    %v5030 = vld [vmem:[#allocation8 + $0x2b8] sm:$0xff]
    %v5031 = vld [vmem:[#allocation8 + $0x2c0] sm:$0xf]
    %v5032 = vld [vmem:[#allocation8 + $0x2c4] sm:$0xff]
    %v5033 = vld [vmem:[#allocation8 + $0x2cc] sm:$0xf]
    %v5034 = vld [vmem:[#allocation8 + $0x2d0] sm:$0xff]
    %v5035 = vld [vmem:[#allocation8 + $0x2d8] sm:$0xf]
    %v5036 = vld [vmem:[#allocation8 + $0x2dc] sm:$0xff]
    %v5037 = vld [vmem:[#allocation8 + $0x2e4] sm:$0xf]
    %v5038 = vld [vmem:[#allocation8 + $0x2e8] sm:$0xff]
    %v5039 = vld [vmem:[#allocation8 + $0x2f0] sm:$0xf]
    %v5040 = vld [vmem:[#allocation8 + $0x2f4] sm:$0xff]
    %v5041 = vld [vmem:[#allocation8 + $0x2fc] sm:$0xf]
    %v5042 = vld [vmem:[#allocation8 + $0x300] sm:$0xff]
    %v5043 = vld [vmem:[#allocation8 + $0x308] sm:$0xf]
    %v5044 = vld [vmem:[#allocation8 + $0x30c] sm:$0xff]
    %v5045 = vld [vmem:[#allocation8 + $0x314] sm:$0xf]
    %v5046 = vld [vmem:[#allocation8 + $0x318] sm:$0xff]
    %v5047 = vld [vmem:[#allocation8 + $0x320] sm:$0xf]
    %v5048 = vld [vmem:[#allocation8 + $0x324] sm:$0xff]
    %v5049 = vld [vmem:[#allocation8 + $0x32c] sm:$0xf]
    %v5050 = vld [vmem:[#allocation8 + $0x330] sm:$0xff]
    %v5051 = vld [vmem:[#allocation8 + $0x338] sm:$0xf]
    %v5052 = vld [vmem:[#allocation8 + $0x33c] sm:$0xff]
    %v5053 = vld [vmem:[#allocation8 + $0x344] sm:$0xf]
    %v5054 = vld [vmem:[#allocation8 + $0x348] sm:$0xff]
    %v5055 = vld [vmem:[#allocation8 + $0x350] sm:$0xf]
    %v5056 = vld [vmem:[#allocation8 + $0x354] sm:$0xff]
    %v5057 = vld [vmem:[#allocation8 + $0x35c] sm:$0xf]
    %v5058 = vld [vmem:[#allocation8 + $0x360] sm:$0xff]
    %v5059 = vld [vmem:[#allocation8 + $0x368] sm:$0xf]
    %v5060 = vld [vmem:[#allocation8 + $0x36c] sm:$0xff]
    %v5061 = vld [vmem:[#allocation8 + $0x374] sm:$0xf]
    %v5062 = vld [vmem:[#allocation8 + $0x378] sm:$0xff]
    %v5063 = vld [vmem:[#allocation8 + $0x380] sm:$0xf]
    %v5064 = vld [vmem:[#allocation8 + $0x384] sm:$0xff]
    %v5065 = vld [vmem:[#allocation8 + $0x38c] sm:$0xf]
    %v5066 = vld [vmem:[#allocation8 + $0x390] sm:$0xff]
    %v5067 = vld [vmem:[#allocation8 + $0x398] sm:$0xf]
    %v5068 = vld [vmem:[#allocation8 + $0x39c] sm:$0xff]
    %v5069 = vld [vmem:[#allocation8 + $0x3a4] sm:$0xf]
    %v5070 = vld [vmem:[#allocation8 + $0x3a8] sm:$0xff]
    %v5071 = vld [vmem:[#allocation8 + $0x3b0] sm:$0xf]
    %v5072 = vld [vmem:[#allocation8 + $0x3b4] sm:$0xff]
    %v5073 = vld [vmem:[#allocation8 + $0x3bc] sm:$0xf]
    %v5074 = vld [vmem:[#allocation8 + $0x3c0] sm:$0xff]
    %v5075 = vld [vmem:[#allocation8 + $0x3c8] sm:$0xf]
    %v5076 = vld [vmem:[#allocation8 + $0x3cc] sm:$0xff]
    %v5077 = vld [vmem:[#allocation8 + $0x3d4] sm:$0xf]
    %v5078 = vld [vmem:[#allocation8 + $0x3d8] sm:$0xff]
    %v5079 = vld [vmem:[#allocation8 + $0x3e0] sm:$0xf]
    %v5080 = vld [vmem:[#allocation8 + $0x3e4] sm:$0xff]
    %v5081 = vld [vmem:[#allocation8 + $0x3ec] sm:$0xf]
    %v5082 = vld [vmem:[#allocation8 + $0x3f0] sm:$0xff]
    %v5083 = vld [vmem:[#allocation8 + $0x3f8] sm:$0xf]
    %v5084 = vld [vmem:[#allocation8 + $0x3fc] sm:$0xff]
    %v5085 = vld [vmem:[#allocation8 + $0x404] sm:$0xf]
    %v5086 = vld [vmem:[#allocation8 + $0x408] sm:$0xff]
    %v5087 = vld [vmem:[#allocation8 + $0x410] sm:$0xf]
    %v5088 = vld [vmem:[#allocation8 + $0x414] sm:$0xff]
    %v5089 = vld [vmem:[#allocation8 + $0x41c] sm:$0xf]
    %v5090 = vld [vmem:[#allocation8 + $0x420] sm:$0xff]
    %v5091 = vld [vmem:[#allocation8 + $0x428] sm:$0xf]
    %v5092 = vld [vmem:[#allocation8 + $0x42c] sm:$0xff]
    %v5093 = vld [vmem:[#allocation8 + $0x434] sm:$0xf]
    %v5094 = vld [vmem:[#allocation8 + $0x438] sm:$0xff]
    %v5095 = vld [vmem:[#allocation8 + $0x440] sm:$0xf]
    %v5096 = vld [vmem:[#allocation8 + $0x444] sm:$0xff]
    %v5097 = vld [vmem:[#allocation8 + $0x44c] sm:$0xf]
    %v5098 = vld [vmem:[#allocation8 + $0x450] sm:$0xff]
    %v5099 = vld [vmem:[#allocation8 + $0x458] sm:$0xf]
    %v5100 = vld [vmem:[#allocation8 + $0x45c] sm:$0xff]
    %v5101 = vld [vmem:[#allocation8 + $0x464] sm:$0xf]
    %v5102 = vld [vmem:[#allocation8 + $0x468] sm:$0xff]
    %v5103 = vld [vmem:[#allocation8 + $0x470] sm:$0xf]
    %v5104 = vld [vmem:[#allocation8 + $0x474] sm:$0xff]
    %v5105 = vld [vmem:[#allocation8 + $0x47c] sm:$0xf]
    %v5106 = vld [vmem:[#allocation8 + $0x480] sm:$0xff]
    %v5107 = vld [vmem:[#allocation8 + $0x488] sm:$0xf]
    %v5108 = vld [vmem:[#allocation8 + $0x48c] sm:$0xff]
    %v5109 = vld [vmem:[#allocation8 + $0x494] sm:$0xf]
    %v5110 = vld [vmem:[#allocation8 + $0x498] sm:$0xff]
    %v5111 = vld [vmem:[#allocation8 + $0x4a0] sm:$0xf]
    %v5112 = vld [vmem:[#allocation8 + $0x4a4] sm:$0xff]
    %v5113 = vld [vmem:[#allocation8 + $0x4ac] sm:$0xf]
    %v5114 = vld [vmem:[#allocation8 + $0x4b0] sm:$0xff]
    %v5115 = vld [vmem:[#allocation8 + $0x4b8] sm:$0xf]
    %v5116 = vld [vmem:[#allocation8 + $0x4bc] sm:$0xff]
    %v5117 = vld [vmem:[#allocation8 + $0x4c4] sm:$0xf]
    %v5118 = vld [vmem:[#allocation8 + $0x4c8] sm:$0xff]
    %v5119 = vld [vmem:[#allocation8 + $0x4d0] sm:$0xf]
    %v5120 = vld [vmem:[#allocation8 + $0x4d4] sm:$0xff]
    %v5121 = vld [vmem:[#allocation8 + $0x4dc] sm:$0xf]
    %v5122 = vld [vmem:[#allocation8 + $0x4e0] sm:$0xff]
    %v5123 = vld [vmem:[#allocation8 + $0x4e8] sm:$0xf]
    %v5124 = vld [vmem:[#allocation8 + $0x4ec] sm:$0xff]
    %v5125 = vld [vmem:[#allocation8 + $0x4f4] sm:$0xf]
    %v5126 = vld [vmem:[#allocation8 + $0x4f8] sm:$0xff]
    %v5127 = vld [vmem:[#allocation8 + $0x500] sm:$0xf]
    %v5128 = vld [vmem:[#allocation8 + $0x504] sm:$0xff]
    %v5129 = vld [vmem:[#allocation8 + $0x50c] sm:$0xf]
    %v5130 = vld [vmem:[#allocation8 + $0x510] sm:$0xff]
    %v5131 = vld [vmem:[#allocation8 + $0x518] sm:$0xf]
    %v5132 = vld [vmem:[#allocation8 + $0x51c] sm:$0xff]
    %v5133 = vld [vmem:[#allocation8 + $0x524] sm:$0xf]
    %v5134 = vld [vmem:[#allocation8 + $0x528] sm:$0xff]
    %v5135 = vld [vmem:[#allocation8 + $0x530] sm:$0xf]
    %v5136 = vld [vmem:[#allocation8 + $0x534] sm:$0xff]
    %v5137 = vld [vmem:[#allocation8 + $0x53c] sm:$0xf]
    %v5138 = vld [vmem:[#allocation8 + $0x540] sm:$0xff]
    %v5139 = vld [vmem:[#allocation8 + $0x548] sm:$0xf]
    %v5140 = vld [vmem:[#allocation8 + $0x54c] sm:$0xff]
    %v5141 = vld [vmem:[#allocation8 + $0x554] sm:$0xf]
    %v5142 = vld [vmem:[#allocation8 + $0x558] sm:$0xff]
    %v5143 = vld [vmem:[#allocation8 + $0x560] sm:$0xf]
    %v5144 = vld [vmem:[#allocation8 + $0x564] sm:$0xff]
    %v5145 = vld [vmem:[#allocation8 + $0x56c] sm:$0xf]
    %v5146 = vld [vmem:[#allocation8 + $0x570] sm:$0xff]
    %v5147 = vld [vmem:[#allocation8 + $0x578] sm:$0xf]
    %v5148 = vld [vmem:[#allocation8 + $0x57c] sm:$0xff]
    %v5149 = vld [vmem:[#allocation8 + $0x584] sm:$0xf]
    %v5150 = vld [vmem:[#allocation8 + $0x588] sm:$0xff]
    %v5151 = vld [vmem:[#allocation8 + $0x590] sm:$0xf]
    %v5152 = vld [vmem:[#allocation8 + $0x594] sm:$0xff]
    %v5153 = vld [vmem:[#allocation8 + $0x59c] sm:$0xf]
    %v5154 = vld [vmem:[#allocation8 + $0x5a0] sm:$0xff]
    %v5155 = vld [vmem:[#allocation8 + $0x5a8] sm:$0xf]
    %v5156 = vld [vmem:[#allocation8 + $0x5ac] sm:$0xff]
    %v5157 = vld [vmem:[#allocation8 + $0x5b4] sm:$0xf]
    %v5158 = vld [vmem:[#allocation8 + $0x5b8] sm:$0xff]
    %v5159 = vld [vmem:[#allocation8 + $0x5c0] sm:$0xf]
    %v5160 = vld [vmem:[#allocation8 + $0x5c4] sm:$0xff]
    %v5161 = vld [vmem:[#allocation8 + $0x5cc] sm:$0xf]
    %v5162 = vld [vmem:[#allocation8 + $0x5d0] sm:$0xff]
    %v5163 = vld [vmem:[#allocation8 + $0x5d8] sm:$0xf]
    %v5164 = vld [vmem:[#allocation8 + $0x5dc] sm:$0xff]
    %v5165 = vld [vmem:[#allocation8 + $0x5e4] sm:$0xf]
    %v5166 = vld [vmem:[#allocation8 + $0x5e8] sm:$0xff]
    %v5167 = vld [vmem:[#allocation8 + $0x5f0] sm:$0xf]
    %v5168 = vld [vmem:[#allocation8 + $0x5f4] sm:$0xff]
    %v5169 = vld [vmem:[#allocation8 + $0x5fc] sm:$0xf]
    %v5170 = vld [vmem:[#allocation8 + $0x600] sm:$0xff]
    %v5171 = vld [vmem:[#allocation8 + $0x608] sm:$0xf]
    %v5172 = vld [vmem:[#allocation8 + $0x60c] sm:$0xff]
    %v5173 = vld [vmem:[#allocation8 + $0x614] sm:$0xf]
    %v5174 = vld [vmem:[#allocation8 + $0x618] sm:$0xff]
    %v5175 = vld [vmem:[#allocation8 + $0x620] sm:$0xf]
    %v5176 = vld [vmem:[#allocation8 + $0x624] sm:$0xff]
    %v5177 = vld [vmem:[#allocation8 + $0x62c] sm:$0xf]
    %v5178 = vld [vmem:[#allocation8 + $0x630] sm:$0xff]
    %v5179 = vld [vmem:[#allocation8 + $0x638] sm:$0xf]
    %v5180 = vld [vmem:[#allocation8 + $0x63c] sm:$0xff]
    %v5181 = vld [vmem:[#allocation8 + $0x644] sm:$0xf]
    %v5182 = vld [vmem:[#allocation8 + $0x648] sm:$0xff]
    %v5183 = vld [vmem:[#allocation8 + $0x650] sm:$0xf]
    %v5184 = vld [vmem:[#allocation8 + $0x654] sm:$0xff]
    %v5185 = vld [vmem:[#allocation8 + $0x65c] sm:$0xf]
    %v5186 = vld [vmem:[#allocation8 + $0x660] sm:$0xff]
    %v5187 = vld [vmem:[#allocation8 + $0x668] sm:$0xf]
    %v5188 = vld [vmem:[#allocation8 + $0x66c] sm:$0xff]
    %v5189 = vld [vmem:[#allocation8 + $0x674] sm:$0xf]
    %v5190 = vld [vmem:[#allocation8 + $0x678] sm:$0xff]
    %v5191 = vld [vmem:[#allocation8 + $0x680] sm:$0xf]
    %v5192 = vld [vmem:[#allocation8 + $0x684] sm:$0xff]
    %v5193 = vld [vmem:[#allocation8 + $0x68c] sm:$0xf]
    %v5194 = vld [vmem:[#allocation8 + $0x690] sm:$0xff]
    %v5195 = vld [vmem:[#allocation8 + $0x698] sm:$0xf]
    %v5196 = vld [vmem:[#allocation8 + $0x69c] sm:$0xff]
    %v5197 = vld [vmem:[#allocation8 + $0x6a4] sm:$0xf]
    %v5198 = vld [vmem:[#allocation8 + $0x6a8] sm:$0xff]
    %v5199 = vld [vmem:[#allocation8 + $0x6b0] sm:$0xf]
    %v5200 = vld [vmem:[#allocation8 + $0x6b4] sm:$0xff]
    %v5201 = vld [vmem:[#allocation8 + $0x6bc] sm:$0xf]
    %v5202 = vld [vmem:[#allocation8 + $0x6c0] sm:$0xff]
    %v5203 = vld [vmem:[#allocation8 + $0x6c8] sm:$0xf]
    %v5204 = vld [vmem:[#allocation8 + $0x6cc] sm:$0xff]
    %v5205 = vld [vmem:[#allocation8 + $0x6d4] sm:$0xf]
    %v5206 = vld [vmem:[#allocation8 + $0x6d8] sm:$0xff]
    %v5207 = vld [vmem:[#allocation8 + $0x6e0] sm:$0xf]
    %v5208 = vld [vmem:[#allocation8 + $0x6e4] sm:$0xff]
    %v5209 = vld [vmem:[#allocation8 + $0x6ec] sm:$0xf]
    %v5210 = vld [vmem:[#allocation8 + $0x6f0] sm:$0xff]
    %v5211 = vld [vmem:[#allocation8 + $0x6f8] sm:$0xf]
    %v5212 = vld [vmem:[#allocation8 + $0x6fc] sm:$0xff]
    %v5213 = vld [vmem:[#allocation8 + $0x704] sm:$0xf]
    %v5214 = vld [vmem:[#allocation8 + $0x708] sm:$0xff]
    %v5215 = vld [vmem:[#allocation8 + $0x710] sm:$0xf]
    %v5216 = vld [vmem:[#allocation8 + $0x714] sm:$0xff]
    %v5217 = vld [vmem:[#allocation8 + $0x71c] sm:$0xf]
    %v5218 = vld [vmem:[#allocation8 + $0x720] sm:$0xff]
    %v5219 = vld [vmem:[#allocation8 + $0x728] sm:$0xf]
    %v5220 = vld [vmem:[#allocation8 + $0x72c] sm:$0xff]
    %v5221 = vld [vmem:[#allocation8 + $0x734] sm:$0xf]
    %v5222 = vld [vmem:[#allocation8 + $0x738] sm:$0xff]
    %v5223 = vld [vmem:[#allocation8 + $0x740] sm:$0xf]
    %v5224 = vld [vmem:[#allocation8 + $0x744] sm:$0xff]
    %v5225 = vld [vmem:[#allocation8 + $0x74c] sm:$0xf]
    %v5226 = vld [vmem:[#allocation8 + $0x750] sm:$0xff]
    %v5227 = vld [vmem:[#allocation8 + $0x758] sm:$0xf]
    %v5228 = vld [vmem:[#allocation8 + $0x75c] sm:$0xff]
    %v5229 = vld [vmem:[#allocation8 + $0x764] sm:$0xf]
    %v5230 = vld [vmem:[#allocation8 + $0x768] sm:$0xff]
    %v5231 = vld [vmem:[#allocation8 + $0x770] sm:$0xf]
    %v5232 = vld [vmem:[#allocation8 + $0x774] sm:$0xff]
    %v5233 = vld [vmem:[#allocation8 + $0x77c] sm:$0xf]
    %v5234 = vld [vmem:[#allocation8 + $0x780] sm:$0xff]
    %v5235 = vld [vmem:[#allocation8 + $0x788] sm:$0xf]
    %v5236 = vld [vmem:[#allocation8 + $0x78c] sm:$0xff]
    %v5237 = vld [vmem:[#allocation8 + $0x794] sm:$0xf]
    %v5238 = vld [vmem:[#allocation8 + $0x798] sm:$0xff]
    %v5239 = vld [vmem:[#allocation8 + $0x7a0] sm:$0xf]
    %v5240 = vld [vmem:[#allocation8 + $0x7a4] sm:$0xff]
    %v5241 = vld [vmem:[#allocation8 + $0x7ac] sm:$0xf]
    %v5242 = vld [vmem:[#allocation8 + $0x7b0] sm:$0xff]
    %v5243 = vld [vmem:[#allocation8 + $0x7b8] sm:$0xf]
    %v5244 = vld [vmem:[#allocation8 + $0x7bc] sm:$0xff]
    %v5245 = vld [vmem:[#allocation8 + $0x7c4] sm:$0xf]
    %v5246 = vld [vmem:[#allocation8 + $0x7c8] sm:$0xff]
    %v5247 = vld [vmem:[#allocation8 + $0x7d0] sm:$0xf]
    %v5248 = vld [vmem:[#allocation8 + $0x7d4] sm:$0xff]
    %v5249 = vld [vmem:[#allocation8 + $0x7dc] sm:$0xf]
    %v5250 = vld [vmem:[#allocation8 + $0x7e0] sm:$0xff]
    %v5251 = vld [vmem:[#allocation8 + $0x7e8] sm:$0xf]
    %v5252 = vld [vmem:[#allocation8 + $0x7ec] sm:$0xff]
    %v5253 = vld [vmem:[#allocation8 + $0x7f4] sm:$0xf]
    %v5254 = vld [vmem:[#allocation8 + $0x7f8] sm:$0xff]
    %v5255 = vld [vmem:[#allocation8 + $0x800] sm:$0xf]
    %v5256 = vld [vmem:[#allocation8 + $0x804] sm:$0xff]
    %v5257 = vld [vmem:[#allocation8 + $0x80c] sm:$0xf]
    %v5258 = vld [vmem:[#allocation8 + $0x810] sm:$0xff]
    %v5259 = vld [vmem:[#allocation8 + $0x818] sm:$0xf]
    %v5260 = vld [vmem:[#allocation8 + $0x81c] sm:$0xff]
    %v5261 = vld [vmem:[#allocation8 + $0x824] sm:$0xf]
    %v5262 = vld [vmem:[#allocation8 + $0x828] sm:$0xff]
    %v5263 = vld [vmem:[#allocation8 + $0x830] sm:$0xf]
    %v5264 = vld [vmem:[#allocation8 + $0x834] sm:$0xff]
    %v5265 = vld [vmem:[#allocation8 + $0x83c] sm:$0xf]
    %v5266 = vld [vmem:[#allocation8 + $0x840] sm:$0xff]
    %v5267 = vld [vmem:[#allocation8 + $0x848] sm:$0xf]
    %v5268 = vld [vmem:[#allocation8 + $0x84c] sm:$0xff]
    %v5269 = vld [vmem:[#allocation8 + $0x854] sm:$0xf]
    %v5270 = vld [vmem:[#allocation8 + $0x858] sm:$0xff]
    %v5271 = vld [vmem:[#allocation8 + $0x860] sm:$0xf]
    %v5272 = vld [vmem:[#allocation8 + $0x864] sm:$0xff]
    %v5273 = vld [vmem:[#allocation8 + $0x86c] sm:$0xf]
    %v5274 = vld [vmem:[#allocation8 + $0x870] sm:$0xff]
    %v5275 = vld [vmem:[#allocation8 + $0x878] sm:$0xf]
    %v5276 = vld [vmem:[#allocation8 + $0x87c] sm:$0xff]
    %v5277 = vld [vmem:[#allocation8 + $0x884] sm:$0xf]
    %v5278 = vld [vmem:[#allocation8 + $0x888] sm:$0xff]
    %v5279 = vld [vmem:[#allocation8 + $0x890] sm:$0xf]
    %v5280 = vld [vmem:[#allocation8 + $0x894] sm:$0xff]
    %v5281 = vld [vmem:[#allocation8 + $0x89c] sm:$0xf]
    %v5282 = vld [vmem:[#allocation8 + $0x8a0] sm:$0xff]
    %v5283 = vld [vmem:[#allocation8 + $0x8a8] sm:$0xf]
    %v5284 = vld [vmem:[#allocation8 + $0x8ac] sm:$0xff]
    %v5285 = vld [vmem:[#allocation8 + $0x8b4] sm:$0xf]
    %v5286 = vld [vmem:[#allocation8 + $0x8b8] sm:$0xff]
    %v5287 = vld [vmem:[#allocation8 + $0x8c0] sm:$0xf]
    %v5288 = vld [vmem:[#allocation8 + $0x8c4] sm:$0xff]
    %v5289 = vld [vmem:[#allocation8 + $0x8cc] sm:$0xf]
    %v5290 = vld [vmem:[#allocation8 + $0x8d0] sm:$0xff]
    %v5291 = vld [vmem:[#allocation8 + $0x8d8] sm:$0xf]
    %v5292 = vld [vmem:[#allocation8 + $0x8dc] sm:$0xff]
    %v5293 = vld [vmem:[#allocation8 + $0x8e4] sm:$0xf]
    %v5294 = vld [vmem:[#allocation8 + $0x8e8] sm:$0xff]
    %v5295 = vld [vmem:[#allocation8 + $0x8f0] sm:$0xf]
    %v5296 = vld [vmem:[#allocation8 + $0x8f4] sm:$0xff]
    %v5297 = vld [vmem:[#allocation8 + $0x8fc] sm:$0xf]
    %v5298 = vld [vmem:[#allocation10] sm:$0x7]
    %v5300 = vlaneseq
    %v5301 = vshrl.u32 %v5300, 7
    %v5302 = vsub.s32 0, %v5301
    %v5303 = vrot.slane %v5298, %v5302
    %v5304 = vlaneseq
    %v5305 = vshrl.u32 %v5304, 7
    %v5306 = vsub.s32 1, %v5305
    %v5307 = vrot.slane %v5298, %v5306
    %v5308 = vlaneseq
    %v5309 = vshrl.u32 %v5308, 7
    %v5310 = vsub.s32 2, %v5309
    %v5311 = vrot.slane %v5298, %v5310
    %v5699 = vunpack.c.l.b16 %v4914
    %v5700 = vunpack.c.h.b16 %v4914
    %v5701 = vunpack.c.l.b16 %v4915
    %v5702 = vunpack.c.l.b16 %v4916
    %v5703 = vunpack.c.h.b16 %v4916
    %v5704 = vunpack.c.l.b16 %v4917
    %v5705 = vunpack.c.l.b16 %v4918
    %v5706 = vunpack.c.h.b16 %v4918
    %v5707 = vunpack.c.l.b16 %v4919
    %v5708 = vunpack.c.l.b16 %v4920
    %v5709 = vunpack.c.h.b16 %v4920
    %v5710 = vunpack.c.l.b16 %v4921
    %v5711 = vunpack.c.l.b16 %v4922
    %v5712 = vunpack.c.h.b16 %v4922
    %v5713 = vunpack.c.l.b16 %v4923
    %v5714 = vunpack.c.l.b16 %v4924
    %v5715 = vunpack.c.h.b16 %v4924
    %v5716 = vunpack.c.l.b16 %v4925
    %v5717 = vunpack.c.l.b16 %v4926
    %v5718 = vunpack.c.h.b16 %v4926
    %v5719 = vunpack.c.l.b16 %v4927
    %v5720 = vunpack.c.l.b16 %v4928
    %v5721 = vunpack.c.h.b16 %v4928
    %v5722 = vunpack.c.l.b16 %v4929
    %v5723 = vunpack.c.l.b16 %v4930
    %v5724 = vunpack.c.h.b16 %v4930
    %v5725 = vunpack.c.l.b16 %v4931
    %v5726 = vunpack.c.l.b16 %v4932
    %v5727 = vunpack.c.h.b16 %v4932
    %v5728 = vunpack.c.l.b16 %v4933
    %v5729 = vunpack.c.l.b16 %v4934
    %v5730 = vunpack.c.h.b16 %v4934
    %v5731 = vunpack.c.l.b16 %v4935
    %v5732 = vunpack.c.l.b16 %v4936
    %v5733 = vunpack.c.h.b16 %v4936
    %v5734 = vunpack.c.l.b16 %v4937
    %v5735 = vunpack.c.l.b16 %v4938
    %v5736 = vunpack.c.h.b16 %v4938
    %v5737 = vunpack.c.l.b16 %v4939
    %v5738 = vunpack.c.l.b16 %v4940
    %v5739 = vunpack.c.h.b16 %v4940
    %v5740 = vunpack.c.l.b16 %v4941
    %v5741 = vunpack.c.l.b16 %v4942
    %v5742 = vunpack.c.h.b16 %v4942
    %v5743 = vunpack.c.l.b16 %v4943
    %v5744 = vunpack.c.l.b16 %v4944
    %v5745 = vunpack.c.h.b16 %v4944
    %v5746 = vunpack.c.l.b16 %v4945
    %v5747 = vunpack.c.l.b16 %v4946
    %v5748 = vunpack.c.h.b16 %v4946
    %v5749 = vunpack.c.l.b16 %v4947
    %v5750 = vunpack.c.l.b16 %v4948
    %v5751 = vunpack.c.h.b16 %v4948
    %v5752 = vunpack.c.l.b16 %v4949
    %v5753 = vunpack.c.l.b16 %v4950
    %v5754 = vunpack.c.h.b16 %v4950
    %v5755 = vunpack.c.l.b16 %v4951
    %v5756 = vunpack.c.l.b16 %v4952
    %v5757 = vunpack.c.h.b16 %v4952
    %v5758 = vunpack.c.l.b16 %v4953
    %v5759 = vunpack.c.l.b16 %v4954
    %v5760 = vunpack.c.h.b16 %v4954
    %v5761 = vunpack.c.l.b16 %v4955
    %v5762 = vunpack.c.l.b16 %v4956
    %v5763 = vunpack.c.h.b16 %v4956
    %v5764 = vunpack.c.l.b16 %v4957
    %v5765 = vunpack.c.l.b16 %v4958
    %v5766 = vunpack.c.h.b16 %v4958
    %v5767 = vunpack.c.l.b16 %v4959
    %v5768 = vunpack.c.l.b16 %v4960
    %v5769 = vunpack.c.h.b16 %v4960
    %v5770 = vunpack.c.l.b16 %v4961
    %v5771 = vunpack.c.l.b16 %v4962
    %v5772 = vunpack.c.h.b16 %v4962
    %v5773 = vunpack.c.l.b16 %v4963
    %v5774 = vunpack.c.l.b16 %v4964
    %v5775 = vunpack.c.h.b16 %v4964
    %v5776 = vunpack.c.l.b16 %v4965
    %v5777 = vunpack.c.l.b16 %v4966
    %v5778 = vunpack.c.h.b16 %v4966
    %v5779 = vunpack.c.l.b16 %v4967
    %v5780 = vunpack.c.l.b16 %v4968
    %v5781 = vunpack.c.h.b16 %v4968
    %v5782 = vunpack.c.l.b16 %v4969
    %v5783 = vunpack.c.l.b16 %v4970
    %v5784 = vunpack.c.h.b16 %v4970
    %v5785 = vunpack.c.l.b16 %v4971
    %v5786 = vunpack.c.l.b16 %v4972
    %v5787 = vunpack.c.h.b16 %v4972
    %v5788 = vunpack.c.l.b16 %v4973
    %v5789 = vunpack.c.l.b16 %v4974
    %v5790 = vunpack.c.h.b16 %v4974
    %v5791 = vunpack.c.l.b16 %v4975
    %v5792 = vunpack.c.l.b16 %v4976
    %v5793 = vunpack.c.h.b16 %v4976
    %v5794 = vunpack.c.l.b16 %v4977
    %v5795 = vunpack.c.l.b16 %v4978
    %v5796 = vunpack.c.h.b16 %v4978
    %v5797 = vunpack.c.l.b16 %v4979
    %v5798 = vunpack.c.l.b16 %v4980
    %v5799 = vunpack.c.h.b16 %v4980
    %v5800 = vunpack.c.l.b16 %v4981
    %v5801 = vunpack.c.l.b16 %v4982
    %v5802 = vunpack.c.h.b16 %v4982
    %v5803 = vunpack.c.l.b16 %v4983
    %v5804 = vunpack.c.l.b16 %v4984
    %v5805 = vunpack.c.h.b16 %v4984
    %v5806 = vunpack.c.l.b16 %v4985
    %v5807 = vunpack.c.l.b16 %v4986
    %v5808 = vunpack.c.h.b16 %v4986
    %v5809 = vunpack.c.l.b16 %v4987
    %v5810 = vunpack.c.l.b16 %v4988
    %v5811 = vunpack.c.h.b16 %v4988
    %v5812 = vunpack.c.l.b16 %v4989
    %v5813 = vunpack.c.l.b16 %v4990
    %v5814 = vunpack.c.h.b16 %v4990
    %v5815 = vunpack.c.l.b16 %v4991
    %v5816 = vunpack.c.l.b16 %v4992
    %v5817 = vunpack.c.h.b16 %v4992
    %v5818 = vunpack.c.l.b16 %v4993
    %v5819 = vunpack.c.l.b16 %v4994
    %v5820 = vunpack.c.h.b16 %v4994
    %v5821 = vunpack.c.l.b16 %v4995
    %v5822 = vunpack.c.l.b16 %v4996
    %v5823 = vunpack.c.h.b16 %v4996
    %v5824 = vunpack.c.l.b16 %v4997
    %v5825 = vunpack.c.l.b16 %v4998
    %v5826 = vunpack.c.h.b16 %v4998
    %v5827 = vunpack.c.l.b16 %v4999
    %v5828 = vunpack.c.l.b16 %v5000
    %v5829 = vunpack.c.h.b16 %v5000
    %v5830 = vunpack.c.l.b16 %v5001
    %v5831 = vunpack.c.l.b16 %v5002
    %v5832 = vunpack.c.h.b16 %v5002
    %v5833 = vunpack.c.l.b16 %v5003
    %v5834 = vunpack.c.l.b16 %v5004
    %v5835 = vunpack.c.h.b16 %v5004
    %v5836 = vunpack.c.l.b16 %v5005
    %v5837 = vunpack.c.l.b16 %v5006
    %v5838 = vunpack.c.h.b16 %v5006
    %v5839 = vunpack.c.l.b16 %v5007
    %v5840 = vunpack.c.l.b16 %v5008
    %v5841 = vunpack.c.h.b16 %v5008
    %v5842 = vunpack.c.l.b16 %v5009
    %v5843 = vunpack.c.l.b16 %v5010
    %v5844 = vunpack.c.h.b16 %v5010
    %v5845 = vunpack.c.l.b16 %v5011
    %v5846 = vunpack.c.l.b16 %v5012
    %v5847 = vunpack.c.h.b16 %v5012
    %v5848 = vunpack.c.l.b16 %v5013
    %v5849 = vunpack.c.l.b16 %v5014
    %v5850 = vunpack.c.h.b16 %v5014
    %v5851 = vunpack.c.l.b16 %v5015
    %v5852 = vunpack.c.l.b16 %v5016
    %v5853 = vunpack.c.h.b16 %v5016
    %v5854 = vunpack.c.l.b16 %v5017
    %v5855 = vunpack.c.l.b16 %v5018
    %v5856 = vunpack.c.h.b16 %v5018
    %v5857 = vunpack.c.l.b16 %v5019
    %v5858 = vunpack.c.l.b16 %v5020
    %v5859 = vunpack.c.h.b16 %v5020
    %v5860 = vunpack.c.l.b16 %v5021
    %v5861 = vunpack.c.l.b16 %v5022
    %v5862 = vunpack.c.h.b16 %v5022
    %v5863 = vunpack.c.l.b16 %v5023
    %v5864 = vunpack.c.l.b16 %v5024
    %v5865 = vunpack.c.h.b16 %v5024
    %v5866 = vunpack.c.l.b16 %v5025
    %v5867 = vunpack.c.l.b16 %v5026
    %v5868 = vunpack.c.h.b16 %v5026
    %v5869 = vunpack.c.l.b16 %v5027
    %v5870 = vunpack.c.l.b16 %v5028
    %v5871 = vunpack.c.h.b16 %v5028
    %v5872 = vunpack.c.l.b16 %v5029
    %v5873 = vunpack.c.l.b16 %v5030
    %v5874 = vunpack.c.h.b16 %v5030
    %v5875 = vunpack.c.l.b16 %v5031
    %v5876 = vunpack.c.l.b16 %v5032
    %v5877 = vunpack.c.h.b16 %v5032
    %v5878 = vunpack.c.l.b16 %v5033
    %v5879 = vunpack.c.l.b16 %v5034
    %v5880 = vunpack.c.h.b16 %v5034
    %v5881 = vunpack.c.l.b16 %v5035
    %v5882 = vunpack.c.l.b16 %v5036
    %v5883 = vunpack.c.h.b16 %v5036
    %v5884 = vunpack.c.l.b16 %v5037
    %v5885 = vunpack.c.l.b16 %v5038
    %v5886 = vunpack.c.h.b16 %v5038
    %v5887 = vunpack.c.l.b16 %v5039
    %v5888 = vunpack.c.l.b16 %v5040
    %v5889 = vunpack.c.h.b16 %v5040
    %v5890 = vunpack.c.l.b16 %v5041
    %v5891 = vunpack.c.l.b16 %v5042
    %v5892 = vunpack.c.h.b16 %v5042
    %v5893 = vunpack.c.l.b16 %v5043
    %v5894 = vunpack.c.l.b16 %v5044
    %v5895 = vunpack.c.h.b16 %v5044
    %v5896 = vunpack.c.l.b16 %v5045
    %v5897 = vunpack.c.l.b16 %v5046
    %v5898 = vunpack.c.h.b16 %v5046
    %v5899 = vunpack.c.l.b16 %v5047
    %v5900 = vunpack.c.l.b16 %v5048
    %v5901 = vunpack.c.h.b16 %v5048
    %v5902 = vunpack.c.l.b16 %v5049
    %v5903 = vunpack.c.l.b16 %v5050
    %v5904 = vunpack.c.h.b16 %v5050
    %v5905 = vunpack.c.l.b16 %v5051
    %v5906 = vunpack.c.l.b16 %v5052
    %v5907 = vunpack.c.h.b16 %v5052
    %v5908 = vunpack.c.l.b16 %v5053
    %v5909 = vunpack.c.l.b16 %v5054
    %v5910 = vunpack.c.h.b16 %v5054
    %v5911 = vunpack.c.l.b16 %v5055
    %v5912 = vunpack.c.l.b16 %v5056
    %v5913 = vunpack.c.h.b16 %v5056
    %v5914 = vunpack.c.l.b16 %v5057
    %v5915 = vunpack.c.l.b16 %v5058
    %v5916 = vunpack.c.h.b16 %v5058
    %v5917 = vunpack.c.l.b16 %v5059
    %v5918 = vunpack.c.l.b16 %v5060
    %v5919 = vunpack.c.h.b16 %v5060
    %v5920 = vunpack.c.l.b16 %v5061
    %v5921 = vunpack.c.l.b16 %v5062
    %v5922 = vunpack.c.h.b16 %v5062
    %v5923 = vunpack.c.l.b16 %v5063
    %v5924 = vunpack.c.l.b16 %v5064
    %v5925 = vunpack.c.h.b16 %v5064
    %v5926 = vunpack.c.l.b16 %v5065
    %v5927 = vunpack.c.l.b16 %v5066
    %v5928 = vunpack.c.h.b16 %v5066
    %v5929 = vunpack.c.l.b16 %v5067
    %v5930 = vunpack.c.l.b16 %v5068
    %v5931 = vunpack.c.h.b16 %v5068
    %v5932 = vunpack.c.l.b16 %v5069
    %v5933 = vunpack.c.l.b16 %v5070
    %v5934 = vunpack.c.h.b16 %v5070
    %v5935 = vunpack.c.l.b16 %v5071
    %v5936 = vunpack.c.l.b16 %v5072
    %v5937 = vunpack.c.h.b16 %v5072
    %v5938 = vunpack.c.l.b16 %v5073
    %v5939 = vunpack.c.l.b16 %v5074
    %v5940 = vunpack.c.h.b16 %v5074
    %v5941 = vunpack.c.l.b16 %v5075
    %v5942 = vunpack.c.l.b16 %v5076
    %v5943 = vunpack.c.h.b16 %v5076
    %v5944 = vunpack.c.l.b16 %v5077
    %v5945 = vunpack.c.l.b16 %v5078
    %v5946 = vunpack.c.h.b16 %v5078
    %v5947 = vunpack.c.l.b16 %v5079
    %v5948 = vunpack.c.l.b16 %v5080
    %v5949 = vunpack.c.h.b16 %v5080
    %v5950 = vunpack.c.l.b16 %v5081
    %v5951 = vunpack.c.l.b16 %v5082
    %v5952 = vunpack.c.h.b16 %v5082
    %v5953 = vunpack.c.l.b16 %v5083
    %v5954 = vunpack.c.l.b16 %v5084
    %v5955 = vunpack.c.h.b16 %v5084
    %v5956 = vunpack.c.l.b16 %v5085
    %v5957 = vunpack.c.l.b16 %v5086
    %v5958 = vunpack.c.h.b16 %v5086
    %v5959 = vunpack.c.l.b16 %v5087
    %v5960 = vunpack.c.l.b16 %v5088
    %v5961 = vunpack.c.h.b16 %v5088
    %v5962 = vunpack.c.l.b16 %v5089
    %v5963 = vunpack.c.l.b16 %v5090
    %v5964 = vunpack.c.h.b16 %v5090
    %v5965 = vunpack.c.l.b16 %v5091
    %v5966 = vunpack.c.l.b16 %v5092
    %v5967 = vunpack.c.h.b16 %v5092
    %v5968 = vunpack.c.l.b16 %v5093
    %v5969 = vunpack.c.l.b16 %v5094
    %v5970 = vunpack.c.h.b16 %v5094
    %v5971 = vunpack.c.l.b16 %v5095
    %v5972 = vunpack.c.l.b16 %v5096
    %v5973 = vunpack.c.h.b16 %v5096
    %v5974 = vunpack.c.l.b16 %v5097
    %v5975 = vunpack.c.l.b16 %v5098
    %v5976 = vunpack.c.h.b16 %v5098
    %v5977 = vunpack.c.l.b16 %v5099
    %v5978 = vunpack.c.l.b16 %v5100
    %v5979 = vunpack.c.h.b16 %v5100
    %v5980 = vunpack.c.l.b16 %v5101
    %v5981 = vunpack.c.l.b16 %v5102
    %v5982 = vunpack.c.h.b16 %v5102
    %v5983 = vunpack.c.l.b16 %v5103
    %v5984 = vunpack.c.l.b16 %v5104
    %v5985 = vunpack.c.h.b16 %v5104
    %v5986 = vunpack.c.l.b16 %v5105
    %v5987 = vunpack.c.l.b16 %v5106
    %v5988 = vunpack.c.h.b16 %v5106
    %v5989 = vunpack.c.l.b16 %v5107
    %v5990 = vunpack.c.l.b16 %v5108
    %v5991 = vunpack.c.h.b16 %v5108
    %v5992 = vunpack.c.l.b16 %v5109
    %v5993 = vunpack.c.l.b16 %v5110
    %v5994 = vunpack.c.h.b16 %v5110
    %v5995 = vunpack.c.l.b16 %v5111
    %v5996 = vunpack.c.l.b16 %v5112
    %v5997 = vunpack.c.h.b16 %v5112
    %v5998 = vunpack.c.l.b16 %v5113
    %v5999 = vunpack.c.l.b16 %v5114
    %v6000 = vunpack.c.h.b16 %v5114
    %v6001 = vunpack.c.l.b16 %v5115
    %v6002 = vunpack.c.l.b16 %v5116
    %v6003 = vunpack.c.h.b16 %v5116
    %v6004 = vunpack.c.l.b16 %v5117
    %v6005 = vunpack.c.l.b16 %v5118
    %v6006 = vunpack.c.h.b16 %v5118
    %v6007 = vunpack.c.l.b16 %v5119
    %v6008 = vunpack.c.l.b16 %v5120
    %v6009 = vunpack.c.h.b16 %v5120
    %v6010 = vunpack.c.l.b16 %v5121
    %v6011 = vunpack.c.l.b16 %v5122
    %v6012 = vunpack.c.h.b16 %v5122
    %v6013 = vunpack.c.l.b16 %v5123
    %v6014 = vunpack.c.l.b16 %v5124
    %v6015 = vunpack.c.h.b16 %v5124
    %v6016 = vunpack.c.l.b16 %v5125
    %v6017 = vunpack.c.l.b16 %v5126
    %v6018 = vunpack.c.h.b16 %v5126
    %v6019 = vunpack.c.l.b16 %v5127
    %v6020 = vunpack.c.l.b16 %v5128
    %v6021 = vunpack.c.h.b16 %v5128
    %v6022 = vunpack.c.l.b16 %v5129
    %v6023 = vunpack.c.l.b16 %v5130
    %v6024 = vunpack.c.h.b16 %v5130
    %v6025 = vunpack.c.l.b16 %v5131
    %v6026 = vunpack.c.l.b16 %v5132
    %v6027 = vunpack.c.h.b16 %v5132
    %v6028 = vunpack.c.l.b16 %v5133
    %v6029 = vunpack.c.l.b16 %v5134
    %v6030 = vunpack.c.h.b16 %v5134
    %v6031 = vunpack.c.l.b16 %v5135
    %v6032 = vunpack.c.l.b16 %v5136
    %v6033 = vunpack.c.h.b16 %v5136
    %v6034 = vunpack.c.l.b16 %v5137
    %v6035 = vunpack.c.l.b16 %v5138
    %v6036 = vunpack.c.h.b16 %v5138
    %v6037 = vunpack.c.l.b16 %v5139
    %v6038 = vunpack.c.l.b16 %v5140
    %v6039 = vunpack.c.h.b16 %v5140
    %v6040 = vunpack.c.l.b16 %v5141
    %v6041 = vunpack.c.l.b16 %v5142
    %v6042 = vunpack.c.h.b16 %v5142
    %v6043 = vunpack.c.l.b16 %v5143
    %v6044 = vunpack.c.l.b16 %v5144
    %v6045 = vunpack.c.h.b16 %v5144
    %v6046 = vunpack.c.l.b16 %v5145
    %v6047 = vunpack.c.l.b16 %v5146
    %v6048 = vunpack.c.h.b16 %v5146
    %v6049 = vunpack.c.l.b16 %v5147
    %v6050 = vunpack.c.l.b16 %v5148
    %v6051 = vunpack.c.h.b16 %v5148
    %v6052 = vunpack.c.l.b16 %v5149
    %v6053 = vunpack.c.l.b16 %v5150
    %v6054 = vunpack.c.h.b16 %v5150
    %v6055 = vunpack.c.l.b16 %v5151
    %v6056 = vunpack.c.l.b16 %v5152
    %v6057 = vunpack.c.h.b16 %v5152
    %v6058 = vunpack.c.l.b16 %v5153
    %v6059 = vunpack.c.l.b16 %v5154
    %v6060 = vunpack.c.h.b16 %v5154
    %v6061 = vunpack.c.l.b16 %v5155
    %v6062 = vunpack.c.l.b16 %v5156
    %v6063 = vunpack.c.h.b16 %v5156
    %v6064 = vunpack.c.l.b16 %v5157
    %v6065 = vunpack.c.l.b16 %v5158
    %v6066 = vunpack.c.h.b16 %v5158
    %v6067 = vunpack.c.l.b16 %v5159
    %v6068 = vunpack.c.l.b16 %v5160
    %v6069 = vunpack.c.h.b16 %v5160
    %v6070 = vunpack.c.l.b16 %v5161
    %v6071 = vunpack.c.l.b16 %v5162
    %v6072 = vunpack.c.h.b16 %v5162
    %v6073 = vunpack.c.l.b16 %v5163
    %v6074 = vunpack.c.l.b16 %v5164
    %v6075 = vunpack.c.h.b16 %v5164
    %v6076 = vunpack.c.l.b16 %v5165
    %v6077 = vunpack.c.l.b16 %v5166
    %v6078 = vunpack.c.h.b16 %v5166
    %v6079 = vunpack.c.l.b16 %v5167
    %v6080 = vunpack.c.l.b16 %v5168
    %v6081 = vunpack.c.h.b16 %v5168
    %v6082 = vunpack.c.l.b16 %v5169
    %v6083 = vunpack.c.l.b16 %v5170
    %v6084 = vunpack.c.h.b16 %v5170
    %v6085 = vunpack.c.l.b16 %v5171
    %v6086 = vunpack.c.l.b16 %v5172
    %v6087 = vunpack.c.h.b16 %v5172
    %v6088 = vunpack.c.l.b16 %v5173
    %v6089 = vunpack.c.l.b16 %v5174
    %v6090 = vunpack.c.h.b16 %v5174
    %v6091 = vunpack.c.l.b16 %v5175
    %v6092 = vunpack.c.l.b16 %v5176
    %v6093 = vunpack.c.h.b16 %v5176
    %v6094 = vunpack.c.l.b16 %v5177
    %v6095 = vunpack.c.l.b16 %v5178
    %v6096 = vunpack.c.h.b16 %v5178
    %v6097 = vunpack.c.l.b16 %v5179
    %v6098 = vunpack.c.l.b16 %v5180
    %v6099 = vunpack.c.h.b16 %v5180
    %v6100 = vunpack.c.l.b16 %v5181
    %v6101 = vunpack.c.l.b16 %v5182
    %v6102 = vunpack.c.h.b16 %v5182
    %v6103 = vunpack.c.l.b16 %v5183
    %v6104 = vunpack.c.l.b16 %v5184
    %v6105 = vunpack.c.h.b16 %v5184
    %v6106 = vunpack.c.l.b16 %v5185
    %v6107 = vunpack.c.l.b16 %v5186
    %v6108 = vunpack.c.h.b16 %v5186
    %v6109 = vunpack.c.l.b16 %v5187
    %v6110 = vunpack.c.l.b16 %v5188
    %v6111 = vunpack.c.h.b16 %v5188
    %v6112 = vunpack.c.l.b16 %v5189
    %v6113 = vunpack.c.l.b16 %v5190
    %v6114 = vunpack.c.h.b16 %v5190
    %v6115 = vunpack.c.l.b16 %v5191
    %v6116 = vunpack.c.l.b16 %v5192
    %v6117 = vunpack.c.h.b16 %v5192
    %v6118 = vunpack.c.l.b16 %v5193
    %v6119 = vunpack.c.l.b16 %v5194
    %v6120 = vunpack.c.h.b16 %v5194
    %v6121 = vunpack.c.l.b16 %v5195
    %v6122 = vunpack.c.l.b16 %v5196
    %v6123 = vunpack.c.h.b16 %v5196
    %v6124 = vunpack.c.l.b16 %v5197
    %v6125 = vunpack.c.l.b16 %v5198
    %v6126 = vunpack.c.h.b16 %v5198
    %v6127 = vunpack.c.l.b16 %v5199
    %v6128 = vunpack.c.l.b16 %v5200
    %v6129 = vunpack.c.h.b16 %v5200
    %v6130 = vunpack.c.l.b16 %v5201
    %v6131 = vunpack.c.l.b16 %v5202
    %v6132 = vunpack.c.h.b16 %v5202
    %v6133 = vunpack.c.l.b16 %v5203
    %v6134 = vunpack.c.l.b16 %v5204
    %v6135 = vunpack.c.h.b16 %v5204
    %v6136 = vunpack.c.l.b16 %v5205
    %v6137 = vunpack.c.l.b16 %v5206
    %v6138 = vunpack.c.h.b16 %v5206
    %v6139 = vunpack.c.l.b16 %v5207
    %v6140 = vunpack.c.l.b16 %v5208
    %v6141 = vunpack.c.h.b16 %v5208
    %v6142 = vunpack.c.l.b16 %v5209
    %v6143 = vunpack.c.l.b16 %v5210
    %v6144 = vunpack.c.h.b16 %v5210
    %v6145 = vunpack.c.l.b16 %v5211
    %v6146 = vunpack.c.l.b16 %v5212
    %v6147 = vunpack.c.h.b16 %v5212
    %v6148 = vunpack.c.l.b16 %v5213
    %v6149 = vunpack.c.l.b16 %v5214
    %v6150 = vunpack.c.h.b16 %v5214
    %v6151 = vunpack.c.l.b16 %v5215
    %v6152 = vunpack.c.l.b16 %v5216
    %v6153 = vunpack.c.h.b16 %v5216
    %v6154 = vunpack.c.l.b16 %v5217
    %v6155 = vunpack.c.l.b16 %v5218
    %v6156 = vunpack.c.h.b16 %v5218
    %v6157 = vunpack.c.l.b16 %v5219
    %v6158 = vunpack.c.l.b16 %v5220
    %v6159 = vunpack.c.h.b16 %v5220
    %v6160 = vunpack.c.l.b16 %v5221
    %v6161 = vunpack.c.l.b16 %v5222
    %v6162 = vunpack.c.h.b16 %v5222
    %v6163 = vunpack.c.l.b16 %v5223
    %v6164 = vunpack.c.l.b16 %v5224
    %v6165 = vunpack.c.h.b16 %v5224
    %v6166 = vunpack.c.l.b16 %v5225
    %v6167 = vunpack.c.l.b16 %v5226
    %v6168 = vunpack.c.h.b16 %v5226
    %v6169 = vunpack.c.l.b16 %v5227
    %v6170 = vunpack.c.l.b16 %v5228
    %v6171 = vunpack.c.h.b16 %v5228
    %v6172 = vunpack.c.l.b16 %v5229
    %v6173 = vunpack.c.l.b16 %v5230
    %v6174 = vunpack.c.h.b16 %v5230
    %v6175 = vunpack.c.l.b16 %v5231
    %v6176 = vunpack.c.l.b16 %v5232
    %v6177 = vunpack.c.h.b16 %v5232
    %v6178 = vunpack.c.l.b16 %v5233
    %v6179 = vunpack.c.l.b16 %v5234
    %v6180 = vunpack.c.h.b16 %v5234
    %v6181 = vunpack.c.l.b16 %v5235
    %v6182 = vunpack.c.l.b16 %v5236
    %v6183 = vunpack.c.h.b16 %v5236
    %v6184 = vunpack.c.l.b16 %v5237
    %v6185 = vunpack.c.l.b16 %v5238
    %v6186 = vunpack.c.h.b16 %v5238
    %v6187 = vunpack.c.l.b16 %v5239
    %v6188 = vunpack.c.l.b16 %v5240
    %v6189 = vunpack.c.h.b16 %v5240
    %v6190 = vunpack.c.l.b16 %v5241
    %v6191 = vunpack.c.l.b16 %v5242
    %v6192 = vunpack.c.h.b16 %v5242
    %v6193 = vunpack.c.l.b16 %v5243
    %v6194 = vunpack.c.l.b16 %v5244
    %v6195 = vunpack.c.h.b16 %v5244
    %v6196 = vunpack.c.l.b16 %v5245
    %v6197 = vunpack.c.l.b16 %v5246
    %v6198 = vunpack.c.h.b16 %v5246
    %v6199 = vunpack.c.l.b16 %v5247
    %v6200 = vunpack.c.l.b16 %v5248
    %v6201 = vunpack.c.h.b16 %v5248
    %v6202 = vunpack.c.l.b16 %v5249
    %v6203 = vunpack.c.l.b16 %v5250
    %v6204 = vunpack.c.h.b16 %v5250
    %v6205 = vunpack.c.l.b16 %v5251
    %v6206 = vunpack.c.l.b16 %v5252
    %v6207 = vunpack.c.h.b16 %v5252
    %v6208 = vunpack.c.l.b16 %v5253
    %v6209 = vunpack.c.l.b16 %v5254
    %v6210 = vunpack.c.h.b16 %v5254
    %v6211 = vunpack.c.l.b16 %v5255
    %v6212 = vunpack.c.l.b16 %v5256
    %v6213 = vunpack.c.h.b16 %v5256
    %v6214 = vunpack.c.l.b16 %v5257
    %v6215 = vunpack.c.l.b16 %v5258
    %v6216 = vunpack.c.h.b16 %v5258
    %v6217 = vunpack.c.l.b16 %v5259
    %v6218 = vunpack.c.l.b16 %v5260
    %v6219 = vunpack.c.h.b16 %v5260
    %v6220 = vunpack.c.l.b16 %v5261
    %v6221 = vunpack.c.l.b16 %v5262
    %v6222 = vunpack.c.h.b16 %v5262
    %v6223 = vunpack.c.l.b16 %v5263
    %v6224 = vunpack.c.l.b16 %v5264
    %v6225 = vunpack.c.h.b16 %v5264
    %v6226 = vunpack.c.l.b16 %v5265
    %v6227 = vunpack.c.l.b16 %v5266
    %v6228 = vunpack.c.h.b16 %v5266
    %v6229 = vunpack.c.l.b16 %v5267
    %v6230 = vunpack.c.l.b16 %v5268
    %v6231 = vunpack.c.h.b16 %v5268
    %v6232 = vunpack.c.l.b16 %v5269
    %v6233 = vunpack.c.l.b16 %v5270
    %v6234 = vunpack.c.h.b16 %v5270
    %v6235 = vunpack.c.l.b16 %v5271
    %v6236 = vunpack.c.l.b16 %v5272
    %v6237 = vunpack.c.h.b16 %v5272
    %v6238 = vunpack.c.l.b16 %v5273
    %v6239 = vunpack.c.l.b16 %v5274
    %v6240 = vunpack.c.h.b16 %v5274
    %v6241 = vunpack.c.l.b16 %v5275
    %v6242 = vunpack.c.l.b16 %v5276
    %v6243 = vunpack.c.h.b16 %v5276
    %v6244 = vunpack.c.l.b16 %v5277
    %v6245 = vunpack.c.l.b16 %v5278
    %v6246 = vunpack.c.h.b16 %v5278
    %v6247 = vunpack.c.l.b16 %v5279
    %v6248 = vunpack.c.l.b16 %v5280
    %v6249 = vunpack.c.h.b16 %v5280
    %v6250 = vunpack.c.l.b16 %v5281
    %v6251 = vunpack.c.l.b16 %v5282
    %v6252 = vunpack.c.h.b16 %v5282
    %v6253 = vunpack.c.l.b16 %v5283
    %v6254 = vunpack.c.l.b16 %v5284
    %v6255 = vunpack.c.h.b16 %v5284
    %v6256 = vunpack.c.l.b16 %v5285
    %v6257 = vunpack.c.l.b16 %v5286
    %v6258 = vunpack.c.h.b16 %v5286
    %v6259 = vunpack.c.l.b16 %v5287
    %v6260 = vunpack.c.l.b16 %v5288
    %v6261 = vunpack.c.h.b16 %v5288
    %v6262 = vunpack.c.l.b16 %v5289
    %v6263 = vunpack.c.l.b16 %v5290
    %v6264 = vunpack.c.h.b16 %v5290
    %v6265 = vunpack.c.l.b16 %v5291
    %v6266 = vunpack.c.l.b16 %v5292
    %v6267 = vunpack.c.h.b16 %v5292
    %v6268 = vunpack.c.l.b16 %v5293
    %v6269 = vunpack.c.l.b16 %v5294
    %v6270 = vunpack.c.h.b16 %v5294
    %v6271 = vunpack.c.l.b16 %v5295
    %v6272 = vunpack.c.l.b16 %v5296
    %v6273 = vunpack.c.h.b16 %v5296
    %v6274 = vunpack.c.l.b16 %v5297
    %v6275 = vpack.c.b16 %v5702, %v5699
    %v6276 = vpack.c.b16 %v5703, %v5700
    %v6277 = vpack.c.b16 %v5704, %v5701
    %v6278 = vpack.c.b16 %v5708, %v5705
    %v6279 = vpack.c.b16 %v5709, %v5706
    %v6280 = vpack.c.b16 %v5710, %v5707
    %v6281 = vpack.c.b16 %v5714, %v5711
    %v6282 = vpack.c.b16 %v5715, %v5712
    %v6283 = vpack.c.b16 %v5716, %v5713
    %v6284 = vpack.c.b16 %v5720, %v5717
    %v6285 = vpack.c.b16 %v5721, %v5718
    %v6286 = vpack.c.b16 %v5722, %v5719
    %v6287 = vpack.c.b16 %v5726, %v5723
    %v6288 = vpack.c.b16 %v5727, %v5724
    %v6289 = vpack.c.b16 %v5728, %v5725
    %v6290 = vpack.c.b16 %v5732, %v5729
    %v6291 = vpack.c.b16 %v5733, %v5730
    %v6292 = vpack.c.b16 %v5734, %v5731
    %v6293 = vpack.c.b16 %v5738, %v5735
    %v6294 = vpack.c.b16 %v5739, %v5736
    %v6295 = vpack.c.b16 %v5740, %v5737
    %v6296 = vpack.c.b16 %v5744, %v5741
    %v6297 = vpack.c.b16 %v5745, %v5742
    %v6298 = vpack.c.b16 %v5746, %v5743
    %v6299 = vpack.c.b16 %v5750, %v5747
    %v6300 = vpack.c.b16 %v5751, %v5748
    %v6301 = vpack.c.b16 %v5752, %v5749
    %v6302 = vpack.c.b16 %v5756, %v5753
    %v6303 = vpack.c.b16 %v5757, %v5754
    %v6304 = vpack.c.b16 %v5758, %v5755
    %v6305 = vpack.c.b16 %v5762, %v5759
    %v6306 = vpack.c.b16 %v5763, %v5760
    %v6307 = vpack.c.b16 %v5764, %v5761
    %v6308 = vpack.c.b16 %v5768, %v5765
    %v6309 = vpack.c.b16 %v5769, %v5766
    %v6310 = vpack.c.b16 %v5770, %v5767
    %v6311 = vpack.c.b16 %v5774, %v5771
    %v6312 = vpack.c.b16 %v5775, %v5772
    %v6313 = vpack.c.b16 %v5776, %v5773
    %v6314 = vpack.c.b16 %v5780, %v5777
    %v6315 = vpack.c.b16 %v5781, %v5778
    %v6316 = vpack.c.b16 %v5782, %v5779
    %v6317 = vpack.c.b16 %v5786, %v5783
    %v6318 = vpack.c.b16 %v5787, %v5784
    %v6319 = vpack.c.b16 %v5788, %v5785
    %v6320 = vpack.c.b16 %v5792, %v5789
    %v6321 = vpack.c.b16 %v5793, %v5790
    %v6322 = vpack.c.b16 %v5794, %v5791
    %v6323 = vpack.c.b16 %v5798, %v5795
    %v6324 = vpack.c.b16 %v5799, %v5796
    %v6325 = vpack.c.b16 %v5800, %v5797
    %v6326 = vpack.c.b16 %v5804, %v5801
    %v6327 = vpack.c.b16 %v5805, %v5802
    %v6328 = vpack.c.b16 %v5806, %v5803
    %v6329 = vpack.c.b16 %v5810, %v5807
    %v6330 = vpack.c.b16 %v5811, %v5808
    %v6331 = vpack.c.b16 %v5812, %v5809
    %v6332 = vpack.c.b16 %v5816, %v5813
    %v6333 = vpack.c.b16 %v5817, %v5814
    %v6334 = vpack.c.b16 %v5818, %v5815
    %v6335 = vpack.c.b16 %v5822, %v5819
    %v6336 = vpack.c.b16 %v5823, %v5820
    %v6337 = vpack.c.b16 %v5824, %v5821
    %v6338 = vpack.c.b16 %v5828, %v5825
    %v6339 = vpack.c.b16 %v5829, %v5826
    %v6340 = vpack.c.b16 %v5830, %v5827
    %v6341 = vpack.c.b16 %v5834, %v5831
    %v6342 = vpack.c.b16 %v5835, %v5832
    %v6343 = vpack.c.b16 %v5836, %v5833
    %v6344 = vpack.c.b16 %v5840, %v5837
    %v6345 = vpack.c.b16 %v5841, %v5838
    %v6346 = vpack.c.b16 %v5842, %v5839
    %v6347 = vpack.c.b16 %v5846, %v5843
    %v6348 = vpack.c.b16 %v5847, %v5844
    %v6349 = vpack.c.b16 %v5848, %v5845
    %v6350 = vpack.c.b16 %v5852, %v5849
    %v6351 = vpack.c.b16 %v5853, %v5850
    %v6352 = vpack.c.b16 %v5854, %v5851
    %v6353 = vpack.c.b16 %v5858, %v5855
    %v6354 = vpack.c.b16 %v5859, %v5856
    %v6355 = vpack.c.b16 %v5860, %v5857
    %v6356 = vpack.c.b16 %v5864, %v5861
    %v6357 = vpack.c.b16 %v5865, %v5862
    %v6358 = vpack.c.b16 %v5866, %v5863
    %v6359 = vpack.c.b16 %v5870, %v5867
    %v6360 = vpack.c.b16 %v5871, %v5868
    %v6361 = vpack.c.b16 %v5872, %v5869
    %v6362 = vpack.c.b16 %v5876, %v5873
    %v6363 = vpack.c.b16 %v5877, %v5874
    %v6364 = vpack.c.b16 %v5878, %v5875
    %v6365 = vpack.c.b16 %v5882, %v5879
    %v6366 = vpack.c.b16 %v5883, %v5880
    %v6367 = vpack.c.b16 %v5884, %v5881
    %v6368 = vpack.c.b16 %v5888, %v5885
    %v6369 = vpack.c.b16 %v5889, %v5886
    %v6370 = vpack.c.b16 %v5890, %v5887
    %v6371 = vpack.c.b16 %v5894, %v5891
    %v6372 = vpack.c.b16 %v5895, %v5892
    %v6373 = vpack.c.b16 %v5896, %v5893
    %v6374 = vpack.c.b16 %v5900, %v5897
    %v6375 = vpack.c.b16 %v5901, %v5898
    %v6376 = vpack.c.b16 %v5902, %v5899
    %v6377 = vpack.c.b16 %v5906, %v5903
    %v6378 = vpack.c.b16 %v5907, %v5904
    %v6379 = vpack.c.b16 %v5908, %v5905
    %v6380 = vpack.c.b16 %v5912, %v5909
    %v6381 = vpack.c.b16 %v5913, %v5910
    %v6382 = vpack.c.b16 %v5914, %v5911
    %v6383 = vpack.c.b16 %v5918, %v5915
    %v6384 = vpack.c.b16 %v5919, %v5916
    %v6385 = vpack.c.b16 %v5920, %v5917
    %v6386 = vpack.c.b16 %v5924, %v5921
    %v6387 = vpack.c.b16 %v5925, %v5922
    %v6388 = vpack.c.b16 %v5926, %v5923
    %v6389 = vpack.c.b16 %v5930, %v5927
    %v6390 = vpack.c.b16 %v5931, %v5928
    %v6391 = vpack.c.b16 %v5932, %v5929
    %v6392 = vpack.c.b16 %v5936, %v5933
    %v6393 = vpack.c.b16 %v5937, %v5934
    %v6394 = vpack.c.b16 %v5938, %v5935
    %v6395 = vpack.c.b16 %v5942, %v5939
    %v6396 = vpack.c.b16 %v5943, %v5940
    %v6397 = vpack.c.b16 %v5944, %v5941
    %v6398 = vpack.c.b16 %v5948, %v5945
    %v6399 = vpack.c.b16 %v5949, %v5946
    %v6400 = vpack.c.b16 %v5950, %v5947
    %v6401 = vpack.c.b16 %v5954, %v5951
    %v6402 = vpack.c.b16 %v5955, %v5952
    %v6403 = vpack.c.b16 %v5956, %v5953
    %v6404 = vpack.c.b16 %v5960, %v5957
    %v6405 = vpack.c.b16 %v5961, %v5958
    %v6406 = vpack.c.b16 %v5962, %v5959
    %v6407 = vpack.c.b16 %v5966, %v5963
    %v6408 = vpack.c.b16 %v5967, %v5964
    %v6409 = vpack.c.b16 %v5968, %v5965
    %v6410 = vpack.c.b16 %v5972, %v5969
    %v6411 = vpack.c.b16 %v5973, %v5970
    %v6412 = vpack.c.b16 %v5974, %v5971
    %v6413 = vpack.c.b16 %v5978, %v5975
    %v6414 = vpack.c.b16 %v5979, %v5976
    %v6415 = vpack.c.b16 %v5980, %v5977
    %v6416 = vpack.c.b16 %v5984, %v5981
    %v6417 = vpack.c.b16 %v5985, %v5982
    %v6418 = vpack.c.b16 %v5986, %v5983
    %v6419 = vpack.c.b16 %v5990, %v5987
    %v6420 = vpack.c.b16 %v5991, %v5988
    %v6421 = vpack.c.b16 %v5992, %v5989
    %v6422 = vpack.c.b16 %v5996, %v5993
    %v6423 = vpack.c.b16 %v5997, %v5994
    %v6424 = vpack.c.b16 %v5998, %v5995
    %v6425 = vpack.c.b16 %v6002, %v5999
    %v6426 = vpack.c.b16 %v6003, %v6000
    %v6427 = vpack.c.b16 %v6004, %v6001
    %v6428 = vpack.c.b16 %v6008, %v6005
    %v6429 = vpack.c.b16 %v6009, %v6006
    %v6430 = vpack.c.b16 %v6010, %v6007
    %v6431 = vpack.c.b16 %v6014, %v6011
    %v6432 = vpack.c.b16 %v6015, %v6012
    %v6433 = vpack.c.b16 %v6016, %v6013
    %v6434 = vpack.c.b16 %v6020, %v6017
    %v6435 = vpack.c.b16 %v6021, %v6018
    %v6436 = vpack.c.b16 %v6022, %v6019
    %v6437 = vpack.c.b16 %v6026, %v6023
    %v6438 = vpack.c.b16 %v6027, %v6024
    %v6439 = vpack.c.b16 %v6028, %v6025
    %v6440 = vpack.c.b16 %v6032, %v6029
    %v6441 = vpack.c.b16 %v6033, %v6030
    %v6442 = vpack.c.b16 %v6034, %v6031
    %v6443 = vpack.c.b16 %v6038, %v6035
    %v6444 = vpack.c.b16 %v6039, %v6036
    %v6445 = vpack.c.b16 %v6040, %v6037
    %v6446 = vpack.c.b16 %v6044, %v6041
    %v6447 = vpack.c.b16 %v6045, %v6042
    %v6448 = vpack.c.b16 %v6046, %v6043
    %v6449 = vpack.c.b16 %v6050, %v6047
    %v6450 = vpack.c.b16 %v6051, %v6048
    %v6451 = vpack.c.b16 %v6052, %v6049
    %v6452 = vpack.c.b16 %v6056, %v6053
    %v6453 = vpack.c.b16 %v6057, %v6054
    %v6454 = vpack.c.b16 %v6058, %v6055
    %v6455 = vpack.c.b16 %v6062, %v6059
    %v6456 = vpack.c.b16 %v6063, %v6060
    %v6457 = vpack.c.b16 %v6064, %v6061
    %v6458 = vpack.c.b16 %v6068, %v6065
    %v6459 = vpack.c.b16 %v6069, %v6066
    %v6460 = vpack.c.b16 %v6070, %v6067
    %v6461 = vpack.c.b16 %v6074, %v6071
    %v6462 = vpack.c.b16 %v6075, %v6072
    %v6463 = vpack.c.b16 %v6076, %v6073
    %v6464 = vpack.c.b16 %v6080, %v6077
    %v6465 = vpack.c.b16 %v6081, %v6078
    %v6466 = vpack.c.b16 %v6082, %v6079
    %v6467 = vpack.c.b16 %v6086, %v6083
    %v6468 = vpack.c.b16 %v6087, %v6084
    %v6469 = vpack.c.b16 %v6088, %v6085
    %v6470 = vpack.c.b16 %v6092, %v6089
    %v6471 = vpack.c.b16 %v6093, %v6090
    %v6472 = vpack.c.b16 %v6094, %v6091
    %v6473 = vpack.c.b16 %v6098, %v6095
    %v6474 = vpack.c.b16 %v6099, %v6096
    %v6475 = vpack.c.b16 %v6100, %v6097
    %v6476 = vpack.c.b16 %v6104, %v6101
    %v6477 = vpack.c.b16 %v6105, %v6102
    %v6478 = vpack.c.b16 %v6106, %v6103
    %v6479 = vpack.c.b16 %v6110, %v6107
    %v6480 = vpack.c.b16 %v6111, %v6108
    %v6481 = vpack.c.b16 %v6112, %v6109
    %v6482 = vpack.c.b16 %v6116, %v6113
    %v6483 = vpack.c.b16 %v6117, %v6114
    %v6484 = vpack.c.b16 %v6118, %v6115
    %v6485 = vpack.c.b16 %v6122, %v6119
    %v6486 = vpack.c.b16 %v6123, %v6120
    %v6487 = vpack.c.b16 %v6124, %v6121
    %v6488 = vpack.c.b16 %v6128, %v6125
    %v6489 = vpack.c.b16 %v6129, %v6126
    %v6490 = vpack.c.b16 %v6130, %v6127
    %v6491 = vpack.c.b16 %v6134, %v6131
    %v6492 = vpack.c.b16 %v6135, %v6132
    %v6493 = vpack.c.b16 %v6136, %v6133
    %v6494 = vpack.c.b16 %v6140, %v6137
    %v6495 = vpack.c.b16 %v6141, %v6138
    %v6496 = vpack.c.b16 %v6142, %v6139
    %v6497 = vpack.c.b16 %v6146, %v6143
    %v6498 = vpack.c.b16 %v6147, %v6144
    %v6499 = vpack.c.b16 %v6148, %v6145
    %v6500 = vpack.c.b16 %v6152, %v6149
    %v6501 = vpack.c.b16 %v6153, %v6150
    %v6502 = vpack.c.b16 %v6154, %v6151
    %v6503 = vpack.c.b16 %v6158, %v6155
    %v6504 = vpack.c.b16 %v6159, %v6156
    %v6505 = vpack.c.b16 %v6160, %v6157
    %v6506 = vpack.c.b16 %v6164, %v6161
    %v6507 = vpack.c.b16 %v6165, %v6162
    %v6508 = vpack.c.b16 %v6166, %v6163
    %v6509 = vpack.c.b16 %v6170, %v6167
    %v6510 = vpack.c.b16 %v6171, %v6168
    %v6511 = vpack.c.b16 %v6172, %v6169
    %v6512 = vpack.c.b16 %v6176, %v6173
    %v6513 = vpack.c.b16 %v6177, %v6174
    %v6514 = vpack.c.b16 %v6178, %v6175
    %v6515 = vpack.c.b16 %v6182, %v6179
    %v6516 = vpack.c.b16 %v6183, %v6180
    %v6517 = vpack.c.b16 %v6184, %v6181
    %v6518 = vpack.c.b16 %v6188, %v6185
    %v6519 = vpack.c.b16 %v6189, %v6186
    %v6520 = vpack.c.b16 %v6190, %v6187
    %v6521 = vpack.c.b16 %v6194, %v6191
    %v6522 = vpack.c.b16 %v6195, %v6192
    %v6523 = vpack.c.b16 %v6196, %v6193
    %v6524 = vpack.c.b16 %v6200, %v6197
    %v6525 = vpack.c.b16 %v6201, %v6198
    %v6526 = vpack.c.b16 %v6202, %v6199
    %v6527 = vpack.c.b16 %v6206, %v6203
    %v6528 = vpack.c.b16 %v6207, %v6204
    %v6529 = vpack.c.b16 %v6208, %v6205
    %v6530 = vpack.c.b16 %v6212, %v6209
    %v6531 = vpack.c.b16 %v6213, %v6210
    %v6532 = vpack.c.b16 %v6214, %v6211
    %v6533 = vpack.c.b16 %v6218, %v6215
    %v6534 = vpack.c.b16 %v6219, %v6216
    %v6535 = vpack.c.b16 %v6220, %v6217
    %v6536 = vpack.c.b16 %v6224, %v6221
    %v6537 = vpack.c.b16 %v6225, %v6222
    %v6538 = vpack.c.b16 %v6226, %v6223
    %v6539 = vpack.c.b16 %v6230, %v6227
    %v6540 = vpack.c.b16 %v6231, %v6228
    %v6541 = vpack.c.b16 %v6232, %v6229
    %v6542 = vpack.c.b16 %v6236, %v6233
    %v6543 = vpack.c.b16 %v6237, %v6234
    %v6544 = vpack.c.b16 %v6238, %v6235
    %v6545 = vpack.c.b16 %v6242, %v6239
    %v6546 = vpack.c.b16 %v6243, %v6240
    %v6547 = vpack.c.b16 %v6244, %v6241
    %v6548 = vpack.c.b16 %v6248, %v6245
    %v6549 = vpack.c.b16 %v6249, %v6246
    %v6550 = vpack.c.b16 %v6250, %v6247
    %v6551 = vpack.c.b16 %v6254, %v6251
    %v6552 = vpack.c.b16 %v6255, %v6252
    %v6553 = vpack.c.b16 %v6256, %v6253
    %v6554 = vpack.c.b16 %v6260, %v6257
    %v6555 = vpack.c.b16 %v6261, %v6258
    %v6556 = vpack.c.b16 %v6262, %v6259
    %v6557 = vpack.c.b16 %v6266, %v6263
    %v6558 = vpack.c.b16 %v6267, %v6264
    %v6559 = vpack.c.b16 %v6268, %v6265
    %v6560 = vpack.c.b16 %v6272, %v6269
    %v6561 = vpack.c.b16 %v6273, %v6270
    %v6562 = vpack.c.b16 %v6274, %v6271
    %6851 = vmatprep.subr.bf16.mxu0 %v6276
    %6852 = vmatpush1.bf16.msra.mxu0 %v6275
    %6853 = vmatprep.subr.bf16.mxu0 %v6279
    %6854 = vmatpush1.bf16.msra.mxu0 %v6278
    %6855 = vmatprep.subr.bf16.mxu0 %v6282
    %6856 = vmatpush1.bf16.msra.mxu0 %v6281
    %6857 = vmatprep.subr.bf16.mxu0 %v6285
    %6858 = vmatpush1.bf16.msra.mxu0 %v6284
    %6859 = vmatprep.subr.bf16.mxu0 %v6288
    %6860 = vmatpush1.bf16.msra.mxu0 %v6287
    %6861 = vmatprep.subr.bf16.mxu0 %v6291
    %6862 = vmatpush1.bf16.msra.mxu0 %v6290
    %6863 = vmatprep.subr.bf16.mxu0 %v6294
    %6864 = vmatpush1.bf16.msra.mxu0 %v6293
    %6865 = vmatprep.subr.bf16.mxu0 %v6297
    %6866 = vmatpush1.bf16.msra.mxu0 %v6296
    %6867 = vmatprep.subr.bf16.mxu0 %v6300
    %6868 = vmatpush1.bf16.msra.mxu0 %v6299
    %6869 = vmatprep.subr.bf16.mxu0 %v6303
    %6870 = vmatpush1.bf16.msra.mxu0 %v6302
    %6871 = vmatprep.subr.bf16.mxu0 %v6306
    %6872 = vmatpush1.bf16.msra.mxu0 %v6305
    %6873 = vmatprep.subr.bf16.mxu0 %v6309
    %6874 = vmatpush1.bf16.msra.mxu0 %v6308
    %6875 = vmatprep.subr.bf16.mxu0 %v6312
    %6876 = vmatpush1.bf16.msra.mxu0 %v6311
    %6877 = vmatprep.subr.bf16.mxu0 %v6315
    %6878 = vmatpush1.bf16.msra.mxu0 %v6314
    %6879 = vmatprep.subr.bf16.mxu0 %v6318
    %6880 = vmatpush1.bf16.msra.mxu0 %v6317
    %6881 = vmatprep.subr.bf16.mxu0 %v6321
    %6882 = vmatpush1.bf16.msra.mxu0 %v6320
    %6883 = vmatprep.mubr.bf16.mxu0 %v4723
    %6884 = vmatmul.mubr.bf16.gmra.mrb[0].mxu0 %v4722
    %v6885 = vpop.f32.mrb[0].mxu0
    %v6886 = vadd.f32 %v5303, %v6885
    %v6887 = vpop.f32.mrb[0].mxu0
    %v6888 = vadd.f32 %v5307, %v6887
    %v6889 = vpop.f32.mrb[0].mxu0
    %v6890 = vadd.f32 %v5303, %v6889
    %v6891 = vpop.f32.mrb[0].mxu0
    %v6892 = vadd.f32 %v5307, %v6891
    %6893 = vmatprep.mubr.bf16.mxu0 %v4735
    %6894 = vmatmul.mubr.bf16.gmra.mrb[0].mxu0 %v4734
    %v6895 = vpop.f32.mrb[0].mxu0
    %v6896 = vadd.f32 %v5303, %v6895
    %v6897 = vpop.f32.mrb[0].mxu0
    %v6898 = vadd.f32 %v5307, %v6897
    %v6899 = vpop.f32.mrb[0].mxu0
    %v6900 = vadd.f32 %v5303, %v6899
    %v6901 = vpop.f32.mrb[0].mxu0
    %v6902 = vadd.f32 %v5307, %v6901
    %6903 = vmatprep.mubr.bf16.mxu0 %v4747
    %6904 = vmatmul.mubr.bf16.gmra.mrb[0].mxu0 %v4746
    %v6905 = vpop.f32.mrb[0].mxu0
    %v6906 = vadd.f32 %v5303, %v6905
    %v6907 = vpop.f32.mrb[0].mxu0
    %v6908 = vadd.f32 %v5307, %v6907
    %v6909 = vpop.f32.mrb[0].mxu0
    %v6910 = vadd.f32 %v5303, %v6909
    %v6911 = vpop.f32.mrb[0].mxu0
    %v6912 = vadd.f32 %v5307, %v6911
    %6913 = vmatprep.mubr.bf16.mxu0 %v4759
    %6914 = vmatmul.mubr.bf16.gmra.mrb[0].mxu0 %v4758
    %v6915 = vpop.f32.mrb[0].mxu0
    %v6916 = vadd.f32 %v5303, %v6915
    %v6917 = vpop.f32.mrb[0].mxu0
    %v6918 = vadd.f32 %v5307, %v6917
    %v6919 = vpop.f32.mrb[0].mxu0
    %v6920 = vadd.f32 %v5303, %v6919
    %v6921 = vpop.f32.mrb[0].mxu0
    %v6922 = vadd.f32 %v5307, %v6921
    %6923 = vmatprep.mubr.bf16.mxu0 %v4771
    %6924 = vmatmul.mubr.bf16.gmra.mrb[0].mxu0 %v4770
    %v6925 = vpop.f32.mrb[0].mxu0
    %v6926 = vadd.f32 %v5303, %v6925
    %v6927 = vpop.f32.mrb[0].mxu0
    %v6928 = vadd.f32 %v5307, %v6927
    %v6929 = vpop.f32.mrb[0].mxu0
    %v6930 = vadd.f32 %v5303, %v6929
    %v6931 = vpop.f32.mrb[0].mxu0
    %v6932 = vadd.f32 %v5307, %v6931
    %6933 = vmatprep.mubr.bf16.mxu0 %v4783
    %6934 = vmatmul.mubr.bf16.gmra.mrb[0].mxu0 %v4782
    %v6935 = vpop.f32.mrb[0].mxu0
    %v6936 = vadd.f32 %v5303, %v6935
    %v6937 = vpop.f32.mrb[0].mxu0
    %v6938 = vadd.f32 %v5307, %v6937
    %v6939 = vpop.f32.mrb[0].mxu0
    %v6940 = vadd.f32 %v5303, %v6939
    %v6941 = vpop.f32.mrb[0].mxu0
    %v6942 = vadd.f32 %v5307, %v6941
    %6943 = vmatprep.mubr.bf16.mxu0 %v4795
    %6944 = vmatmul.mubr.bf16.gmra.mrb[0].mxu0 %v4794
    %v6945 = vpop.f32.mrb[0].mxu0
    %v6946 = vadd.f32 %v5303, %v6945
    %v6947 = vpop.f32.mrb[0].mxu0
    %v6948 = vadd.f32 %v5307, %v6947
    %v6949 = vpop.f32.mrb[0].mxu0
    %v6950 = vadd.f32 %v5303, %v6949
    %v6951 = vpop.f32.mrb[0].mxu0
    %v6952 = vadd.f32 %v5307, %v6951
    %6953 = vmatprep.mubr.bf16.mxu0 %v4807
    %6954 = vmatmul.mubr.bf16.gmra.mrb[0].mxu0 %v4806
    %v6955 = vpop.f32.mrb[0].mxu0
    %v6956 = vadd.f32 %v5303, %v6955
    %v6957 = vpop.f32.mrb[0].mxu0
    %v6958 = vadd.f32 %v5307, %v6957
    %v6959 = vpop.f32.mrb[0].mxu0
    %v6960 = vadd.f32 %v5303, %v6959
    %v6961 = vpop.f32.mrb[0].mxu0
    %v6962 = vadd.f32 %v5307, %v6961
    %6963 = vmatprep.mubr.bf16.mxu0 %v4819
    %6964 = vmatmul.mubr.bf16.gmra.mrb[0].mxu0 %v4818
    %v6965 = vpop.f32.mrb[0].mxu0
    %v6966 = vadd.f32 %v5303, %v6965
    %v6967 = vpop.f32.mrb[0].mxu0
    %v6968 = vadd.f32 %v5307, %v6967
    %v6969 = vpop.f32.mrb[0].mxu0
    %v6970 = vadd.f32 %v5303, %v6969
    %v6971 = vpop.f32.mrb[0].mxu0
    %v6972 = vadd.f32 %v5307, %v6971
    %6973 = vmatprep.mubr.bf16.mxu0 %v4831
    %6974 = vmatmul.mubr.bf16.gmra.mrb[0].mxu0 %v4830
    %v6975 = vpop.f32.mrb[0].mxu0
    %v6976 = vadd.f32 %v5303, %v6975
    %v6977 = vpop.f32.mrb[0].mxu0
    %v6978 = vadd.f32 %v5307, %v6977
    %v6979 = vpop.f32.mrb[0].mxu0
    %v6980 = vadd.f32 %v5303, %v6979
    %v6981 = vpop.f32.mrb[0].mxu0
    %v6982 = vadd.f32 %v5307, %v6981
    %6983 = vmatprep.mubr.bf16.mxu0 %v4843
    %6984 = vmatmul.mubr.bf16.gmra.mrb[0].mxu0 %v4842
    %v6985 = vpop.f32.mrb[0].mxu0
    %v6986 = vadd.f32 %v5303, %v6985
    %v6987 = vpop.f32.mrb[0].mxu0
    %v6988 = vadd.f32 %v5307, %v6987
    %v6989 = vpop.f32.mrb[0].mxu0
    %v6990 = vadd.f32 %v5303, %v6989
    %v6991 = vpop.f32.mrb[0].mxu0
    %v6992 = vadd.f32 %v5307, %v6991
    %6993 = vmatprep.mubr.bf16.mxu0 %v4855
    %6994 = vmatmul.mubr.bf16.gmra.mrb[0].mxu0 %v4854
    %v6995 = vpop.f32.mrb[0].mxu0
    %v6996 = vadd.f32 %v5303, %v6995
    %v6997 = vpop.f32.mrb[0].mxu0
    %v6998 = vadd.f32 %v5307, %v6997
    %v6999 = vpop.f32.mrb[0].mxu0
    %v7000 = vadd.f32 %v5303, %v6999
    %v7001 = vpop.f32.mrb[0].mxu0
    %v7002 = vadd.f32 %v5307, %v7001
    %7003 = vmatprep.mubr.bf16.mxu0 %v4867
    %7004 = vmatmul.mubr.bf16.gmra.mrb[0].mxu0 %v4866
    %v7005 = vpop.f32.mrb[0].mxu0
    %v7006 = vadd.f32 %v5303, %v7005
    %v7007 = vpop.f32.mrb[0].mxu0
    %v7008 = vadd.f32 %v5307, %v7007
    %v7009 = vpop.f32.mrb[0].mxu0
    %v7010 = vadd.f32 %v5303, %v7009
    %v7011 = vpop.f32.mrb[0].mxu0
    %v7012 = vadd.f32 %v5307, %v7011
    %7013 = vmatprep.mubr.bf16.mxu0 %v4879
    %7014 = vmatmul.mubr.bf16.gmra.mrb[0].mxu0 %v4878
    %v7015 = vpop.f32.mrb[0].mxu0
    %v7016 = vadd.f32 %v5303, %v7015
    %v7017 = vpop.f32.mrb[0].mxu0
    %v7018 = vadd.f32 %v5307, %v7017
    %v7019 = vpop.f32.mrb[0].mxu0
    %v7020 = vadd.f32 %v5303, %v7019
    %v7021 = vpop.f32.mrb[0].mxu0
    %v7022 = vadd.f32 %v5307, %v7021
    %7023 = vmatprep.mubr.bf16.mxu0 %v4891
    %7024 = vmatmul.mubr.bf16.gmra.mrb[0].mxu0 %v4890
    %v7025 = vpop.f32.mrb[0].mxu0
    %v7026 = vadd.f32 %v5303, %v7025
    %v7027 = vpop.f32.mrb[0].mxu0
    %v7028 = vadd.f32 %v5307, %v7027
    %v7029 = vpop.f32.mrb[0].mxu0
    %v7030 = vadd.f32 %v5303, %v7029
    %v7031 = vpop.f32.mrb[0].mxu0
    %v7032 = vadd.f32 %v5307, %v7031
    %7033 = vmatprep.mubr.bf16.mxu0 %v4903
    %7034 = vmatmul.mubr.bf16.gmra.mrb[0].mxu0 %v4902
    %v7035 = vpop.f32.mrb[0].mxu0
    %v7036 = vadd.f32 %v5303, %v7035
    %v7037 = vpop.f32.mrb[0].mxu0
    %v7038 = vadd.f32 %v5307, %v7037
    %v7039 = vpop.f32.mrb[0].mxu0
    %v7040 = vadd.f32 %v5303, %v7039
    %v7041 = vpop.f32.mrb[0].mxu0
    %v7042 = vadd.f32 %v5307, %v7041
    %7043 = vdwg.mxu0
    %7044 = vmatprep.subr.bf16.mxu0 %v6324
    %7045 = vmatpush1.bf16.msra.mxu0 %v6323
    %7046 = vmatprep.subr.bf16.mxu0 %v6327
    %7047 = vmatpush1.bf16.msra.mxu0 %v6326
    %7048 = vmatprep.subr.bf16.mxu0 %v6330
    %7049 = vmatpush1.bf16.msra.mxu0 %v6329
    %7050 = vmatprep.subr.bf16.mxu0 %v6333
    %7051 = vmatpush1.bf16.msra.mxu0 %v6332
    %7052 = vmatprep.subr.bf16.mxu0 %v6336
    %7053 = vmatpush1.bf16.msra.mxu0 %v6335
    %7054 = vmatprep.subr.bf16.mxu0 %v6339
    %7055 = vmatpush1.bf16.msra.mxu0 %v6338
    %7056 = vmatprep.subr.bf16.mxu0 %v6342
    %7057 = vmatpush1.bf16.msra.mxu0 %v6341
    %7058 = vmatprep.subr.bf16.mxu0 %v6345
    %7059 = vmatpush1.bf16.msra.mxu0 %v6344
    %7060 = vmatprep.subr.bf16.mxu0 %v6348
    %7061 = vmatpush1.bf16.msra.mxu0 %v6347
    %7062 = vmatprep.subr.bf16.mxu0 %v6351
    %7063 = vmatpush1.bf16.msra.mxu0 %v6350
    %7064 = vmatprep.subr.bf16.mxu0 %v6354
    %7065 = vmatpush1.bf16.msra.mxu0 %v6353
    %7066 = vmatprep.subr.bf16.mxu0 %v6357
    %7067 = vmatpush1.bf16.msra.mxu0 %v6356
    %7068 = vmatprep.subr.bf16.mxu0 %v6360
    %7069 = vmatpush1.bf16.msra.mxu0 %v6359
    %7070 = vmatprep.subr.bf16.mxu0 %v6363
    %7071 = vmatpush1.bf16.msra.mxu0 %v6362
    %7072 = vmatprep.subr.bf16.mxu0 %v6366
    %7073 = vmatpush1.bf16.msra.mxu0 %v6365
    %7074 = vmatprep.subr.bf16.mxu0 %v6369
    %7075 = vmatpush1.bf16.msra.mxu0 %v6368
    %7076 = vmatprep.mubr.bf16.mxu0 %v4725
    %7077 = vmatmul.mubr.bf16.gmra.mrb[0].mxu0 %v4724
    %v7078 = vpop.f32.mrb[0].mxu0
    %v7079 = vadd.f32 %v6886, %v7078
    %v7080 = vpop.f32.mrb[0].mxu0
    %v7081 = vadd.f32 %v6888, %v7080
    %v7082 = vpop.f32.mrb[0].mxu0
    %v7083 = vadd.f32 %v6890, %v7082
    %v7084 = vpop.f32.mrb[0].mxu0
    %v7085 = vadd.f32 %v6892, %v7084
    %7086 = vmatprep.mubr.bf16.mxu0 %v4737
    %7087 = vmatmul.mubr.bf16.gmra.mrb[0].mxu0 %v4736
    %v7088 = vpop.f32.mrb[0].mxu0
    %v7089 = vadd.f32 %v6896, %v7088
    %v7090 = vpop.f32.mrb[0].mxu0
    %v7091 = vadd.f32 %v6898, %v7090
    %v7092 = vpop.f32.mrb[0].mxu0
    %v7093 = vadd.f32 %v6900, %v7092
    %v7094 = vpop.f32.mrb[0].mxu0
    %v7095 = vadd.f32 %v6902, %v7094
    %7096 = vmatprep.mubr.bf16.mxu0 %v4749
    %7097 = vmatmul.mubr.bf16.gmra.mrb[0].mxu0 %v4748
    %v7098 = vpop.f32.mrb[0].mxu0
    %v7099 = vadd.f32 %v6906, %v7098
    %v7100 = vpop.f32.mrb[0].mxu0
    %v7101 = vadd.f32 %v6908, %v7100
    %v7102 = vpop.f32.mrb[0].mxu0
    %v7103 = vadd.f32 %v6910, %v7102
    %v7104 = vpop.f32.mrb[0].mxu0
    %v7105 = vadd.f32 %v6912, %v7104
    %7106 = vmatprep.mubr.bf16.mxu0 %v4761
    %7107 = vmatmul.mubr.bf16.gmra.mrb[0].mxu0 %v4760
    %v7108 = vpop.f32.mrb[0].mxu0
    %v7109 = vadd.f32 %v6916, %v7108
    %v7110 = vpop.f32.mrb[0].mxu0
    %v7111 = vadd.f32 %v6918, %v7110
    %v7112 = vpop.f32.mrb[0].mxu0
    %v7113 = vadd.f32 %v6920, %v7112
    %v7114 = vpop.f32.mrb[0].mxu0
    %v7115 = vadd.f32 %v6922, %v7114
    %7116 = vmatprep.mubr.bf16.mxu0 %v4773
    %7117 = vmatmul.mubr.bf16.gmra.mrb[0].mxu0 %v4772
    %v7118 = vpop.f32.mrb[0].mxu0
    %v7119 = vadd.f32 %v6926, %v7118
    %v7120 = vpop.f32.mrb[0].mxu0
    %v7121 = vadd.f32 %v6928, %v7120
    %v7122 = vpop.f32.mrb[0].mxu0
    %v7123 = vadd.f32 %v6930, %v7122
    %v7124 = vpop.f32.mrb[0].mxu0
    %v7125 = vadd.f32 %v6932, %v7124
    %7126 = vmatprep.mubr.bf16.mxu0 %v4785
    %7127 = vmatmul.mubr.bf16.gmra.mrb[0].mxu0 %v4784
    %v7128 = vpop.f32.mrb[0].mxu0
    %v7129 = vadd.f32 %v6936, %v7128
    %v7130 = vpop.f32.mrb[0].mxu0
    %v7131 = vadd.f32 %v6938, %v7130
    %v7132 = vpop.f32.mrb[0].mxu0
    %v7133 = vadd.f32 %v6940, %v7132
    %v7134 = vpop.f32.mrb[0].mxu0
    %v7135 = vadd.f32 %v6942, %v7134
    %7136 = vmatprep.mubr.bf16.mxu0 %v4797
    %7137 = vmatmul.mubr.bf16.gmra.mrb[0].mxu0 %v4796
    %v7138 = vpop.f32.mrb[0].mxu0
    %v7139 = vadd.f32 %v6946, %v7138
    %v7140 = vpop.f32.mrb[0].mxu0
    %v7141 = vadd.f32 %v6948, %v7140
    %v7142 = vpop.f32.mrb[0].mxu0
    %v7143 = vadd.f32 %v6950, %v7142
    %v7144 = vpop.f32.mrb[0].mxu0
    %v7145 = vadd.f32 %v6952, %v7144
    %7146 = vmatprep.mubr.bf16.mxu0 %v4809
    %7147 = vmatmul.mubr.bf16.gmra.mrb[0].mxu0 %v4808
    %v7148 = vpop.f32.mrb[0].mxu0
    %v7149 = vadd.f32 %v6956, %v7148
    %v7150 = vpop.f32.mrb[0].mxu0
    %v7151 = vadd.f32 %v6958, %v7150
    %v7152 = vpop.f32.mrb[0].mxu0
    %v7153 = vadd.f32 %v6960, %v7152
    %v7154 = vpop.f32.mrb[0].mxu0
    %v7155 = vadd.f32 %v6962, %v7154
    %7156 = vmatprep.mubr.bf16.mxu0 %v4821
    %7157 = vmatmul.mubr.bf16.gmra.mrb[0].mxu0 %v4820
    %v7158 = vpop.f32.mrb[0].mxu0
    %v7159 = vadd.f32 %v6966, %v7158
    %v7160 = vpop.f32.mrb[0].mxu0
    %v7161 = vadd.f32 %v6968, %v7160
    %v7162 = vpop.f32.mrb[0].mxu0
    %v7163 = vadd.f32 %v6970, %v7162
    %v7164 = vpop.f32.mrb[0].mxu0
    %v7165 = vadd.f32 %v6972, %v7164
    %7166 = vmatprep.mubr.bf16.mxu0 %v4833
    %7167 = vmatmul.mubr.bf16.gmra.mrb[0].mxu0 %v4832
    %v7168 = vpop.f32.mrb[0].mxu0
    %v7169 = vadd.f32 %v6976, %v7168
    %v7170 = vpop.f32.mrb[0].mxu0
    %v7171 = vadd.f32 %v6978, %v7170
    %v7172 = vpop.f32.mrb[0].mxu0
    %v7173 = vadd.f32 %v6980, %v7172
    %v7174 = vpop.f32.mrb[0].mxu0
    %v7175 = vadd.f32 %v6982, %v7174
    %7176 = vmatprep.mubr.bf16.mxu0 %v4845
    %7177 = vmatmul.mubr.bf16.gmra.mrb[0].mxu0 %v4844
    %v7178 = vpop.f32.mrb[0].mxu0
    %v7179 = vadd.f32 %v6986, %v7178
    %v7180 = vpop.f32.mrb[0].mxu0
    %v7181 = vadd.f32 %v6988, %v7180
    %v7182 = vpop.f32.mrb[0].mxu0
    %v7183 = vadd.f32 %v6990, %v7182
    %v7184 = vpop.f32.mrb[0].mxu0
    %v7185 = vadd.f32 %v6992, %v7184
    %7186 = vmatprep.mubr.bf16.mxu0 %v4857
    %7187 = vmatmul.mubr.bf16.gmra.mrb[0].mxu0 %v4856
    %v7188 = vpop.f32.mrb[0].mxu0
    %v7189 = vadd.f32 %v6996, %v7188
    %v7190 = vpop.f32.mrb[0].mxu0
    %v7191 = vadd.f32 %v6998, %v7190
    %v7192 = vpop.f32.mrb[0].mxu0
    %v7193 = vadd.f32 %v7000, %v7192
    %v7194 = vpop.f32.mrb[0].mxu0
    %v7195 = vadd.f32 %v7002, %v7194
    %7196 = vmatprep.mubr.bf16.mxu0 %v4869
    %7197 = vmatmul.mubr.bf16.gmra.mrb[0].mxu0 %v4868
    %v7198 = vpop.f32.mrb[0].mxu0
    %v7199 = vadd.f32 %v7006, %v7198
    %v7200 = vpop.f32.mrb[0].mxu0
    %v7201 = vadd.f32 %v7008, %v7200
    %v7202 = vpop.f32.mrb[0].mxu0
    %v7203 = vadd.f32 %v7010, %v7202
    %v7204 = vpop.f32.mrb[0].mxu0
    %v7205 = vadd.f32 %v7012, %v7204
    %7206 = vmatprep.mubr.bf16.mxu0 %v4881
    %7207 = vmatmul.mubr.bf16.gmra.mrb[0].mxu0 %v4880
    %v7208 = vpop.f32.mrb[0].mxu0
    %v7209 = vadd.f32 %v7016, %v7208
    %v7210 = vpop.f32.mrb[0].mxu0
    %v7211 = vadd.f32 %v7018, %v7210
    %v7212 = vpop.f32.mrb[0].mxu0
    %v7213 = vadd.f32 %v7020, %v7212
    %v7214 = vpop.f32.mrb[0].mxu0
    %v7215 = vadd.f32 %v7022, %v7214
    %7216 = vmatprep.mubr.bf16.mxu0 %v4893
    %7217 = vmatmul.mubr.bf16.gmra.mrb[0].mxu0 %v4892
    %v7218 = vpop.f32.mrb[0].mxu0
    %v7219 = vadd.f32 %v7026, %v7218
    %v7220 = vpop.f32.mrb[0].mxu0
    %v7221 = vadd.f32 %v7028, %v7220
    %v7222 = vpop.f32.mrb[0].mxu0
    %v7223 = vadd.f32 %v7030, %v7222
    %v7224 = vpop.f32.mrb[0].mxu0
    %v7225 = vadd.f32 %v7032, %v7224
    %7226 = vmatprep.mubr.bf16.mxu0 %v4905
    %7227 = vmatmul.mubr.bf16.gmra.mrb[0].mxu0 %v4904
    %v7228 = vpop.f32.mrb[0].mxu0
    %v7229 = vadd.f32 %v7036, %v7228
    %v7230 = vpop.f32.mrb[0].mxu0
    %v7231 = vadd.f32 %v7038, %v7230
    %v7232 = vpop.f32.mrb[0].mxu0
    %v7233 = vadd.f32 %v7040, %v7232
    %v7234 = vpop.f32.mrb[0].mxu0
    %v7235 = vadd.f32 %v7042, %v7234
    %7236 = vdwg.mxu0
    %7237 = vmatprep.subr.bf16.mxu0 %v6372
    %7238 = vmatpush1.bf16.msra.mxu0 %v6371
    %7239 = vmatprep.subr.bf16.mxu0 %v6375
    %7240 = vmatpush1.bf16.msra.mxu0 %v6374
    %7241 = vmatprep.subr.bf16.mxu0 %v6378
    %7242 = vmatpush1.bf16.msra.mxu0 %v6377
    %7243 = vmatprep.subr.bf16.mxu0 %v6381
    %7244 = vmatpush1.bf16.msra.mxu0 %v6380
    %7245 = vmatprep.subr.bf16.mxu0 %v6384
    %7246 = vmatpush1.bf16.msra.mxu0 %v6383
    %7247 = vmatprep.subr.bf16.mxu0 %v6387
    %7248 = vmatpush1.bf16.msra.mxu0 %v6386
    %7249 = vmatprep.subr.bf16.mxu0 %v6390
    %7250 = vmatpush1.bf16.msra.mxu0 %v6389
    %7251 = vmatprep.subr.bf16.mxu0 %v6393
    %7252 = vmatpush1.bf16.msra.mxu0 %v6392
    %7253 = vmatprep.subr.bf16.mxu0 %v6396
    %7254 = vmatpush1.bf16.msra.mxu0 %v6395
    %7255 = vmatprep.subr.bf16.mxu0 %v6399
    %7256 = vmatpush1.bf16.msra.mxu0 %v6398
    %7257 = vmatprep.subr.bf16.mxu0 %v6402
    %7258 = vmatpush1.bf16.msra.mxu0 %v6401
    %7259 = vmatprep.subr.bf16.mxu0 %v6405
    %7260 = vmatpush1.bf16.msra.mxu0 %v6404
    %7261 = vmatprep.subr.bf16.mxu0 %v6408
    %7262 = vmatpush1.bf16.msra.mxu0 %v6407
    %7263 = vmatprep.subr.bf16.mxu0 %v6411
    %7264 = vmatpush1.bf16.msra.mxu0 %v6410
    %7265 = vmatprep.subr.bf16.mxu0 %v6414
    %7266 = vmatpush1.bf16.msra.mxu0 %v6413
    %7267 = vmatprep.subr.bf16.mxu0 %v6417
    %7268 = vmatpush1.bf16.msra.mxu0 %v6416
    %7269 = vmatprep.mubr.bf16.mxu0 %v4727
    %7270 = vmatmul.mubr.bf16.gmra.mrb[0].mxu0 %v4726
    %v7271 = vpop.f32.mrb[0].mxu0
    %v7272 = vadd.f32 %v7079, %v7271
    %v7273 = vpop.f32.mrb[0].mxu0
    %v7274 = vadd.f32 %v7081, %v7273
    %v7275 = vpop.f32.mrb[0].mxu0
    %v7276 = vadd.f32 %v7083, %v7275
    %v7277 = vpop.f32.mrb[0].mxu0
    %v7278 = vadd.f32 %v7085, %v7277
    %7279 = vmatprep.mubr.bf16.mxu0 %v4739
    %7280 = vmatmul.mubr.bf16.gmra.mrb[0].mxu0 %v4738
    %v7281 = vpop.f32.mrb[0].mxu0
    %v7282 = vadd.f32 %v7089, %v7281
    %v7283 = vpop.f32.mrb[0].mxu0
    %v7284 = vadd.f32 %v7091, %v7283
    %v7285 = vpop.f32.mrb[0].mxu0
    %v7286 = vadd.f32 %v7093, %v7285
    %v7287 = vpop.f32.mrb[0].mxu0
    %v7288 = vadd.f32 %v7095, %v7287
    %7289 = vmatprep.mubr.bf16.mxu0 %v4751
    %7290 = vmatmul.mubr.bf16.gmra.mrb[0].mxu0 %v4750
    %v7291 = vpop.f32.mrb[0].mxu0
    %v7292 = vadd.f32 %v7099, %v7291
    %v7293 = vpop.f32.mrb[0].mxu0
    %v7294 = vadd.f32 %v7101, %v7293
    %v7295 = vpop.f32.mrb[0].mxu0
    %v7296 = vadd.f32 %v7103, %v7295
    %v7297 = vpop.f32.mrb[0].mxu0
    %v7298 = vadd.f32 %v7105, %v7297
    %7299 = vmatprep.mubr.bf16.mxu0 %v4763
    %7300 = vmatmul.mubr.bf16.gmra.mrb[0].mxu0 %v4762
    %v7301 = vpop.f32.mrb[0].mxu0
    %v7302 = vadd.f32 %v7109, %v7301
    %v7303 = vpop.f32.mrb[0].mxu0
    %v7304 = vadd.f32 %v7111, %v7303
    %v7305 = vpop.f32.mrb[0].mxu0
    %v7306 = vadd.f32 %v7113, %v7305
    %v7307 = vpop.f32.mrb[0].mxu0
    %v7308 = vadd.f32 %v7115, %v7307
    %7309 = vmatprep.mubr.bf16.mxu0 %v4775
    %7310 = vmatmul.mubr.bf16.gmra.mrb[0].mxu0 %v4774
    %v7311 = vpop.f32.mrb[0].mxu0
    %v7312 = vadd.f32 %v7119, %v7311
    %v7313 = vpop.f32.mrb[0].mxu0
    %v7314 = vadd.f32 %v7121, %v7313
    %v7315 = vpop.f32.mrb[0].mxu0
    %v7316 = vadd.f32 %v7123, %v7315
    %v7317 = vpop.f32.mrb[0].mxu0
    %v7318 = vadd.f32 %v7125, %v7317
    %7319 = vmatprep.mubr.bf16.mxu0 %v4787
    %7320 = vmatmul.mubr.bf16.gmra.mrb[0].mxu0 %v4786
    %v7321 = vpop.f32.mrb[0].mxu0
    %v7322 = vadd.f32 %v7129, %v7321
    %v7323 = vpop.f32.mrb[0].mxu0
    %v7324 = vadd.f32 %v7131, %v7323
    %v7325 = vpop.f32.mrb[0].mxu0
    %v7326 = vadd.f32 %v7133, %v7325
    %v7327 = vpop.f32.mrb[0].mxu0
    %v7328 = vadd.f32 %v7135, %v7327
    %7329 = vmatprep.mubr.bf16.mxu0 %v4799
    %7330 = vmatmul.mubr.bf16.gmra.mrb[0].mxu0 %v4798
    %v7331 = vpop.f32.mrb[0].mxu0
    %v7332 = vadd.f32 %v7139, %v7331
    %v7333 = vpop.f32.mrb[0].mxu0
    %v7334 = vadd.f32 %v7141, %v7333
    %v7335 = vpop.f32.mrb[0].mxu0
    %v7336 = vadd.f32 %v7143, %v7335
    %v7337 = vpop.f32.mrb[0].mxu0
    %v7338 = vadd.f32 %v7145, %v7337
    %7339 = vmatprep.mubr.bf16.mxu0 %v4811
    %7340 = vmatmul.mubr.bf16.gmra.mrb[0].mxu0 %v4810
    %v7341 = vpop.f32.mrb[0].mxu0
    %v7342 = vadd.f32 %v7149, %v7341
    %v7343 = vpop.f32.mrb[0].mxu0
    %v7344 = vadd.f32 %v7151, %v7343
    %v7345 = vpop.f32.mrb[0].mxu0
    %v7346 = vadd.f32 %v7153, %v7345
    %v7347 = vpop.f32.mrb[0].mxu0
    %v7348 = vadd.f32 %v7155, %v7347
    %7349 = vmatprep.mubr.bf16.mxu0 %v4823
    %7350 = vmatmul.mubr.bf16.gmra.mrb[0].mxu0 %v4822
    %v7351 = vpop.f32.mrb[0].mxu0
    %v7352 = vadd.f32 %v7159, %v7351
    %v7353 = vpop.f32.mrb[0].mxu0
    %v7354 = vadd.f32 %v7161, %v7353
    %v7355 = vpop.f32.mrb[0].mxu0
    %v7356 = vadd.f32 %v7163, %v7355
    %v7357 = vpop.f32.mrb[0].mxu0
    %v7358 = vadd.f32 %v7165, %v7357
    %7359 = vmatprep.mubr.bf16.mxu0 %v4835
    %7360 = vmatmul.mubr.bf16.gmra.mrb[0].mxu0 %v4834
    %v7361 = vpop.f32.mrb[0].mxu0
    %v7362 = vadd.f32 %v7169, %v7361
    %v7363 = vpop.f32.mrb[0].mxu0
    %v7364 = vadd.f32 %v7171, %v7363
    %v7365 = vpop.f32.mrb[0].mxu0
    %v7366 = vadd.f32 %v7173, %v7365
    %v7367 = vpop.f32.mrb[0].mxu0
    %v7368 = vadd.f32 %v7175, %v7367
    %7369 = vmatprep.mubr.bf16.mxu0 %v4847
    %7370 = vmatmul.mubr.bf16.gmra.mrb[0].mxu0 %v4846
    %v7371 = vpop.f32.mrb[0].mxu0
    %v7372 = vadd.f32 %v7179, %v7371
    %v7373 = vpop.f32.mrb[0].mxu0
    %v7374 = vadd.f32 %v7181, %v7373
    %v7375 = vpop.f32.mrb[0].mxu0
    %v7376 = vadd.f32 %v7183, %v7375
    %v7377 = vpop.f32.mrb[0].mxu0
    %v7378 = vadd.f32 %v7185, %v7377
    %7379 = vmatprep.mubr.bf16.mxu0 %v4859
    %7380 = vmatmul.mubr.bf16.gmra.mrb[0].mxu0 %v4858
    %v7381 = vpop.f32.mrb[0].mxu0
    %v7382 = vadd.f32 %v7189, %v7381
    %v7383 = vpop.f32.mrb[0].mxu0
    %v7384 = vadd.f32 %v7191, %v7383
    %v7385 = vpop.f32.mrb[0].mxu0
    %v7386 = vadd.f32 %v7193, %v7385
    %v7387 = vpop.f32.mrb[0].mxu0
    %v7388 = vadd.f32 %v7195, %v7387
    %7389 = vmatprep.mubr.bf16.mxu0 %v4871
    %7390 = vmatmul.mubr.bf16.gmra.mrb[0].mxu0 %v4870
    %v7391 = vpop.f32.mrb[0].mxu0
    %v7392 = vadd.f32 %v7199, %v7391
    %v7393 = vpop.f32.mrb[0].mxu0
    %v7394 = vadd.f32 %v7201, %v7393
    %v7395 = vpop.f32.mrb[0].mxu0
    %v7396 = vadd.f32 %v7203, %v7395
    %v7397 = vpop.f32.mrb[0].mxu0
    %v7398 = vadd.f32 %v7205, %v7397
    %7399 = vmatprep.mubr.bf16.mxu0 %v4883
    %7400 = vmatmul.mubr.bf16.gmra.mrb[0].mxu0 %v4882
    %v7401 = vpop.f32.mrb[0].mxu0
    %v7402 = vadd.f32 %v7209, %v7401
    %v7403 = vpop.f32.mrb[0].mxu0
    %v7404 = vadd.f32 %v7211, %v7403
    %v7405 = vpop.f32.mrb[0].mxu0
    %v7406 = vadd.f32 %v7213, %v7405
    %v7407 = vpop.f32.mrb[0].mxu0
    %v7408 = vadd.f32 %v7215, %v7407
    %7409 = vmatprep.mubr.bf16.mxu0 %v4895
    %7410 = vmatmul.mubr.bf16.gmra.mrb[0].mxu0 %v4894
    %v7411 = vpop.f32.mrb[0].mxu0
    %v7412 = vadd.f32 %v7219, %v7411
    %v7413 = vpop.f32.mrb[0].mxu0
    %v7414 = vadd.f32 %v7221, %v7413
    %v7415 = vpop.f32.mrb[0].mxu0
    %v7416 = vadd.f32 %v7223, %v7415
    %v7417 = vpop.f32.mrb[0].mxu0
    %v7418 = vadd.f32 %v7225, %v7417
    %7419 = vmatprep.mubr.bf16.mxu0 %v4907
    %7420 = vmatmul.mubr.bf16.gmra.mrb[0].mxu0 %v4906
    %v7421 = vpop.f32.mrb[0].mxu0
    %v7422 = vadd.f32 %v7229, %v7421
    %v7423 = vpop.f32.mrb[0].mxu0
    %v7424 = vadd.f32 %v7231, %v7423
    %v7425 = vpop.f32.mrb[0].mxu0
    %v7426 = vadd.f32 %v7233, %v7425
    %v7427 = vpop.f32.mrb[0].mxu0
    %v7428 = vadd.f32 %v7235, %v7427
    %7429 = vdwg.mxu0
    %7430 = vmatprep.subr.bf16.mxu0 %v6420
    %7431 = vmatpush1.bf16.msra.mxu0 %v6419
    %7432 = vmatprep.subr.bf16.mxu0 %v6423
    %7433 = vmatpush1.bf16.msra.mxu0 %v6422
    %7434 = vmatprep.subr.bf16.mxu0 %v6426
    %7435 = vmatpush1.bf16.msra.mxu0 %v6425
    %7436 = vmatprep.subr.bf16.mxu0 %v6429
    %7437 = vmatpush1.bf16.msra.mxu0 %v6428
    %7438 = vmatprep.subr.bf16.mxu0 %v6432
    %7439 = vmatpush1.bf16.msra.mxu0 %v6431
    %7440 = vmatprep.subr.bf16.mxu0 %v6435
    %7441 = vmatpush1.bf16.msra.mxu0 %v6434
    %7442 = vmatprep.subr.bf16.mxu0 %v6438
    %7443 = vmatpush1.bf16.msra.mxu0 %v6437
    %7444 = vmatprep.subr.bf16.mxu0 %v6441
    %7445 = vmatpush1.bf16.msra.mxu0 %v6440
    %7446 = vmatprep.subr.bf16.mxu0 %v6444
    %7447 = vmatpush1.bf16.msra.mxu0 %v6443
    %7448 = vmatprep.subr.bf16.mxu0 %v6447
    %7449 = vmatpush1.bf16.msra.mxu0 %v6446
    %7450 = vmatprep.subr.bf16.mxu0 %v6450
    %7451 = vmatpush1.bf16.msra.mxu0 %v6449
    %7452 = vmatprep.subr.bf16.mxu0 %v6453
    %7453 = vmatpush1.bf16.msra.mxu0 %v6452
    %7454 = vmatprep.subr.bf16.mxu0 %v6456
    %7455 = vmatpush1.bf16.msra.mxu0 %v6455
    %7456 = vmatprep.subr.bf16.mxu0 %v6459
    %7457 = vmatpush1.bf16.msra.mxu0 %v6458
    %7458 = vmatprep.subr.bf16.mxu0 %v6462
    %7459 = vmatpush1.bf16.msra.mxu0 %v6461
    %7460 = vmatprep.subr.bf16.mxu0 %v6465
    %7461 = vmatpush1.bf16.msra.mxu0 %v6464
    %7462 = vmatprep.mubr.bf16.mxu0 %v4729
    %7463 = vmatmul.mubr.bf16.gmra.mrb[0].mxu0 %v4728
    %v7464 = vpop.f32.mrb[0].mxu0
    %v7465 = vadd.f32 %v7272, %v7464
    %v7466 = vpop.f32.mrb[0].mxu0
    %v7467 = vadd.f32 %v7274, %v7466
    %v7468 = vpop.f32.mrb[0].mxu0
    %v7469 = vadd.f32 %v7276, %v7468
    %v7470 = vpop.f32.mrb[0].mxu0
    %v7471 = vadd.f32 %v7278, %v7470
    %7472 = vmatprep.mubr.bf16.mxu0 %v4741
    %7473 = vmatmul.mubr.bf16.gmra.mrb[0].mxu0 %v4740
    %v7474 = vpop.f32.mrb[0].mxu0
    %v7475 = vadd.f32 %v7282, %v7474
    %v7476 = vpop.f32.mrb[0].mxu0
    %v7477 = vadd.f32 %v7284, %v7476
    %v7478 = vpop.f32.mrb[0].mxu0
    %v7479 = vadd.f32 %v7286, %v7478
    %v7480 = vpop.f32.mrb[0].mxu0
    %v7481 = vadd.f32 %v7288, %v7480
    %7482 = vmatprep.mubr.bf16.mxu0 %v4753
    %7483 = vmatmul.mubr.bf16.gmra.mrb[0].mxu0 %v4752
    %v7484 = vpop.f32.mrb[0].mxu0
    %v7485 = vadd.f32 %v7292, %v7484
    %v7486 = vpop.f32.mrb[0].mxu0
    %v7487 = vadd.f32 %v7294, %v7486
    %v7488 = vpop.f32.mrb[0].mxu0
    %v7489 = vadd.f32 %v7296, %v7488
    %v7490 = vpop.f32.mrb[0].mxu0
    %v7491 = vadd.f32 %v7298, %v7490
    %7492 = vmatprep.mubr.bf16.mxu0 %v4765
    %7493 = vmatmul.mubr.bf16.gmra.mrb[0].mxu0 %v4764
    %v7494 = vpop.f32.mrb[0].mxu0
    %v7495 = vadd.f32 %v7302, %v7494
    %v7496 = vpop.f32.mrb[0].mxu0
    %v7497 = vadd.f32 %v7304, %v7496
    %v7498 = vpop.f32.mrb[0].mxu0
    %v7499 = vadd.f32 %v7306, %v7498
    %v7500 = vpop.f32.mrb[0].mxu0
    %v7501 = vadd.f32 %v7308, %v7500
    %7502 = vmatprep.mubr.bf16.mxu0 %v4777
    %7503 = vmatmul.mubr.bf16.gmra.mrb[0].mxu0 %v4776
    %v7504 = vpop.f32.mrb[0].mxu0
    %v7505 = vadd.f32 %v7312, %v7504
    %v7506 = vpop.f32.mrb[0].mxu0
    %v7507 = vadd.f32 %v7314, %v7506
    %v7508 = vpop.f32.mrb[0].mxu0
    %v7509 = vadd.f32 %v7316, %v7508
    %v7510 = vpop.f32.mrb[0].mxu0
    %v7511 = vadd.f32 %v7318, %v7510
    %7512 = vmatprep.mubr.bf16.mxu0 %v4789
    %7513 = vmatmul.mubr.bf16.gmra.mrb[0].mxu0 %v4788
    %v7514 = vpop.f32.mrb[0].mxu0
    %v7515 = vadd.f32 %v7322, %v7514
    %v7516 = vpop.f32.mrb[0].mxu0
    %v7517 = vadd.f32 %v7324, %v7516
    %v7518 = vpop.f32.mrb[0].mxu0
    %v7519 = vadd.f32 %v7326, %v7518
    %v7520 = vpop.f32.mrb[0].mxu0
    %v7521 = vadd.f32 %v7328, %v7520
    %7522 = vmatprep.mubr.bf16.mxu0 %v4801
    %7523 = vmatmul.mubr.bf16.gmra.mrb[0].mxu0 %v4800
    %v7524 = vpop.f32.mrb[0].mxu0
    %v7525 = vadd.f32 %v7332, %v7524
    %v7526 = vpop.f32.mrb[0].mxu0
    %v7527 = vadd.f32 %v7334, %v7526
    %v7528 = vpop.f32.mrb[0].mxu0
    %v7529 = vadd.f32 %v7336, %v7528
    %v7530 = vpop.f32.mrb[0].mxu0
    %v7531 = vadd.f32 %v7338, %v7530
    %7532 = vmatprep.mubr.bf16.mxu0 %v4813
    %7533 = vmatmul.mubr.bf16.gmra.mrb[0].mxu0 %v4812
    %v7534 = vpop.f32.mrb[0].mxu0
    %v7535 = vadd.f32 %v7342, %v7534
    %v7536 = vpop.f32.mrb[0].mxu0
    %v7537 = vadd.f32 %v7344, %v7536
    %v7538 = vpop.f32.mrb[0].mxu0
    %v7539 = vadd.f32 %v7346, %v7538
    %v7540 = vpop.f32.mrb[0].mxu0
    %v7541 = vadd.f32 %v7348, %v7540
    %7542 = vmatprep.mubr.bf16.mxu0 %v4825
    %7543 = vmatmul.mubr.bf16.gmra.mrb[0].mxu0 %v4824
    %v7544 = vpop.f32.mrb[0].mxu0
    %v7545 = vadd.f32 %v7352, %v7544
    %v7546 = vpop.f32.mrb[0].mxu0
    %v7547 = vadd.f32 %v7354, %v7546
    %v7548 = vpop.f32.mrb[0].mxu0
    %v7549 = vadd.f32 %v7356, %v7548
    %v7550 = vpop.f32.mrb[0].mxu0
    %v7551 = vadd.f32 %v7358, %v7550
    %7552 = vmatprep.mubr.bf16.mxu0 %v4837
    %7553 = vmatmul.mubr.bf16.gmra.mrb[0].mxu0 %v4836
    %v7554 = vpop.f32.mrb[0].mxu0
    %v7555 = vadd.f32 %v7362, %v7554
    %v7556 = vpop.f32.mrb[0].mxu0
    %v7557 = vadd.f32 %v7364, %v7556
    %v7558 = vpop.f32.mrb[0].mxu0
    %v7559 = vadd.f32 %v7366, %v7558
    %v7560 = vpop.f32.mrb[0].mxu0
    %v7561 = vadd.f32 %v7368, %v7560
    %7562 = vmatprep.mubr.bf16.mxu0 %v4849
    %7563 = vmatmul.mubr.bf16.gmra.mrb[0].mxu0 %v4848
    %v7564 = vpop.f32.mrb[0].mxu0
    %v7565 = vadd.f32 %v7372, %v7564
    %v7566 = vpop.f32.mrb[0].mxu0
    %v7567 = vadd.f32 %v7374, %v7566
    %v7568 = vpop.f32.mrb[0].mxu0
    %v7569 = vadd.f32 %v7376, %v7568
    %v7570 = vpop.f32.mrb[0].mxu0
    %v7571 = vadd.f32 %v7378, %v7570
    %7572 = vmatprep.mubr.bf16.mxu0 %v4861
    %7573 = vmatmul.mubr.bf16.gmra.mrb[0].mxu0 %v4860
    %v7574 = vpop.f32.mrb[0].mxu0
    %v7575 = vadd.f32 %v7382, %v7574
    %v7576 = vpop.f32.mrb[0].mxu0
    %v7577 = vadd.f32 %v7384, %v7576
    %v7578 = vpop.f32.mrb[0].mxu0
    %v7579 = vadd.f32 %v7386, %v7578
    %v7580 = vpop.f32.mrb[0].mxu0
    %v7581 = vadd.f32 %v7388, %v7580
    %7582 = vmatprep.mubr.bf16.mxu0 %v4873
    %7583 = vmatmul.mubr.bf16.gmra.mrb[0].mxu0 %v4872
    %v7584 = vpop.f32.mrb[0].mxu0
    %v7585 = vadd.f32 %v7392, %v7584
    %v7586 = vpop.f32.mrb[0].mxu0
    %v7587 = vadd.f32 %v7394, %v7586
    %v7588 = vpop.f32.mrb[0].mxu0
    %v7589 = vadd.f32 %v7396, %v7588
    %v7590 = vpop.f32.mrb[0].mxu0
    %v7591 = vadd.f32 %v7398, %v7590
    %7592 = vmatprep.mubr.bf16.mxu0 %v4885
    %7593 = vmatmul.mubr.bf16.gmra.mrb[0].mxu0 %v4884
    %v7594 = vpop.f32.mrb[0].mxu0
    %v7595 = vadd.f32 %v7402, %v7594
    %v7596 = vpop.f32.mrb[0].mxu0
    %v7597 = vadd.f32 %v7404, %v7596
    %v7598 = vpop.f32.mrb[0].mxu0
    %v7599 = vadd.f32 %v7406, %v7598
    %v7600 = vpop.f32.mrb[0].mxu0
    %v7601 = vadd.f32 %v7408, %v7600
    %7602 = vmatprep.mubr.bf16.mxu0 %v4897
    %7603 = vmatmul.mubr.bf16.gmra.mrb[0].mxu0 %v4896
    %v7604 = vpop.f32.mrb[0].mxu0
    %v7605 = vadd.f32 %v7412, %v7604
    %v7606 = vpop.f32.mrb[0].mxu0
    %v7607 = vadd.f32 %v7414, %v7606
    %v7608 = vpop.f32.mrb[0].mxu0
    %v7609 = vadd.f32 %v7416, %v7608
    %v7610 = vpop.f32.mrb[0].mxu0
    %v7611 = vadd.f32 %v7418, %v7610
    %7612 = vmatprep.mubr.bf16.mxu0 %v4909
    %7613 = vmatmul.mubr.bf16.gmra.mrb[0].mxu0 %v4908
    %v7614 = vpop.f32.mrb[0].mxu0
    %v7615 = vadd.f32 %v7422, %v7614
    %v7616 = vpop.f32.mrb[0].mxu0
    %v7617 = vadd.f32 %v7424, %v7616
    %v7618 = vpop.f32.mrb[0].mxu0
    %v7619 = vadd.f32 %v7426, %v7618
    %v7620 = vpop.f32.mrb[0].mxu0
    %v7621 = vadd.f32 %v7428, %v7620
    %7622 = vdwg.mxu0
    %7623 = vmatprep.subr.bf16.mxu0 %v6468
    %7624 = vmatpush1.bf16.msra.mxu0 %v6467
    %7625 = vmatprep.subr.bf16.mxu0 %v6471
    %7626 = vmatpush1.bf16.msra.mxu0 %v6470
    %7627 = vmatprep.subr.bf16.mxu0 %v6474
    %7628 = vmatpush1.bf16.msra.mxu0 %v6473
    %7629 = vmatprep.subr.bf16.mxu0 %v6477
    %7630 = vmatpush1.bf16.msra.mxu0 %v6476
    %7631 = vmatprep.subr.bf16.mxu0 %v6480
    %7632 = vmatpush1.bf16.msra.mxu0 %v6479
    %7633 = vmatprep.subr.bf16.mxu0 %v6483
    %7634 = vmatpush1.bf16.msra.mxu0 %v6482
    %7635 = vmatprep.subr.bf16.mxu0 %v6486
    %7636 = vmatpush1.bf16.msra.mxu0 %v6485
    %7637 = vmatprep.subr.bf16.mxu0 %v6489
    %7638 = vmatpush1.bf16.msra.mxu0 %v6488
    %7639 = vmatprep.subr.bf16.mxu0 %v6492
    %7640 = vmatpush1.bf16.msra.mxu0 %v6491
    %7641 = vmatprep.subr.bf16.mxu0 %v6495
    %7642 = vmatpush1.bf16.msra.mxu0 %v6494
    %7643 = vmatprep.subr.bf16.mxu0 %v6498
    %7644 = vmatpush1.bf16.msra.mxu0 %v6497
    %7645 = vmatprep.subr.bf16.mxu0 %v6501
    %7646 = vmatpush1.bf16.msra.mxu0 %v6500
    %7647 = vmatprep.subr.bf16.mxu0 %v6504
    %7648 = vmatpush1.bf16.msra.mxu0 %v6503
    %7649 = vmatprep.subr.bf16.mxu0 %v6507
    %7650 = vmatpush1.bf16.msra.mxu0 %v6506
    %7651 = vmatprep.subr.bf16.mxu0 %v6510
    %7652 = vmatpush1.bf16.msra.mxu0 %v6509
    %7653 = vmatprep.subr.bf16.mxu0 %v6513
    %7654 = vmatpush1.bf16.msra.mxu0 %v6512
    %7655 = vmatprep.mubr.bf16.mxu0 %v4731
    %7656 = vmatmul.mubr.bf16.gmra.mrb[0].mxu0 %v4730
    %v7657 = vpop.f32.mrb[0].mxu0
    %v7658 = vadd.f32 %v7465, %v7657
    %v7659 = vpop.f32.mrb[0].mxu0
    %v7660 = vadd.f32 %v7467, %v7659
    %v7661 = vpop.f32.mrb[0].mxu0
    %v7662 = vadd.f32 %v7469, %v7661
    %v7663 = vpop.f32.mrb[0].mxu0
    %v7664 = vadd.f32 %v7471, %v7663
    %7665 = vmatprep.mubr.bf16.mxu0 %v4743
    %7666 = vmatmul.mubr.bf16.gmra.mrb[0].mxu0 %v4742
    %v7667 = vpop.f32.mrb[0].mxu0
    %v7668 = vadd.f32 %v7475, %v7667
    %v7669 = vpop.f32.mrb[0].mxu0
    %v7670 = vadd.f32 %v7477, %v7669
    %v7671 = vpop.f32.mrb[0].mxu0
    %v7672 = vadd.f32 %v7479, %v7671
    %v7673 = vpop.f32.mrb[0].mxu0
    %v7674 = vadd.f32 %v7481, %v7673
    %7675 = vmatprep.mubr.bf16.mxu0 %v4755
    %7676 = vmatmul.mubr.bf16.gmra.mrb[0].mxu0 %v4754
    %v7677 = vpop.f32.mrb[0].mxu0
    %v7678 = vadd.f32 %v7485, %v7677
    %v7679 = vpop.f32.mrb[0].mxu0
    %v7680 = vadd.f32 %v7487, %v7679
    %v7681 = vpop.f32.mrb[0].mxu0
    %v7682 = vadd.f32 %v7489, %v7681
    %v7683 = vpop.f32.mrb[0].mxu0
    %v7684 = vadd.f32 %v7491, %v7683
    %7685 = vmatprep.mubr.bf16.mxu0 %v4767
    %7686 = vmatmul.mubr.bf16.gmra.mrb[0].mxu0 %v4766
    %v7687 = vpop.f32.mrb[0].mxu0
    %v7688 = vadd.f32 %v7495, %v7687
    %v7689 = vpop.f32.mrb[0].mxu0
    %v7690 = vadd.f32 %v7497, %v7689
    %v7691 = vpop.f32.mrb[0].mxu0
    %v7692 = vadd.f32 %v7499, %v7691
    %v7693 = vpop.f32.mrb[0].mxu0
    %v7694 = vadd.f32 %v7501, %v7693
    %7695 = vmatprep.mubr.bf16.mxu0 %v4779
    %7696 = vmatmul.mubr.bf16.gmra.mrb[0].mxu0 %v4778
    %v7697 = vpop.f32.mrb[0].mxu0
    %v7698 = vadd.f32 %v7505, %v7697
    %v7699 = vpop.f32.mrb[0].mxu0
    %v7700 = vadd.f32 %v7507, %v7699
    %v7701 = vpop.f32.mrb[0].mxu0
    %v7702 = vadd.f32 %v7509, %v7701
    %v7703 = vpop.f32.mrb[0].mxu0
    %v7704 = vadd.f32 %v7511, %v7703
    %7705 = vmatprep.mubr.bf16.mxu0 %v4791
    %7706 = vmatmul.mubr.bf16.gmra.mrb[0].mxu0 %v4790
    %v7707 = vpop.f32.mrb[0].mxu0
    %v7708 = vadd.f32 %v7515, %v7707
    %v7709 = vpop.f32.mrb[0].mxu0
    %v7710 = vadd.f32 %v7517, %v7709
    %v7711 = vpop.f32.mrb[0].mxu0
    %v7712 = vadd.f32 %v7519, %v7711
    %v7713 = vpop.f32.mrb[0].mxu0
    %v7714 = vadd.f32 %v7521, %v7713
    %7715 = vmatprep.mubr.bf16.mxu0 %v4803
    %7716 = vmatmul.mubr.bf16.gmra.mrb[0].mxu0 %v4802
    %v7717 = vpop.f32.mrb[0].mxu0
    %v7718 = vadd.f32 %v7525, %v7717
    %v7719 = vpop.f32.mrb[0].mxu0
    %v7720 = vadd.f32 %v7527, %v7719
    %v7721 = vpop.f32.mrb[0].mxu0
    %v7722 = vadd.f32 %v7529, %v7721
    %v7723 = vpop.f32.mrb[0].mxu0
    %v7724 = vadd.f32 %v7531, %v7723
    %7725 = vmatprep.mubr.bf16.mxu0 %v4815
    %7726 = vmatmul.mubr.bf16.gmra.mrb[0].mxu0 %v4814
    %v7727 = vpop.f32.mrb[0].mxu0
    %v7728 = vadd.f32 %v7535, %v7727
    %v7729 = vpop.f32.mrb[0].mxu0
    %v7730 = vadd.f32 %v7537, %v7729
    %v7731 = vpop.f32.mrb[0].mxu0
    %v7732 = vadd.f32 %v7539, %v7731
    %v7733 = vpop.f32.mrb[0].mxu0
    %v7734 = vadd.f32 %v7541, %v7733
    %7735 = vmatprep.mubr.bf16.mxu0 %v4827
    %7736 = vmatmul.mubr.bf16.gmra.mrb[0].mxu0 %v4826
    %v7737 = vpop.f32.mrb[0].mxu0
    %v7738 = vadd.f32 %v7545, %v7737
    %v7739 = vpop.f32.mrb[0].mxu0
    %v7740 = vadd.f32 %v7547, %v7739
    %v7741 = vpop.f32.mrb[0].mxu0
    %v7742 = vadd.f32 %v7549, %v7741
    %v7743 = vpop.f32.mrb[0].mxu0
    %v7744 = vadd.f32 %v7551, %v7743
    %7745 = vmatprep.mubr.bf16.mxu0 %v4839
    %7746 = vmatmul.mubr.bf16.gmra.mrb[0].mxu0 %v4838
    %v7747 = vpop.f32.mrb[0].mxu0
    %v7748 = vadd.f32 %v7555, %v7747
    %v7749 = vpop.f32.mrb[0].mxu0
    %v7750 = vadd.f32 %v7557, %v7749
    %v7751 = vpop.f32.mrb[0].mxu0
    %v7752 = vadd.f32 %v7559, %v7751
    %v7753 = vpop.f32.mrb[0].mxu0
    %v7754 = vadd.f32 %v7561, %v7753
    %7755 = vmatprep.mubr.bf16.mxu0 %v4851
    %7756 = vmatmul.mubr.bf16.gmra.mrb[0].mxu0 %v4850
    %v7757 = vpop.f32.mrb[0].mxu0
    %v7758 = vadd.f32 %v7565, %v7757
    %v7759 = vpop.f32.mrb[0].mxu0
    %v7760 = vadd.f32 %v7567, %v7759
    %v7761 = vpop.f32.mrb[0].mxu0
    %v7762 = vadd.f32 %v7569, %v7761
    %v7763 = vpop.f32.mrb[0].mxu0
    %v7764 = vadd.f32 %v7571, %v7763
    %7765 = vmatprep.mubr.bf16.mxu0 %v4863
    %7766 = vmatmul.mubr.bf16.gmra.mrb[0].mxu0 %v4862
    %v7767 = vpop.f32.mrb[0].mxu0
    %v7768 = vadd.f32 %v7575, %v7767
    %v7769 = vpop.f32.mrb[0].mxu0
    %v7770 = vadd.f32 %v7577, %v7769
    %v7771 = vpop.f32.mrb[0].mxu0
    %v7772 = vadd.f32 %v7579, %v7771
    %v7773 = vpop.f32.mrb[0].mxu0
    %v7774 = vadd.f32 %v7581, %v7773
    %7775 = vmatprep.mubr.bf16.mxu0 %v4875
    %7776 = vmatmul.mubr.bf16.gmra.mrb[0].mxu0 %v4874
    %v7777 = vpop.f32.mrb[0].mxu0
    %v7778 = vadd.f32 %v7585, %v7777
    %v7779 = vpop.f32.mrb[0].mxu0
    %v7780 = vadd.f32 %v7587, %v7779
    %v7781 = vpop.f32.mrb[0].mxu0
    %v7782 = vadd.f32 %v7589, %v7781
    %v7783 = vpop.f32.mrb[0].mxu0
    %v7784 = vadd.f32 %v7591, %v7783
    %7785 = vmatprep.mubr.bf16.mxu0 %v4887
    %7786 = vmatmul.mubr.bf16.gmra.mrb[0].mxu0 %v4886
    %v7787 = vpop.f32.mrb[0].mxu0
    %v7788 = vadd.f32 %v7595, %v7787
    %v7789 = vpop.f32.mrb[0].mxu0
    %v7790 = vadd.f32 %v7597, %v7789
    %v7791 = vpop.f32.mrb[0].mxu0
    %v7792 = vadd.f32 %v7599, %v7791
    %v7793 = vpop.f32.mrb[0].mxu0
    %v7794 = vadd.f32 %v7601, %v7793
    %7795 = vmatprep.mubr.bf16.mxu0 %v4899
    %7796 = vmatmul.mubr.bf16.gmra.mrb[0].mxu0 %v4898
    %v7797 = vpop.f32.mrb[0].mxu0
    %v7798 = vadd.f32 %v7605, %v7797
    %v7799 = vpop.f32.mrb[0].mxu0
    %v7800 = vadd.f32 %v7607, %v7799
    %v7801 = vpop.f32.mrb[0].mxu0
    %v7802 = vadd.f32 %v7609, %v7801
    %v7803 = vpop.f32.mrb[0].mxu0
    %v7804 = vadd.f32 %v7611, %v7803
    %7805 = vmatprep.mubr.bf16.mxu0 %v4911
    %7806 = vmatmul.mubr.bf16.gmra.mrb[0].mxu0 %v4910
    %v7807 = vpop.f32.mrb[0].mxu0
    %v7808 = vadd.f32 %v7615, %v7807
    %v7809 = vpop.f32.mrb[0].mxu0
    %v7810 = vadd.f32 %v7617, %v7809
    %v7811 = vpop.f32.mrb[0].mxu0
    %v7812 = vadd.f32 %v7619, %v7811
    %v7813 = vpop.f32.mrb[0].mxu0
    %v7814 = vadd.f32 %v7621, %v7813
    %7815 = vdwg.mxu0
    %7816 = vmatprep.subr.bf16.mxu0 %v6516
    %7817 = vmatpush1.bf16.msra.mxu0 %v6515
    %7818 = vmatprep.subr.bf16.mxu0 %v6519
    %7819 = vmatpush1.bf16.msra.mxu0 %v6518
    %7820 = vmatprep.subr.bf16.mxu0 %v6522
    %7821 = vmatpush1.bf16.msra.mxu0 %v6521
    %7822 = vmatprep.subr.bf16.mxu0 %v6525
    %7823 = vmatpush1.bf16.msra.mxu0 %v6524
    %7824 = vmatprep.subr.bf16.mxu0 %v6528
    %7825 = vmatpush1.bf16.msra.mxu0 %v6527
    %7826 = vmatprep.subr.bf16.mxu0 %v6531
    %7827 = vmatpush1.bf16.msra.mxu0 %v6530
    %7828 = vmatprep.subr.bf16.mxu0 %v6534
    %7829 = vmatpush1.bf16.msra.mxu0 %v6533
    %7830 = vmatprep.subr.bf16.mxu0 %v6537
    %7831 = vmatpush1.bf16.msra.mxu0 %v6536
    %7832 = vmatprep.subr.bf16.mxu0 %v6540
    %7833 = vmatpush1.bf16.msra.mxu0 %v6539
    %7834 = vmatprep.subr.bf16.mxu0 %v6543
    %7835 = vmatpush1.bf16.msra.mxu0 %v6542
    %7836 = vmatprep.subr.bf16.mxu0 %v6546
    %7837 = vmatpush1.bf16.msra.mxu0 %v6545
    %7838 = vmatprep.subr.bf16.mxu0 %v6549
    %7839 = vmatpush1.bf16.msra.mxu0 %v6548
    %7840 = vmatprep.subr.bf16.mxu0 %v6552
    %7841 = vmatpush1.bf16.msra.mxu0 %v6551
    %7842 = vmatprep.subr.bf16.mxu0 %v6555
    %7843 = vmatpush1.bf16.msra.mxu0 %v6554
    %7844 = vmatprep.subr.bf16.mxu0 %v6558
    %7845 = vmatpush1.bf16.msra.mxu0 %v6557
    %7846 = vmatprep.subr.bf16.mxu0 %v6561
    %7847 = vmatpush1.bf16.msra.mxu0 %v6560
    %7848 = vmatprep.mubr.bf16.mxu0 %v4733
    %7849 = vmatmul.mubr.bf16.gmra.mrb[0].mxu0 %v4732
    %v7850 = vpop.f32.mrb[0].mxu0
    %v7851 = vadd.f32 %v7658, %v7850
    %v7852 = vpop.f32.mrb[0].mxu0
    %v7853 = vadd.f32 %v7660, %v7852
    %v7854 = vpop.f32.mrb[0].mxu0
    %v7855 = vadd.f32 %v7662, %v7854
    %v7856 = vpop.f32.mrb[0].mxu0
    %v7857 = vadd.f32 %v7664, %v7856
    %7858 = vmatprep.mubr.bf16.mxu0 %v4745
    %7859 = vmatmul.mubr.bf16.gmra.mrb[0].mxu0 %v4744
    %v7860 = vpop.f32.mrb[0].mxu0
    %v7861 = vadd.f32 %v7668, %v7860
    %v7862 = vpop.f32.mrb[0].mxu0
    %v7863 = vadd.f32 %v7670, %v7862
    %v7864 = vpop.f32.mrb[0].mxu0
    %v7865 = vadd.f32 %v7672, %v7864
    %v7866 = vpop.f32.mrb[0].mxu0
    %v7867 = vadd.f32 %v7674, %v7866
    %7868 = vmatprep.mubr.bf16.mxu0 %v4757
    %7869 = vmatmul.mubr.bf16.gmra.mrb[0].mxu0 %v4756
    %v7870 = vpop.f32.mrb[0].mxu0
    %v7871 = vadd.f32 %v7678, %v7870
    %v7872 = vpop.f32.mrb[0].mxu0
    %v7873 = vadd.f32 %v7680, %v7872
    %v7874 = vpop.f32.mrb[0].mxu0
    %v7875 = vadd.f32 %v7682, %v7874
    %v7876 = vpop.f32.mrb[0].mxu0
    %v7877 = vadd.f32 %v7684, %v7876
    %7878 = vmatprep.mubr.bf16.mxu0 %v4769
    %7879 = vmatmul.mubr.bf16.gmra.mrb[0].mxu0 %v4768
    %v7880 = vpop.f32.mrb[0].mxu0
    %v7881 = vadd.f32 %v7688, %v7880
    %v7882 = vpop.f32.mrb[0].mxu0
    %v7883 = vadd.f32 %v7690, %v7882
    %v7884 = vpop.f32.mrb[0].mxu0
    %v7885 = vadd.f32 %v7692, %v7884
    %v7886 = vpop.f32.mrb[0].mxu0
    %v7887 = vadd.f32 %v7694, %v7886
    %7888 = vmatprep.mubr.bf16.mxu0 %v4781
    %7889 = vmatmul.mubr.bf16.gmra.mrb[0].mxu0 %v4780
    %v7890 = vpop.f32.mrb[0].mxu0
    %v7891 = vadd.f32 %v7698, %v7890
    %v7892 = vpop.f32.mrb[0].mxu0
    %v7893 = vadd.f32 %v7700, %v7892
    %v7894 = vpop.f32.mrb[0].mxu0
    %v7895 = vadd.f32 %v7702, %v7894
    %v7896 = vpop.f32.mrb[0].mxu0
    %v7897 = vadd.f32 %v7704, %v7896
    %7898 = vmatprep.mubr.bf16.mxu0 %v4793
    %7899 = vmatmul.mubr.bf16.gmra.mrb[0].mxu0 %v4792
    %v7900 = vpop.f32.mrb[0].mxu0
    %v7901 = vadd.f32 %v7708, %v7900
    %v7902 = vpop.f32.mrb[0].mxu0
    %v7903 = vadd.f32 %v7710, %v7902
    %v7904 = vpop.f32.mrb[0].mxu0
    %v7905 = vadd.f32 %v7712, %v7904
    %v7906 = vpop.f32.mrb[0].mxu0
    %v7907 = vadd.f32 %v7714, %v7906
    %7908 = vmatprep.mubr.bf16.mxu0 %v4805
    %7909 = vmatmul.mubr.bf16.gmra.mrb[0].mxu0 %v4804
    %v7910 = vpop.f32.mrb[0].mxu0
    %v7911 = vadd.f32 %v7718, %v7910
    %v7912 = vpop.f32.mrb[0].mxu0
    %v7913 = vadd.f32 %v7720, %v7912
    %v7914 = vpop.f32.mrb[0].mxu0
    %v7915 = vadd.f32 %v7722, %v7914
    %v7916 = vpop.f32.mrb[0].mxu0
    %v7917 = vadd.f32 %v7724, %v7916
    %7918 = vmatprep.mubr.bf16.mxu0 %v4817
    %7919 = vmatmul.mubr.bf16.gmra.mrb[0].mxu0 %v4816
    %v7920 = vpop.f32.mrb[0].mxu0
    %v7921 = vadd.f32 %v7728, %v7920
    %v7922 = vpop.f32.mrb[0].mxu0
    %v7923 = vadd.f32 %v7730, %v7922
    %v7924 = vpop.f32.mrb[0].mxu0
    %v7925 = vadd.f32 %v7732, %v7924
    %v7926 = vpop.f32.mrb[0].mxu0
    %v7927 = vadd.f32 %v7734, %v7926
    %7928 = vmatprep.mubr.bf16.mxu0 %v4829
    %7929 = vmatmul.mubr.bf16.gmra.mrb[0].mxu0 %v4828
    %v7930 = vpop.f32.mrb[0].mxu0
    %v7931 = vadd.f32 %v7738, %v7930
    %v7932 = vpop.f32.mrb[0].mxu0
    %v7933 = vadd.f32 %v7740, %v7932
    %v7934 = vpop.f32.mrb[0].mxu0
    %v7935 = vadd.f32 %v7742, %v7934
    %v7936 = vpop.f32.mrb[0].mxu0
    %v7937 = vadd.f32 %v7744, %v7936
    %7938 = vmatprep.mubr.bf16.mxu0 %v4841
    %7939 = vmatmul.mubr.bf16.gmra.mrb[0].mxu0 %v4840
    %v7940 = vpop.f32.mrb[0].mxu0
    %v7941 = vadd.f32 %v7748, %v7940
    %v7942 = vpop.f32.mrb[0].mxu0
    %v7943 = vadd.f32 %v7750, %v7942
    %v7944 = vpop.f32.mrb[0].mxu0
    %v7945 = vadd.f32 %v7752, %v7944
    %v7946 = vpop.f32.mrb[0].mxu0
    %v7947 = vadd.f32 %v7754, %v7946
    %7948 = vmatprep.mubr.bf16.mxu0 %v4853
    %7949 = vmatmul.mubr.bf16.gmra.mrb[0].mxu0 %v4852
    %v7950 = vpop.f32.mrb[0].mxu0
    %v7951 = vadd.f32 %v7758, %v7950
    %v7952 = vpop.f32.mrb[0].mxu0
    %v7953 = vadd.f32 %v7760, %v7952
    %v7954 = vpop.f32.mrb[0].mxu0
    %v7955 = vadd.f32 %v7762, %v7954
    %v7956 = vpop.f32.mrb[0].mxu0
    %v7957 = vadd.f32 %v7764, %v7956
    %7958 = vmatprep.mubr.bf16.mxu0 %v4865
    %7959 = vmatmul.mubr.bf16.gmra.mrb[0].mxu0 %v4864
    %v7960 = vpop.f32.mrb[0].mxu0
    %v7961 = vadd.f32 %v7768, %v7960
    %v7962 = vpop.f32.mrb[0].mxu0
    %v7963 = vadd.f32 %v7770, %v7962
    %v7964 = vpop.f32.mrb[0].mxu0
    %v7965 = vadd.f32 %v7772, %v7964
    %v7966 = vpop.f32.mrb[0].mxu0
    %v7967 = vadd.f32 %v7774, %v7966
    %7968 = vmatprep.mubr.bf16.mxu0 %v4877
    %7969 = vmatmul.mubr.bf16.gmra.mrb[0].mxu0 %v4876
    %v7970 = vpop.f32.mrb[0].mxu0
    %v7971 = vadd.f32 %v7778, %v7970
    %v7972 = vpop.f32.mrb[0].mxu0
    %v7973 = vadd.f32 %v7780, %v7972
    %v7974 = vpop.f32.mrb[0].mxu0
    %v7975 = vadd.f32 %v7782, %v7974
    %v7976 = vpop.f32.mrb[0].mxu0
    %v7977 = vadd.f32 %v7784, %v7976
    %7978 = vmatprep.mubr.bf16.mxu0 %v4889
    %7979 = vmatmul.mubr.bf16.gmra.mrb[0].mxu0 %v4888
    %v7980 = vpop.f32.mrb[0].mxu0
    %v7981 = vadd.f32 %v7788, %v7980
    %v7982 = vpop.f32.mrb[0].mxu0
    %v7983 = vadd.f32 %v7790, %v7982
    %v7984 = vpop.f32.mrb[0].mxu0
    %v7985 = vadd.f32 %v7792, %v7984
    %v7986 = vpop.f32.mrb[0].mxu0
    %v7987 = vadd.f32 %v7794, %v7986
    %7988 = vmatprep.mubr.bf16.mxu0 %v4901
    %7989 = vmatmul.mubr.bf16.gmra.mrb[0].mxu0 %v4900
    %v7990 = vpop.f32.mrb[0].mxu0
    %v7991 = vadd.f32 %v7798, %v7990
    %v7992 = vpop.f32.mrb[0].mxu0
    %v7993 = vadd.f32 %v7800, %v7992
    %v7994 = vpop.f32.mrb[0].mxu0
    %v7995 = vadd.f32 %v7802, %v7994
    %v7996 = vpop.f32.mrb[0].mxu0
    %v7997 = vadd.f32 %v7804, %v7996
    %7998 = vmatprep.mubr.bf16.mxu0 %v4913
    %7999 = vmatmul.mubr.bf16.gmra.mrb[0].mxu0 %v4912
    %v8000 = vpop.f32.mrb[0].mxu0
    %v8001 = vadd.f32 %v7808, %v8000
    %v8002 = vpop.f32.mrb[0].mxu0
    %v8003 = vadd.f32 %v7810, %v8002
    %v8004 = vpop.f32.mrb[0].mxu0
    %v8005 = vadd.f32 %v7812, %v8004
    %v8006 = vpop.f32.mrb[0].mxu0
    %v8007 = vadd.f32 %v7814, %v8006
    %8008 = vdwg.mxu0
    %8009 = vmatprep.subr.bf16.mxu0 0
    %8010 = vmatpush1.bf16.msra.mxu0 %v6277
    %8011 = vmatprep.subr.bf16.mxu0 0
    %8012 = vmatpush1.bf16.msra.mxu0 %v6280
    %8013 = vmatprep.subr.bf16.mxu0 0
    %8014 = vmatpush1.bf16.msra.mxu0 %v6283
    %8015 = vmatprep.subr.bf16.mxu0 0
    %8016 = vmatpush1.bf16.msra.mxu0 %v6286
    %8017 = vmatprep.subr.bf16.mxu0 0
    %8018 = vmatpush1.bf16.msra.mxu0 %v6289
    %8019 = vmatprep.subr.bf16.mxu0 0
    %8020 = vmatpush1.bf16.msra.mxu0 %v6292
    %8021 = vmatprep.subr.bf16.mxu0 0
    %8022 = vmatpush1.bf16.msra.mxu0 %v6295
    %8023 = vmatprep.subr.bf16.mxu0 0
    %8024 = vmatpush1.bf16.msra.mxu0 %v6298
    %8025 = vmatprep.subr.bf16.mxu0 0
    %8026 = vmatpush1.bf16.msra.mxu0 %v6301
    %8027 = vmatprep.subr.bf16.mxu0 0
    %8028 = vmatpush1.bf16.msra.mxu0 %v6304
    %8029 = vmatprep.subr.bf16.mxu0 0
    %8030 = vmatpush1.bf16.msra.mxu0 %v6307
    %8031 = vmatprep.subr.bf16.mxu0 0
    %8032 = vmatpush1.bf16.msra.mxu0 %v6310
    %8033 = vmatprep.subr.bf16.mxu0 0
    %8034 = vmatpush1.bf16.msra.mxu0 %v6313
    %8035 = vmatprep.subr.bf16.mxu0 0
    %8036 = vmatpush1.bf16.msra.mxu0 %v6316
    %8037 = vmatprep.subr.bf16.mxu0 0
    %8038 = vmatpush1.bf16.msra.mxu0 %v6319
    %8039 = vmatprep.subr.bf16.mxu0 0
    %8040 = vmatpush1.bf16.msra.mxu0 %v6322
    %8041 = vmatprep.mubr.bf16.mxu0 %v4723
    %8042 = vmatmul.mubr.bf16.gmra.mrb[0].mxu0 %v4722
    %v8043 = vpop.f32.mrb[0].mxu0
    %v8044 = vadd.f32 %v5311, %v8043
    %v8045 = vpop.f32.mrb[0].mxu0
    %v8046 = vpop.f32.mrb[0].mxu0
    %v8047 = vadd.f32 %v5311, %v8046
    %v8048 = vpop.f32.mrb[0].mxu0
    %8049 = vmatprep.mubr.bf16.mxu0 %v4735
    %8050 = vmatmul.mubr.bf16.gmra.mrb[0].mxu0 %v4734
    %v8051 = vpop.f32.mrb[0].mxu0
    %v8052 = vadd.f32 %v5311, %v8051
    %v8053 = vpop.f32.mrb[0].mxu0
    %v8054 = vpop.f32.mrb[0].mxu0
    %v8055 = vadd.f32 %v5311, %v8054
    %v8056 = vpop.f32.mrb[0].mxu0
    %8057 = vmatprep.mubr.bf16.mxu0 %v4747
    %8058 = vmatmul.mubr.bf16.gmra.mrb[0].mxu0 %v4746
    %v8059 = vpop.f32.mrb[0].mxu0
    %v8060 = vadd.f32 %v5311, %v8059
    %v8061 = vpop.f32.mrb[0].mxu0
    %v8062 = vpop.f32.mrb[0].mxu0
    %v8063 = vadd.f32 %v5311, %v8062
    %v8064 = vpop.f32.mrb[0].mxu0
    %8065 = vmatprep.mubr.bf16.mxu0 %v4759
    %8066 = vmatmul.mubr.bf16.gmra.mrb[0].mxu0 %v4758
    %v8067 = vpop.f32.mrb[0].mxu0
    %v8068 = vadd.f32 %v5311, %v8067
    %v8069 = vpop.f32.mrb[0].mxu0
    %v8070 = vpop.f32.mrb[0].mxu0
    %v8071 = vadd.f32 %v5311, %v8070
    %v8072 = vpop.f32.mrb[0].mxu0
    %8073 = vmatprep.mubr.bf16.mxu0 %v4771
    %8074 = vmatmul.mubr.bf16.gmra.mrb[0].mxu0 %v4770
    %v8075 = vpop.f32.mrb[0].mxu0
    %v8076 = vadd.f32 %v5311, %v8075
    %v8077 = vpop.f32.mrb[0].mxu0
    %v8078 = vpop.f32.mrb[0].mxu0
    %v8079 = vadd.f32 %v5311, %v8078
    %v8080 = vpop.f32.mrb[0].mxu0
    %8081 = vmatprep.mubr.bf16.mxu0 %v4783
    %8082 = vmatmul.mubr.bf16.gmra.mrb[0].mxu0 %v4782
    %v8083 = vpop.f32.mrb[0].mxu0
    %v8084 = vadd.f32 %v5311, %v8083
    %v8085 = vpop.f32.mrb[0].mxu0
    %v8086 = vpop.f32.mrb[0].mxu0
    %v8087 = vadd.f32 %v5311, %v8086
    %v8088 = vpop.f32.mrb[0].mxu0
    %8089 = vmatprep.mubr.bf16.mxu0 %v4795
    %8090 = vmatmul.mubr.bf16.gmra.mrb[0].mxu0 %v4794
    %v8091 = vpop.f32.mrb[0].mxu0
    %v8092 = vadd.f32 %v5311, %v8091
    %v8093 = vpop.f32.mrb[0].mxu0
    %v8094 = vpop.f32.mrb[0].mxu0
    %v8095 = vadd.f32 %v5311, %v8094
    %v8096 = vpop.f32.mrb[0].mxu0
    %8097 = vmatprep.mubr.bf16.mxu0 %v4807
    %8098 = vmatmul.mubr.bf16.gmra.mrb[0].mxu0 %v4806
    %v8099 = vpop.f32.mrb[0].mxu0
    %v8100 = vadd.f32 %v5311, %v8099
    %v8101 = vpop.f32.mrb[0].mxu0
    %v8102 = vpop.f32.mrb[0].mxu0
    %v8103 = vadd.f32 %v5311, %v8102
    %v8104 = vpop.f32.mrb[0].mxu0
    %8105 = vmatprep.mubr.bf16.mxu0 %v4819
    %8106 = vmatmul.mubr.bf16.gmra.mrb[0].mxu0 %v4818
    %v8107 = vpop.f32.mrb[0].mxu0
    %v8108 = vadd.f32 %v5311, %v8107
    %v8109 = vpop.f32.mrb[0].mxu0
    %v8110 = vpop.f32.mrb[0].mxu0
    %v8111 = vadd.f32 %v5311, %v8110
    %v8112 = vpop.f32.mrb[0].mxu0
    %8113 = vmatprep.mubr.bf16.mxu0 %v4831
    %8114 = vmatmul.mubr.bf16.gmra.mrb[0].mxu0 %v4830
    %v8115 = vpop.f32.mrb[0].mxu0
    %v8116 = vadd.f32 %v5311, %v8115
    %v8117 = vpop.f32.mrb[0].mxu0
    %v8118 = vpop.f32.mrb[0].mxu0
    %v8119 = vadd.f32 %v5311, %v8118
    %v8120 = vpop.f32.mrb[0].mxu0
    %8121 = vmatprep.mubr.bf16.mxu0 %v4843
    %8122 = vmatmul.mubr.bf16.gmra.mrb[0].mxu0 %v4842
    %v8123 = vpop.f32.mrb[0].mxu0
    %v8124 = vadd.f32 %v5311, %v8123
    %v8125 = vpop.f32.mrb[0].mxu0
    %v8126 = vpop.f32.mrb[0].mxu0
    %v8127 = vadd.f32 %v5311, %v8126
    %v8128 = vpop.f32.mrb[0].mxu0
    %8129 = vmatprep.mubr.bf16.mxu0 %v4855
    %8130 = vmatmul.mubr.bf16.gmra.mrb[0].mxu0 %v4854
    %v8131 = vpop.f32.mrb[0].mxu0
    %v8132 = vadd.f32 %v5311, %v8131
    %v8133 = vpop.f32.mrb[0].mxu0
    %v8134 = vpop.f32.mrb[0].mxu0
    %v8135 = vadd.f32 %v5311, %v8134
    %v8136 = vpop.f32.mrb[0].mxu0
    %8137 = vmatprep.mubr.bf16.mxu0 %v4867
    %8138 = vmatmul.mubr.bf16.gmra.mrb[0].mxu0 %v4866
    %v8139 = vpop.f32.mrb[0].mxu0
    %v8140 = vadd.f32 %v5311, %v8139
    %v8141 = vpop.f32.mrb[0].mxu0
    %v8142 = vpop.f32.mrb[0].mxu0
    %v8143 = vadd.f32 %v5311, %v8142
    %v8144 = vpop.f32.mrb[0].mxu0
    %8145 = vmatprep.mubr.bf16.mxu0 %v4879
    %8146 = vmatmul.mubr.bf16.gmra.mrb[0].mxu0 %v4878
    %v8147 = vpop.f32.mrb[0].mxu0
    %v8148 = vadd.f32 %v5311, %v8147
    %v8149 = vpop.f32.mrb[0].mxu0
    %v8150 = vpop.f32.mrb[0].mxu0
    %v8151 = vadd.f32 %v5311, %v8150
    %v8152 = vpop.f32.mrb[0].mxu0
    %8153 = vmatprep.mubr.bf16.mxu0 %v4891
    %8154 = vmatmul.mubr.bf16.gmra.mrb[0].mxu0 %v4890
    %v8155 = vpop.f32.mrb[0].mxu0
    %v8156 = vadd.f32 %v5311, %v8155
    %v8157 = vpop.f32.mrb[0].mxu0
    %v8158 = vpop.f32.mrb[0].mxu0
    %v8159 = vadd.f32 %v5311, %v8158
    %v8160 = vpop.f32.mrb[0].mxu0
    %8161 = vmatprep.mubr.bf16.mxu0 %v4903
    %8162 = vmatmul.mubr.bf16.gmra.mrb[0].mxu0 %v4902
    %v8163 = vpop.f32.mrb[0].mxu0
    %v8164 = vadd.f32 %v5311, %v8163
    %v8165 = vpop.f32.mrb[0].mxu0
    %v8166 = vpop.f32.mrb[0].mxu0
    %v8167 = vadd.f32 %v5311, %v8166
    %v8168 = vpop.f32.mrb[0].mxu0
    %8169 = vdwg.mxu0
    %8170 = vmatprep.subr.bf16.mxu0 0
    %8171 = vmatpush1.bf16.msra.mxu0 %v6325
    %8172 = vmatprep.subr.bf16.mxu0 0
    %8173 = vmatpush1.bf16.msra.mxu0 %v6328
    %8174 = vmatprep.subr.bf16.mxu0 0
    %8175 = vmatpush1.bf16.msra.mxu0 %v6331
    %8176 = vmatprep.subr.bf16.mxu0 0
    %8177 = vmatpush1.bf16.msra.mxu0 %v6334
    %8178 = vmatprep.subr.bf16.mxu0 0
    %8179 = vmatpush1.bf16.msra.mxu0 %v6337
    %8180 = vmatprep.subr.bf16.mxu0 0
    %8181 = vmatpush1.bf16.msra.mxu0 %v6340
    %8182 = vmatprep.subr.bf16.mxu0 0
    %8183 = vmatpush1.bf16.msra.mxu0 %v6343
    %8184 = vmatprep.subr.bf16.mxu0 0
    %8185 = vmatpush1.bf16.msra.mxu0 %v6346
    %8186 = vmatprep.subr.bf16.mxu0 0
    %8187 = vmatpush1.bf16.msra.mxu0 %v6349
    %8188 = vmatprep.subr.bf16.mxu0 0
    %8189 = vmatpush1.bf16.msra.mxu0 %v6352
    %8190 = vmatprep.subr.bf16.mxu0 0
    %8191 = vmatpush1.bf16.msra.mxu0 %v6355
    %8192 = vmatprep.subr.bf16.mxu0 0
    %8193 = vmatpush1.bf16.msra.mxu0 %v6358
    %8194 = vmatprep.subr.bf16.mxu0 0
    %8195 = vmatpush1.bf16.msra.mxu0 %v6361
    %8196 = vmatprep.subr.bf16.mxu0 0
    %8197 = vmatpush1.bf16.msra.mxu0 %v6364
    %8198 = vmatprep.subr.bf16.mxu0 0
    %8199 = vmatpush1.bf16.msra.mxu0 %v6367
    %8200 = vmatprep.subr.bf16.mxu0 0
    %8201 = vmatpush1.bf16.msra.mxu0 %v6370
    %8202 = vmatprep.mubr.bf16.mxu0 %v4725
    %8203 = vmatmul.mubr.bf16.gmra.mrb[0].mxu0 %v4724
    %v8204 = vpop.f32.mrb[0].mxu0
    %v8205 = vadd.f32 %v8044, %v8204
    %v8206 = vpop.f32.mrb[0].mxu0
    %v8207 = vpop.f32.mrb[0].mxu0
    %v8208 = vadd.f32 %v8047, %v8207
    %v8209 = vpop.f32.mrb[0].mxu0
    %8210 = vmatprep.mubr.bf16.mxu0 %v4737
    %8211 = vmatmul.mubr.bf16.gmra.mrb[0].mxu0 %v4736
    %v8212 = vpop.f32.mrb[0].mxu0
    %v8213 = vadd.f32 %v8052, %v8212
    %v8214 = vpop.f32.mrb[0].mxu0
    %v8215 = vpop.f32.mrb[0].mxu0
    %v8216 = vadd.f32 %v8055, %v8215
    %v8217 = vpop.f32.mrb[0].mxu0
    %8218 = vmatprep.mubr.bf16.mxu0 %v4749
    %8219 = vmatmul.mubr.bf16.gmra.mrb[0].mxu0 %v4748
    %v8220 = vpop.f32.mrb[0].mxu0
    %v8221 = vadd.f32 %v8060, %v8220
    %v8222 = vpop.f32.mrb[0].mxu0
    %v8223 = vpop.f32.mrb[0].mxu0
    %v8224 = vadd.f32 %v8063, %v8223
    %v8225 = vpop.f32.mrb[0].mxu0
    %8226 = vmatprep.mubr.bf16.mxu0 %v4761
    %8227 = vmatmul.mubr.bf16.gmra.mrb[0].mxu0 %v4760
    %v8228 = vpop.f32.mrb[0].mxu0
    %v8229 = vadd.f32 %v8068, %v8228
    %v8230 = vpop.f32.mrb[0].mxu0
    %v8231 = vpop.f32.mrb[0].mxu0
    %v8232 = vadd.f32 %v8071, %v8231
    %v8233 = vpop.f32.mrb[0].mxu0
    %8234 = vmatprep.mubr.bf16.mxu0 %v4773
    %8235 = vmatmul.mubr.bf16.gmra.mrb[0].mxu0 %v4772
    %v8236 = vpop.f32.mrb[0].mxu0
    %v8237 = vadd.f32 %v8076, %v8236
    %v8238 = vpop.f32.mrb[0].mxu0
    %v8239 = vpop.f32.mrb[0].mxu0
    %v8240 = vadd.f32 %v8079, %v8239
    %v8241 = vpop.f32.mrb[0].mxu0
    %8242 = vmatprep.mubr.bf16.mxu0 %v4785
    %8243 = vmatmul.mubr.bf16.gmra.mrb[0].mxu0 %v4784
    %v8244 = vpop.f32.mrb[0].mxu0
    %v8245 = vadd.f32 %v8084, %v8244
    %v8246 = vpop.f32.mrb[0].mxu0
    %v8247 = vpop.f32.mrb[0].mxu0
    %v8248 = vadd.f32 %v8087, %v8247
    %v8249 = vpop.f32.mrb[0].mxu0
    %8250 = vmatprep.mubr.bf16.mxu0 %v4797
    %8251 = vmatmul.mubr.bf16.gmra.mrb[0].mxu0 %v4796
    %v8252 = vpop.f32.mrb[0].mxu0
    %v8253 = vadd.f32 %v8092, %v8252
    %v8254 = vpop.f32.mrb[0].mxu0
    %v8255 = vpop.f32.mrb[0].mxu0
    %v8256 = vadd.f32 %v8095, %v8255
    %v8257 = vpop.f32.mrb[0].mxu0
    %8258 = vmatprep.mubr.bf16.mxu0 %v4809
    %8259 = vmatmul.mubr.bf16.gmra.mrb[0].mxu0 %v4808
    %v8260 = vpop.f32.mrb[0].mxu0
    %v8261 = vadd.f32 %v8100, %v8260
    %v8262 = vpop.f32.mrb[0].mxu0
    %v8263 = vpop.f32.mrb[0].mxu0
    %v8264 = vadd.f32 %v8103, %v8263
    %v8265 = vpop.f32.mrb[0].mxu0
    %8266 = vmatprep.mubr.bf16.mxu0 %v4821
    %8267 = vmatmul.mubr.bf16.gmra.mrb[0].mxu0 %v4820
    %v8268 = vpop.f32.mrb[0].mxu0
    %v8269 = vadd.f32 %v8108, %v8268
    %v8270 = vpop.f32.mrb[0].mxu0
    %v8271 = vpop.f32.mrb[0].mxu0
    %v8272 = vadd.f32 %v8111, %v8271
    %v8273 = vpop.f32.mrb[0].mxu0
    %8274 = vmatprep.mubr.bf16.mxu0 %v4833
    %8275 = vmatmul.mubr.bf16.gmra.mrb[0].mxu0 %v4832
    %v8276 = vpop.f32.mrb[0].mxu0
    %v8277 = vadd.f32 %v8116, %v8276
    %v8278 = vpop.f32.mrb[0].mxu0
    %v8279 = vpop.f32.mrb[0].mxu0
    %v8280 = vadd.f32 %v8119, %v8279
    %v8281 = vpop.f32.mrb[0].mxu0
    %8282 = vmatprep.mubr.bf16.mxu0 %v4845
    %8283 = vmatmul.mubr.bf16.gmra.mrb[0].mxu0 %v4844
    %v8284 = vpop.f32.mrb[0].mxu0
    %v8285 = vadd.f32 %v8124, %v8284
    %v8286 = vpop.f32.mrb[0].mxu0
    %v8287 = vpop.f32.mrb[0].mxu0
    %v8288 = vadd.f32 %v8127, %v8287
    %v8289 = vpop.f32.mrb[0].mxu0
    %8290 = vmatprep.mubr.bf16.mxu0 %v4857
    %8291 = vmatmul.mubr.bf16.gmra.mrb[0].mxu0 %v4856
    %v8292 = vpop.f32.mrb[0].mxu0
    %v8293 = vadd.f32 %v8132, %v8292
    %v8294 = vpop.f32.mrb[0].mxu0
    %v8295 = vpop.f32.mrb[0].mxu0
    %v8296 = vadd.f32 %v8135, %v8295
    %v8297 = vpop.f32.mrb[0].mxu0
    %8298 = vmatprep.mubr.bf16.mxu0 %v4869
    %8299 = vmatmul.mubr.bf16.gmra.mrb[0].mxu0 %v4868
    %v8300 = vpop.f32.mrb[0].mxu0
    %v8301 = vadd.f32 %v8140, %v8300
    %v8302 = vpop.f32.mrb[0].mxu0
    %v8303 = vpop.f32.mrb[0].mxu0
    %v8304 = vadd.f32 %v8143, %v8303
    %v8305 = vpop.f32.mrb[0].mxu0
    %8306 = vmatprep.mubr.bf16.mxu0 %v4881
    %8307 = vmatmul.mubr.bf16.gmra.mrb[0].mxu0 %v4880
    %v8308 = vpop.f32.mrb[0].mxu0
    %v8309 = vadd.f32 %v8148, %v8308
    %v8310 = vpop.f32.mrb[0].mxu0
    %v8311 = vpop.f32.mrb[0].mxu0
    %v8312 = vadd.f32 %v8151, %v8311
    %v8313 = vpop.f32.mrb[0].mxu0
    %8314 = vmatprep.mubr.bf16.mxu0 %v4893
    %8315 = vmatmul.mubr.bf16.gmra.mrb[0].mxu0 %v4892
    %v8316 = vpop.f32.mrb[0].mxu0
    %v8317 = vadd.f32 %v8156, %v8316
    %v8318 = vpop.f32.mrb[0].mxu0
    %v8319 = vpop.f32.mrb[0].mxu0
    %v8320 = vadd.f32 %v8159, %v8319
    %v8321 = vpop.f32.mrb[0].mxu0
    %8322 = vmatprep.mubr.bf16.mxu0 %v4905
    %8323 = vmatmul.mubr.bf16.gmra.mrb[0].mxu0 %v4904
    %v8324 = vpop.f32.mrb[0].mxu0
    %v8325 = vadd.f32 %v8164, %v8324
    %v8326 = vpop.f32.mrb[0].mxu0
    %v8327 = vpop.f32.mrb[0].mxu0
    %v8328 = vadd.f32 %v8167, %v8327
    %v8329 = vpop.f32.mrb[0].mxu0
    %8330 = vdwg.mxu0
    %8331 = vmatprep.subr.bf16.mxu0 0
    %8332 = vmatpush1.bf16.msra.mxu0 %v6373
    %8333 = vmatprep.subr.bf16.mxu0 0
    %8334 = vmatpush1.bf16.msra.mxu0 %v6376
    %8335 = vmatprep.subr.bf16.mxu0 0
    %8336 = vmatpush1.bf16.msra.mxu0 %v6379
    %8337 = vmatprep.subr.bf16.mxu0 0
    %8338 = vmatpush1.bf16.msra.mxu0 %v6382
    %8339 = vmatprep.subr.bf16.mxu0 0
    %8340 = vmatpush1.bf16.msra.mxu0 %v6385
    %8341 = vmatprep.subr.bf16.mxu0 0
    %8342 = vmatpush1.bf16.msra.mxu0 %v6388
    %8343 = vmatprep.subr.bf16.mxu0 0
    %8344 = vmatpush1.bf16.msra.mxu0 %v6391
    %8345 = vmatprep.subr.bf16.mxu0 0
    %8346 = vmatpush1.bf16.msra.mxu0 %v6394
    %8347 = vmatprep.subr.bf16.mxu0 0
    %8348 = vmatpush1.bf16.msra.mxu0 %v6397
    %8349 = vmatprep.subr.bf16.mxu0 0
    %8350 = vmatpush1.bf16.msra.mxu0 %v6400
    %8351 = vmatprep.subr.bf16.mxu0 0
    %8352 = vmatpush1.bf16.msra.mxu0 %v6403
    %8353 = vmatprep.subr.bf16.mxu0 0
    %8354 = vmatpush1.bf16.msra.mxu0 %v6406
    %8355 = vmatprep.subr.bf16.mxu0 0
    %8356 = vmatpush1.bf16.msra.mxu0 %v6409
    %8357 = vmatprep.subr.bf16.mxu0 0
    %8358 = vmatpush1.bf16.msra.mxu0 %v6412
    %8359 = vmatprep.subr.bf16.mxu0 0
    %8360 = vmatpush1.bf16.msra.mxu0 %v6415
    %8361 = vmatprep.subr.bf16.mxu0 0
    %8362 = vmatpush1.bf16.msra.mxu0 %v6418
    %8363 = vmatprep.mubr.bf16.mxu0 %v4727
    %8364 = vmatmul.mubr.bf16.gmra.mrb[0].mxu0 %v4726
    %v8365 = vpop.f32.mrb[0].mxu0
    %v8366 = vadd.f32 %v8205, %v8365
    %v8367 = vpop.f32.mrb[0].mxu0
    %v8368 = vpop.f32.mrb[0].mxu0
    %v8369 = vadd.f32 %v8208, %v8368
    %v8370 = vpop.f32.mrb[0].mxu0
    %8371 = vmatprep.mubr.bf16.mxu0 %v4739
    %8372 = vmatmul.mubr.bf16.gmra.mrb[0].mxu0 %v4738
    %v8373 = vpop.f32.mrb[0].mxu0
    %v8374 = vadd.f32 %v8213, %v8373
    %v8375 = vpop.f32.mrb[0].mxu0
    %v8376 = vpop.f32.mrb[0].mxu0
    %v8377 = vadd.f32 %v8216, %v8376
    %v8378 = vpop.f32.mrb[0].mxu0
    %8379 = vmatprep.mubr.bf16.mxu0 %v4751
    %8380 = vmatmul.mubr.bf16.gmra.mrb[0].mxu0 %v4750
    %v8381 = vpop.f32.mrb[0].mxu0
    %v8382 = vadd.f32 %v8221, %v8381
    %v8383 = vpop.f32.mrb[0].mxu0
    %v8384 = vpop.f32.mrb[0].mxu0
    %v8385 = vadd.f32 %v8224, %v8384
    %v8386 = vpop.f32.mrb[0].mxu0
    %8387 = vmatprep.mubr.bf16.mxu0 %v4763
    %8388 = vmatmul.mubr.bf16.gmra.mrb[0].mxu0 %v4762
    %v8389 = vpop.f32.mrb[0].mxu0
    %v8390 = vadd.f32 %v8229, %v8389
    %v8391 = vpop.f32.mrb[0].mxu0
    %v8392 = vpop.f32.mrb[0].mxu0
    %v8393 = vadd.f32 %v8232, %v8392
    %v8394 = vpop.f32.mrb[0].mxu0
    %8395 = vmatprep.mubr.bf16.mxu0 %v4775
    %8396 = vmatmul.mubr.bf16.gmra.mrb[0].mxu0 %v4774
    %v8397 = vpop.f32.mrb[0].mxu0
    %v8398 = vadd.f32 %v8237, %v8397
    %v8399 = vpop.f32.mrb[0].mxu0
    %v8400 = vpop.f32.mrb[0].mxu0
    %v8401 = vadd.f32 %v8240, %v8400
    %v8402 = vpop.f32.mrb[0].mxu0
    %8403 = vmatprep.mubr.bf16.mxu0 %v4787
    %8404 = vmatmul.mubr.bf16.gmra.mrb[0].mxu0 %v4786
    %v8405 = vpop.f32.mrb[0].mxu0
    %v8406 = vadd.f32 %v8245, %v8405
    %v8407 = vpop.f32.mrb[0].mxu0
    %v8408 = vpop.f32.mrb[0].mxu0
    %v8409 = vadd.f32 %v8248, %v8408
    %v8410 = vpop.f32.mrb[0].mxu0
    %8411 = vmatprep.mubr.bf16.mxu0 %v4799
    %8412 = vmatmul.mubr.bf16.gmra.mrb[0].mxu0 %v4798
    %v8413 = vpop.f32.mrb[0].mxu0
    %v8414 = vadd.f32 %v8253, %v8413
    %v8415 = vpop.f32.mrb[0].mxu0
    %v8416 = vpop.f32.mrb[0].mxu0
    %v8417 = vadd.f32 %v8256, %v8416
    %v8418 = vpop.f32.mrb[0].mxu0
    %8419 = vmatprep.mubr.bf16.mxu0 %v4811
    %8420 = vmatmul.mubr.bf16.gmra.mrb[0].mxu0 %v4810
    %v8421 = vpop.f32.mrb[0].mxu0
    %v8422 = vadd.f32 %v8261, %v8421
    %v8423 = vpop.f32.mrb[0].mxu0
    %v8424 = vpop.f32.mrb[0].mxu0
    %v8425 = vadd.f32 %v8264, %v8424
    %v8426 = vpop.f32.mrb[0].mxu0
    %8427 = vmatprep.mubr.bf16.mxu0 %v4823
    %8428 = vmatmul.mubr.bf16.gmra.mrb[0].mxu0 %v4822
    %v8429 = vpop.f32.mrb[0].mxu0
    %v8430 = vadd.f32 %v8269, %v8429
    %v8431 = vpop.f32.mrb[0].mxu0
    %v8432 = vpop.f32.mrb[0].mxu0
    %v8433 = vadd.f32 %v8272, %v8432
    %v8434 = vpop.f32.mrb[0].mxu0
    %8435 = vmatprep.mubr.bf16.mxu0 %v4835
    %8436 = vmatmul.mubr.bf16.gmra.mrb[0].mxu0 %v4834
    %v8437 = vpop.f32.mrb[0].mxu0
    %v8438 = vadd.f32 %v8277, %v8437
    %v8439 = vpop.f32.mrb[0].mxu0
    %v8440 = vpop.f32.mrb[0].mxu0
    %v8441 = vadd.f32 %v8280, %v8440
    %v8442 = vpop.f32.mrb[0].mxu0
    %8443 = vmatprep.mubr.bf16.mxu0 %v4847
    %8444 = vmatmul.mubr.bf16.gmra.mrb[0].mxu0 %v4846
    %v8445 = vpop.f32.mrb[0].mxu0
    %v8446 = vadd.f32 %v8285, %v8445
    %v8447 = vpop.f32.mrb[0].mxu0
    %v8448 = vpop.f32.mrb[0].mxu0
    %v8449 = vadd.f32 %v8288, %v8448
    %v8450 = vpop.f32.mrb[0].mxu0
    %8451 = vmatprep.mubr.bf16.mxu0 %v4859
    %8452 = vmatmul.mubr.bf16.gmra.mrb[0].mxu0 %v4858
    %v8453 = vpop.f32.mrb[0].mxu0
    %v8454 = vadd.f32 %v8293, %v8453
    %v8455 = vpop.f32.mrb[0].mxu0
    %v8456 = vpop.f32.mrb[0].mxu0
    %v8457 = vadd.f32 %v8296, %v8456
    %v8458 = vpop.f32.mrb[0].mxu0
    %8459 = vmatprep.mubr.bf16.mxu0 %v4871
    %8460 = vmatmul.mubr.bf16.gmra.mrb[0].mxu0 %v4870
    %v8461 = vpop.f32.mrb[0].mxu0
    %v8462 = vadd.f32 %v8301, %v8461
    %v8463 = vpop.f32.mrb[0].mxu0
    %v8464 = vpop.f32.mrb[0].mxu0
    %v8465 = vadd.f32 %v8304, %v8464
    %v8466 = vpop.f32.mrb[0].mxu0
    %8467 = vmatprep.mubr.bf16.mxu0 %v4883
    %8468 = vmatmul.mubr.bf16.gmra.mrb[0].mxu0 %v4882
    %v8469 = vpop.f32.mrb[0].mxu0
    %v8470 = vadd.f32 %v8309, %v8469
    %v8471 = vpop.f32.mrb[0].mxu0
    %v8472 = vpop.f32.mrb[0].mxu0
    %v8473 = vadd.f32 %v8312, %v8472
    %v8474 = vpop.f32.mrb[0].mxu0
    %8475 = vmatprep.mubr.bf16.mxu0 %v4895
    %8476 = vmatmul.mubr.bf16.gmra.mrb[0].mxu0 %v4894
    %v8477 = vpop.f32.mrb[0].mxu0
    %v8478 = vadd.f32 %v8317, %v8477
    %v8479 = vpop.f32.mrb[0].mxu0
    %v8480 = vpop.f32.mrb[0].mxu0
    %v8481 = vadd.f32 %v8320, %v8480
    %v8482 = vpop.f32.mrb[0].mxu0
    %8483 = vmatprep.mubr.bf16.mxu0 %v4907
    %8484 = vmatmul.mubr.bf16.gmra.mrb[0].mxu0 %v4906
    %v8485 = vpop.f32.mrb[0].mxu0
    %v8486 = vadd.f32 %v8325, %v8485
    %v8487 = vpop.f32.mrb[0].mxu0
    %v8488 = vpop.f32.mrb[0].mxu0
    %v8489 = vadd.f32 %v8328, %v8488
    %v8490 = vpop.f32.mrb[0].mxu0
    %8491 = vdwg.mxu0
    %8492 = vmatprep.subr.bf16.mxu0 0
    %8493 = vmatpush1.bf16.msra.mxu0 %v6421
    %8494 = vmatprep.subr.bf16.mxu0 0
    %8495 = vmatpush1.bf16.msra.mxu0 %v6424
    %8496 = vmatprep.subr.bf16.mxu0 0
    %8497 = vmatpush1.bf16.msra.mxu0 %v6427
    %8498 = vmatprep.subr.bf16.mxu0 0
    %8499 = vmatpush1.bf16.msra.mxu0 %v6430
    %8500 = vmatprep.subr.bf16.mxu0 0
    %8501 = vmatpush1.bf16.msra.mxu0 %v6433
    %8502 = vmatprep.subr.bf16.mxu0 0
    %8503 = vmatpush1.bf16.msra.mxu0 %v6436
    %8504 = vmatprep.subr.bf16.mxu0 0
    %8505 = vmatpush1.bf16.msra.mxu0 %v6439
    %8506 = vmatprep.subr.bf16.mxu0 0
    %8507 = vmatpush1.bf16.msra.mxu0 %v6442
    %8508 = vmatprep.subr.bf16.mxu0 0
    %8509 = vmatpush1.bf16.msra.mxu0 %v6445
    %8510 = vmatprep.subr.bf16.mxu0 0
    %8511 = vmatpush1.bf16.msra.mxu0 %v6448
    %8512 = vmatprep.subr.bf16.mxu0 0
    %8513 = vmatpush1.bf16.msra.mxu0 %v6451
    %8514 = vmatprep.subr.bf16.mxu0 0
    %8515 = vmatpush1.bf16.msra.mxu0 %v6454
    %8516 = vmatprep.subr.bf16.mxu0 0
    %8517 = vmatpush1.bf16.msra.mxu0 %v6457
    %8518 = vmatprep.subr.bf16.mxu0 0
    %8519 = vmatpush1.bf16.msra.mxu0 %v6460
    %8520 = vmatprep.subr.bf16.mxu0 0
    %8521 = vmatpush1.bf16.msra.mxu0 %v6463
    %8522 = vmatprep.subr.bf16.mxu0 0
    %8523 = vmatpush1.bf16.msra.mxu0 %v6466
    %8524 = vmatprep.mubr.bf16.mxu0 %v4729
    %8525 = vmatmul.mubr.bf16.gmra.mrb[0].mxu0 %v4728
    %v8526 = vpop.f32.mrb[0].mxu0
    %v8527 = vadd.f32 %v8366, %v8526
    %v8528 = vpop.f32.mrb[0].mxu0
    %v8529 = vpop.f32.mrb[0].mxu0
    %v8530 = vadd.f32 %v8369, %v8529
    %v8531 = vpop.f32.mrb[0].mxu0
    %8532 = vmatprep.mubr.bf16.mxu0 %v4741
    %8533 = vmatmul.mubr.bf16.gmra.mrb[0].mxu0 %v4740
    %v8534 = vpop.f32.mrb[0].mxu0
    %v8535 = vadd.f32 %v8374, %v8534
    %v8536 = vpop.f32.mrb[0].mxu0
    %v8537 = vpop.f32.mrb[0].mxu0
    %v8538 = vadd.f32 %v8377, %v8537
    %v8539 = vpop.f32.mrb[0].mxu0
    %8540 = vmatprep.mubr.bf16.mxu0 %v4753
    %8541 = vmatmul.mubr.bf16.gmra.mrb[0].mxu0 %v4752
    %v8542 = vpop.f32.mrb[0].mxu0
    %v8543 = vadd.f32 %v8382, %v8542
    %v8544 = vpop.f32.mrb[0].mxu0
    %v8545 = vpop.f32.mrb[0].mxu0
    %v8546 = vadd.f32 %v8385, %v8545
    %v8547 = vpop.f32.mrb[0].mxu0
    %8548 = vmatprep.mubr.bf16.mxu0 %v4765
    %8549 = vmatmul.mubr.bf16.gmra.mrb[0].mxu0 %v4764
    %v8550 = vpop.f32.mrb[0].mxu0
    %v8551 = vadd.f32 %v8390, %v8550
    %v8552 = vpop.f32.mrb[0].mxu0
    %v8553 = vpop.f32.mrb[0].mxu0
    %v8554 = vadd.f32 %v8393, %v8553
    %v8555 = vpop.f32.mrb[0].mxu0
    %8556 = vmatprep.mubr.bf16.mxu0 %v4777
    %8557 = vmatmul.mubr.bf16.gmra.mrb[0].mxu0 %v4776
    %v8558 = vpop.f32.mrb[0].mxu0
    %v8559 = vadd.f32 %v8398, %v8558
    %v8560 = vpop.f32.mrb[0].mxu0
    %v8561 = vpop.f32.mrb[0].mxu0
    %v8562 = vadd.f32 %v8401, %v8561
    %v8563 = vpop.f32.mrb[0].mxu0
    %8564 = vmatprep.mubr.bf16.mxu0 %v4789
    %8565 = vmatmul.mubr.bf16.gmra.mrb[0].mxu0 %v4788
    %v8566 = vpop.f32.mrb[0].mxu0
    %v8567 = vadd.f32 %v8406, %v8566
    %v8568 = vpop.f32.mrb[0].mxu0
    %v8569 = vpop.f32.mrb[0].mxu0
    %v8570 = vadd.f32 %v8409, %v8569
    %v8571 = vpop.f32.mrb[0].mxu0
    %8572 = vmatprep.mubr.bf16.mxu0 %v4801
    %8573 = vmatmul.mubr.bf16.gmra.mrb[0].mxu0 %v4800
    %v8574 = vpop.f32.mrb[0].mxu0
    %v8575 = vadd.f32 %v8414, %v8574
    %v8576 = vpop.f32.mrb[0].mxu0
    %v8577 = vpop.f32.mrb[0].mxu0
    %v8578 = vadd.f32 %v8417, %v8577
    %v8579 = vpop.f32.mrb[0].mxu0
    %8580 = vmatprep.mubr.bf16.mxu0 %v4813
    %8581 = vmatmul.mubr.bf16.gmra.mrb[0].mxu0 %v4812
    %v8582 = vpop.f32.mrb[0].mxu0
    %v8583 = vadd.f32 %v8422, %v8582
    %v8584 = vpop.f32.mrb[0].mxu0
    %v8585 = vpop.f32.mrb[0].mxu0
    %v8586 = vadd.f32 %v8425, %v8585
    %v8587 = vpop.f32.mrb[0].mxu0
    %8588 = vmatprep.mubr.bf16.mxu0 %v4825
    %8589 = vmatmul.mubr.bf16.gmra.mrb[0].mxu0 %v4824
    %v8590 = vpop.f32.mrb[0].mxu0
    %v8591 = vadd.f32 %v8430, %v8590
    %v8592 = vpop.f32.mrb[0].mxu0
    %v8593 = vpop.f32.mrb[0].mxu0
    %v8594 = vadd.f32 %v8433, %v8593
    %v8595 = vpop.f32.mrb[0].mxu0
    %8596 = vmatprep.mubr.bf16.mxu0 %v4837
    %8597 = vmatmul.mubr.bf16.gmra.mrb[0].mxu0 %v4836
    %v8598 = vpop.f32.mrb[0].mxu0
    %v8599 = vadd.f32 %v8438, %v8598
    %v8600 = vpop.f32.mrb[0].mxu0
    %v8601 = vpop.f32.mrb[0].mxu0
    %v8602 = vadd.f32 %v8441, %v8601
    %v8603 = vpop.f32.mrb[0].mxu0
    %8604 = vmatprep.mubr.bf16.mxu0 %v4849
    %8605 = vmatmul.mubr.bf16.gmra.mrb[0].mxu0 %v4848
    %v8606 = vpop.f32.mrb[0].mxu0
    %v8607 = vadd.f32 %v8446, %v8606
    %v8608 = vpop.f32.mrb[0].mxu0
    %v8609 = vpop.f32.mrb[0].mxu0
    %v8610 = vadd.f32 %v8449, %v8609
    %v8611 = vpop.f32.mrb[0].mxu0
    %8612 = vmatprep.mubr.bf16.mxu0 %v4861
    %8613 = vmatmul.mubr.bf16.gmra.mrb[0].mxu0 %v4860
    %v8614 = vpop.f32.mrb[0].mxu0
    %v8615 = vadd.f32 %v8454, %v8614
    %v8616 = vpop.f32.mrb[0].mxu0
    %v8617 = vpop.f32.mrb[0].mxu0
    %v8618 = vadd.f32 %v8457, %v8617
    %v8619 = vpop.f32.mrb[0].mxu0
    %8620 = vmatprep.mubr.bf16.mxu0 %v4873
    %8621 = vmatmul.mubr.bf16.gmra.mrb[0].mxu0 %v4872
    %v8622 = vpop.f32.mrb[0].mxu0
    %v8623 = vadd.f32 %v8462, %v8622
    %v8624 = vpop.f32.mrb[0].mxu0
    %v8625 = vpop.f32.mrb[0].mxu0
    %v8626 = vadd.f32 %v8465, %v8625
    %v8627 = vpop.f32.mrb[0].mxu0
    %8628 = vmatprep.mubr.bf16.mxu0 %v4885
    %8629 = vmatmul.mubr.bf16.gmra.mrb[0].mxu0 %v4884
    %v8630 = vpop.f32.mrb[0].mxu0
    %v8631 = vadd.f32 %v8470, %v8630
    %v8632 = vpop.f32.mrb[0].mxu0
    %v8633 = vpop.f32.mrb[0].mxu0
    %v8634 = vadd.f32 %v8473, %v8633
    %v8635 = vpop.f32.mrb[0].mxu0
    %8636 = vmatprep.mubr.bf16.mxu0 %v4897
    %8637 = vmatmul.mubr.bf16.gmra.mrb[0].mxu0 %v4896
    %v8638 = vpop.f32.mrb[0].mxu0
    %v8639 = vadd.f32 %v8478, %v8638
    %v8640 = vpop.f32.mrb[0].mxu0
    %v8641 = vpop.f32.mrb[0].mxu0
    %v8642 = vadd.f32 %v8481, %v8641
    %v8643 = vpop.f32.mrb[0].mxu0
    %8644 = vmatprep.mubr.bf16.mxu0 %v4909
    %8645 = vmatmul.mubr.bf16.gmra.mrb[0].mxu0 %v4908
    %v8646 = vpop.f32.mrb[0].mxu0
    %v8647 = vadd.f32 %v8486, %v8646
    %v8648 = vpop.f32.mrb[0].mxu0
    %v8649 = vpop.f32.mrb[0].mxu0
    %v8650 = vadd.f32 %v8489, %v8649
    %v8651 = vpop.f32.mrb[0].mxu0
    %8652 = vdwg.mxu0
    %8653 = vmatprep.subr.bf16.mxu0 0
    %8654 = vmatpush1.bf16.msra.mxu0 %v6469
    %8655 = vmatprep.subr.bf16.mxu0 0
    %8656 = vmatpush1.bf16.msra.mxu0 %v6472
    %8657 = vmatprep.subr.bf16.mxu0 0
    %8658 = vmatpush1.bf16.msra.mxu0 %v6475
    %8659 = vmatprep.subr.bf16.mxu0 0
    %8660 = vmatpush1.bf16.msra.mxu0 %v6478
    %8661 = vmatprep.subr.bf16.mxu0 0
    %8662 = vmatpush1.bf16.msra.mxu0 %v6481
    %8663 = vmatprep.subr.bf16.mxu0 0
    %8664 = vmatpush1.bf16.msra.mxu0 %v6484
    %8665 = vmatprep.subr.bf16.mxu0 0
    %8666 = vmatpush1.bf16.msra.mxu0 %v6487
    %8667 = vmatprep.subr.bf16.mxu0 0
    %8668 = vmatpush1.bf16.msra.mxu0 %v6490
    %8669 = vmatprep.subr.bf16.mxu0 0
    %8670 = vmatpush1.bf16.msra.mxu0 %v6493
    %8671 = vmatprep.subr.bf16.mxu0 0
    %8672 = vmatpush1.bf16.msra.mxu0 %v6496
    %8673 = vmatprep.subr.bf16.mxu0 0
    %8674 = vmatpush1.bf16.msra.mxu0 %v6499
    %8675 = vmatprep.subr.bf16.mxu0 0
    %8676 = vmatpush1.bf16.msra.mxu0 %v6502
    %8677 = vmatprep.subr.bf16.mxu0 0
    %8678 = vmatpush1.bf16.msra.mxu0 %v6505
    %8679 = vmatprep.subr.bf16.mxu0 0
    %8680 = vmatpush1.bf16.msra.mxu0 %v6508
    %8681 = vmatprep.subr.bf16.mxu0 0
    %8682 = vmatpush1.bf16.msra.mxu0 %v6511
    %8683 = vmatprep.subr.bf16.mxu0 0
    %8684 = vmatpush1.bf16.msra.mxu0 %v6514
    %8685 = vmatprep.mubr.bf16.mxu0 %v4731
    %8686 = vmatmul.mubr.bf16.gmra.mrb[0].mxu0 %v4730
    %v8687 = vpop.f32.mrb[0].mxu0
    %v8688 = vadd.f32 %v8527, %v8687
    %v8689 = vpop.f32.mrb[0].mxu0
    %v8690 = vpop.f32.mrb[0].mxu0
    %v8691 = vadd.f32 %v8530, %v8690
    %v8692 = vpop.f32.mrb[0].mxu0
    %8693 = vmatprep.mubr.bf16.mxu0 %v4743
    %8694 = vmatmul.mubr.bf16.gmra.mrb[0].mxu0 %v4742
    %v8695 = vpop.f32.mrb[0].mxu0
    %v8696 = vadd.f32 %v8535, %v8695
    %v8697 = vpop.f32.mrb[0].mxu0
    %v8698 = vpop.f32.mrb[0].mxu0
    %v8699 = vadd.f32 %v8538, %v8698
    %v8700 = vpop.f32.mrb[0].mxu0
    %8701 = vmatprep.mubr.bf16.mxu0 %v4755
    %8702 = vmatmul.mubr.bf16.gmra.mrb[0].mxu0 %v4754
    %v8703 = vpop.f32.mrb[0].mxu0
    %v8704 = vadd.f32 %v8543, %v8703
    %v8705 = vpop.f32.mrb[0].mxu0
    %v8706 = vpop.f32.mrb[0].mxu0
    %v8707 = vadd.f32 %v8546, %v8706
    %v8708 = vpop.f32.mrb[0].mxu0
    %8709 = vmatprep.mubr.bf16.mxu0 %v4767
    %8710 = vmatmul.mubr.bf16.gmra.mrb[0].mxu0 %v4766
    %v8711 = vpop.f32.mrb[0].mxu0
    %v8712 = vadd.f32 %v8551, %v8711
    %v8713 = vpop.f32.mrb[0].mxu0
    %v8714 = vpop.f32.mrb[0].mxu0
    %v8715 = vadd.f32 %v8554, %v8714
    %v8716 = vpop.f32.mrb[0].mxu0
    %8717 = vmatprep.mubr.bf16.mxu0 %v4779
    %8718 = vmatmul.mubr.bf16.gmra.mrb[0].mxu0 %v4778
    %v8719 = vpop.f32.mrb[0].mxu0
    %v8720 = vadd.f32 %v8559, %v8719
    %v8721 = vpop.f32.mrb[0].mxu0
    %v8722 = vpop.f32.mrb[0].mxu0
    %v8723 = vadd.f32 %v8562, %v8722
    %v8724 = vpop.f32.mrb[0].mxu0
    %8725 = vmatprep.mubr.bf16.mxu0 %v4791
    %8726 = vmatmul.mubr.bf16.gmra.mrb[0].mxu0 %v4790
    %v8727 = vpop.f32.mrb[0].mxu0
    %v8728 = vadd.f32 %v8567, %v8727
    %v8729 = vpop.f32.mrb[0].mxu0
    %v8730 = vpop.f32.mrb[0].mxu0
    %v8731 = vadd.f32 %v8570, %v8730
    %v8732 = vpop.f32.mrb[0].mxu0
    %8733 = vmatprep.mubr.bf16.mxu0 %v4803
    %8734 = vmatmul.mubr.bf16.gmra.mrb[0].mxu0 %v4802
    %v8735 = vpop.f32.mrb[0].mxu0
    %v8736 = vadd.f32 %v8575, %v8735
    %v8737 = vpop.f32.mrb[0].mxu0
    %v8738 = vpop.f32.mrb[0].mxu0
    %v8739 = vadd.f32 %v8578, %v8738
    %v8740 = vpop.f32.mrb[0].mxu0
    %8741 = vmatprep.mubr.bf16.mxu0 %v4815
    %8742 = vmatmul.mubr.bf16.gmra.mrb[0].mxu0 %v4814
    %v8743 = vpop.f32.mrb[0].mxu0
    %v8744 = vadd.f32 %v8583, %v8743
    %v8745 = vpop.f32.mrb[0].mxu0
    %v8746 = vpop.f32.mrb[0].mxu0
    %v8747 = vadd.f32 %v8586, %v8746
    %v8748 = vpop.f32.mrb[0].mxu0
    %8749 = vmatprep.mubr.bf16.mxu0 %v4827
    %8750 = vmatmul.mubr.bf16.gmra.mrb[0].mxu0 %v4826
    %v8751 = vpop.f32.mrb[0].mxu0
    %v8752 = vadd.f32 %v8591, %v8751
    %v8753 = vpop.f32.mrb[0].mxu0
    %v8754 = vpop.f32.mrb[0].mxu0
    %v8755 = vadd.f32 %v8594, %v8754
    %v8756 = vpop.f32.mrb[0].mxu0
    %8757 = vmatprep.mubr.bf16.mxu0 %v4839
    %8758 = vmatmul.mubr.bf16.gmra.mrb[0].mxu0 %v4838
    %v8759 = vpop.f32.mrb[0].mxu0
    %v8760 = vadd.f32 %v8599, %v8759
    %v8761 = vpop.f32.mrb[0].mxu0
    %v8762 = vpop.f32.mrb[0].mxu0
    %v8763 = vadd.f32 %v8602, %v8762
    %v8764 = vpop.f32.mrb[0].mxu0
    %8765 = vmatprep.mubr.bf16.mxu0 %v4851
    %8766 = vmatmul.mubr.bf16.gmra.mrb[0].mxu0 %v4850
    %v8767 = vpop.f32.mrb[0].mxu0
    %v8768 = vadd.f32 %v8607, %v8767
    %v8769 = vpop.f32.mrb[0].mxu0
    %v8770 = vpop.f32.mrb[0].mxu0
    %v8771 = vadd.f32 %v8610, %v8770
    %v8772 = vpop.f32.mrb[0].mxu0
    %8773 = vmatprep.mubr.bf16.mxu0 %v4863
    %8774 = vmatmul.mubr.bf16.gmra.mrb[0].mxu0 %v4862
    %v8775 = vpop.f32.mrb[0].mxu0
    %v8776 = vadd.f32 %v8615, %v8775
    %v8777 = vpop.f32.mrb[0].mxu0
    %v8778 = vpop.f32.mrb[0].mxu0
    %v8779 = vadd.f32 %v8618, %v8778
    %v8780 = vpop.f32.mrb[0].mxu0
    %8781 = vmatprep.mubr.bf16.mxu0 %v4875
    %8782 = vmatmul.mubr.bf16.gmra.mrb[0].mxu0 %v4874
    %v8783 = vpop.f32.mrb[0].mxu0
    %v8784 = vadd.f32 %v8623, %v8783
    %v8785 = vpop.f32.mrb[0].mxu0
    %v8786 = vpop.f32.mrb[0].mxu0
    %v8787 = vadd.f32 %v8626, %v8786
    %v8788 = vpop.f32.mrb[0].mxu0
    %8789 = vmatprep.mubr.bf16.mxu0 %v4887
    %8790 = vmatmul.mubr.bf16.gmra.mrb[0].mxu0 %v4886
    %v8791 = vpop.f32.mrb[0].mxu0
    %v8792 = vadd.f32 %v8631, %v8791
    %v8793 = vpop.f32.mrb[0].mxu0
    %v8794 = vpop.f32.mrb[0].mxu0
    %v8795 = vadd.f32 %v8634, %v8794
    %v8796 = vpop.f32.mrb[0].mxu0
    %8797 = vmatprep.mubr.bf16.mxu0 %v4899
    %8798 = vmatmul.mubr.bf16.gmra.mrb[0].mxu0 %v4898
    %v8799 = vpop.f32.mrb[0].mxu0
    %v8800 = vadd.f32 %v8639, %v8799
    %v8801 = vpop.f32.mrb[0].mxu0
    %v8802 = vpop.f32.mrb[0].mxu0
    %v8803 = vadd.f32 %v8642, %v8802
    %v8804 = vpop.f32.mrb[0].mxu0
    %8805 = vmatprep.mubr.bf16.mxu0 %v4911
    %8806 = vmatmul.mubr.bf16.gmra.mrb[0].mxu0 %v4910
    %v8807 = vpop.f32.mrb[0].mxu0
    %v8808 = vadd.f32 %v8647, %v8807
    %v8809 = vpop.f32.mrb[0].mxu0
    %v8810 = vpop.f32.mrb[0].mxu0
    %v8811 = vadd.f32 %v8650, %v8810
    %v8812 = vpop.f32.mrb[0].mxu0
    %8813 = vdwg.mxu0
    %8814 = vmatprep.subr.bf16.mxu0 0
    %8815 = vmatpush1.bf16.msra.mxu0 %v6517
    %8816 = vmatprep.subr.bf16.mxu0 0
    %8817 = vmatpush1.bf16.msra.mxu0 %v6520
    %8818 = vmatprep.subr.bf16.mxu0 0
    %8819 = vmatpush1.bf16.msra.mxu0 %v6523
    %8820 = vmatprep.subr.bf16.mxu0 0
    %8821 = vmatpush1.bf16.msra.mxu0 %v6526
    %8822 = vmatprep.subr.bf16.mxu0 0
    %8823 = vmatpush1.bf16.msra.mxu0 %v6529
    %8824 = vmatprep.subr.bf16.mxu0 0
    %8825 = vmatpush1.bf16.msra.mxu0 %v6532
    %8826 = vmatprep.subr.bf16.mxu0 0
    %8827 = vmatpush1.bf16.msra.mxu0 %v6535
    %8828 = vmatprep.subr.bf16.mxu0 0
    %8829 = vmatpush1.bf16.msra.mxu0 %v6538
    %8830 = vmatprep.subr.bf16.mxu0 0
    %8831 = vmatpush1.bf16.msra.mxu0 %v6541
    %8832 = vmatprep.subr.bf16.mxu0 0
    %8833 = vmatpush1.bf16.msra.mxu0 %v6544
    %8834 = vmatprep.subr.bf16.mxu0 0
    %8835 = vmatpush1.bf16.msra.mxu0 %v6547
    %8836 = vmatprep.subr.bf16.mxu0 0
    %8837 = vmatpush1.bf16.msra.mxu0 %v6550
    %8838 = vmatprep.subr.bf16.mxu0 0
    %8839 = vmatpush1.bf16.msra.mxu0 %v6553
    %8840 = vmatprep.subr.bf16.mxu0 0
    %8841 = vmatpush1.bf16.msra.mxu0 %v6556
    %8842 = vmatprep.subr.bf16.mxu0 0
    %8843 = vmatpush1.bf16.msra.mxu0 %v6559
    %8844 = vmatprep.subr.bf16.mxu0 0
    %8845 = vmatpush1.bf16.msra.mxu0 %v6562
    %8846 = vmatprep.mubr.bf16.mxu0 %v4733
    %8847 = vmatmul.mubr.bf16.gmra.mrb[0].mxu0 %v4732
    %v8848 = vpop.f32.mrb[0].mxu0
    %v8849 = vadd.f32 %v8688, %v8848
    %v8850 = vpop.f32.mrb[0].mxu0
    %v8851 = vpop.f32.mrb[0].mxu0
    %v8852 = vadd.f32 %v8691, %v8851
    %v8853 = vpop.f32.mrb[0].mxu0
    %8854 = vmatprep.mubr.bf16.mxu0 %v4745
    %8855 = vmatmul.mubr.bf16.gmra.mrb[0].mxu0 %v4744
    %v8856 = vpop.f32.mrb[0].mxu0
    %v8857 = vadd.f32 %v8696, %v8856
    %v8858 = vpop.f32.mrb[0].mxu0
    %v8859 = vpop.f32.mrb[0].mxu0
    %v8860 = vadd.f32 %v8699, %v8859
    %v8861 = vpop.f32.mrb[0].mxu0
    %8862 = vmatprep.mubr.bf16.mxu0 %v4757
    %8863 = vmatmul.mubr.bf16.gmra.mrb[0].mxu0 %v4756
    %v8864 = vpop.f32.mrb[0].mxu0
    %v8865 = vadd.f32 %v8704, %v8864
    %v8866 = vpop.f32.mrb[0].mxu0
    %v8867 = vpop.f32.mrb[0].mxu0
    %v8868 = vadd.f32 %v8707, %v8867
    %v8869 = vpop.f32.mrb[0].mxu0
    %8870 = vmatprep.mubr.bf16.mxu0 %v4769
    %8871 = vmatmul.mubr.bf16.gmra.mrb[0].mxu0 %v4768
    %v8872 = vpop.f32.mrb[0].mxu0
    %v8873 = vadd.f32 %v8712, %v8872
    %v8874 = vpop.f32.mrb[0].mxu0
    %v8875 = vpop.f32.mrb[0].mxu0
    %v8876 = vadd.f32 %v8715, %v8875
    %v8877 = vpop.f32.mrb[0].mxu0
    %8878 = vmatprep.mubr.bf16.mxu0 %v4781
    %8879 = vmatmul.mubr.bf16.gmra.mrb[0].mxu0 %v4780
    %v8880 = vpop.f32.mrb[0].mxu0
    %v8881 = vadd.f32 %v8720, %v8880
    %v8882 = vpop.f32.mrb[0].mxu0
    %v8883 = vpop.f32.mrb[0].mxu0
    %v8884 = vadd.f32 %v8723, %v8883
    %v8885 = vpop.f32.mrb[0].mxu0
    %8886 = vmatprep.mubr.bf16.mxu0 %v4793
    %8887 = vmatmul.mubr.bf16.gmra.mrb[0].mxu0 %v4792
    %v8888 = vpop.f32.mrb[0].mxu0
    %v8889 = vadd.f32 %v8728, %v8888
    %v8890 = vpop.f32.mrb[0].mxu0
    %v8891 = vpop.f32.mrb[0].mxu0
    %v8892 = vadd.f32 %v8731, %v8891
    %v8893 = vpop.f32.mrb[0].mxu0
    %8894 = vmatprep.mubr.bf16.mxu0 %v4805
    %8895 = vmatmul.mubr.bf16.gmra.mrb[0].mxu0 %v4804
    %v8896 = vpop.f32.mrb[0].mxu0
    %v8897 = vadd.f32 %v8736, %v8896
    %v8898 = vpop.f32.mrb[0].mxu0
    %v8899 = vpop.f32.mrb[0].mxu0
    %v8900 = vadd.f32 %v8739, %v8899
    %v8901 = vpop.f32.mrb[0].mxu0
    %8902 = vmatprep.mubr.bf16.mxu0 %v4817
    %8903 = vmatmul.mubr.bf16.gmra.mrb[0].mxu0 %v4816
    %v8904 = vpop.f32.mrb[0].mxu0
    %v8905 = vadd.f32 %v8744, %v8904
    %v8906 = vpop.f32.mrb[0].mxu0
    %v8907 = vpop.f32.mrb[0].mxu0
    %v8908 = vadd.f32 %v8747, %v8907
    %v8909 = vpop.f32.mrb[0].mxu0
    %8910 = vmatprep.mubr.bf16.mxu0 %v4829
    %8911 = vmatmul.mubr.bf16.gmra.mrb[0].mxu0 %v4828
    %v8912 = vpop.f32.mrb[0].mxu0
    %v8913 = vadd.f32 %v8752, %v8912
    %v8914 = vpop.f32.mrb[0].mxu0
    %v8915 = vpop.f32.mrb[0].mxu0
    %v8916 = vadd.f32 %v8755, %v8915
    %v8917 = vpop.f32.mrb[0].mxu0
    %8918 = vmatprep.mubr.bf16.mxu0 %v4841
    %8919 = vmatmul.mubr.bf16.gmra.mrb[0].mxu0 %v4840
    %v8920 = vpop.f32.mrb[0].mxu0
    %v8921 = vadd.f32 %v8760, %v8920
    %v8922 = vpop.f32.mrb[0].mxu0
    %v8923 = vpop.f32.mrb[0].mxu0
    %v8924 = vadd.f32 %v8763, %v8923
    %v8925 = vpop.f32.mrb[0].mxu0
    %8926 = vmatprep.mubr.bf16.mxu0 %v4853
    %8927 = vmatmul.mubr.bf16.gmra.mrb[0].mxu0 %v4852
    %v8928 = vpop.f32.mrb[0].mxu0
    %v8929 = vadd.f32 %v8768, %v8928
    %v8930 = vpop.f32.mrb[0].mxu0
    %v8931 = vpop.f32.mrb[0].mxu0
    %v8932 = vadd.f32 %v8771, %v8931
    %v8933 = vpop.f32.mrb[0].mxu0
    %8934 = vmatprep.mubr.bf16.mxu0 %v4865
    %8935 = vmatmul.mubr.bf16.gmra.mrb[0].mxu0 %v4864
    %v8936 = vpop.f32.mrb[0].mxu0
    %v8937 = vadd.f32 %v8776, %v8936
    %v8938 = vpop.f32.mrb[0].mxu0
    %v8939 = vpop.f32.mrb[0].mxu0
    %v8940 = vadd.f32 %v8779, %v8939
    %v8941 = vpop.f32.mrb[0].mxu0
    %8942 = vmatprep.mubr.bf16.mxu0 %v4877
    %8943 = vmatmul.mubr.bf16.gmra.mrb[0].mxu0 %v4876
    %v8944 = vpop.f32.mrb[0].mxu0
    %v8945 = vadd.f32 %v8784, %v8944
    %v8946 = vpop.f32.mrb[0].mxu0
    %v8947 = vpop.f32.mrb[0].mxu0
    %v8948 = vadd.f32 %v8787, %v8947
    %v8949 = vpop.f32.mrb[0].mxu0
    %8950 = vmatprep.mubr.bf16.mxu0 %v4889
    %8951 = vmatmul.mubr.bf16.gmra.mrb[0].mxu0 %v4888
    %v8952 = vpop.f32.mrb[0].mxu0
    %v8953 = vadd.f32 %v8792, %v8952
    %v8954 = vpop.f32.mrb[0].mxu0
    %v8955 = vpop.f32.mrb[0].mxu0
    %v8956 = vadd.f32 %v8795, %v8955
    %v8957 = vpop.f32.mrb[0].mxu0
    %8958 = vmatprep.mubr.bf16.mxu0 %v4901
    %8959 = vmatmul.mubr.bf16.gmra.mrb[0].mxu0 %v4900
    %v8960 = vpop.f32.mrb[0].mxu0
    %v8961 = vadd.f32 %v8800, %v8960
    %v8962 = vpop.f32.mrb[0].mxu0
    %v8963 = vpop.f32.mrb[0].mxu0
    %v8964 = vadd.f32 %v8803, %v8963
    %v8965 = vpop.f32.mrb[0].mxu0
    %8966 = vmatprep.mubr.bf16.mxu0 %v4913
    %8967 = vmatmul.mubr.bf16.gmra.mrb[0].mxu0 %v4912
    %v8968 = vpop.f32.mrb[0].mxu0
    %v8969 = vadd.f32 %v8808, %v8968
    %v8970 = vpop.f32.mrb[0].mxu0
    %v8971 = vpop.f32.mrb[0].mxu0
    %v8972 = vadd.f32 %v8811, %v8971
    %v8973 = vpop.f32.mrb[0].mxu0
    %8974 = vdwg.mxu0
    %8975 = vst [vmem:[#allocation11] sm:$0xff] %v7851
    %8976 = vst [vmem:[#allocation11 + $0x8] sm:$0xff] %v7853
    %8977 = vst [vmem:[#allocation11 + $0x10] sm:$0xff] %v8849
    %8978 = vst [vmem:[#allocation11 + $0x18] sm:$0xff] %v7855
    %8979 = vst [vmem:[#allocation11 + $0x20] sm:$0xff] %v7857
    %8980 = vst [vmem:[#allocation11 + $0x28] sm:$0xff] %v8852
    %8981 = vst [vmem:[#allocation11 + $0x30] sm:$0xff] %v7861
    %8982 = vst [vmem:[#allocation11 + $0x38] sm:$0xff] %v7863
    %8983 = vst [vmem:[#allocation11 + $0x40] sm:$0xff] %v8857
    %8984 = vst [vmem:[#allocation11 + $0x48] sm:$0xff] %v7865
    %8985 = vst [vmem:[#allocation11 + $0x50] sm:$0xff] %v7867
    %8986 = vst [vmem:[#allocation11 + $0x58] sm:$0xff] %v8860
    %8987 = vst [vmem:[#allocation11 + $0x60] sm:$0xff] %v7871
    %8988 = vst [vmem:[#allocation11 + $0x68] sm:$0xff] %v7873
    %8989 = vst [vmem:[#allocation11 + $0x70] sm:$0xff] %v8865
    %8990 = vst [vmem:[#allocation11 + $0x78] sm:$0xff] %v7875
    %8991 = vst [vmem:[#allocation11 + $0x80] sm:$0xff] %v7877
    %8992 = vst [vmem:[#allocation11 + $0x88] sm:$0xff] %v8868
    %8993 = vst [vmem:[#allocation11 + $0x90] sm:$0xff] %v7881
    %8994 = vst [vmem:[#allocation11 + $0x98] sm:$0xff] %v7883
    %8995 = vst [vmem:[#allocation11 + $0xa0] sm:$0xff] %v8873
    %8996 = vst [vmem:[#allocation11 + $0xa8] sm:$0xff] %v7885
    %8997 = vst [vmem:[#allocation11 + $0xb0] sm:$0xff] %v7887
    %8998 = vst [vmem:[#allocation11 + $0xb8] sm:$0xff] %v8876
    %8999 = vst [vmem:[#allocation11 + $0xc0] sm:$0xff] %v7891
    %9000 = vst [vmem:[#allocation11 + $0xc8] sm:$0xff] %v7893
    %9001 = vst [vmem:[#allocation11 + $0xd0] sm:$0xff] %v8881
    %9002 = vst [vmem:[#allocation11 + $0xd8] sm:$0xff] %v7895
    %9003 = vst [vmem:[#allocation11 + $0xe0] sm:$0xff] %v7897
    %9004 = vst [vmem:[#allocation11 + $0xe8] sm:$0xff] %v8884
    %9005 = vst [vmem:[#allocation11 + $0xf0] sm:$0xff] %v7901
    %9006 = vst [vmem:[#allocation11 + $0xf8] sm:$0xff] %v7903
    %9007 = vst [vmem:[#allocation11 + $0x100] sm:$0xff] %v8889
    %9008 = vst [vmem:[#allocation11 + $0x108] sm:$0xff] %v7905
    %9009 = vst [vmem:[#allocation11 + $0x110] sm:$0xff] %v7907
    %9010 = vst [vmem:[#allocation11 + $0x118] sm:$0xff] %v8892
    %9011 = vst [vmem:[#allocation11 + $0x120] sm:$0xff] %v7911
    %9012 = vst [vmem:[#allocation11 + $0x128] sm:$0xff] %v7913
    %9013 = vst [vmem:[#allocation11 + $0x130] sm:$0xff] %v8897
    %9014 = vst [vmem:[#allocation11 + $0x138] sm:$0xff] %v7915
    %9015 = vst [vmem:[#allocation11 + $0x140] sm:$0xff] %v7917
    %9016 = vst [vmem:[#allocation11 + $0x148] sm:$0xff] %v8900
    %9017 = vst [vmem:[#allocation11 + $0x150] sm:$0xff] %v7921
    %9018 = vst [vmem:[#allocation11 + $0x158] sm:$0xff] %v7923
    %9019 = vst [vmem:[#allocation11 + $0x160] sm:$0xff] %v8905
    %9020 = vst [vmem:[#allocation11 + $0x168] sm:$0xff] %v7925
    %9021 = vst [vmem:[#allocation11 + $0x170] sm:$0xff] %v7927
    %9022 = vst [vmem:[#allocation11 + $0x178] sm:$0xff] %v8908
    %9023 = vst [vmem:[#allocation11 + $0x180] sm:$0xff] %v7931
    %9024 = vst [vmem:[#allocation11 + $0x188] sm:$0xff] %v7933
    %9025 = vst [vmem:[#allocation11 + $0x190] sm:$0xff] %v8913
    %9026 = vst [vmem:[#allocation11 + $0x198] sm:$0xff] %v7935
    %9027 = vst [vmem:[#allocation11 + $0x1a0] sm:$0xff] %v7937
    %9028 = vst [vmem:[#allocation11 + $0x1a8] sm:$0xff] %v8916
    %9029 = vst [vmem:[#allocation11 + $0x1b0] sm:$0xff] %v7941
    %9030 = vst [vmem:[#allocation11 + $0x1b8] sm:$0xff] %v7943
    %9031 = vst [vmem:[#allocation11 + $0x1c0] sm:$0xff] %v8921
    %9032 = vst [vmem:[#allocation11 + $0x1c8] sm:$0xff] %v7945
    %9033 = vst [vmem:[#allocation11 + $0x1d0] sm:$0xff] %v7947
    %9034 = vst [vmem:[#allocation11 + $0x1d8] sm:$0xff] %v8924
    %9035 = vst [vmem:[#allocation11 + $0x1e0] sm:$0xff] %v7951
    %9036 = vst [vmem:[#allocation11 + $0x1e8] sm:$0xff] %v7953
    %9037 = vst [vmem:[#allocation11 + $0x1f0] sm:$0xff] %v8929
    %9038 = vst [vmem:[#allocation11 + $0x1f8] sm:$0xff] %v7955
    %9039 = vst [vmem:[#allocation11 + $0x200] sm:$0xff] %v7957
    %9040 = vst [vmem:[#allocation11 + $0x208] sm:$0xff] %v8932
    %9041 = vst [vmem:[#allocation11 + $0x210] sm:$0xff] %v7961
    %9042 = vst [vmem:[#allocation11 + $0x218] sm:$0xff] %v7963
    %9043 = vst [vmem:[#allocation11 + $0x220] sm:$0xff] %v8937
    %9044 = vst [vmem:[#allocation11 + $0x228] sm:$0xff] %v7965
    %9045 = vst [vmem:[#allocation11 + $0x230] sm:$0xff] %v7967
    %9046 = vst [vmem:[#allocation11 + $0x238] sm:$0xff] %v8940
    %9047 = vst [vmem:[#allocation11 + $0x240] sm:$0xff] %v7971
    %9048 = vst [vmem:[#allocation11 + $0x248] sm:$0xff] %v7973
    %9049 = vst [vmem:[#allocation11 + $0x250] sm:$0xff] %v8945
    %9050 = vst [vmem:[#allocation11 + $0x258] sm:$0xff] %v7975
    %9051 = vst [vmem:[#allocation11 + $0x260] sm:$0xff] %v7977
    %9052 = vst [vmem:[#allocation11 + $0x268] sm:$0xff] %v8948
    %9053 = vst [vmem:[#allocation11 + $0x270] sm:$0xff] %v7981
    %9054 = vst [vmem:[#allocation11 + $0x278] sm:$0xff] %v7983
    %9055 = vst [vmem:[#allocation11 + $0x280] sm:$0xff] %v8953
    %9056 = vst [vmem:[#allocation11 + $0x288] sm:$0xff] %v7985
    %9057 = vst [vmem:[#allocation11 + $0x290] sm:$0xff] %v7987
    %9058 = vst [vmem:[#allocation11 + $0x298] sm:$0xff] %v8956
    %9059 = vst [vmem:[#allocation11 + $0x2a0] sm:$0xff] %v7991
    %9060 = vst [vmem:[#allocation11 + $0x2a8] sm:$0xff] %v7993
    %9061 = vst [vmem:[#allocation11 + $0x2b0] sm:$0xff] %v8961
    %9062 = vst [vmem:[#allocation11 + $0x2b8] sm:$0xff] %v7995
    %9063 = vst [vmem:[#allocation11 + $0x2c0] sm:$0xff] %v7997
    %9064 = vst [vmem:[#allocation11 + $0x2c8] sm:$0xff] %v8964
    %9065 = vst [vmem:[#allocation11 + $0x2d0] sm:$0xff] %v8001
    %9066 = vst [vmem:[#allocation11 + $0x2d8] sm:$0xff] %v8003
    %9067 = vst [vmem:[#allocation11 + $0x2e0] sm:$0xff] %v8969
    %9068 = vst [vmem:[#allocation11 + $0x2e8] sm:$0xff] %v8005
    %9069 = vst [vmem:[#allocation11 + $0x2f0] sm:$0xff] %v8007
    %9070 = vst [vmem:[#allocation11 + $0x2f8] sm:$0xff] %v8972
    // Predicated region
    $region42: #{tpu_custom_call.1} parent=1 // pred_check
      _
    $region43: #{tpu_custom_call.1} parent=1 // pred_check_branch
      %9072 = sbr.rel (0) target = $region45
    $region44: #{tpu_custom_call.1} parent=1 // pred_region
      %s9074 = ssub.s32 12288, 12288
      %9075 = vsyncadd [#allocation4], %s9074
      %s9076 = sshll.u32 [#allocation11], 4
      %s9077 = int_to_ptr.vmem [resolvable:$true] %s9076
      %9082 = dma.vmem_to_hbm [thread:$0]  %s9077, 12288, %s5, [#allocation4], 384, 384, 24
    $region45: #{tpu_custom_call.1} parent=1 // pred_fallthru
      _
    // Predicated region
    $region46: #{tpu_custom_call.1} parent=1 // pred_check
      _
    $region47: #{tpu_custom_call.1} parent=1 // pred_check_branch
      %9084 = sbr.rel (0) target = $region49
    $region48: #{tpu_custom_call.1} parent=1 // pred_region
      %9085 = dma.done [#allocation4], 12288
    $region49: #{tpu_custom_call.1} parent=1 // pred_fallthru
      _
    %9086 = vsyncpa [#allocation3], 1
    %9087 = vsyncpa [#allocation6], 1
    %9088 = vsyncpa [#allocation9], 1
    %9089 = vsyncpa [#allocation4], 1

</llo_original>
